<compile_context>
chip_gen: v6e
topology: v6e:2x2x1
jax: 0.10.0
libtpu: 0.0.40
codegen_flags: <defaults>
</compile_context>

<pallas_src>
import jax
import jax.numpy as jnp
from jax import lax
from jax.experimental import pallas as pl
from jax.experimental.pallas import tpu as pltpu

_BN_EPS = 1e-5


# ----------------------------------------------------------------------------
# Pallas kernels
# ----------------------------------------------------------------------------
def _conv_pool_kernel(p_ref, w_ref, b_ref, a_ref, s_ref, t_ref, o_ref):
    """Conv (im2col matmul, bf16->f32 acc) + bias + PReLU + BN, fused 2x2 pool.

    p_ref: (4, TM, K) pool-plane patches; each plane q holds the patch rows of
    one position of the 2x2 max-pool window. Pool == elementwise max over q.
    """
    w = w_ref[...]
    b = b_ref[...]
    a = a_ref[...]            # (1, 1) PReLU alpha (shared)
    s = s_ref[...]            # (1, C) BN scale (eval-mode, folded)
    t = t_ref[...]            # (1, C) BN shift

    def plane(q):
        h = jnp.dot(p_ref[q], w, preferred_element_type=jnp.float32)
        h = h + b
        h = jnp.where(h >= 0.0, h, a * h)
        return h * s + t

    m = plane(0)
    for q in range(1, 4):                       # MaxPool2d(2) after BN
        m = jnp.maximum(m, plane(q))
    o_ref[...] = m.astype(o_ref.dtype)          # bf16 store


def _conv_pool_gate_kernel(p_ref, w_ref, b_ref, a_ref, s_ref, t_ref,
                           wa_ref, ba_ref, o_ref):
    """Stage-2 conv + PReLU + BN + 2x2 pool + fused Softplus attention gate."""
    w = w_ref[...]
    b = b_ref[...]
    a = a_ref[...]
    s = s_ref[...]
    t = t_ref[...]

    def plane(q):
        h = jnp.dot(p_ref[q], w, preferred_element_type=jnp.float32)
        h = h + b
        h = jnp.where(h >= 0.0, h, a * h)
        return h * s + t

    m = plane(0)
    for q in range(1, 4):
        m = jnp.maximum(m, plane(q))                       # (TM, 64) f32

    # attention: 1x1 conv (64->1) + Softplus(beta=1, threshold=20), x * atten
    z = jnp.sum(m * wa_ref[...], axis=-1, keepdims=True) + ba_ref[...]
    ez = jnp.exp(z)
    # stable softplus: linear for z>20 (PyTorch threshold), exp(z) for z<<0
    # (avoids log(1+exp(z)) rounding to 0), log(1+exp(z)) otherwise.
    sp = jnp.where(z > 20.0, z, jnp.where(z < -20.0, ez, jnp.log(1.0 + ez)))
    o_ref[...] = (m * sp).astype(o_ref.dtype)              # bf16 store


def _fc_l2norm_kernel(x_ref, w_ref, b_ref, o_ref):
    """Linear(2304 -> 128) bf16/f32-acc + L2 normalize (rsqrt on EUP)."""
    z = jnp.dot(x_ref[...], w_ref[...], preferred_element_type=jnp.float32)
    z = z + b_ref[...]
    ss = jnp.sum(z * z, axis=-1, keepdims=True)
    # F.normalize(p=2, eps=1e-12): z / max(||z||, 1e-12) == z*rsqrt(max(ss,1e-24))
    o_ref[...] = z * lax.rsqrt(jnp.maximum(ss, 1e-24))


# ----------------------------------------------------------------------------
# Pallas call wrappers (M-tiled, "parallel" grid semantics)
# ----------------------------------------------------------------------------
def _round_up(n, m):
    return ((n + m - 1) // m) * m


def _pick_tm(m_rows, cap):
    """Largest M tile <= cap, keeping >=2 grid steps when possible (v7x 2 TCs)."""
    return max(8, min(cap, _round_up(pl.cdiv(m_rows, 2), 8)))


def _pad_rows(p, tm):
    mp = _round_up(p.shape[1], tm)
    if mp != p.shape[1]:
        p = jnp.pad(p, ((0, 0), (0, mp - p.shape[1]), (0, 0)))
    return p


def _conv_pool(patches, w, b, alpha, scale, shift, tm):
    P, Mp, K = patches.shape
    C = w.shape[1]
    return pl.pallas_call(
        _conv_pool_kernel,
        out_shape=jax.ShapeDtypeStruct((Mp, C), jnp.bfloat16),
        grid=(Mp // tm,),
        in_specs=[
            pl.BlockSpec((P, tm, K), lambda i: (0, i, 0)),   # pool-plane patches
            pl.BlockSpec((K, C), lambda i: (0, 0)),          # conv weight
            pl.BlockSpec((1, C), lambda i: (0, 0)),          # conv bias
            pl.BlockSpec((1, 1), lambda i: (0, 0)),          # PReLU alpha
            pl.BlockSpec((1, C), lambda i: (0, 0)),          # BN scale
            pl.BlockSpec((1, C), lambda i: (0, 0)),          # BN shift
        ],
        out_specs=pl.BlockSpec((tm, C), lambda i: (i, 0)),
        compiler_params=pltpu.CompilerParams(
            dimension_semantics=("parallel",)),
        cost_estimate=pl.CostEstimate(
            flops=2 * P * Mp * K * C,
            transcendentals=0,
            bytes_accessed=P * Mp * K * 2 + K * C * 2 + Mp * C * 2),
    )(patches, w, b, alpha, scale, shift)


def _conv_pool_gate(patches, w, b, alpha, scale, shift, w_att, b_att, tm):
    P, Mp, K = patches.shape
    C = w.shape[1]
    return pl.pallas_call(
        _conv_pool_gate_kernel,
        out_shape=jax.ShapeDtypeStruct((Mp, C), jnp.bfloat16),
        grid=(Mp // tm,),
        in_specs=[
            pl.BlockSpec((P, tm, K), lambda i: (0, i, 0)),
            pl.BlockSpec((K, C), lambda i: (0, 0)),
            pl.BlockSpec((1, C), lambda i: (0, 0)),
            pl.BlockSpec((1, 1), lambda i: (0, 0)),
            pl.BlockSpec((1, C), lambda i: (0, 0)),
            pl.BlockSpec((1, C), lambda i: (0, 0)),
            pl.BlockSpec((1, C), lambda i: (0, 0)),          # attention weight
            pl.BlockSpec((1, 1), lambda i: (0, 0)),          # attention bias
        ],
        out_specs=pl.BlockSpec((tm, C), lambda i: (i, 0)),
        compiler_params=pltpu.CompilerParams(
            dimension_semantics=("parallel",)),
        cost_estimate=pl.CostEstimate(
            flops=2 * P * Mp * K * C + 4 * Mp * C,
            transcendentals=Mp,
            bytes_accessed=P * Mp * K * 2 + K * C * 2 + Mp * C * 2),
    )(patches, w, b, alpha, scale, shift, w_att, b_att)


def _fc_l2norm(xf, w_fc, b_fc):
    B, K = xf.shape
    N = w_fc.shape[1]
    if B <= 16:
        tb, Bp = B, B                      # single lane-dense block
    else:
        tb = min(128, _round_up(pl.cdiv(B, 2), 8))
        Bp = _round_up(B, tb)
        if Bp != B:                        # padded rows are masked out below
            xf = jnp.pad(xf, ((0, Bp - B), (0, 0)))
    out = pl.pallas_call(
        _fc_l2norm_kernel,
        out_shape=jax.ShapeDtypeStruct((Bp, N), jnp.float32),
        grid=(Bp // tb,),
        in_specs=[
            pl.BlockSpec((tb, K), lambda i: (i, 0)),
            pl.BlockSpec((K, N), lambda i: (0, 0)),
            pl.BlockSpec((1, N), lambda i: (0, 0)),
        ],
        out_specs=pl.BlockSpec((tb, N), lambda i: (i, 0)),
        compiler_params=pltpu.CompilerParams(
            dimension_semantics=("parallel",)),
        cost_estimate=pl.CostEstimate(
            flops=2 * Bp * K * N,
            transcendentals=Bp,
            bytes_accessed=Bp * K * 2 + K * N * 2 + Bp * N * 4),
    )(xf, w_fc, b_fc)
    return out[:B]


# ----------------------------------------------------------------------------
# Wrapper-side layout plumbing (padding / pool-plane im2col) -- pure XLA
# ----------------------------------------------------------------------------
def _pool_plane_patches(xpad, kh, kw, oh, ow):
    """Build im2col patches grouped by 2x2 pool-window position.

    xpad: (B, Hp, Wp, C) padded input.  Returns (4, B*oh*ow, kh*kw*C) where
    plane q = dy*2+dx holds the patch for conv position (2i+dy, 2j+dx) of
    pooled output (i, j).  Row order: b-major, then i*ow + j (NHWC flatten).
    """
    B, _, _, C = xpad.shape
    planes = []
    for dy in range(2):
        for dx in range(2):
            cols = []
            for ky in range(kh):
                for kx in range(kw):
                    sl = xpad[:, dy + ky: dy + ky + 2 * oh: 2,
                              dx + kx: dx + kx + 2 * ow: 2, :]   # (B, oh, ow, C)
                    cols.append(sl)
            pq = jnp.stack(cols, axis=-2)                        # (B, oh, ow, kh*kw, C)
            planes.append(pq.reshape(B * oh * ow, kh * kw * C))
    return jnp.stack(planes, axis=0)                             # (4, B*oh*ow, K)


def fenet3_forward(x, p):
    """x: (B, 28, 28, 1) float32 NHWC -> (B, 128) L2-normalized features."""
    B = x.shape[0]

    # fold eval-mode BatchNorm into per-channel scale/shift
    s1 = p["bn1_gamma"] * lax.rsqrt(p["bn1_var"] + _BN_EPS)
    t1 = p["bn1_beta"] - p["bn1_mean"] * s1
    s2 = p["bn2_gamma"] * lax.rsqrt(p["bn2_var"] + _BN_EPS)
    t2 = p["bn2_beta"] - p["bn2_mean"] * s2

    # ---- stage 1: Conv2d(1,64,4,pad=2)+PReLU+BN+MaxPool(2), one fused kernel
    xpad = jnp.pad(x, ((0, 0), (2, 2), (2, 2), (0, 0))).astype(jnp.bfloat16)
    pat1 = _pool_plane_patches(xpad, 4, 4, 14, 14)          # (4, B*196, 16) bf16
    m1 = B * 196
    tm1 = _pick_tm(m1, 2048)
    h1 = _conv_pool(_pad_rows(pat1, tm1),
                    p["w1"].reshape(16, 64).astype(jnp.bfloat16),
                    p["b1"].reshape(1, 64),
                    p["alpha1"].reshape(1, 1),
                    s1.reshape(1, 64), t1.reshape(1, 64), tm1)[:m1]
    h1 = h1.reshape(B, 14, 14, 64)                          # pooled, bf16
    # TODO(synk): Dropout2d(0.1) training-mode channel mask not implemented (eval = identity).

    # ---- stage 2: Conv2d(64,64,4,pad=1)+PReLU+BN+MaxPool(2)+Softplus gate
    hp = jnp.pad(h1, ((0, 0), (1, 1), (1, 1), (0, 0)))
    pat2 = _pool_plane_patches(hp, 4, 4, 6, 6)              # (4, B*36, 1024) bf16
    m2 = B * 36
    tm2 = _pick_tm(m2, 512)                                 # VMEM-safe on v5e/v7x
    g = _conv_pool_gate(_pad_rows(pat2, tm2),
                        p["w2"].reshape(1024, 64).astype(jnp.bfloat16),
                        p["b2"].reshape(1, 64),
                        p["alpha2"].reshape(1, 1),
                        s2.reshape(1, 64), t2.reshape(1, 64),
                        p["w_att"].reshape(1, 64),
                        p["b_att"].reshape(1, 1), tm2)[:m2]
    # TODO(synk): Dropout2d(0.3) training-mode channel mask not implemented (eval = identity).

    # ---- fc(2304 -> 128) + L2 normalize (lane-dense (TB, 128) output)
    xf = g.reshape(B, 36 * 64)                              # NHWC flatten, bf16
    return _fc_l2norm(xf, p["w_fc"].astype(jnp.bfloat16), p["b_fc"].reshape(1, -1))


# ----------------------------------------------------------------------------
# Parameter init + pure-JAX f32 reference
# ----------------------------------------------------------------------------
def init_params(key, num_features=128):
    ks = jax.random.split(key, 16)
    nrm = lambda k, shape, s: s * jax.random.normal(k, shape, jnp.float32)
    return {
        # conv1: Conv2d(1, 64, k=4, pad=2), HWIO
        "w1": nrm(ks[0], (4, 4, 1, 64), 0.25),
        "b1": nrm(ks[1], (64,), 0.1),
        "alpha1": jnp.float32(0.25),                 # nn.PReLU() default init
        "bn1_gamma": 1.0 + 0.2 * jax.random.normal(ks[2], (64,), jnp.float32),
        "bn1_beta": nrm(ks[3], (64,), 0.1),
        "bn1_mean": nrm(ks[4], (64,), 0.2),
        "bn1_var": 0.5 + jax.random.uniform(ks[5], (64,), jnp.float32),
        # conv2: Conv2d(64, 64, k=4, pad=1), HWIO
        "w2": nrm(ks[6], (4, 4, 64, 64), 0.05),
        "b2": nrm(ks[7], (64,), 0.1),
        "alpha2": jnp.float32(0.25),
        "bn2_gamma": 1.0 + 0.2 * jax.random.normal(ks[8], (64,), jnp.float32),
        "bn2_beta": nrm(ks[9], (64,), 0.1),
        "bn2_mean": nrm(ks[10], (64,), 0.2),
        "bn2_var": 0.5 + jax.random.uniform(ks[11], (64,), jnp.float32),
        # attention: Conv2d(64, 1, 1) + Softplus
        "w_att": nrm(ks[12], (64,), 0.1),
        "b_att": jnp.float32(0.1),
        # fc: Linear(64*6*6 -> num_features); rows ordered for NHWC flatten
        "w_fc": nrm(ks[13], (2304, num_features), 0.02),
        "b_fc": nrm(ks[14], (num_features,), 0.05),
    }


def _reference(x, p):
    """Plain-JAX f32 reference of FENet3.forward (eval mode, NHWC)."""
    def conv(h, w, b, pad):
        y = lax.conv_general_dilated(
            h, w, window_strides=(1, 1), padding=[(pad, pad), (pad, pad)],
            dimension_numbers=("NHWC", "HWIO", "NHWC"))
        return y + b
    prelu = lambda h, a: jnp.where(h >= 0, h, a * h)
    bn = lambda h, g, bt, m, v: (h - m) * g * lax.rsqrt(v + _BN_EPS) + bt
    pool = lambda h: lax.reduce_window(h, -jnp.inf, lax.max,
                                       (1, 2, 2, 1), (1, 2, 2, 1), "VALID")

    h = conv(x, p["w1"], p["b1"], 2)
    h = pool(bn(prelu(h, p["alpha1"]),
                p["bn1_gamma"], p["bn1_beta"], p["bn1_mean"], p["bn1_var"]))
    h = conv(h, p["w2"], p["b2"], 1)
    h = pool(bn(prelu(h, p["alpha2"]),
                p["bn2_gamma"], p["bn2_beta"], p["bn2_mean"], p["bn2_var"]))
    z = jnp.einsum("bhwc,c->bhw", h, p["w_att"]) + p["b_att"]
    att = jnp.where(z > 20.0, z, jnp.log1p(jnp.exp(z)))          # Softplus
    h = h * att[..., None]
    hf = h.reshape(h.shape[0], -1)                               # NHWC flatten
    z = hf @ p["w_fc"] + p["b_fc"]
    n = jnp.sqrt(jnp.sum(z * z, axis=1, keepdims=True))
    return z / jnp.maximum(n, 1e-12)


if __name__ == "__main__":
    key = jax.random.PRNGKey(0)
    kx, kp = jax.random.split(key)
    B = 2
    x = jax.random.normal(kx, (B, 28, 28, 1), jnp.float32)       # MNIST-sized
    params = init_params(kp, num_features=128)

    fwd = jax.jit(fenet3_forward)
    out = jax.block_until_ready(fwd(x, params))

    ref = _reference(x, params)
    assert out.shape == (B, 128)
    # bf16 matmul operands / bf16 activation stores (f32 accumulation & math)
    # => small drift vs the pure-f32 reference.
    assert jnp.allclose(out, ref, atol=2e-2, rtol=2e-2), "mismatch vs reference"
    print("KERNEL_OK")
</pallas_src>

<mosaic_0001>
module attributes {stable_mosaic.version = 11 : i64} {
  func.func @_conv_pool_kernel(%arg0: i32, %arg1: memref<4x200x16xbf16, #tpu.memory_space<vmem>>, %arg2: memref<16x64xbf16, #tpu.memory_space<vmem>>, %arg3: memref<1x64xf32, #tpu.memory_space<vmem>>, %arg4: memref<1x1xf32, #tpu.memory_space<vmem>>, %arg5: memref<1x64xf32, #tpu.memory_space<vmem>>, %arg6: memref<1x64xf32, #tpu.memory_space<vmem>>, %arg7: memref<200x64xbf16, #tpu.memory_space<vmem>>) attributes {dimension_semantics = [#tpu.dimension_semantics<parallel>], iteration_bounds = array<i64: 2>, scalar_prefetch = 0 : i64, scratch_operands = 0 : i64, tpu.core_type = #tpu.core_type<tc>, window_params = [{transform_indices = @transform_0, window_bounds = array<i64: 4, 200, 16>}, {pipeline_mode = #tpu.pipeline_mode<synchronous>, transform_indices = @transform_1, window_bounds = array<i64: 16, 64>}, {pipeline_mode = #tpu.pipeline_mode<synchronous>, transform_indices = @transform_2, window_bounds = array<i64: 1, 64>}, {pipeline_mode = #tpu.pipeline_mode<synchronous>, transform_indices = @transform_3, window_bounds = array<i64: 1, 1>}, {pipeline_mode = #tpu.pipeline_mode<synchronous>, transform_indices = @transform_4, window_bounds = array<i64: 1, 64>}, {pipeline_mode = #tpu.pipeline_mode<synchronous>, transform_indices = @transform_5, window_bounds = array<i64: 1, 64>}, {transform_indices = @transform_6, window_bounds = array<i64: 200, 64>}]} {
    %c0 = arith.constant 0 : index
    %c0_0 = arith.constant 0 : index
    %0 = vector.load %arg2[%c0, %c0_0] : memref<16x64xbf16, #tpu.memory_space<vmem>>, vector<16x64xbf16>
    %c0_1 = arith.constant 0 : index
    %c0_2 = arith.constant 0 : index
    %1 = vector.load %arg3[%c0_1, %c0_2] : memref<1x64xf32, #tpu.memory_space<vmem>>, vector<1x64xf32>
    %c0_3 = arith.constant 0 : index
    %c0_4 = arith.constant 0 : index
    %2 = vector.load %arg4[%c0_3, %c0_4] : memref<1x1xf32, #tpu.memory_space<vmem>>, vector<1x1xf32>
    %c0_5 = arith.constant 0 : index
    %c0_6 = arith.constant 0 : index
    %3 = vector.load %arg5[%c0_5, %c0_6] : memref<1x64xf32, #tpu.memory_space<vmem>>, vector<1x64xf32>
    %c0_7 = arith.constant 0 : index
    %c0_8 = arith.constant 0 : index
    %4 = vector.load %arg6[%c0_7, %c0_8] : memref<1x64xf32, #tpu.memory_space<vmem>>, vector<1x64xf32>
    %c0_9 = arith.constant 0 : index
    %c0_10 = arith.constant 0 : index
    %c0_11 = arith.constant 0 : index
    %5 = vector.load %arg1[%c0_9, %c0_10, %c0_11] : memref<4x200x16xbf16, #tpu.memory_space<vmem>>, vector<1x200x16xbf16>
    %6 = vector.shape_cast %5 : vector<1x200x16xbf16> to vector<200x16xbf16>
    %cst = arith.constant dense<0.000000e+00> : vector<200x64xf32>
    %7 = tpu.matmul %6, %0, %cst {dimension_numbers = #tpu.dot_dimension_numbers<[1], [0], [0], [1], [0, 0, 1, 1], [], []>} : vector<200x16xbf16>, vector<16x64xbf16>, vector<200x64xf32> -> vector<200x64xf32>
    %8 = vector.broadcast %1 : vector<1x64xf32> to vector<200x64xf32>
    %9 = arith.addf %7, %8 : vector<200x64xf32>
    %cst_12 = arith.constant 0.000000e+00 : f32
    %10 = vector.broadcast %cst_12 : f32 to vector<200x64xf32>
    %11 = arith.cmpf oge, %9, %10 : vector<200x64xf32>
    %12 = vector.broadcast %2 : vector<1x1xf32> to vector<200x64xf32>
    %13 = arith.mulf %12, %9 : vector<200x64xf32>
    %14 = arith.select %11, %9, %13 : vector<200x64xi1>, vector<200x64xf32>
    %15 = vector.broadcast %3 : vector<1x64xf32> to vector<200x64xf32>
    %16 = arith.mulf %14, %15 : vector<200x64xf32>
    %17 = vector.broadcast %4 : vector<1x64xf32> to vector<200x64xf32>
    %18 = arith.addf %16, %17 : vector<200x64xf32>
    %c1 = arith.constant 1 : index
    %c0_13 = arith.constant 0 : index
    %c0_14 = arith.constant 0 : index
    %19 = vector.load %arg1[%c1, %c0_13, %c0_14] : memref<4x200x16xbf16, #tpu.memory_space<vmem>>, vector<1x200x16xbf16>
    %20 = vector.shape_cast %19 : vector<1x200x16xbf16> to vector<200x16xbf16>
    %cst_15 = arith.constant dense<0.000000e+00> : vector<200x64xf32>
    %21 = tpu.matmul %20, %0, %cst_15 {dimension_numbers = #tpu.dot_dimension_numbers<[1], [0], [0], [1], [0, 0, 1, 1], [], []>} : vector<200x16xbf16>, vector<16x64xbf16>, vector<200x64xf32> -> vector<200x64xf32>
    %22 = vector.broadcast %1 : vector<1x64xf32> to vector<200x64xf32>
    %23 = arith.addf %21, %22 : vector<200x64xf32>
    %cst_16 = arith.constant 0.000000e+00 : f32
    %24 = vector.broadcast %cst_16 : f32 to vector<200x64xf32>
    %25 = arith.cmpf oge, %23, %24 : vector<200x64xf32>
    %26 = vector.broadcast %2 : vector<1x1xf32> to vector<200x64xf32>
    %27 = arith.mulf %26, %23 : vector<200x64xf32>
    %28 = arith.select %25, %23, %27 : vector<200x64xi1>, vector<200x64xf32>
    %29 = vector.broadcast %3 : vector<1x64xf32> to vector<200x64xf32>
    %30 = arith.mulf %28, %29 : vector<200x64xf32>
    %31 = vector.broadcast %4 : vector<1x64xf32> to vector<200x64xf32>
    %32 = arith.addf %30, %31 : vector<200x64xf32>
    %33 = arith.maximumf %18, %32 : vector<200x64xf32>
    %c2 = arith.constant 2 : index
    %c0_17 = arith.constant 0 : index
    %c0_18 = arith.constant 0 : index
    %34 = vector.load %arg1[%c2, %c0_17, %c0_18] : memref<4x200x16xbf16, #tpu.memory_space<vmem>>, vector<1x200x16xbf16>
    %35 = vector.shape_cast %34 : vector<1x200x16xbf16> to vector<200x16xbf16>
    %cst_19 = arith.constant dense<0.000000e+00> : vector<200x64xf32>
    %36 = tpu.matmul %35, %0, %cst_19 {dimension_numbers = #tpu.dot_dimension_numbers<[1], [0], [0], [1], [0, 0, 1, 1], [], []>} : vector<200x16xbf16>, vector<16x64xbf16>, vector<200x64xf32> -> vector<200x64xf32>
    %37 = vector.broadcast %1 : vector<1x64xf32> to vector<200x64xf32>
    %38 = arith.addf %36, %37 : vector<200x64xf32>
    %cst_20 = arith.constant 0.000000e+00 : f32
    %39 = vector.broadcast %cst_20 : f32 to vector<200x64xf32>
    %40 = arith.cmpf oge, %38, %39 : vector<200x64xf32>
    %41 = vector.broadcast %2 : vector<1x1xf32> to vector<200x64xf32>
    %42 = arith.mulf %41, %38 : vector<200x64xf32>
    %43 = arith.select %40, %38, %42 : vector<200x64xi1>, vector<200x64xf32>
    %44 = vector.broadcast %3 : vector<1x64xf32> to vector<200x64xf32>
    %45 = arith.mulf %43, %44 : vector<200x64xf32>
    %46 = vector.broadcast %4 : vector<1x64xf32> to vector<200x64xf32>
    %47 = arith.addf %45, %46 : vector<200x64xf32>
    %48 = arith.maximumf %33, %47 : vector<200x64xf32>
    %c3 = arith.constant 3 : index
    %c0_21 = arith.constant 0 : index
    %c0_22 = arith.constant 0 : index
    %49 = vector.load %arg1[%c3, %c0_21, %c0_22] : memref<4x200x16xbf16, #tpu.memory_space<vmem>>, vector<1x200x16xbf16>
    %50 = vector.shape_cast %49 : vector<1x200x16xbf16> to vector<200x16xbf16>
    %cst_23 = arith.constant dense<0.000000e+00> : vector<200x64xf32>
    %51 = tpu.matmul %50, %0, %cst_23 {dimension_numbers = #tpu.dot_dimension_numbers<[1], [0], [0], [1], [0, 0, 1, 1], [], []>} : vector<200x16xbf16>, vector<16x64xbf16>, vector<200x64xf32> -> vector<200x64xf32>
    %52 = vector.broadcast %1 : vector<1x64xf32> to vector<200x64xf32>
    %53 = arith.addf %51, %52 : vector<200x64xf32>
    %cst_24 = arith.constant 0.000000e+00 : f32
    %54 = vector.broadcast %cst_24 : f32 to vector<200x64xf32>
    %55 = arith.cmpf oge, %53, %54 : vector<200x64xf32>
    %56 = vector.broadcast %2 : vector<1x1xf32> to vector<200x64xf32>
    %57 = arith.mulf %56, %53 : vector<200x64xf32>
    %58 = arith.select %55, %53, %57 : vector<200x64xi1>, vector<200x64xf32>
    %59 = vector.broadcast %3 : vector<1x64xf32> to vector<200x64xf32>
    %60 = arith.mulf %58, %59 : vector<200x64xf32>
    %61 = vector.broadcast %4 : vector<1x64xf32> to vector<200x64xf32>
    %62 = arith.addf %60, %61 : vector<200x64xf32>
    %63 = arith.maximumf %48, %62 : vector<200x64xf32>
    %64 = arith.truncf %63 : vector<200x64xf32> to vector<200x64xbf16>
    %c0_25 = arith.constant 0 : index
    %c0_26 = arith.constant 0 : index
    %65 = vector.load %arg7[%c0_25, %c0_26] : memref<200x64xbf16, #tpu.memory_space<vmem>>, vector<200x64xbf16>
    tpu.vector_store %arg7[%c0_25, %c0_26], %64 {strides = array<i32>} : memref<200x64xbf16, #tpu.memory_space<vmem>>, vector<200x64xbf16>,
    return
  }
  func.func @transform_0(%arg0: i32) -> (i32, i32, i32) {
    %c0_i32 = arith.constant 0 : i32
    %c0_i32_0 = arith.constant 0 : i32
    %c0_i32_1 = arith.constant 0 : i32
    return %c0_i32, %arg0, %c0_i32_0 : i32, i32, i32
  }
  func.func @transform_1(%arg0: i32) -> (i32, i32) {
    %c0_i32 = arith.constant 0 : i32
    %c0_i32_0 = arith.constant 0 : i32
    %c0_i32_1 = arith.constant 0 : i32
    return %c0_i32, %c0_i32_0 : i32, i32
  }
  func.func @transform_2(%arg0: i32) -> (i32, i32) {
    %c0_i32 = arith.constant 0 : i32
    %c0_i32_0 = arith.constant 0 : i32
    %c0_i32_1 = arith.constant 0 : i32
    return %c0_i32, %c0_i32_0 : i32, i32
  }
  func.func @transform_3(%arg0: i32) -> (i32, i32) {
    %c0_i32 = arith.constant 0 : i32
    %c0_i32_0 = arith.constant 0 : i32
    %c0_i32_1 = arith.constant 0 : i32
    return %c0_i32, %c0_i32_0 : i32, i32
  }
  func.func @transform_4(%arg0: i32) -> (i32, i32) {
    %c0_i32 = arith.constant 0 : i32
    %c0_i32_0 = arith.constant 0 : i32
    %c0_i32_1 = arith.constant 0 : i32
    return %c0_i32, %c0_i32_0 : i32, i32
  }
  func.func @transform_5(%arg0: i32) -> (i32, i32) {
    %c0_i32 = arith.constant 0 : i32
    %c0_i32_0 = arith.constant 0 : i32
    %c0_i32_1 = arith.constant 0 : i32
    return %c0_i32, %c0_i32_0 : i32, i32
  }
  func.func @transform_6(%arg0: i32) -> (i32, i32) {
    %c0_i32 = arith.constant 0 : i32
    %c0_i32_0 = arith.constant 0 : i32
    return %arg0, %c0_i32 : i32, i32
  }
}

module attributes {stable_mosaic.version = 11 : i64} {
  func.func @_conv_pool_gate_kernel(%arg0: i32, %arg1: memref<4x40x1024xbf16, #tpu.memory_space<vmem>>, %arg2: memref<1024x64xbf16, #tpu.memory_space<vmem>>, %arg3: memref<1x64xf32, #tpu.memory_space<vmem>>, %arg4: memref<1x1xf32, #tpu.memory_space<vmem>>, %arg5: memref<1x64xf32, #tpu.memory_space<vmem>>, %arg6: memref<1x64xf32, #tpu.memory_space<vmem>>, %arg7: memref<1x64xf32, #tpu.memory_space<vmem>>, %arg8: memref<1x1xf32, #tpu.memory_space<vmem>>, %arg9: memref<40x64xbf16, #tpu.memory_space<vmem>>) attributes {dimension_semantics = [#tpu.dimension_semantics<parallel>], iteration_bounds = array<i64: 2>, scalar_prefetch = 0 : i64, scratch_operands = 0 : i64, tpu.core_type = #tpu.core_type<tc>, window_params = [{transform_indices = @transform_0, window_bounds = array<i64: 4, 40, 1024>}, {pipeline_mode = #tpu.pipeline_mode<synchronous>, transform_indices = @transform_1, window_bounds = array<i64: 1024, 64>}, {pipeline_mode = #tpu.pipeline_mode<synchronous>, transform_indices = @transform_2, window_bounds = array<i64: 1, 64>}, {pipeline_mode = #tpu.pipeline_mode<synchronous>, transform_indices = @transform_3, window_bounds = array<i64: 1, 1>}, {pipeline_mode = #tpu.pipeline_mode<synchronous>, transform_indices = @transform_4, window_bounds = array<i64: 1, 64>}, {pipeline_mode = #tpu.pipeline_mode<synchronous>, transform_indices = @transform_5, window_bounds = array<i64: 1, 64>}, {pipeline_mode = #tpu.pipeline_mode<synchronous>, transform_indices = @transform_6, window_bounds = array<i64: 1, 64>}, {pipeline_mode = #tpu.pipeline_mode<synchronous>, transform_indices = @transform_7, window_bounds = array<i64: 1, 1>}, {transform_indices = @transform_8, window_bounds = array<i64: 40, 64>}]} {
    %c0 = arith.constant 0 : index
    %c0_0 = arith.constant 0 : index
    %0 = vector.load %arg2[%c0, %c0_0] : memref<1024x64xbf16, #tpu.memory_space<vmem>>, vector<1024x64xbf16>
    %c0_1 = arith.constant 0 : index
    %c0_2 = arith.constant 0 : index
    %1 = vector.load %arg3[%c0_1, %c0_2] : memref<1x64xf32, #tpu.memory_space<vmem>>, vector<1x64xf32>
    %c0_3 = arith.constant 0 : index
    %c0_4 = arith.constant 0 : index
    %2 = vector.load %arg4[%c0_3, %c0_4] : memref<1x1xf32, #tpu.memory_space<vmem>>, vector<1x1xf32>
    %c0_5 = arith.constant 0 : index
    %c0_6 = arith.constant 0 : index
    %3 = vector.load %arg5[%c0_5, %c0_6] : memref<1x64xf32, #tpu.memory_space<vmem>>, vector<1x64xf32>
    %c0_7 = arith.constant 0 : index
    %c0_8 = arith.constant 0 : index
    %4 = vector.load %arg6[%c0_7, %c0_8] : memref<1x64xf32, #tpu.memory_space<vmem>>, vector<1x64xf32>
    %c0_9 = arith.constant 0 : index
    %c0_10 = arith.constant 0 : index
    %c0_11 = arith.constant 0 : index
    %5 = vector.load %arg1[%c0_9, %c0_10, %c0_11] : memref<4x40x1024xbf16, #tpu.memory_space<vmem>>, vector<1x40x1024xbf16>
    %6 = vector.shape_cast %5 : vector<1x40x1024xbf16> to vector<40x1024xbf16>
    %cst = arith.constant dense<0.000000e+00> : vector<40x64xf32>
    %7 = tpu.matmul %6, %0, %cst {dimension_numbers = #tpu.dot_dimension_numbers<[1], [0], [0], [1], [0, 0, 1, 1], [], []>} : vector<40x1024xbf16>, vector<1024x64xbf16>, vector<40x64xf32> -> vector<40x64xf32>
    %8 = vector.broadcast %1 : vector<1x64xf32> to vector<40x64xf32>
    %9 = arith.addf %7, %8 : vector<40x64xf32>
    %cst_12 = arith.constant 0.000000e+00 : f32
    %10 = vector.broadcast %cst_12 : f32 to vector<40x64xf32>
    %11 = arith.cmpf oge, %9, %10 : vector<40x64xf32>
    %12 = vector.broadcast %2 : vector<1x1xf32> to vector<40x64xf32>
    %13 = arith.mulf %12, %9 : vector<40x64xf32>
    %14 = arith.select %11, %9, %13 : vector<40x64xi1>, vector<40x64xf32>
    %15 = vector.broadcast %3 : vector<1x64xf32> to vector<40x64xf32>
    %16 = arith.mulf %14, %15 : vector<40x64xf32>
    %17 = vector.broadcast %4 : vector<1x64xf32> to vector<40x64xf32>
    %18 = arith.addf %16, %17 : vector<40x64xf32>
    %c1 = arith.constant 1 : index
    %c0_13 = arith.constant 0 : index
    %c0_14 = arith.constant 0 : index
    %19 = vector.load %arg1[%c1, %c0_13, %c0_14] : memref<4x40x1024xbf16, #tpu.memory_space<vmem>>, vector<1x40x1024xbf16>
    %20 = vector.shape_cast %19 : vector<1x40x1024xbf16> to vector<40x1024xbf16>
    %cst_15 = arith.constant dense<0.000000e+00> : vector<40x64xf32>
    %21 = tpu.matmul %20, %0, %cst_15 {dimension_numbers = #tpu.dot_dimension_numbers<[1], [0], [0], [1], [0, 0, 1, 1], [], []>} : vector<40x1024xbf16>, vector<1024x64xbf16>, vector<40x64xf32> -> vector<40x64xf32>
    %22 = vector.broadcast %1 : vector<1x64xf32> to vector<40x64xf32>
    %23 = arith.addf %21, %22 : vector<40x64xf32>
    %cst_16 = arith.constant 0.000000e+00 : f32
    %24 = vector.broadcast %cst_16 : f32 to vector<40x64xf32>
    %25 = arith.cmpf oge, %23, %24 : vector<40x64xf32>
    %26 = vector.broadcast %2 : vector<1x1xf32> to vector<40x64xf32>
    %27 = arith.mulf %26, %23 : vector<40x64xf32>
    %28 = arith.select %25, %23, %27 : vector<40x64xi1>, vector<40x64xf32>
    %29 = vector.broadcast %3 : vector<1x64xf32> to vector<40x64xf32>
    %30 = arith.mulf %28, %29 : vector<40x64xf32>
    %31 = vector.broadcast %4 : vector<1x64xf32> to vector<40x64xf32>
    %32 = arith.addf %30, %31 : vector<40x64xf32>
    %33 = arith.maximumf %18, %32 : vector<40x64xf32>
    %c2 = arith.constant 2 : index
    %c0_17 = arith.constant 0 : index
    %c0_18 = arith.constant 0 : index
    %34 = vector.load %arg1[%c2, %c0_17, %c0_18] : memref<4x40x1024xbf16, #tpu.memory_space<vmem>>, vector<1x40x1024xbf16>
    %35 = vector.shape_cast %34 : vector<1x40x1024xbf16> to vector<40x1024xbf16>
    %cst_19 = arith.constant dense<0.000000e+00> : vector<40x64xf32>
    %36 = tpu.matmul %35, %0, %cst_19 {dimension_numbers = #tpu.dot_dimension_numbers<[1], [0], [0], [1], [0, 0, 1, 1], [], []>} : vector<40x1024xbf16>, vector<1024x64xbf16>, vector<40x64xf32> -> vector<40x64xf32>
    %37 = vector.broadcast %1 : vector<1x64xf32> to vector<40x64xf32>
    %38 = arith.addf %36, %37 : vector<40x64xf32>
    %cst_20 = arith.constant 0.000000e+00 : f32
    %39 = vector.broadcast %cst_20 : f32 to vector<40x64xf32>
    %40 = arith.cmpf oge, %38, %39 : vector<40x64xf32>
    %41 = vector.broadcast %2 : vector<1x1xf32> to vector<40x64xf32>
    %42 = arith.mulf %41, %38 : vector<40x64xf32>
    %43 = arith.select %40, %38, %42 : vector<40x64xi1>, vector<40x64xf32>
    %44 = vector.broadcast %3 : vector<1x64xf32> to vector<40x64xf32>
    %45 = arith.mulf %43, %44 : vector<40x64xf32>
    %46 = vector.broadcast %4 : vector<1x64xf32> to vector<40x64xf32>
    %47 = arith.addf %45, %46 : vector<40x64xf32>
    %48 = arith.maximumf %33, %47 : vector<40x64xf32>
    %c3 = arith.constant 3 : index
    %c0_21 = arith.constant 0 : index
    %c0_22 = arith.constant 0 : index
    %49 = vector.load %arg1[%c3, %c0_21, %c0_22] : memref<4x40x1024xbf16, #tpu.memory_space<vmem>>, vector<1x40x1024xbf16>
    %50 = vector.shape_cast %49 : vector<1x40x1024xbf16> to vector<40x1024xbf16>
    %cst_23 = arith.constant dense<0.000000e+00> : vector<40x64xf32>
    %51 = tpu.matmul %50, %0, %cst_23 {dimension_numbers = #tpu.dot_dimension_numbers<[1], [0], [0], [1], [0, 0, 1, 1], [], []>} : vector<40x1024xbf16>, vector<1024x64xbf16>, vector<40x64xf32> -> vector<40x64xf32>
    %52 = vector.broadcast %1 : vector<1x64xf32> to vector<40x64xf32>
    %53 = arith.addf %51, %52 : vector<40x64xf32>
    %cst_24 = arith.constant 0.000000e+00 : f32
    %54 = vector.broadcast %cst_24 : f32 to vector<40x64xf32>
    %55 = arith.cmpf oge, %53, %54 : vector<40x64xf32>
    %56 = vector.broadcast %2 : vector<1x1xf32> to vector<40x64xf32>
    %57 = arith.mulf %56, %53 : vector<40x64xf32>
    %58 = arith.select %55, %53, %57 : vector<40x64xi1>, vector<40x64xf32>
    %59 = vector.broadcast %3 : vector<1x64xf32> to vector<40x64xf32>
    %60 = arith.mulf %58, %59 : vector<40x64xf32>
    %61 = vector.broadcast %4 : vector<1x64xf32> to vector<40x64xf32>
    %62 = arith.addf %60, %61 : vector<40x64xf32>
    %63 = arith.maximumf %48, %62 : vector<40x64xf32>
    %c0_25 = arith.constant 0 : index
    %c0_26 = arith.constant 0 : index
    %64 = vector.load %arg7[%c0_25, %c0_26] : memref<1x64xf32, #tpu.memory_space<vmem>>, vector<1x64xf32>
    %65 = vector.broadcast %64 : vector<1x64xf32> to vector<40x64xf32>
    %66 = arith.mulf %63, %65 : vector<40x64xf32>
    %cst_27 = arith.constant dense<0.000000e+00> : vector<40xf32>
    %67 = vector.multi_reduction <add>, %66, %cst_27 [1] : vector<40x64xf32> to vector<40xf32>
    %68 = vector.shape_cast %67 : vector<40xf32> to vector<40x1xf32>
    %c0_28 = arith.constant 0 : index
    %c0_29 = arith.constant 0 : index
    %69 = vector.load %arg8[%c0_28, %c0_29] : memref<1x1xf32, #tpu.memory_space<vmem>>, vector<1x1xf32>
    %70 = vector.broadcast %69 : vector<1x1xf32> to vector<40x1xf32>
    %71 = arith.addf %68, %70 : vector<40x1xf32>
    %72 = math.exp %71 : vector<40x1xf32>
    %cst_30 = arith.constant 2.000000e+01 : f32
    %73 = vector.broadcast %cst_30 : f32 to vector<40x1xf32>
    %74 = arith.cmpf ogt, %71, %73 : vector<40x1xf32>
    %cst_31 = arith.constant -2.000000e+01 : f32
    %75 = vector.broadcast %cst_31 : f32 to vector<40x1xf32>
    %76 = arith.cmpf olt, %71, %75 : vector<40x1xf32>
    %cst_32 = arith.constant 1.000000e+00 : f32
    %77 = vector.broadcast %cst_32 : f32 to vector<40x1xf32>
    %78 = arith.addf %77, %72 : vector<40x1xf32>
    %79 = math.log %78 : vector<40x1xf32>
    %80 = arith.select %76, %72, %79 : vector<40x1xi1>, vector<40x1xf32>
    %81 = arith.select %74, %71, %80 : vector<40x1xi1>, vector<40x1xf32>
    %82 = vector.broadcast %81 : vector<40x1xf32> to vector<40x64xf32>
    %83 = arith.mulf %63, %82 : vector<40x64xf32>
    %84 = arith.truncf %83 : vector<40x64xf32> to vector<40x64xbf16>
    %c0_33 = arith.constant 0 : index
    %c0_34 = arith.constant 0 : index
    %85 = vector.load %arg9[%c0_33, %c0_34] : memref<40x64xbf16, #tpu.memory_space<vmem>>, vector<40x64xbf16>
    tpu.vector_store %arg9[%c0_33, %c0_34], %84 {strides = array<i32>} : memref<40x64xbf16, #tpu.memory_space<vmem>>, vector<40x64xbf16>,
    return
  }
  func.func @transform_0(%arg0: i32) -> (i32, i32, i32) {
    %c0_i32 = arith.constant 0 : i32
    %c0_i32_0 = arith.constant 0 : i32
    %c0_i32_1 = arith.constant 0 : i32
    return %c0_i32, %arg0, %c0_i32_0 : i32, i32, i32
  }
  func.func @transform_1(%arg0: i32) -> (i32, i32) {
    %c0_i32 = arith.constant 0 : i32
    %c0_i32_0 = arith.constant 0 : i32
    %c0_i32_1 = arith.constant 0 : i32
    return %c0_i32, %c0_i32_0 : i32, i32
  }
  func.func @transform_2(%arg0: i32) -> (i32, i32) {
    %c0_i32 = arith.constant 0 : i32
    %c0_i32_0 = arith.constant 0 : i32
    %c0_i32_1 = arith.constant 0 : i32
    return %c0_i32, %c0_i32_0 : i32, i32
  }
  func.func @transform_3(%arg0: i32) -> (i32, i32) {
    %c0_i32 = arith.constant 0 : i32
    %c0_i32_0 = arith.constant 0 : i32
    %c0_i32_1 = arith.constant 0 : i32
    return %c0_i32, %c0_i32_0 : i32, i32
  }
  func.func @transform_4(%arg0: i32) -> (i32, i32) {
    %c0_i32 = arith.constant 0 : i32
    %c0_i32_0 = arith.constant 0 : i32
    %c0_i32_1 = arith.constant 0 : i32
    return %c0_i32, %c0_i32_0 : i32, i32
  }
  func.func @transform_5(%arg0: i32) -> (i32, i32) {
    %c0_i32 = arith.constant 0 : i32
    %c0_i32_0 = arith.constant 0 : i32
    %c0_i32_1 = arith.constant 0 : i32
    return %c0_i32, %c0_i32_0 : i32, i32
  }
  func.func @transform_6(%arg0: i32) -> (i32, i32) {
    %c0_i32 = arith.constant 0 : i32
    %c0_i32_0 = arith.constant 0 : i32
    %c0_i32_1 = arith.constant 0 : i32
    return %c0_i32, %c0_i32_0 : i32, i32
  }
  func.func @transform_7(%arg0: i32) -> (i32, i32) {
    %c0_i32 = arith.constant 0 : i32
    %c0_i32_0 = arith.constant 0 : i32
    %c0_i32_1 = arith.constant 0 : i32
    return %c0_i32, %c0_i32_0 : i32, i32
  }
  func.func @transform_8(%arg0: i32) -> (i32, i32) {
    %c0_i32 = arith.constant 0 : i32
    %c0_i32_0 = arith.constant 0 : i32
    return %arg0, %c0_i32 : i32, i32
  }
}

module attributes {stable_mosaic.version = 11 : i64} {
  func.func @_fc_l2norm_kernel(%arg0: i32, %arg1: memref<2x2304xbf16, #tpu.memory_space<vmem>>, %arg2: memref<2304x128xbf16, #tpu.memory_space<vmem>>, %arg3: memref<1x128xf32, #tpu.memory_space<vmem>>, %arg4: memref<2x128xf32, #tpu.memory_space<vmem>>) attributes {dimension_semantics = [#tpu.dimension_semantics<parallel>], iteration_bounds = array<i64: 1>, scalar_prefetch = 0 : i64, scratch_operands = 0 : i64, tpu.core_type = #tpu.core_type<tc>, window_params = [{transform_indices = @transform_0, window_bounds = array<i64: 2, 2304>}, {pipeline_mode = #tpu.pipeline_mode<synchronous>, transform_indices = @transform_1, window_bounds = array<i64: 2304, 128>}, {pipeline_mode = #tpu.pipeline_mode<synchronous>, transform_indices = @transform_2, window_bounds = array<i64: 1, 128>}, {transform_indices = @transform_3, window_bounds = array<i64: 2, 128>}]} {
    %c0 = arith.constant 0 : index
    %c0_0 = arith.constant 0 : index
    %0 = vector.load %arg1[%c0, %c0_0] : memref<2x2304xbf16, #tpu.memory_space<vmem>>, vector<2x2304xbf16>
    %c0_1 = arith.constant 0 : index
    %c0_2 = arith.constant 0 : index
    %1 = vector.load %arg2[%c0_1, %c0_2] : memref<2304x128xbf16, #tpu.memory_space<vmem>>, vector<2304x128xbf16>
    %cst = arith.constant dense<0.000000e+00> : vector<2x128xf32>
    %2 = tpu.matmul %0, %1, %cst {dimension_numbers = #tpu.dot_dimension_numbers<[1], [0], [0], [1], [0, 0, 1, 1], [], []>} : vector<2x2304xbf16>, vector<2304x128xbf16>, vector<2x128xf32> -> vector<2x128xf32>
    %c0_3 = arith.constant 0 : index
    %c0_4 = arith.constant 0 : index
    %3 = vector.load %arg3[%c0_3, %c0_4] : memref<1x128xf32, #tpu.memory_space<vmem>>, vector<1x128xf32>
    %4 = vector.broadcast %3 : vector<1x128xf32> to vector<2x128xf32>
    %5 = arith.addf %2, %4 : vector<2x128xf32>
    %6 = arith.mulf %5, %5 : vector<2x128xf32>
    %cst_5 = arith.constant dense<0.000000e+00> : vector<2xf32>
    %7 = vector.multi_reduction <add>, %6, %cst_5 [1] : vector<2x128xf32> to vector<2xf32>
    %8 = vector.shape_cast %7 : vector<2xf32> to vector<2x1xf32>
    %cst_6 = arith.constant 1.000000e-24 : f32
    %9 = vector.broadcast %cst_6 : f32 to vector<2x1xf32>
    %10 = arith.maximumf %8, %9 : vector<2x1xf32>
    %11 = math.rsqrt %10 : vector<2x1xf32>
    %12 = vector.broadcast %11 : vector<2x1xf32> to vector<2x128xf32>
    %13 = arith.mulf %5, %12 : vector<2x128xf32>
    %c0_7 = arith.constant 0 : index
    %c0_8 = arith.constant 0 : index
    %14 = vector.load %arg4[%c0_7, %c0_8] : memref<2x128xf32, #tpu.memory_space<vmem>>, vector<2x128xf32>
    tpu.vector_store %arg4[%c0_7, %c0_8], %13 {strides = array<i32>} : memref<2x128xf32, #tpu.memory_space<vmem>>, vector<2x128xf32>,
    return
  }
  func.func @transform_0(%arg0: i32) -> (i32, i32) {
    %c0_i32 = arith.constant 0 : i32
    %c0_i32_0 = arith.constant 0 : i32
    return %arg0, %c0_i32 : i32, i32
  }
  func.func @transform_1(%arg0: i32) -> (i32, i32) {
    %c0_i32 = arith.constant 0 : i32
    %c0_i32_0 = arith.constant 0 : i32
    %c0_i32_1 = arith.constant 0 : i32
    return %c0_i32, %c0_i32_0 : i32, i32
  }
  func.func @transform_2(%arg0: i32) -> (i32, i32) {
    %c0_i32 = arith.constant 0 : i32
    %c0_i32_0 = arith.constant 0 : i32
    %c0_i32_1 = arith.constant 0 : i32
    return %c0_i32, %c0_i32_0 : i32, i32
  }
  func.func @transform_3(%arg0: i32) -> (i32, i32) {
    %c0_i32 = arith.constant 0 : i32
    %c0_i32_0 = arith.constant 0 : i32
    return %arg0, %c0_i32 : i32, i32
  }
}

</mosaic_0001>

<llo_original>
// kernel: fenet3_forward.3
$region0: #{fenet3_forward.3}
  #allocation0 [shape = 'u32[]', space=smem, size = 0x4, offset = 0x4, fixed_abs, tag = 'smem constant byte address 0x4 - core index']
  #allocation1 [shape = 'u32[144,128]{1,0:T(1,128)}', space=vmem, size = 0x12000, scoped, tag = 'internal scratch']
  #allocation2 [shape = 'f32[1,1]{1,0:T(1,128)S(1)}', space=vmem, size = 0x200, scoped, tag = 'scoped memory for fenet3_forward.3']
  %s0 = inlined_call_operand.vmem [shape: bf16[4,400,16], index: 0, kind: input, shape index: {}]
  %s1 = inlined_call_operand.vmem [shape: bf16[16,64], index: 1, kind: input, shape index: {}]
  %s2 = inlined_call_operand.vmem [shape: f32[1,64], index: 2, kind: input, shape index: {}]
  %s3 = inlined_call_operand.<no memory space> [shape: f32[1,1], index: 3, kind: input, shape index: {}]
  %s4 = inlined_call_operand.vmem [shape: f32[1,64], index: 4, kind: input, shape index: {}]
  %s5 = inlined_call_operand.vmem [shape: f32[1,64], index: 5, kind: input, shape index: {}]
  %s6 = inlined_call_operand.vmem [shape: bf16[400,64], index: 6, kind: output, shape index: {}]
  %s7 = sld [smem:[#allocation0]]
  $region98: #{fenet3_forward.3} parent=0
    _
  %s9 = ssub.s32 1, %s7
  %s10 = scalar_select 0, %s9, %s7
  %v11 = vstv %s3
  %12 = vst [vmem:[#allocation2] sm:$0x1] %v11
  $region1: #{fenet3_forward.3} parent=0
    #allocation3 [shape = 'u8[409600]{0}', space=vmem, size = 0x64000, scoped, tag = 'input window, operand 0']
    loop: start=0, step=1, limit=4
    $region2: #{fenet3_forward.3} parent=1 // loop_pre_header
      _
    $region3: #{fenet3_forward.3} parent=1 // loop_header
      %s14 = sphi 0, %s18
      %p15 = scmp.ge.s32.totalorder %s14, 4
      %s24 = sphi 0, %s26
      %s27 = sphi 0, %s24
      %s28 = sphi 0, %s27
      %s44 = sphi 0, %s28
      %s48 = sphi 0, %s48
      %s50 = sphi 0, %s48
      %s51 = sphi 0, %s50
      %s65 = sphi 0, %s51
      %s69 = sphi 0, %s69
      %s71 = sphi 0, %s69
      %s72 = sphi 0, %s71
      %s86 = sphi 0, %s72
      %s90 = sphi 0, %s90
      %s92 = sphi 0, %s90
      %s93 = sphi 0, %s92
      %s107 = sphi 0, %s93
      %s111 = sphi 0, %s111
      %s113 = sphi 0, %s111
      %s114 = sphi 0, %s113
      %s128 = sphi 0, %s114
      %s132 = sphi 0, %s132
      %s134 = sphi 0, %s132
      %s135 = sphi 0, %s134
      %s149 = sphi 0, %s135
      %s155 = sphi 0, %s157
      %s158 = sphi 0, %s155
      %s159 = sphi 0, %s158
      %s175 = sphi 0, %s159
    $region4: #{fenet3_forward.3} parent=1 // loop_header_branch
      %17 = sbr.rel (%p15) target = $region8
    $region5: #{fenet3_forward.3} parent=1 // loop_body
      %s19 = ssub.s32 %s14, 1
      %s20 = ssub.s32 %s14, 2
      %s21 = sadd.s32 %s14, 1
      %s22 = ssub.s32 %s14, %s21
      %p23 = scmp.eq.s32.totalorder %s22, 0
      %s25 = sadd.s32 %s24, 1
      %s26 = scalar_select %p23, %s24, %s25
      %p29 = pneg %p23
      %p30 = scmp.eq.s32.totalorder %s14, 1
      %p31 = por %p29, %p30
      %p32 = scmp.ne.s32.totalorder %s24, %s27
      %p33 = scmp.eq.s32.totalorder %s14, 0
      %p34 = por %p32, %p33
      %p35 = scmp.ne.s32.totalorder %s24, %s27
      %p36 = scmp.eq.s32.totalorder %s19, 1
      %p37 = por %p35, %p36
      %p38 = scmp.ne.s32.totalorder %s27, %s28
      %p39 = scmp.eq.s32.totalorder %s19, 0
      %p40 = por %p38, %p39
      %p41 = scmp.ne.s32.totalorder %s27, %s28
      %p42 = scmp.eq.s32.totalorder %s20, 1
      %p43 = por %p41, %p42
      %p45 = scmp.ne.s32.totalorder %s28, %s44
      %p46 = scmp.eq.s32.totalorder %s20, 0
      %p47 = por %p45, %p46
      %s49 = sadd.s32 %s48, 1
      %p52 = scmp.eq.s32.totalorder %s14, 1
      %p53 = scmp.ne.s32.totalorder %s48, %s50
      %p54 = scmp.eq.s32.totalorder %s14, 0
      %p55 = por %p53, %p54
      %p56 = scmp.ne.s32.totalorder %s48, %s50
      %p57 = scmp.eq.s32.totalorder %s19, 1
      %p58 = por %p56, %p57
      %p59 = scmp.ne.s32.totalorder %s50, %s51
      %p60 = scmp.eq.s32.totalorder %s19, 0
      %p61 = por %p59, %p60
      %p62 = scmp.ne.s32.totalorder %s50, %s51
      %p63 = scmp.eq.s32.totalorder %s20, 1
      %p64 = por %p62, %p63
      %p66 = scmp.ne.s32.totalorder %s51, %s65
      %p67 = scmp.eq.s32.totalorder %s20, 0
      %p68 = por %p66, %p67
      %s70 = sadd.s32 %s69, 1
      %p73 = scmp.eq.s32.totalorder %s14, 1
      %p74 = scmp.ne.s32.totalorder %s69, %s71
      %p75 = scmp.eq.s32.totalorder %s14, 0
      %p76 = por %p74, %p75
      %p77 = scmp.ne.s32.totalorder %s69, %s71
      %p78 = scmp.eq.s32.totalorder %s19, 1
      %p79 = por %p77, %p78
      %p80 = scmp.ne.s32.totalorder %s71, %s72
      %p81 = scmp.eq.s32.totalorder %s19, 0
      %p82 = por %p80, %p81
      %p83 = scmp.ne.s32.totalorder %s71, %s72
      %p84 = scmp.eq.s32.totalorder %s20, 1
      %p85 = por %p83, %p84
      %p87 = scmp.ne.s32.totalorder %s72, %s86
      %p88 = scmp.eq.s32.totalorder %s20, 0
      %p89 = por %p87, %p88
      %s91 = sadd.s32 %s90, 1
      %p94 = scmp.eq.s32.totalorder %s14, 1
      %p95 = scmp.ne.s32.totalorder %s90, %s92
      %p96 = scmp.eq.s32.totalorder %s14, 0
      %p97 = por %p95, %p96
      %p98 = scmp.ne.s32.totalorder %s90, %s92
      %p99 = scmp.eq.s32.totalorder %s19, 1
      %p100 = por %p98, %p99
      %p101 = scmp.ne.s32.totalorder %s92, %s93
      %p102 = scmp.eq.s32.totalorder %s19, 0
      %p103 = por %p101, %p102
      %p104 = scmp.ne.s32.totalorder %s92, %s93
      %p105 = scmp.eq.s32.totalorder %s20, 1
      %p106 = por %p104, %p105
      %p108 = scmp.ne.s32.totalorder %s93, %s107
      %p109 = scmp.eq.s32.totalorder %s20, 0
      %p110 = por %p108, %p109
      %s112 = sadd.s32 %s111, 1
      %p115 = scmp.eq.s32.totalorder %s14, 1
      %p116 = scmp.ne.s32.totalorder %s111, %s113
      %p117 = scmp.eq.s32.totalorder %s14, 0
      %p118 = por %p116, %p117
      %p119 = scmp.ne.s32.totalorder %s111, %s113
      %p120 = scmp.eq.s32.totalorder %s19, 1
      %p121 = por %p119, %p120
      %p122 = scmp.ne.s32.totalorder %s113, %s114
      %p123 = scmp.eq.s32.totalorder %s19, 0
      %p124 = por %p122, %p123
      %p125 = scmp.ne.s32.totalorder %s113, %s114
      %p126 = scmp.eq.s32.totalorder %s20, 1
      %p127 = por %p125, %p126
      %p129 = scmp.ne.s32.totalorder %s114, %s128
      %p130 = scmp.eq.s32.totalorder %s20, 0
      %p131 = por %p129, %p130
      %s133 = sadd.s32 %s132, 1
      %p136 = scmp.eq.s32.totalorder %s14, 1
      %p137 = scmp.ne.s32.totalorder %s132, %s134
      %p138 = scmp.eq.s32.totalorder %s14, 0
      %p139 = por %p137, %p138
      %p140 = scmp.ne.s32.totalorder %s132, %s134
      %p141 = scmp.eq.s32.totalorder %s19, 1
      %p142 = por %p140, %p141
      %p143 = scmp.ne.s32.totalorder %s134, %s135
      %p144 = scmp.eq.s32.totalorder %s19, 0
      %p145 = por %p143, %p144
      %p146 = scmp.ne.s32.totalorder %s134, %s135
      %p147 = scmp.eq.s32.totalorder %s20, 1
      %p148 = por %p146, %p147
      %p150 = scmp.ne.s32.totalorder %s135, %s149
      %p151 = scmp.eq.s32.totalorder %s20, 0
      %p152 = por %p150, %p151
      %s153 = ssub.s32 %s14, %s21
      %p154 = scmp.eq.s32.totalorder %s153, 0
      %s156 = sadd.s32 %s155, 1
      %s157 = scalar_select %p154, %s155, %s156
      %p160 = pneg %p154
      %p161 = scmp.eq.s32.totalorder %s14, 1
      %p162 = por %p160, %p161
      %p163 = scmp.ne.s32.totalorder %s155, %s158
      %p164 = scmp.eq.s32.totalorder %s14, 0
      %p165 = por %p163, %p164
      %p166 = scmp.ne.s32.totalorder %s155, %s158
      %p167 = scmp.eq.s32.totalorder %s19, 1
      %p168 = por %p166, %p167
      %p169 = scmp.ne.s32.totalorder %s158, %s159
      %p170 = scmp.eq.s32.totalorder %s19, 0
      %p171 = por %p169, %p170
      %p172 = scmp.ne.s32.totalorder %s158, %s159
      %p173 = scmp.eq.s32.totalorder %s20, 1
      %p174 = por %p172, %p173
      %p176 = scmp.ne.s32.totalorder %s159, %s175
      %p177 = scmp.eq.s32.totalorder %s20, 0
      %p178 = por %p176, %p177
      %p179 = scmp.le.s32.totalorder 1, %s14
      %p180 = scmp.lt.s32.totalorder %s14, 3
      %p181 = pnand %p179, %p180
      %p182 = pneg %p181
      // Predicated region
      $region9: #{fenet3_forward.3} parent=5 // pred_check
        _
      $region10: #{fenet3_forward.3} parent=5 // pred_check_branch
        %184 = sbr.rel (%p181) target = $region12
      $region11: #{fenet3_forward.3} parent=5 // pred_region
        %s185 = ssub.s32 %s14, 1
        // Predicated region
        $region13: #{fenet3_forward.3} parent=11 // pred_check
          %p186 = pneg %p61
        $region14: #{fenet3_forward.3} parent=11 // pred_check_branch
          %188 = sbr.rel (%p186) target = $region16
        $region15: #{fenet3_forward.3} parent=11 // pred_region
          _
        $region16: #{fenet3_forward.3} parent=11 // pred_fallthru
          _
        // Predicated region
        $region17: #{fenet3_forward.3} parent=11 // pred_check
          %p189 = pneg %p82
        $region18: #{fenet3_forward.3} parent=11 // pred_check_branch
          %191 = sbr.rel (%p189) target = $region20
        $region19: #{fenet3_forward.3} parent=11 // pred_region
          _
        $region20: #{fenet3_forward.3} parent=11 // pred_fallthru
          _
        // Predicated region
        $region21: #{fenet3_forward.3} parent=11 // pred_check
          %p192 = pneg %p103
        $region22: #{fenet3_forward.3} parent=11 // pred_check_branch
          %194 = sbr.rel (%p192) target = $region24
        $region23: #{fenet3_forward.3} parent=11 // pred_region
          _
        $region24: #{fenet3_forward.3} parent=11 // pred_fallthru
          _
        // Predicated region
        $region25: #{fenet3_forward.3} parent=11 // pred_check
          %p195 = pneg %p124
        $region26: #{fenet3_forward.3} parent=11 // pred_check_branch
          %197 = sbr.rel (%p195) target = $region28
        $region27: #{fenet3_forward.3} parent=11 // pred_region
          _
        $region28: #{fenet3_forward.3} parent=11 // pred_fallthru
          _
        // Predicated region
        $region29: #{fenet3_forward.3} parent=11 // pred_check
          %p198 = pneg %p145
        $region30: #{fenet3_forward.3} parent=11 // pred_check_branch
          %200 = sbr.rel (%p198) target = $region32
        $region31: #{fenet3_forward.3} parent=11 // pred_region
          _
        $region32: #{fenet3_forward.3} parent=11 // pred_fallthru
          _
      $region12: #{fenet3_forward.3} parent=5 // pred_fallthru
        _
      %p201 = scmp.lt.s32.totalorder %s14, 2
      // Predicated region
      $region33: #{fenet3_forward.3} parent=5 // pred_check
        %p202 = pneg %p201
      $region34: #{fenet3_forward.3} parent=5 // pred_check_branch
        %204 = sbr.rel (%p202) target = $region36
      $region35: #{fenet3_forward.3} parent=5 // pred_region
        // Predicated region
        $region37: #{fenet3_forward.3} parent=35 // pred_check
          %p205 = pneg %p34
        $region38: #{fenet3_forward.3} parent=35 // pred_check_branch
          %207 = sbr.rel (%p205) target = $region40
        $region39: #{fenet3_forward.3} parent=35 // pred_region
          %s208 = sand.u32 %s24, 1
          %s209 = sand.u32 %s24, 1
          %s210 = smul.addr %s209, 400
          %s211 = scalar_lea.vmem [#allocation3], %s210
          %s212 = smul.u32 25, %s14
          %s213 = smul.addr %s212, 4
          %s214 = scalar_lea.vmem %s0, %s213
          // Predicated region
          $region41: #{fenet3_forward.3} parent=39 // pred_check
            _
          $region42: #{fenet3_forward.3} parent=39 // pred_check_branch
            %216 = sbr.rel (0) target = $region44
          $region43: #{fenet3_forward.3} parent=39 // pred_region
            // Predicated region
            $region45: #{fenet3_forward.3} parent=43 // pred_check
              _
            $region46: #{fenet3_forward.3} parent=43 // pred_check_branch
              %218 = sbr.rel target = $region48
            $region47: #{fenet3_forward.3} parent=43 // pred_region
              // Predicated region
              $region60: #{fenet3_forward.3} parent=47 // pred_check
                _
              $region61: #{fenet3_forward.3} parent=47 // pred_check_branch
                %432 = sbr.rel (0) target = $region63
              $region62: #{fenet3_forward.3} parent=47 // pred_region
                loop: start=0, step=1, limit=1
                $region64: #{fenet3_forward.3} parent=62 // loop_pre_header
                  _
                $region65: #{fenet3_forward.3} parent=62 // loop_header
                  %s434 = sphi 0, %s438
                  %p435 = scmp.ge.s32.totalorder %s434, 1
                  %s439 = sphi %s214, %s214
                  %s440 = sphi %s211, %s211
                $region66: #{fenet3_forward.3} parent=62 // loop_header_branch
                  %437 = sbr.rel (%p435) target = $region70
                $region67: #{fenet3_forward.3} parent=62 // loop_body
                  _
                $region68: #{fenet3_forward.3} parent=62 // loop_footer
                  %s438 = sadd.s32 1, %s434
                $region69: #{fenet3_forward.3} parent=62 // loop_footer_branch
                  %433 = sbr.rel target = $region65
                $region70: #{fenet3_forward.3} parent=62 // loop_exit
                  _
                %s442 = ssub.s32 16, 1
                loop: start=0, step=1, limit=1
                $region71: #{fenet3_forward.3} parent=62 // loop_pre_header
                  _
                $region72: #{fenet3_forward.3} parent=62 // loop_header
                  %s444 = sphi 0, %s448
                  %p445 = scmp.ge.s32.totalorder %s444, 1
                  %s449 = sphi %s214, %s214
                  %s450 = sphi %s211, %s211
                $region73: #{fenet3_forward.3} parent=62 // loop_header_branch
                  %447 = sbr.rel (%p445) target = $region77
                $region74: #{fenet3_forward.3} parent=62 // loop_body
                  %v451 = vld [vmem:[%s449] sm:%s442]
                  %452 = vst [vmem:[%s450] sm:%s442] %v451
                  %v453 = vld [vmem:[%s449 + $0x4] sm:%s442]
                  %454 = vst [vmem:[%s450 + $0x4] sm:%s442] %v453
                  %v455 = vld [vmem:[%s449 + $0x8] sm:%s442]
                  %456 = vst [vmem:[%s450 + $0x8] sm:%s442] %v455
                  %v457 = vld [vmem:[%s449 + $0xc] sm:%s442]
                  %458 = vst [vmem:[%s450 + $0xc] sm:%s442] %v457
                  %v459 = vld [vmem:[%s449 + $0x10] sm:%s442]
                  %460 = vst [vmem:[%s450 + $0x10] sm:%s442] %v459
                  %v461 = vld [vmem:[%s449 + $0x14] sm:%s442]
                  %462 = vst [vmem:[%s450 + $0x14] sm:%s442] %v461
                  %v463 = vld [vmem:[%s449 + $0x18] sm:%s442]
                  %464 = vst [vmem:[%s450 + $0x18] sm:%s442] %v463
                  %v465 = vld [vmem:[%s449 + $0x1c] sm:%s442]
                  %466 = vst [vmem:[%s450 + $0x1c] sm:%s442] %v465
                  %v467 = vld [vmem:[%s449 + $0x20] sm:%s442]
                  %468 = vst [vmem:[%s450 + $0x20] sm:%s442] %v467
                  %v469 = vld [vmem:[%s449 + $0x24] sm:%s442]
                  %470 = vst [vmem:[%s450 + $0x24] sm:%s442] %v469
                  %v471 = vld [vmem:[%s449 + $0x28] sm:%s442]
                  %472 = vst [vmem:[%s450 + $0x28] sm:%s442] %v471
                  %v473 = vld [vmem:[%s449 + $0x2c] sm:%s442]
                  %474 = vst [vmem:[%s450 + $0x2c] sm:%s442] %v473
                  %v475 = vld [vmem:[%s449 + $0x30] sm:%s442]
                  %476 = vst [vmem:[%s450 + $0x30] sm:%s442] %v475
                  %v477 = vld [vmem:[%s449 + $0x34] sm:%s442]
                  %478 = vst [vmem:[%s450 + $0x34] sm:%s442] %v477
                  %v479 = vld [vmem:[%s449 + $0x38] sm:%s442]
                  %480 = vst [vmem:[%s450 + $0x38] sm:%s442] %v479
                  %v481 = vld [vmem:[%s449 + $0x3c] sm:%s442]
                  %482 = vst [vmem:[%s450 + $0x3c] sm:%s442] %v481
                  %v483 = vld [vmem:[%s449 + $0x40] sm:%s442]
                  %484 = vst [vmem:[%s450 + $0x40] sm:%s442] %v483
                  %v485 = vld [vmem:[%s449 + $0x44] sm:%s442]
                  %486 = vst [vmem:[%s450 + $0x44] sm:%s442] %v485
                  %v487 = vld [vmem:[%s449 + $0x48] sm:%s442]
                  %488 = vst [vmem:[%s450 + $0x48] sm:%s442] %v487
                  %v489 = vld [vmem:[%s449 + $0x4c] sm:%s442]
                  %490 = vst [vmem:[%s450 + $0x4c] sm:%s442] %v489
                  %v491 = vld [vmem:[%s449 + $0x50] sm:%s442]
                  %492 = vst [vmem:[%s450 + $0x50] sm:%s442] %v491
                  %v493 = vld [vmem:[%s449 + $0x54] sm:%s442]
                  %494 = vst [vmem:[%s450 + $0x54] sm:%s442] %v493
                  %v495 = vld [vmem:[%s449 + $0x58] sm:%s442]
                  %496 = vst [vmem:[%s450 + $0x58] sm:%s442] %v495
                  %v497 = vld [vmem:[%s449 + $0x5c] sm:%s442]
                  %498 = vst [vmem:[%s450 + $0x5c] sm:%s442] %v497
                  %v499 = vld [vmem:[%s449 + $0x60] sm:%s442]
                  %500 = vst [vmem:[%s450 + $0x60] sm:%s442] %v499
                  %v501 = vld [vmem:[%s449 + $0xc8] sm:%s442]
                  %502 = vst [vmem:[%s450 + $0x64] sm:%s442] %v501
                  %v503 = vld [vmem:[%s449 + $0xcc] sm:%s442]
                  %504 = vst [vmem:[%s450 + $0x68] sm:%s442] %v503
                  %v505 = vld [vmem:[%s449 + $0xd0] sm:%s442]
                  %506 = vst [vmem:[%s450 + $0x6c] sm:%s442] %v505
                  %v507 = vld [vmem:[%s449 + $0xd4] sm:%s442]
                  %508 = vst [vmem:[%s450 + $0x70] sm:%s442] %v507
                  %v509 = vld [vmem:[%s449 + $0xd8] sm:%s442]
                  %510 = vst [vmem:[%s450 + $0x74] sm:%s442] %v509
                  %v511 = vld [vmem:[%s449 + $0xdc] sm:%s442]
                  %512 = vst [vmem:[%s450 + $0x78] sm:%s442] %v511
                  %v513 = vld [vmem:[%s449 + $0xe0] sm:%s442]
                  %514 = vst [vmem:[%s450 + $0x7c] sm:%s442] %v513
                  %v515 = vld [vmem:[%s449 + $0xe4] sm:%s442]
                  %516 = vst [vmem:[%s450 + $0x80] sm:%s442] %v515
                  %v517 = vld [vmem:[%s449 + $0xe8] sm:%s442]
                  %518 = vst [vmem:[%s450 + $0x84] sm:%s442] %v517
                  %v519 = vld [vmem:[%s449 + $0xec] sm:%s442]
                  %520 = vst [vmem:[%s450 + $0x88] sm:%s442] %v519
                  %v521 = vld [vmem:[%s449 + $0xf0] sm:%s442]
                  %522 = vst [vmem:[%s450 + $0x8c] sm:%s442] %v521
                  %v523 = vld [vmem:[%s449 + $0xf4] sm:%s442]
                  %524 = vst [vmem:[%s450 + $0x90] sm:%s442] %v523
                  %v525 = vld [vmem:[%s449 + $0xf8] sm:%s442]
                  %526 = vst [vmem:[%s450 + $0x94] sm:%s442] %v525
                  %v527 = vld [vmem:[%s449 + $0xfc] sm:%s442]
                  %528 = vst [vmem:[%s450 + $0x98] sm:%s442] %v527
                  %v529 = vld [vmem:[%s449 + $0x100] sm:%s442]
                  %530 = vst [vmem:[%s450 + $0x9c] sm:%s442] %v529
                  %v531 = vld [vmem:[%s449 + $0x104] sm:%s442]
                  %532 = vst [vmem:[%s450 + $0xa0] sm:%s442] %v531
                  %v533 = vld [vmem:[%s449 + $0x108] sm:%s442]
                  %534 = vst [vmem:[%s450 + $0xa4] sm:%s442] %v533
                  %v535 = vld [vmem:[%s449 + $0x10c] sm:%s442]
                  %536 = vst [vmem:[%s450 + $0xa8] sm:%s442] %v535
                  %v537 = vld [vmem:[%s449 + $0x110] sm:%s442]
                  %538 = vst [vmem:[%s450 + $0xac] sm:%s442] %v537
                  %v539 = vld [vmem:[%s449 + $0x114] sm:%s442]
                  %540 = vst [vmem:[%s450 + $0xb0] sm:%s442] %v539
                  %v541 = vld [vmem:[%s449 + $0x118] sm:%s442]
                  %542 = vst [vmem:[%s450 + $0xb4] sm:%s442] %v541
                  %v543 = vld [vmem:[%s449 + $0x11c] sm:%s442]
                  %544 = vst [vmem:[%s450 + $0xb8] sm:%s442] %v543
                  %v545 = vld [vmem:[%s449 + $0x120] sm:%s442]
                  %546 = vst [vmem:[%s450 + $0xbc] sm:%s442] %v545
                  %v547 = vld [vmem:[%s449 + $0x124] sm:%s442]
                  %548 = vst [vmem:[%s450 + $0xc0] sm:%s442] %v547
                  %v549 = vld [vmem:[%s449 + $0x128] sm:%s442]
                  %550 = vst [vmem:[%s450 + $0xc4] sm:%s442] %v549
                  %v551 = vld [vmem:[%s449 + $0x190] sm:%s442]
                  %552 = vst [vmem:[%s450 + $0xc8] sm:%s442] %v551
                  %v553 = vld [vmem:[%s449 + $0x194] sm:%s442]
                  %554 = vst [vmem:[%s450 + $0xcc] sm:%s442] %v553
                  %v555 = vld [vmem:[%s449 + $0x198] sm:%s442]
                  %556 = vst [vmem:[%s450 + $0xd0] sm:%s442] %v555
                  %v557 = vld [vmem:[%s449 + $0x19c] sm:%s442]
                  %558 = vst [vmem:[%s450 + $0xd4] sm:%s442] %v557
                  %v559 = vld [vmem:[%s449 + $0x1a0] sm:%s442]
                  %560 = vst [vmem:[%s450 + $0xd8] sm:%s442] %v559
                  %v561 = vld [vmem:[%s449 + $0x1a4] sm:%s442]
                  %562 = vst [vmem:[%s450 + $0xdc] sm:%s442] %v561
                  %v563 = vld [vmem:[%s449 + $0x1a8] sm:%s442]
                  %564 = vst [vmem:[%s450 + $0xe0] sm:%s442] %v563
                  %v565 = vld [vmem:[%s449 + $0x1ac] sm:%s442]
                  %566 = vst [vmem:[%s450 + $0xe4] sm:%s442] %v565
                  %v567 = vld [vmem:[%s449 + $0x1b0] sm:%s442]
                  %568 = vst [vmem:[%s450 + $0xe8] sm:%s442] %v567
                  %v569 = vld [vmem:[%s449 + $0x1b4] sm:%s442]
                  %570 = vst [vmem:[%s450 + $0xec] sm:%s442] %v569
                  %v571 = vld [vmem:[%s449 + $0x1b8] sm:%s442]
                  %572 = vst [vmem:[%s450 + $0xf0] sm:%s442] %v571
                  %v573 = vld [vmem:[%s449 + $0x1bc] sm:%s442]
                  %574 = vst [vmem:[%s450 + $0xf4] sm:%s442] %v573
                  %v575 = vld [vmem:[%s449 + $0x1c0] sm:%s442]
                  %576 = vst [vmem:[%s450 + $0xf8] sm:%s442] %v575
                  %v577 = vld [vmem:[%s449 + $0x1c4] sm:%s442]
                  %578 = vst [vmem:[%s450 + $0xfc] sm:%s442] %v577
                  %v579 = vld [vmem:[%s449 + $0x1c8] sm:%s442]
                  %580 = vst [vmem:[%s450 + $0x100] sm:%s442] %v579
                  %v581 = vld [vmem:[%s449 + $0x1cc] sm:%s442]
                  %582 = vst [vmem:[%s450 + $0x104] sm:%s442] %v581
                  %v583 = vld [vmem:[%s449 + $0x1d0] sm:%s442]
                  %584 = vst [vmem:[%s450 + $0x108] sm:%s442] %v583
                  %v585 = vld [vmem:[%s449 + $0x1d4] sm:%s442]
                  %586 = vst [vmem:[%s450 + $0x10c] sm:%s442] %v585
                  %v587 = vld [vmem:[%s449 + $0x1d8] sm:%s442]
                  %588 = vst [vmem:[%s450 + $0x110] sm:%s442] %v587
                  %v589 = vld [vmem:[%s449 + $0x1dc] sm:%s442]
                  %590 = vst [vmem:[%s450 + $0x114] sm:%s442] %v589
                  %v591 = vld [vmem:[%s449 + $0x1e0] sm:%s442]
                  %592 = vst [vmem:[%s450 + $0x118] sm:%s442] %v591
                  %v593 = vld [vmem:[%s449 + $0x1e4] sm:%s442]
                  %594 = vst [vmem:[%s450 + $0x11c] sm:%s442] %v593
                  %v595 = vld [vmem:[%s449 + $0x1e8] sm:%s442]
                  %596 = vst [vmem:[%s450 + $0x120] sm:%s442] %v595
                  %v597 = vld [vmem:[%s449 + $0x1ec] sm:%s442]
                  %598 = vst [vmem:[%s450 + $0x124] sm:%s442] %v597
                  %v599 = vld [vmem:[%s449 + $0x1f0] sm:%s442]
                  %600 = vst [vmem:[%s450 + $0x128] sm:%s442] %v599
                  %v601 = vld [vmem:[%s449 + $0x258] sm:%s442]
                  %602 = vst [vmem:[%s450 + $0x12c] sm:%s442] %v601
                  %v603 = vld [vmem:[%s449 + $0x25c] sm:%s442]
                  %604 = vst [vmem:[%s450 + $0x130] sm:%s442] %v603
                  %v605 = vld [vmem:[%s449 + $0x260] sm:%s442]
                  %606 = vst [vmem:[%s450 + $0x134] sm:%s442] %v605
                  %v607 = vld [vmem:[%s449 + $0x264] sm:%s442]
                  %608 = vst [vmem:[%s450 + $0x138] sm:%s442] %v607
                  %v609 = vld [vmem:[%s449 + $0x268] sm:%s442]
                  %610 = vst [vmem:[%s450 + $0x13c] sm:%s442] %v609
                  %v611 = vld [vmem:[%s449 + $0x26c] sm:%s442]
                  %612 = vst [vmem:[%s450 + $0x140] sm:%s442] %v611
                  %v613 = vld [vmem:[%s449 + $0x270] sm:%s442]
                  %614 = vst [vmem:[%s450 + $0x144] sm:%s442] %v613
                  %v615 = vld [vmem:[%s449 + $0x274] sm:%s442]
                  %616 = vst [vmem:[%s450 + $0x148] sm:%s442] %v615
                  %v617 = vld [vmem:[%s449 + $0x278] sm:%s442]
                  %618 = vst [vmem:[%s450 + $0x14c] sm:%s442] %v617
                  %v619 = vld [vmem:[%s449 + $0x27c] sm:%s442]
                  %620 = vst [vmem:[%s450 + $0x150] sm:%s442] %v619
                  %v621 = vld [vmem:[%s449 + $0x280] sm:%s442]
                  %622 = vst [vmem:[%s450 + $0x154] sm:%s442] %v621
                  %v623 = vld [vmem:[%s449 + $0x284] sm:%s442]
                  %624 = vst [vmem:[%s450 + $0x158] sm:%s442] %v623
                  %v625 = vld [vmem:[%s449 + $0x288] sm:%s442]
                  %626 = vst [vmem:[%s450 + $0x15c] sm:%s442] %v625
                  %v627 = vld [vmem:[%s449 + $0x28c] sm:%s442]
                  %628 = vst [vmem:[%s450 + $0x160] sm:%s442] %v627
                  %v629 = vld [vmem:[%s449 + $0x290] sm:%s442]
                  %630 = vst [vmem:[%s450 + $0x164] sm:%s442] %v629
                  %v631 = vld [vmem:[%s449 + $0x294] sm:%s442]
                  %632 = vst [vmem:[%s450 + $0x168] sm:%s442] %v631
                  %v633 = vld [vmem:[%s449 + $0x298] sm:%s442]
                  %634 = vst [vmem:[%s450 + $0x16c] sm:%s442] %v633
                  %v635 = vld [vmem:[%s449 + $0x29c] sm:%s442]
                  %636 = vst [vmem:[%s450 + $0x170] sm:%s442] %v635
                  %v637 = vld [vmem:[%s449 + $0x2a0] sm:%s442]
                  %638 = vst [vmem:[%s450 + $0x174] sm:%s442] %v637
                  %v639 = vld [vmem:[%s449 + $0x2a4] sm:%s442]
                  %640 = vst [vmem:[%s450 + $0x178] sm:%s442] %v639
                  %v641 = vld [vmem:[%s449 + $0x2a8] sm:%s442]
                  %642 = vst [vmem:[%s450 + $0x17c] sm:%s442] %v641
                  %v643 = vld [vmem:[%s449 + $0x2ac] sm:%s442]
                  %644 = vst [vmem:[%s450 + $0x180] sm:%s442] %v643
                  %v645 = vld [vmem:[%s449 + $0x2b0] sm:%s442]
                  %646 = vst [vmem:[%s450 + $0x184] sm:%s442] %v645
                  %v647 = vld [vmem:[%s449 + $0x2b4] sm:%s442]
                  %648 = vst [vmem:[%s450 + $0x188] sm:%s442] %v647
                  %v649 = vld [vmem:[%s449 + $0x2b8] sm:%s442]
                  %650 = vst [vmem:[%s450 + $0x18c] sm:%s442] %v649
                $region75: #{fenet3_forward.3} parent=62 // loop_footer
                  %s448 = sadd.s32 1, %s444
                $region76: #{fenet3_forward.3} parent=62 // loop_footer_branch
                  %443 = sbr.rel target = $region72
                $region77: #{fenet3_forward.3} parent=62 // loop_exit
                  _
              $region63: #{fenet3_forward.3} parent=47 // pred_fallthru
                _
            $region48: #{fenet3_forward.3} parent=43 // pred_fallthru
              _
            // Predicated region
            $region49: #{fenet3_forward.3} parent=43 // pred_check
              _
            $region50: #{fenet3_forward.3} parent=43 // pred_check_branch
              %220 = sbr.rel (0) target = $region52
            $region51: #{fenet3_forward.3} parent=43 // pred_region
              %s222 = ssub.s32 16, 1
              loop: start=0, step=1, limit=1
              $region53: #{fenet3_forward.3} parent=51 // loop_pre_header
                _
              $region54: #{fenet3_forward.3} parent=51 // loop_header
                %s224 = sphi 0, %s228
                %p225 = scmp.ge.s32.totalorder %s224, 1
                %s229 = sphi %s214, %s214
                %s230 = sphi %s211, %s211
              $region55: #{fenet3_forward.3} parent=51 // loop_header_branch
                %227 = sbr.rel (%p225) target = $region59
              $region56: #{fenet3_forward.3} parent=51 // loop_body
                %v231 = vld [vmem:[%s229] sm:%s222]
                %232 = vst [vmem:[%s230] sm:%s222] %v231
                %v233 = vld [vmem:[%s229 + $0x4] sm:%s222]
                %234 = vst [vmem:[%s230 + $0x4] sm:%s222] %v233
                %v235 = vld [vmem:[%s229 + $0x8] sm:%s222]
                %236 = vst [vmem:[%s230 + $0x8] sm:%s222] %v235
                %v237 = vld [vmem:[%s229 + $0xc] sm:%s222]
                %238 = vst [vmem:[%s230 + $0xc] sm:%s222] %v237
                %v239 = vld [vmem:[%s229 + $0x10] sm:%s222]
                %240 = vst [vmem:[%s230 + $0x10] sm:%s222] %v239
                %v241 = vld [vmem:[%s229 + $0x14] sm:%s222]
                %242 = vst [vmem:[%s230 + $0x14] sm:%s222] %v241
                %v243 = vld [vmem:[%s229 + $0x18] sm:%s222]
                %244 = vst [vmem:[%s230 + $0x18] sm:%s222] %v243
                %v245 = vld [vmem:[%s229 + $0x1c] sm:%s222]
                %246 = vst [vmem:[%s230 + $0x1c] sm:%s222] %v245
                %v247 = vld [vmem:[%s229 + $0x20] sm:%s222]
                %248 = vst [vmem:[%s230 + $0x20] sm:%s222] %v247
                %v249 = vld [vmem:[%s229 + $0x24] sm:%s222]
                %250 = vst [vmem:[%s230 + $0x24] sm:%s222] %v249
                %v251 = vld [vmem:[%s229 + $0x28] sm:%s222]
                %252 = vst [vmem:[%s230 + $0x28] sm:%s222] %v251
                %v253 = vld [vmem:[%s229 + $0x2c] sm:%s222]
                %254 = vst [vmem:[%s230 + $0x2c] sm:%s222] %v253
                %v255 = vld [vmem:[%s229 + $0x30] sm:%s222]
                %256 = vst [vmem:[%s230 + $0x30] sm:%s222] %v255
                %v257 = vld [vmem:[%s229 + $0x34] sm:%s222]
                %258 = vst [vmem:[%s230 + $0x34] sm:%s222] %v257
                %v259 = vld [vmem:[%s229 + $0x38] sm:%s222]
                %260 = vst [vmem:[%s230 + $0x38] sm:%s222] %v259
                %v261 = vld [vmem:[%s229 + $0x3c] sm:%s222]
                %262 = vst [vmem:[%s230 + $0x3c] sm:%s222] %v261
                %v263 = vld [vmem:[%s229 + $0x40] sm:%s222]
                %264 = vst [vmem:[%s230 + $0x40] sm:%s222] %v263
                %v265 = vld [vmem:[%s229 + $0x44] sm:%s222]
                %266 = vst [vmem:[%s230 + $0x44] sm:%s222] %v265
                %v267 = vld [vmem:[%s229 + $0x48] sm:%s222]
                %268 = vst [vmem:[%s230 + $0x48] sm:%s222] %v267
                %v269 = vld [vmem:[%s229 + $0x4c] sm:%s222]
                %270 = vst [vmem:[%s230 + $0x4c] sm:%s222] %v269
                %v271 = vld [vmem:[%s229 + $0x50] sm:%s222]
                %272 = vst [vmem:[%s230 + $0x50] sm:%s222] %v271
                %v273 = vld [vmem:[%s229 + $0x54] sm:%s222]
                %274 = vst [vmem:[%s230 + $0x54] sm:%s222] %v273
                %v275 = vld [vmem:[%s229 + $0x58] sm:%s222]
                %276 = vst [vmem:[%s230 + $0x58] sm:%s222] %v275
                %v277 = vld [vmem:[%s229 + $0x5c] sm:%s222]
                %278 = vst [vmem:[%s230 + $0x5c] sm:%s222] %v277
                %v279 = vld [vmem:[%s229 + $0x60] sm:%s222]
                %280 = vst [vmem:[%s230 + $0x60] sm:%s222] %v279
                %v281 = vld [vmem:[%s229 + $0xc8] sm:%s222]
                %282 = vst [vmem:[%s230 + $0x64] sm:%s222] %v281
                %v283 = vld [vmem:[%s229 + $0xcc] sm:%s222]
                %284 = vst [vmem:[%s230 + $0x68] sm:%s222] %v283
                %v285 = vld [vmem:[%s229 + $0xd0] sm:%s222]
                %286 = vst [vmem:[%s230 + $0x6c] sm:%s222] %v285
                %v287 = vld [vmem:[%s229 + $0xd4] sm:%s222]
                %288 = vst [vmem:[%s230 + $0x70] sm:%s222] %v287
                %v289 = vld [vmem:[%s229 + $0xd8] sm:%s222]
                %290 = vst [vmem:[%s230 + $0x74] sm:%s222] %v289
                %v291 = vld [vmem:[%s229 + $0xdc] sm:%s222]
                %292 = vst [vmem:[%s230 + $0x78] sm:%s222] %v291
                %v293 = vld [vmem:[%s229 + $0xe0] sm:%s222]
                %294 = vst [vmem:[%s230 + $0x7c] sm:%s222] %v293
                %v295 = vld [vmem:[%s229 + $0xe4] sm:%s222]
                %296 = vst [vmem:[%s230 + $0x80] sm:%s222] %v295
                %v297 = vld [vmem:[%s229 + $0xe8] sm:%s222]
                %298 = vst [vmem:[%s230 + $0x84] sm:%s222] %v297
                %v299 = vld [vmem:[%s229 + $0xec] sm:%s222]
                %300 = vst [vmem:[%s230 + $0x88] sm:%s222] %v299
                %v301 = vld [vmem:[%s229 + $0xf0] sm:%s222]
                %302 = vst [vmem:[%s230 + $0x8c] sm:%s222] %v301
                %v303 = vld [vmem:[%s229 + $0xf4] sm:%s222]
                %304 = vst [vmem:[%s230 + $0x90] sm:%s222] %v303
                %v305 = vld [vmem:[%s229 + $0xf8] sm:%s222]
                %306 = vst [vmem:[%s230 + $0x94] sm:%s222] %v305
                %v307 = vld [vmem:[%s229 + $0xfc] sm:%s222]
                %308 = vst [vmem:[%s230 + $0x98] sm:%s222] %v307
                %v309 = vld [vmem:[%s229 + $0x100] sm:%s222]
                %310 = vst [vmem:[%s230 + $0x9c] sm:%s222] %v309
                %v311 = vld [vmem:[%s229 + $0x104] sm:%s222]
                %312 = vst [vmem:[%s230 + $0xa0] sm:%s222] %v311
                %v313 = vld [vmem:[%s229 + $0x108] sm:%s222]
                %314 = vst [vmem:[%s230 + $0xa4] sm:%s222] %v313
                %v315 = vld [vmem:[%s229 + $0x10c] sm:%s222]
                %316 = vst [vmem:[%s230 + $0xa8] sm:%s222] %v315
                %v317 = vld [vmem:[%s229 + $0x110] sm:%s222]
                %318 = vst [vmem:[%s230 + $0xac] sm:%s222] %v317
                %v319 = vld [vmem:[%s229 + $0x114] sm:%s222]
                %320 = vst [vmem:[%s230 + $0xb0] sm:%s222] %v319
                %v321 = vld [vmem:[%s229 + $0x118] sm:%s222]
                %322 = vst [vmem:[%s230 + $0xb4] sm:%s222] %v321
                %v323 = vld [vmem:[%s229 + $0x11c] sm:%s222]
                %324 = vst [vmem:[%s230 + $0xb8] sm:%s222] %v323
                %v325 = vld [vmem:[%s229 + $0x120] sm:%s222]
                %326 = vst [vmem:[%s230 + $0xbc] sm:%s222] %v325
                %v327 = vld [vmem:[%s229 + $0x124] sm:%s222]
                %328 = vst [vmem:[%s230 + $0xc0] sm:%s222] %v327
                %v329 = vld [vmem:[%s229 + $0x128] sm:%s222]
                %330 = vst [vmem:[%s230 + $0xc4] sm:%s222] %v329
                %v331 = vld [vmem:[%s229 + $0x190] sm:%s222]
                %332 = vst [vmem:[%s230 + $0xc8] sm:%s222] %v331
                %v333 = vld [vmem:[%s229 + $0x194] sm:%s222]
                %334 = vst [vmem:[%s230 + $0xcc] sm:%s222] %v333
                %v335 = vld [vmem:[%s229 + $0x198] sm:%s222]
                %336 = vst [vmem:[%s230 + $0xd0] sm:%s222] %v335
                %v337 = vld [vmem:[%s229 + $0x19c] sm:%s222]
                %338 = vst [vmem:[%s230 + $0xd4] sm:%s222] %v337
                %v339 = vld [vmem:[%s229 + $0x1a0] sm:%s222]
                %340 = vst [vmem:[%s230 + $0xd8] sm:%s222] %v339
                %v341 = vld [vmem:[%s229 + $0x1a4] sm:%s222]
                %342 = vst [vmem:[%s230 + $0xdc] sm:%s222] %v341
                %v343 = vld [vmem:[%s229 + $0x1a8] sm:%s222]
                %344 = vst [vmem:[%s230 + $0xe0] sm:%s222] %v343
                %v345 = vld [vmem:[%s229 + $0x1ac] sm:%s222]
                %346 = vst [vmem:[%s230 + $0xe4] sm:%s222] %v345
                %v347 = vld [vmem:[%s229 + $0x1b0] sm:%s222]
                %348 = vst [vmem:[%s230 + $0xe8] sm:%s222] %v347
                %v349 = vld [vmem:[%s229 + $0x1b4] sm:%s222]
                %350 = vst [vmem:[%s230 + $0xec] sm:%s222] %v349
                %v351 = vld [vmem:[%s229 + $0x1b8] sm:%s222]
                %352 = vst [vmem:[%s230 + $0xf0] sm:%s222] %v351
                %v353 = vld [vmem:[%s229 + $0x1bc] sm:%s222]
                %354 = vst [vmem:[%s230 + $0xf4] sm:%s222] %v353
                %v355 = vld [vmem:[%s229 + $0x1c0] sm:%s222]
                %356 = vst [vmem:[%s230 + $0xf8] sm:%s222] %v355
                %v357 = vld [vmem:[%s229 + $0x1c4] sm:%s222]
                %358 = vst [vmem:[%s230 + $0xfc] sm:%s222] %v357
                %v359 = vld [vmem:[%s229 + $0x1c8] sm:%s222]
                %360 = vst [vmem:[%s230 + $0x100] sm:%s222] %v359
                %v361 = vld [vmem:[%s229 + $0x1cc] sm:%s222]
                %362 = vst [vmem:[%s230 + $0x104] sm:%s222] %v361
                %v363 = vld [vmem:[%s229 + $0x1d0] sm:%s222]
                %364 = vst [vmem:[%s230 + $0x108] sm:%s222] %v363
                %v365 = vld [vmem:[%s229 + $0x1d4] sm:%s222]
                %366 = vst [vmem:[%s230 + $0x10c] sm:%s222] %v365
                %v367 = vld [vmem:[%s229 + $0x1d8] sm:%s222]
                %368 = vst [vmem:[%s230 + $0x110] sm:%s222] %v367
                %v369 = vld [vmem:[%s229 + $0x1dc] sm:%s222]
                %370 = vst [vmem:[%s230 + $0x114] sm:%s222] %v369
                %v371 = vld [vmem:[%s229 + $0x1e0] sm:%s222]
                %372 = vst [vmem:[%s230 + $0x118] sm:%s222] %v371
                %v373 = vld [vmem:[%s229 + $0x1e4] sm:%s222]
                %374 = vst [vmem:[%s230 + $0x11c] sm:%s222] %v373
                %v375 = vld [vmem:[%s229 + $0x1e8] sm:%s222]
                %376 = vst [vmem:[%s230 + $0x120] sm:%s222] %v375
                %v377 = vld [vmem:[%s229 + $0x1ec] sm:%s222]
                %378 = vst [vmem:[%s230 + $0x124] sm:%s222] %v377
                %v379 = vld [vmem:[%s229 + $0x1f0] sm:%s222]
                %380 = vst [vmem:[%s230 + $0x128] sm:%s222] %v379
                %v381 = vld [vmem:[%s229 + $0x258] sm:%s222]
                %382 = vst [vmem:[%s230 + $0x12c] sm:%s222] %v381
                %v383 = vld [vmem:[%s229 + $0x25c] sm:%s222]
                %384 = vst [vmem:[%s230 + $0x130] sm:%s222] %v383
                %v385 = vld [vmem:[%s229 + $0x260] sm:%s222]
                %386 = vst [vmem:[%s230 + $0x134] sm:%s222] %v385
                %v387 = vld [vmem:[%s229 + $0x264] sm:%s222]
                %388 = vst [vmem:[%s230 + $0x138] sm:%s222] %v387
                %v389 = vld [vmem:[%s229 + $0x268] sm:%s222]
                %390 = vst [vmem:[%s230 + $0x13c] sm:%s222] %v389
                %v391 = vld [vmem:[%s229 + $0x26c] sm:%s222]
                %392 = vst [vmem:[%s230 + $0x140] sm:%s222] %v391
                %v393 = vld [vmem:[%s229 + $0x270] sm:%s222]
                %394 = vst [vmem:[%s230 + $0x144] sm:%s222] %v393
                %v395 = vld [vmem:[%s229 + $0x274] sm:%s222]
                %396 = vst [vmem:[%s230 + $0x148] sm:%s222] %v395
                %v397 = vld [vmem:[%s229 + $0x278] sm:%s222]
                %398 = vst [vmem:[%s230 + $0x14c] sm:%s222] %v397
                %v399 = vld [vmem:[%s229 + $0x27c] sm:%s222]
                %400 = vst [vmem:[%s230 + $0x150] sm:%s222] %v399
                %v401 = vld [vmem:[%s229 + $0x280] sm:%s222]
                %402 = vst [vmem:[%s230 + $0x154] sm:%s222] %v401
                %v403 = vld [vmem:[%s229 + $0x284] sm:%s222]
                %404 = vst [vmem:[%s230 + $0x158] sm:%s222] %v403
                %v405 = vld [vmem:[%s229 + $0x288] sm:%s222]
                %406 = vst [vmem:[%s230 + $0x15c] sm:%s222] %v405
                %v407 = vld [vmem:[%s229 + $0x28c] sm:%s222]
                %408 = vst [vmem:[%s230 + $0x160] sm:%s222] %v407
                %v409 = vld [vmem:[%s229 + $0x290] sm:%s222]
                %410 = vst [vmem:[%s230 + $0x164] sm:%s222] %v409
                %v411 = vld [vmem:[%s229 + $0x294] sm:%s222]
                %412 = vst [vmem:[%s230 + $0x168] sm:%s222] %v411
                %v413 = vld [vmem:[%s229 + $0x298] sm:%s222]
                %414 = vst [vmem:[%s230 + $0x16c] sm:%s222] %v413
                %v415 = vld [vmem:[%s229 + $0x29c] sm:%s222]
                %416 = vst [vmem:[%s230 + $0x170] sm:%s222] %v415
                %v417 = vld [vmem:[%s229 + $0x2a0] sm:%s222]
                %418 = vst [vmem:[%s230 + $0x174] sm:%s222] %v417
                %v419 = vld [vmem:[%s229 + $0x2a4] sm:%s222]
                %420 = vst [vmem:[%s230 + $0x178] sm:%s222] %v419
                %v421 = vld [vmem:[%s229 + $0x2a8] sm:%s222]
                %422 = vst [vmem:[%s230 + $0x17c] sm:%s222] %v421
                %v423 = vld [vmem:[%s229 + $0x2ac] sm:%s222]
                %424 = vst [vmem:[%s230 + $0x180] sm:%s222] %v423
                %v425 = vld [vmem:[%s229 + $0x2b0] sm:%s222]
                %426 = vst [vmem:[%s230 + $0x184] sm:%s222] %v425
                %v427 = vld [vmem:[%s229 + $0x2b4] sm:%s222]
                %428 = vst [vmem:[%s230 + $0x188] sm:%s222] %v427
                %v429 = vld [vmem:[%s229 + $0x2b8] sm:%s222]
                %430 = vst [vmem:[%s230 + $0x18c] sm:%s222] %v429
              $region57: #{fenet3_forward.3} parent=51 // loop_footer
                %s228 = sadd.s32 1, %s224
              $region58: #{fenet3_forward.3} parent=51 // loop_footer_branch
                %223 = sbr.rel target = $region54
              $region59: #{fenet3_forward.3} parent=51 // loop_exit
                _
            $region52: #{fenet3_forward.3} parent=43 // pred_fallthru
              _
          $region44: #{fenet3_forward.3} parent=39 // pred_fallthru
            _
          %651 = vnop
        $region40: #{fenet3_forward.3} parent=35 // pred_fallthru
          _
      $region36: #{fenet3_forward.3} parent=5 // pred_fallthru
        _
      %p652 = scmp.le.s32.totalorder 1, %s14
      %p653 = scmp.lt.s32.totalorder %s14, 3
      %p654 = pnand %p652, %p653
      %p655 = pneg %p654
      // Predicated region
      $region78: #{fenet3_forward.3} parent=5 // pred_check
        _
      $region79: #{fenet3_forward.3} parent=5 // pred_check_branch
        %657 = sbr.rel (%p654) target = $region81
      $region80: #{fenet3_forward.3} parent=5 // pred_region
        %s658 = ssub.s32 %s14, 1
        %s659 = sand.u32 %s27, 1
        %s660 = sand.u32 %s27, 1
        %s661 = smul.addr %s660, 400
        %s662 = scalar_lea.vmem [#allocation3], %s661
        // Predicated region
        $region82: #{fenet3_forward.3} parent=80 // pred_check
          %p663 = pneg %p40
        $region83: #{fenet3_forward.3} parent=80 // pred_check_branch
          %665 = sbr.rel (%p663) target = $region85
        $region84: #{fenet3_forward.3} parent=80 // pred_region
          _
        $region85: #{fenet3_forward.3} parent=80 // pred_fallthru
          _
        %s666 = sand.u32 %s27, 1
        %s667 = sand.u32 %s27, 1
        %s668 = smul.addr %s667, 400
        %s669 = scalar_lea.vmem [#allocation3], %s668
        %p670 = pneg %p40
        %p671 = pneg %p37
        %p672 = pneg %p61
        %p673 = pneg %p58
        %p674 = pneg %p82
        %p675 = pneg %p79
        %p676 = pneg %p103
        %p677 = pneg %p100
        %p678 = pneg %p124
        %p679 = pneg %p121
        %p680 = pneg %p145
        %p681 = pneg %p142
        %p682 = pneg %p171
        %p683 = pneg %p168
        %s684 = smul.u32 25, %s19
        %p685 = scmp.lt.s32.totalorder %s684, 49
        %s686 = scalar_select %p685, %s684, 49
        %s687 = smul.addr %s686, 4
        %s688 = scalar_lea.vmem %s6, %s687
        %s689 = smul.u32 25, %s19
        %s690 = smul.u32 25, %s19
        %p691 = scmp.lt.s32.totalorder %s690, 49
        %s692 = scalar_select %p691, %s690, 49
        %s693 = smul.addr %s692, 4
        %s694 = scalar_lea.vmem %s6, %s693
        %s695 = smul.u32 25, %s19
        %v697 = vld [vmem:[%s1] sm:$0xf]
        %v698 = vld [vmem:[%s1 + $0x4] sm:$0xf]
        %v699 = vld [vmem:[%s2] sm:$0x1]
        %v700 = vld [vmem:[#allocation2] sm:$0x1]
        %v701 = vld [vmem:[%s4] sm:$0x1]
        %v702 = vld [vmem:[%s5] sm:$0x1]
        %v703 = vld [vmem:[%s662] sm:$0xf]
        %v704 = vld [vmem:[%s662 + $0x4] sm:$0xf]
        %v705 = vld [vmem:[%s662 + $0x8] sm:$0xf]
        %v706 = vld [vmem:[%s662 + $0xc] sm:$0xf]
        %v707 = vld [vmem:[%s662 + $0x10] sm:$0xf]
        %v708 = vld [vmem:[%s662 + $0x14] sm:$0xf]
        %v709 = vld [vmem:[%s662 + $0x18] sm:$0xf]
        %v710 = vld [vmem:[%s662 + $0x1c] sm:$0xf]
        %v711 = vld [vmem:[%s662 + $0x20] sm:$0xf]
        %v712 = vld [vmem:[%s662 + $0x24] sm:$0xf]
        %v713 = vld [vmem:[%s662 + $0x28] sm:$0xf]
        %v714 = vld [vmem:[%s662 + $0x2c] sm:$0xf]
        %v715 = vld [vmem:[%s662 + $0x30] sm:$0xf]
        %v716 = vld [vmem:[%s662 + $0x34] sm:$0xf]
        %v717 = vld [vmem:[%s662 + $0x38] sm:$0xf]
        %v718 = vld [vmem:[%s662 + $0x3c] sm:$0xf]
        %v719 = vld [vmem:[%s662 + $0x40] sm:$0xf]
        %v720 = vld [vmem:[%s662 + $0x44] sm:$0xf]
        %v721 = vld [vmem:[%s662 + $0x48] sm:$0xf]
        %v722 = vld [vmem:[%s662 + $0x4c] sm:$0xf]
        %v723 = vld [vmem:[%s662 + $0x50] sm:$0xf]
        %v724 = vld [vmem:[%s662 + $0x54] sm:$0xf]
        %v725 = vld [vmem:[%s662 + $0x58] sm:$0xf]
        %v726 = vld [vmem:[%s662 + $0x5c] sm:$0xf]
        %v727 = vld [vmem:[%s662 + $0x60] sm:$0xf]
        %v729 = vlaneseq
        %v730 = vshrl.u32 %v729, 7
        %v731 = vsub.s32 0, %v730
        %v732 = vrot.slane %v699, %v731
        %v759 = vunpack.c.l.b16 %v703
        %v760 = vunpack.c.l.b16 %v704
        %v761 = vunpack.c.l.b16 %v705
        %v762 = vunpack.c.l.b16 %v706
        %v763 = vunpack.c.l.b16 %v707
        %v764 = vunpack.c.l.b16 %v708
        %v765 = vunpack.c.l.b16 %v709
        %v766 = vunpack.c.l.b16 %v710
        %v767 = vunpack.c.l.b16 %v711
        %v768 = vunpack.c.l.b16 %v712
        %v769 = vunpack.c.l.b16 %v713
        %v770 = vunpack.c.l.b16 %v714
        %v771 = vunpack.c.l.b16 %v715
        %v772 = vunpack.c.l.b16 %v716
        %v773 = vunpack.c.l.b16 %v717
        %v774 = vunpack.c.l.b16 %v718
        %v775 = vunpack.c.l.b16 %v719
        %v776 = vunpack.c.l.b16 %v720
        %v777 = vunpack.c.l.b16 %v721
        %v778 = vunpack.c.l.b16 %v722
        %v779 = vunpack.c.l.b16 %v723
        %v780 = vunpack.c.l.b16 %v724
        %v781 = vunpack.c.l.b16 %v725
        %v782 = vunpack.c.l.b16 %v726
        %v783 = vunpack.c.l.b16 %v727
        %v784 = vpack.c.b16 %v760, %v759
        %v785 = vpack.c.b16 %v762, %v761
        %v786 = vpack.c.b16 %v764, %v763
        %v787 = vpack.c.b16 %v766, %v765
        %v788 = vpack.c.b16 %v768, %v767
        %v789 = vpack.c.b16 %v770, %v769
        %v790 = vpack.c.b16 %v772, %v771
        %v791 = vpack.c.b16 %v774, %v773
        %v792 = vpack.c.b16 %v776, %v775
        %v793 = vpack.c.b16 %v778, %v777
        %v794 = vpack.c.b16 %v780, %v779
        %v795 = vpack.c.b16 %v782, %v781
        %v796 = vpack.c.b16 %v783, %v783
        %v799 = vunpack.c.l.b16 %v697
        %v800 = vunpack.c.l.b16 %v698
        %v801 = vpack.c.b16 %v800, %v799
        %vm803 = vcmask 130048
        %v805 = vsel %vm803, %v784, 0
        %v808 = vsel %vm803, %v785, 0
        %v811 = vsel %vm803, %v786, 0
        %v814 = vsel %vm803, %v787, 0
        %v817 = vsel %vm803, %v788, 0
        %v820 = vsel %vm803, %v789, 0
        %v823 = vsel %vm803, %v790, 0
        %v826 = vsel %vm803, %v791, 0
        %v829 = vsel %vm803, %v792, 0
        %v832 = vsel %vm803, %v793, 0
        %v835 = vsel %vm803, %v794, 0
        %v838 = vsel %vm803, %v795, 0
        %v841 = vsel %vm803, %v796, 0
        %843 = vmatprep.subr.bf16.mxu0 0
        %844 = vmatpush1.bf16.msra.mxu0 0
        %845 = vmatprep.subr.bf16.mxu0 0
        %846 = vmatpush1.bf16.msra.mxu0 0
        %847 = vmatprep.subr.bf16.mxu0 0
        %848 = vmatpush1.bf16.msra.mxu0 0
        %849 = vmatprep.subr.bf16.mxu0 0
        %850 = vmatpush1.bf16.msra.mxu0 0
        %851 = vmatprep.subr.bf16.mxu0 0
        %852 = vmatpush1.bf16.msra.mxu0 0
        %853 = vmatprep.subr.bf16.mxu0 0
        %854 = vmatpush1.bf16.msra.mxu0 0
        %855 = vmatprep.subr.bf16.mxu0 0
        %856 = vmatpush1.bf16.msra.mxu0 0
        %857 = vmatprep.subr.bf16.mxu0 0
        %858 = vmatpush1.bf16.msra.mxu0 %v801
        %859 = vmatprep.subr.bf16.mxu0 0
        %860 = vmatpush2.bf16.msra.mxu0 0
        %861 = vmatprep.subr.bf16.mxu0 0
        %862 = vmatpush2.bf16.msra.mxu0 0
        %863 = vmatprep.subr.bf16.mxu0 0
        %864 = vmatpush2.bf16.msra.mxu0 0
        %865 = vmatprep.subr.bf16.mxu0 0
        %866 = vmatpush2.bf16.msra.mxu0 0
        %867 = vmatprep.subr.bf16.mxu0 0
        %868 = vmatpush2.bf16.msra.mxu0 0
        %869 = vmatprep.subr.bf16.mxu0 0
        %870 = vmatpush2.bf16.msra.mxu0 0
        %871 = vmatprep.subr.bf16.mxu0 0
        %872 = vmatpush2.bf16.msra.mxu0 0
        %873 = vmatprep.subr.bf16.mxu0 0
        %874 = vmatpush2.bf16.msra.mxu0 0
        %875 = vmatprep.mubr.bf16.mxu0 0
        %876 = vmatmul.mubr.bf16.gmra.mxu0 %v805
        %v877 = vpop.f32.mrf.mxu0
        %v878 = vadd.f32 %v732, %v877
        %v879 = vpop.f32.mrf.mxu0
        %v880 = vpop.f32.mrf.mxu0
        %v881 = vadd.f32 %v732, %v880
        %v882 = vpop.f32.mrf.mxu0
        %883 = vmatprep.mubr.bf16.mxu0 0
        %884 = vmatmul.mubr.bf16.gmra.mxu0 %v808
        %v885 = vpop.f32.mrf.mxu0
        %v886 = vadd.f32 %v732, %v885
        %v887 = vpop.f32.mrf.mxu0
        %v888 = vpop.f32.mrf.mxu0
        %v889 = vadd.f32 %v732, %v888
        %v890 = vpop.f32.mrf.mxu0
        %891 = vmatprep.mubr.bf16.mxu0 0
        %892 = vmatmul.mubr.bf16.gmra.mxu0 %v811
        %v893 = vpop.f32.mrf.mxu0
        %v894 = vadd.f32 %v732, %v893
        %v895 = vpop.f32.mrf.mxu0
        %v896 = vpop.f32.mrf.mxu0
        %v897 = vadd.f32 %v732, %v896
        %v898 = vpop.f32.mrf.mxu0
        %899 = vmatprep.mubr.bf16.mxu0 0
        %900 = vmatmul.mubr.bf16.gmra.mxu0 %v814
        %v901 = vpop.f32.mrf.mxu0
        %v902 = vadd.f32 %v732, %v901
        %v903 = vpop.f32.mrf.mxu0
        %v904 = vpop.f32.mrf.mxu0
        %v905 = vadd.f32 %v732, %v904
        %v906 = vpop.f32.mrf.mxu0
        %907 = vmatprep.mubr.bf16.mxu0 0
        %908 = vmatmul.mubr.bf16.gmra.mxu0 %v817
        %v909 = vpop.f32.mrf.mxu0
        %v910 = vadd.f32 %v732, %v909
        %v911 = vpop.f32.mrf.mxu0
        %v912 = vpop.f32.mrf.mxu0
        %v913 = vadd.f32 %v732, %v912
        %v914 = vpop.f32.mrf.mxu0
        %915 = vmatprep.mubr.bf16.mxu0 0
        %916 = vmatmul.mubr.bf16.gmra.mxu0 %v820
        %v917 = vpop.f32.mrf.mxu0
        %v918 = vadd.f32 %v732, %v917
        %v919 = vpop.f32.mrf.mxu0
        %v920 = vpop.f32.mrf.mxu0
        %v921 = vadd.f32 %v732, %v920
        %v922 = vpop.f32.mrf.mxu0
        %923 = vmatprep.mubr.bf16.mxu0 0
        %924 = vmatmul.mubr.bf16.gmra.mxu0 %v823
        %v925 = vpop.f32.mrf.mxu0
        %v926 = vadd.f32 %v732, %v925
        %v927 = vpop.f32.mrf.mxu0
        %v928 = vpop.f32.mrf.mxu0
        %v929 = vadd.f32 %v732, %v928
        %v930 = vpop.f32.mrf.mxu0
        %931 = vmatprep.mubr.bf16.mxu0 0
        %932 = vmatmul.mubr.bf16.gmra.mxu0 %v826
        %v933 = vpop.f32.mrf.mxu0
        %v934 = vadd.f32 %v732, %v933
        %v935 = vpop.f32.mrf.mxu0
        %v936 = vpop.f32.mrf.mxu0
        %v937 = vadd.f32 %v732, %v936
        %v938 = vpop.f32.mrf.mxu0
        %939 = vmatprep.mubr.bf16.mxu0 0
        %940 = vmatmul.mubr.bf16.gmra.mxu0 %v829
        %v941 = vpop.f32.mrf.mxu0
        %v942 = vadd.f32 %v732, %v941
        %v943 = vpop.f32.mrf.mxu0
        %v944 = vpop.f32.mrf.mxu0
        %v945 = vadd.f32 %v732, %v944
        %v946 = vpop.f32.mrf.mxu0
        %947 = vmatprep.mubr.bf16.mxu0 0
        %948 = vmatmul.mubr.bf16.gmra.mxu0 %v832
        %v949 = vpop.f32.mrf.mxu0
        %v950 = vadd.f32 %v732, %v949
        %v951 = vpop.f32.mrf.mxu0
        %v952 = vpop.f32.mrf.mxu0
        %v953 = vadd.f32 %v732, %v952
        %v954 = vpop.f32.mrf.mxu0
        %955 = vmatprep.mubr.bf16.mxu0 0
        %956 = vmatmul.mubr.bf16.gmra.mxu0 %v835
        %v957 = vpop.f32.mrf.mxu0
        %v958 = vadd.f32 %v732, %v957
        %v959 = vpop.f32.mrf.mxu0
        %v960 = vpop.f32.mrf.mxu0
        %v961 = vadd.f32 %v732, %v960
        %v962 = vpop.f32.mrf.mxu0
        %963 = vmatprep.mubr.bf16.mxu0 0
        %964 = vmatmul.mubr.bf16.gmra.mxu0 %v838
        %v965 = vpop.f32.mrf.mxu0
        %v966 = vadd.f32 %v732, %v965
        %v967 = vpop.f32.mrf.mxu0
        %v968 = vpop.f32.mrf.mxu0
        %v969 = vadd.f32 %v732, %v968
        %v970 = vpop.f32.mrf.mxu0
        %971 = vmatprep.mubr.bf16.mxu0 0
        %972 = vmatmul.mubr.bf16.gmra.mxu0 %v841
        %v973 = vpop.f32.mrf.mxu0
        %v974 = vadd.f32 %v732, %v973
        %v975 = vpop.f32.mrf.mxu0
        %v976 = vpop.f32.mrf.mxu0
        %v977 = vpop.f32.mrf.mxu0
        %978 = vdwg.mxu0
        %vm979 = vcmp.ge.f32.partialorder %v878, 0.0
        %vm980 = vcmp.ge.f32.partialorder %v881, 0.0
        %vm981 = vcmp.ge.f32.partialorder %v886, 0.0
        %vm982 = vcmp.ge.f32.partialorder %v889, 0.0
        %vm983 = vcmp.ge.f32.partialorder %v894, 0.0
        %vm984 = vcmp.ge.f32.partialorder %v897, 0.0
        %vm985 = vcmp.ge.f32.partialorder %v902, 0.0
        %vm986 = vcmp.ge.f32.partialorder %v905, 0.0
        %vm987 = vcmp.ge.f32.partialorder %v910, 0.0
        %vm988 = vcmp.ge.f32.partialorder %v913, 0.0
        %vm989 = vcmp.ge.f32.partialorder %v918, 0.0
        %vm990 = vcmp.ge.f32.partialorder %v921, 0.0
        %vm991 = vcmp.ge.f32.partialorder %v926, 0.0
        %vm992 = vcmp.ge.f32.partialorder %v929, 0.0
        %vm993 = vcmp.ge.f32.partialorder %v934, 0.0
        %vm994 = vcmp.ge.f32.partialorder %v937, 0.0
        %vm995 = vcmp.ge.f32.partialorder %v942, 0.0
        %vm996 = vcmp.ge.f32.partialorder %v945, 0.0
        %vm997 = vcmp.ge.f32.partialorder %v950, 0.0
        %vm998 = vcmp.ge.f32.partialorder %v953, 0.0
        %vm999 = vcmp.ge.f32.partialorder %v958, 0.0
        %vm1000 = vcmp.ge.f32.partialorder %v961, 0.0
        %vm1001 = vcmp.ge.f32.partialorder %v966, 0.0
        %vm1002 = vcmp.ge.f32.partialorder %v969, 0.0
        %vm1003 = vcmp.ge.f32.partialorder %v974, 0.0
        %v1005 = vlaneseq
        %v1006 = vshrl.u32 %v1005, 7
        %v1007 = vsub.s32 0, %v1006
        %v1008 = vrot.slane %v700, %v1007
        %1009 = vset.pattern.permute.xlu0 0
        %1010 = vperm.xlu0 %1009, %v1008
        %v1011 = vpop.permute.xlu0 %1010
        %v1013 = vmul.f32 %v1011, %v878
        %v1014 = vmul.f32 %v1011, %v881
        %v1015 = vmul.f32 %v1011, %v886
        %v1016 = vmul.f32 %v1011, %v889
        %v1017 = vmul.f32 %v1011, %v894
        %v1018 = vmul.f32 %v1011, %v897
        %v1019 = vmul.f32 %v1011, %v902
        %v1020 = vmul.f32 %v1011, %v905
        %v1021 = vmul.f32 %v1011, %v910
        %v1022 = vmul.f32 %v1011, %v913
        %v1023 = vmul.f32 %v1011, %v918
        %v1024 = vmul.f32 %v1011, %v921
        %v1025 = vmul.f32 %v1011, %v926
        %v1026 = vmul.f32 %v1011, %v929
        %v1027 = vmul.f32 %v1011, %v934
        %v1028 = vmul.f32 %v1011, %v937
        %v1029 = vmul.f32 %v1011, %v942
        %v1030 = vmul.f32 %v1011, %v945
        %v1031 = vmul.f32 %v1011, %v950
        %v1032 = vmul.f32 %v1011, %v953
        %v1033 = vmul.f32 %v1011, %v958
        %v1034 = vmul.f32 %v1011, %v961
        %v1035 = vmul.f32 %v1011, %v966
        %v1036 = vmul.f32 %v1011, %v969
        %v1037 = vmul.f32 %v1011, %v974
        %v1038 = vsel %vm979, %v878, %v1013
        %v1039 = vsel %vm980, %v881, %v1014
        %v1040 = vsel %vm981, %v886, %v1015
        %v1041 = vsel %vm982, %v889, %v1016
        %v1042 = vsel %vm983, %v894, %v1017
        %v1043 = vsel %vm984, %v897, %v1018
        %v1044 = vsel %vm985, %v902, %v1019
        %v1045 = vsel %vm986, %v905, %v1020
        %v1046 = vsel %vm987, %v910, %v1021
        %v1047 = vsel %vm988, %v913, %v1022
        %v1048 = vsel %vm989, %v918, %v1023
        %v1049 = vsel %vm990, %v921, %v1024
        %v1050 = vsel %vm991, %v926, %v1025
        %v1051 = vsel %vm992, %v929, %v1026
        %v1052 = vsel %vm993, %v934, %v1027
        %v1053 = vsel %vm994, %v937, %v1028
        %v1054 = vsel %vm995, %v942, %v1029
        %v1055 = vsel %vm996, %v945, %v1030
        %v1056 = vsel %vm997, %v950, %v1031
        %v1057 = vsel %vm998, %v953, %v1032
        %v1058 = vsel %vm999, %v958, %v1033
        %v1059 = vsel %vm1000, %v961, %v1034
        %v1060 = vsel %vm1001, %v966, %v1035
        %v1061 = vsel %vm1002, %v969, %v1036
        %v1062 = vsel %vm1003, %v974, %v1037
        %v1064 = vlaneseq
        %v1065 = vshrl.u32 %v1064, 7
        %v1066 = vsub.s32 0, %v1065
        %v1067 = vrot.slane %v701, %v1066
        %v1069 = vmul.f32 %v1038, %v1067
        %v1070 = vmul.f32 %v1039, %v1067
        %v1071 = vmul.f32 %v1040, %v1067
        %v1072 = vmul.f32 %v1041, %v1067
        %v1073 = vmul.f32 %v1042, %v1067
        %v1074 = vmul.f32 %v1043, %v1067
        %v1075 = vmul.f32 %v1044, %v1067
        %v1076 = vmul.f32 %v1045, %v1067
        %v1077 = vmul.f32 %v1046, %v1067
        %v1078 = vmul.f32 %v1047, %v1067
        %v1079 = vmul.f32 %v1048, %v1067
        %v1080 = vmul.f32 %v1049, %v1067
        %v1081 = vmul.f32 %v1050, %v1067
        %v1082 = vmul.f32 %v1051, %v1067
        %v1083 = vmul.f32 %v1052, %v1067
        %v1084 = vmul.f32 %v1053, %v1067
        %v1085 = vmul.f32 %v1054, %v1067
        %v1086 = vmul.f32 %v1055, %v1067
        %v1087 = vmul.f32 %v1056, %v1067
        %v1088 = vmul.f32 %v1057, %v1067
        %v1089 = vmul.f32 %v1058, %v1067
        %v1090 = vmul.f32 %v1059, %v1067
        %v1091 = vmul.f32 %v1060, %v1067
        %v1092 = vmul.f32 %v1061, %v1067
        %v1093 = vmul.f32 %v1062, %v1067
        %v1095 = vlaneseq
        %v1096 = vshrl.u32 %v1095, 7
        %v1097 = vsub.s32 0, %v1096
        %v1098 = vrot.slane %v702, %v1097
        %v1100 = vadd.f32 %v1069, %v1098
        %v1101 = vadd.f32 %v1070, %v1098
        %v1102 = vadd.f32 %v1071, %v1098
        %v1103 = vadd.f32 %v1072, %v1098
        %v1104 = vadd.f32 %v1073, %v1098
        %v1105 = vadd.f32 %v1074, %v1098
        %v1106 = vadd.f32 %v1075, %v1098
        %v1107 = vadd.f32 %v1076, %v1098
        %v1108 = vadd.f32 %v1077, %v1098
        %v1109 = vadd.f32 %v1078, %v1098
        %v1110 = vadd.f32 %v1079, %v1098
        %v1111 = vadd.f32 %v1080, %v1098
        %v1112 = vadd.f32 %v1081, %v1098
        %v1113 = vadd.f32 %v1082, %v1098
        %v1114 = vadd.f32 %v1083, %v1098
        %v1115 = vadd.f32 %v1084, %v1098
        %v1116 = vadd.f32 %v1085, %v1098
        %v1117 = vadd.f32 %v1086, %v1098
        %v1118 = vadd.f32 %v1087, %v1098
        %v1119 = vadd.f32 %v1088, %v1098
        %v1120 = vadd.f32 %v1089, %v1098
        %v1121 = vadd.f32 %v1090, %v1098
        %v1122 = vadd.f32 %v1091, %v1098
        %v1123 = vadd.f32 %v1092, %v1098
        %v1124 = vadd.f32 %v1093, %v1098
        %s1125 = scalar_lea.vmem %s662, 100 [#allocation3]
        %v1126 = vld [vmem:[%s1125] sm:$0xf]
        %v1127 = vld [vmem:[%s1125 + $0x4] sm:$0xf]
        %v1128 = vld [vmem:[%s1125 + $0x8] sm:$0xf]
        %v1129 = vld [vmem:[%s1125 + $0xc] sm:$0xf]
        %v1130 = vld [vmem:[%s1125 + $0x10] sm:$0xf]
        %v1131 = vld [vmem:[%s1125 + $0x14] sm:$0xf]
        %v1132 = vld [vmem:[%s1125 + $0x18] sm:$0xf]
        %v1133 = vld [vmem:[%s1125 + $0x1c] sm:$0xf]
        %v1134 = vld [vmem:[%s1125 + $0x20] sm:$0xf]
        %v1135 = vld [vmem:[%s1125 + $0x24] sm:$0xf]
        %v1136 = vld [vmem:[%s1125 + $0x28] sm:$0xf]
        %v1137 = vld [vmem:[%s1125 + $0x2c] sm:$0xf]
        %v1138 = vld [vmem:[%s1125 + $0x30] sm:$0xf]
        %v1139 = vld [vmem:[%s1125 + $0x34] sm:$0xf]
        %v1140 = vld [vmem:[%s1125 + $0x38] sm:$0xf]
        %v1141 = vld [vmem:[%s1125 + $0x3c] sm:$0xf]
        %v1142 = vld [vmem:[%s1125 + $0x40] sm:$0xf]
        %v1143 = vld [vmem:[%s1125 + $0x44] sm:$0xf]
        %v1144 = vld [vmem:[%s1125 + $0x48] sm:$0xf]
        %v1145 = vld [vmem:[%s1125 + $0x4c] sm:$0xf]
        %v1146 = vld [vmem:[%s1125 + $0x50] sm:$0xf]
        %v1147 = vld [vmem:[%s1125 + $0x54] sm:$0xf]
        %v1148 = vld [vmem:[%s1125 + $0x58] sm:$0xf]
        %v1149 = vld [vmem:[%s1125 + $0x5c] sm:$0xf]
        %v1150 = vld [vmem:[%s1125 + $0x60] sm:$0xf]
        %v1176 = vunpack.c.l.b16 %v1126
        %v1177 = vunpack.c.l.b16 %v1127
        %v1178 = vunpack.c.l.b16 %v1128
        %v1179 = vunpack.c.l.b16 %v1129
        %v1180 = vunpack.c.l.b16 %v1130
        %v1181 = vunpack.c.l.b16 %v1131
        %v1182 = vunpack.c.l.b16 %v1132
        %v1183 = vunpack.c.l.b16 %v1133
        %v1184 = vunpack.c.l.b16 %v1134
        %v1185 = vunpack.c.l.b16 %v1135
        %v1186 = vunpack.c.l.b16 %v1136
        %v1187 = vunpack.c.l.b16 %v1137
        %v1188 = vunpack.c.l.b16 %v1138
        %v1189 = vunpack.c.l.b16 %v1139
        %v1190 = vunpack.c.l.b16 %v1140
        %v1191 = vunpack.c.l.b16 %v1141
        %v1192 = vunpack.c.l.b16 %v1142
        %v1193 = vunpack.c.l.b16 %v1143
        %v1194 = vunpack.c.l.b16 %v1144
        %v1195 = vunpack.c.l.b16 %v1145
        %v1196 = vunpack.c.l.b16 %v1146
        %v1197 = vunpack.c.l.b16 %v1147
        %v1198 = vunpack.c.l.b16 %v1148
        %v1199 = vunpack.c.l.b16 %v1149
        %v1200 = vunpack.c.l.b16 %v1150
        %v1201 = vpack.c.b16 %v1177, %v1176
        %v1202 = vpack.c.b16 %v1179, %v1178
        %v1203 = vpack.c.b16 %v1181, %v1180
        %v1204 = vpack.c.b16 %v1183, %v1182
        %v1205 = vpack.c.b16 %v1185, %v1184
        %v1206 = vpack.c.b16 %v1187, %v1186
        %v1207 = vpack.c.b16 %v1189, %v1188
        %v1208 = vpack.c.b16 %v1191, %v1190
        %v1209 = vpack.c.b16 %v1193, %v1192
        %v1210 = vpack.c.b16 %v1195, %v1194
        %v1211 = vpack.c.b16 %v1197, %v1196
        %v1212 = vpack.c.b16 %v1199, %v1198
        %v1213 = vpack.c.b16 %v1200, %v1200
        %v1215 = vsel %vm803, %v1201, 0
        %v1218 = vsel %vm803, %v1202, 0
        %v1221 = vsel %vm803, %v1203, 0
        %v1224 = vsel %vm803, %v1204, 0
        %v1227 = vsel %vm803, %v1205, 0
        %v1230 = vsel %vm803, %v1206, 0
        %v1233 = vsel %vm803, %v1207, 0
        %v1236 = vsel %vm803, %v1208, 0
        %v1239 = vsel %vm803, %v1209, 0
        %v1242 = vsel %vm803, %v1210, 0
        %v1245 = vsel %vm803, %v1211, 0
        %v1248 = vsel %vm803, %v1212, 0
        %v1251 = vsel %vm803, %v1213, 0
        %1253 = vmatprep.subr.bf16.mxu0 0
        %1254 = vmatpush1.bf16.msra.mxu0 0
        %1255 = vmatprep.subr.bf16.mxu0 0
        %1256 = vmatpush1.bf16.msra.mxu0 0
        %1257 = vmatprep.subr.bf16.mxu0 0
        %1258 = vmatpush1.bf16.msra.mxu0 0
        %1259 = vmatprep.subr.bf16.mxu0 0
        %1260 = vmatpush1.bf16.msra.mxu0 0
        %1261 = vmatprep.subr.bf16.mxu0 0
        %1262 = vmatpush1.bf16.msra.mxu0 0
        %1263 = vmatprep.subr.bf16.mxu0 0
        %1264 = vmatpush1.bf16.msra.mxu0 0
        %1265 = vmatprep.subr.bf16.mxu0 0
        %1266 = vmatpush1.bf16.msra.mxu0 0
        %1267 = vmatprep.subr.bf16.mxu0 0
        %1268 = vmatpush1.bf16.msra.mxu0 %v801
        %1269 = vmatprep.subr.bf16.mxu0 0
        %1270 = vmatpush2.bf16.msra.mxu0 0
        %1271 = vmatprep.subr.bf16.mxu0 0
        %1272 = vmatpush2.bf16.msra.mxu0 0
        %1273 = vmatprep.subr.bf16.mxu0 0
        %1274 = vmatpush2.bf16.msra.mxu0 0
        %1275 = vmatprep.subr.bf16.mxu0 0
        %1276 = vmatpush2.bf16.msra.mxu0 0
        %1277 = vmatprep.subr.bf16.mxu0 0
        %1278 = vmatpush2.bf16.msra.mxu0 0
        %1279 = vmatprep.subr.bf16.mxu0 0
        %1280 = vmatpush2.bf16.msra.mxu0 0
        %1281 = vmatprep.subr.bf16.mxu0 0
        %1282 = vmatpush2.bf16.msra.mxu0 0
        %1283 = vmatprep.subr.bf16.mxu0 0
        %1284 = vmatpush2.bf16.msra.mxu0 0
        %1285 = vmatprep.mubr.bf16.mxu0 0
        %1286 = vmatmul.mubr.bf16.gmra.mxu0 %v1215
        %v1287 = vpop.f32.mrf.mxu0
        %v1288 = vadd.f32 %v732, %v1287
        %v1289 = vpop.f32.mrf.mxu0
        %v1290 = vpop.f32.mrf.mxu0
        %v1291 = vadd.f32 %v732, %v1290
        %v1292 = vpop.f32.mrf.mxu0
        %1293 = vmatprep.mubr.bf16.mxu0 0
        %1294 = vmatmul.mubr.bf16.gmra.mxu0 %v1218
        %v1295 = vpop.f32.mrf.mxu0
        %v1296 = vadd.f32 %v732, %v1295
        %v1297 = vpop.f32.mrf.mxu0
        %v1298 = vpop.f32.mrf.mxu0
        %v1299 = vadd.f32 %v732, %v1298
        %v1300 = vpop.f32.mrf.mxu0
        %1301 = vmatprep.mubr.bf16.mxu0 0
        %1302 = vmatmul.mubr.bf16.gmra.mxu0 %v1221
        %v1303 = vpop.f32.mrf.mxu0
        %v1304 = vadd.f32 %v732, %v1303
        %v1305 = vpop.f32.mrf.mxu0
        %v1306 = vpop.f32.mrf.mxu0
        %v1307 = vadd.f32 %v732, %v1306
        %v1308 = vpop.f32.mrf.mxu0
        %1309 = vmatprep.mubr.bf16.mxu0 0
        %1310 = vmatmul.mubr.bf16.gmra.mxu0 %v1224
        %v1311 = vpop.f32.mrf.mxu0
        %v1312 = vadd.f32 %v732, %v1311
        %v1313 = vpop.f32.mrf.mxu0
        %v1314 = vpop.f32.mrf.mxu0
        %v1315 = vadd.f32 %v732, %v1314
        %v1316 = vpop.f32.mrf.mxu0
        %1317 = vmatprep.mubr.bf16.mxu0 0
        %1318 = vmatmul.mubr.bf16.gmra.mxu0 %v1227
        %v1319 = vpop.f32.mrf.mxu0
        %v1320 = vadd.f32 %v732, %v1319
        %v1321 = vpop.f32.mrf.mxu0
        %v1322 = vpop.f32.mrf.mxu0
        %v1323 = vadd.f32 %v732, %v1322
        %v1324 = vpop.f32.mrf.mxu0
        %1325 = vmatprep.mubr.bf16.mxu0 0
        %1326 = vmatmul.mubr.bf16.gmra.mxu0 %v1230
        %v1327 = vpop.f32.mrf.mxu0
        %v1328 = vadd.f32 %v732, %v1327
        %v1329 = vpop.f32.mrf.mxu0
        %v1330 = vpop.f32.mrf.mxu0
        %v1331 = vadd.f32 %v732, %v1330
        %v1332 = vpop.f32.mrf.mxu0
        %1333 = vmatprep.mubr.bf16.mxu0 0
        %1334 = vmatmul.mubr.bf16.gmra.mxu0 %v1233
        %v1335 = vpop.f32.mrf.mxu0
        %v1336 = vadd.f32 %v732, %v1335
        %v1337 = vpop.f32.mrf.mxu0
        %v1338 = vpop.f32.mrf.mxu0
        %v1339 = vadd.f32 %v732, %v1338
        %v1340 = vpop.f32.mrf.mxu0
        %1341 = vmatprep.mubr.bf16.mxu0 0
        %1342 = vmatmul.mubr.bf16.gmra.mxu0 %v1236
        %v1343 = vpop.f32.mrf.mxu0
        %v1344 = vadd.f32 %v732, %v1343
        %v1345 = vpop.f32.mrf.mxu0
        %v1346 = vpop.f32.mrf.mxu0
        %v1347 = vadd.f32 %v732, %v1346
        %v1348 = vpop.f32.mrf.mxu0
        %1349 = vmatprep.mubr.bf16.mxu0 0
        %1350 = vmatmul.mubr.bf16.gmra.mxu0 %v1239
        %v1351 = vpop.f32.mrf.mxu0
        %v1352 = vadd.f32 %v732, %v1351
        %v1353 = vpop.f32.mrf.mxu0
        %v1354 = vpop.f32.mrf.mxu0
        %v1355 = vadd.f32 %v732, %v1354
        %v1356 = vpop.f32.mrf.mxu0
        %1357 = vmatprep.mubr.bf16.mxu0 0
        %1358 = vmatmul.mubr.bf16.gmra.mxu0 %v1242
        %v1359 = vpop.f32.mrf.mxu0
        %v1360 = vadd.f32 %v732, %v1359
        %v1361 = vpop.f32.mrf.mxu0
        %v1362 = vpop.f32.mrf.mxu0
        %v1363 = vadd.f32 %v732, %v1362
        %v1364 = vpop.f32.mrf.mxu0
        %1365 = vmatprep.mubr.bf16.mxu0 0
        %1366 = vmatmul.mubr.bf16.gmra.mxu0 %v1245
        %v1367 = vpop.f32.mrf.mxu0
        %v1368 = vadd.f32 %v732, %v1367
        %v1369 = vpop.f32.mrf.mxu0
        %v1370 = vpop.f32.mrf.mxu0
        %v1371 = vadd.f32 %v732, %v1370
        %v1372 = vpop.f32.mrf.mxu0
        %1373 = vmatprep.mubr.bf16.mxu0 0
        %1374 = vmatmul.mubr.bf16.gmra.mxu0 %v1248
        %v1375 = vpop.f32.mrf.mxu0
        %v1376 = vadd.f32 %v732, %v1375
        %v1377 = vpop.f32.mrf.mxu0
        %v1378 = vpop.f32.mrf.mxu0
        %v1379 = vadd.f32 %v732, %v1378
        %v1380 = vpop.f32.mrf.mxu0
        %1381 = vmatprep.mubr.bf16.mxu0 0
        %1382 = vmatmul.mubr.bf16.gmra.mxu0 %v1251
        %v1383 = vpop.f32.mrf.mxu0
        %v1384 = vadd.f32 %v732, %v1383
        %v1385 = vpop.f32.mrf.mxu0
        %v1386 = vpop.f32.mrf.mxu0
        %v1387 = vpop.f32.mrf.mxu0
        %1388 = vdwg.mxu0
        %vm1389 = vcmp.ge.f32.partialorder %v1288, 0.0
        %vm1390 = vcmp.ge.f32.partialorder %v1291, 0.0
        %vm1391 = vcmp.ge.f32.partialorder %v1296, 0.0
        %vm1392 = vcmp.ge.f32.partialorder %v1299, 0.0
        %vm1393 = vcmp.ge.f32.partialorder %v1304, 0.0
        %vm1394 = vcmp.ge.f32.partialorder %v1307, 0.0
        %vm1395 = vcmp.ge.f32.partialorder %v1312, 0.0
        %vm1396 = vcmp.ge.f32.partialorder %v1315, 0.0
        %vm1397 = vcmp.ge.f32.partialorder %v1320, 0.0
        %vm1398 = vcmp.ge.f32.partialorder %v1323, 0.0
        %vm1399 = vcmp.ge.f32.partialorder %v1328, 0.0
        %vm1400 = vcmp.ge.f32.partialorder %v1331, 0.0
        %vm1401 = vcmp.ge.f32.partialorder %v1336, 0.0
        %vm1402 = vcmp.ge.f32.partialorder %v1339, 0.0
        %vm1403 = vcmp.ge.f32.partialorder %v1344, 0.0
        %vm1404 = vcmp.ge.f32.partialorder %v1347, 0.0
        %vm1405 = vcmp.ge.f32.partialorder %v1352, 0.0
        %vm1406 = vcmp.ge.f32.partialorder %v1355, 0.0
        %vm1407 = vcmp.ge.f32.partialorder %v1360, 0.0
        %vm1408 = vcmp.ge.f32.partialorder %v1363, 0.0
        %vm1409 = vcmp.ge.f32.partialorder %v1368, 0.0
        %vm1410 = vcmp.ge.f32.partialorder %v1371, 0.0
        %vm1411 = vcmp.ge.f32.partialorder %v1376, 0.0
        %vm1412 = vcmp.ge.f32.partialorder %v1379, 0.0
        %vm1413 = vcmp.ge.f32.partialorder %v1384, 0.0
        %v1414 = vmul.f32 %v1011, %v1288
        %v1415 = vmul.f32 %v1011, %v1291
        %v1416 = vmul.f32 %v1011, %v1296
        %v1417 = vmul.f32 %v1011, %v1299
        %v1418 = vmul.f32 %v1011, %v1304
        %v1419 = vmul.f32 %v1011, %v1307
        %v1420 = vmul.f32 %v1011, %v1312
        %v1421 = vmul.f32 %v1011, %v1315
        %v1422 = vmul.f32 %v1011, %v1320
        %v1423 = vmul.f32 %v1011, %v1323
        %v1424 = vmul.f32 %v1011, %v1328
        %v1425 = vmul.f32 %v1011, %v1331
        %v1426 = vmul.f32 %v1011, %v1336
        %v1427 = vmul.f32 %v1011, %v1339
        %v1428 = vmul.f32 %v1011, %v1344
        %v1429 = vmul.f32 %v1011, %v1347
        %v1430 = vmul.f32 %v1011, %v1352
        %v1431 = vmul.f32 %v1011, %v1355
        %v1432 = vmul.f32 %v1011, %v1360
        %v1433 = vmul.f32 %v1011, %v1363
        %v1434 = vmul.f32 %v1011, %v1368
        %v1435 = vmul.f32 %v1011, %v1371
        %v1436 = vmul.f32 %v1011, %v1376
        %v1437 = vmul.f32 %v1011, %v1379
        %v1438 = vmul.f32 %v1011, %v1384
        %v1439 = vsel %vm1389, %v1288, %v1414
        %v1440 = vsel %vm1390, %v1291, %v1415
        %v1441 = vsel %vm1391, %v1296, %v1416
        %v1442 = vsel %vm1392, %v1299, %v1417
        %v1443 = vsel %vm1393, %v1304, %v1418
        %v1444 = vsel %vm1394, %v1307, %v1419
        %v1445 = vsel %vm1395, %v1312, %v1420
        %v1446 = vsel %vm1396, %v1315, %v1421
        %v1447 = vsel %vm1397, %v1320, %v1422
        %v1448 = vsel %vm1398, %v1323, %v1423
        %v1449 = vsel %vm1399, %v1328, %v1424
        %v1450 = vsel %vm1400, %v1331, %v1425
        %v1451 = vsel %vm1401, %v1336, %v1426
        %v1452 = vsel %vm1402, %v1339, %v1427
        %v1453 = vsel %vm1403, %v1344, %v1428
        %v1454 = vsel %vm1404, %v1347, %v1429
        %v1455 = vsel %vm1405, %v1352, %v1430
        %v1456 = vsel %vm1406, %v1355, %v1431
        %v1457 = vsel %vm1407, %v1360, %v1432
        %v1458 = vsel %vm1408, %v1363, %v1433
        %v1459 = vsel %vm1409, %v1368, %v1434
        %v1460 = vsel %vm1410, %v1371, %v1435
        %v1461 = vsel %vm1411, %v1376, %v1436
        %v1462 = vsel %vm1412, %v1379, %v1437
        %v1463 = vsel %vm1413, %v1384, %v1438
        %v1464 = vmul.f32 %v1439, %v1067
        %v1465 = vmul.f32 %v1440, %v1067
        %v1466 = vmul.f32 %v1441, %v1067
        %v1467 = vmul.f32 %v1442, %v1067
        %v1468 = vmul.f32 %v1443, %v1067
        %v1469 = vmul.f32 %v1444, %v1067
        %v1470 = vmul.f32 %v1445, %v1067
        %v1471 = vmul.f32 %v1446, %v1067
        %v1472 = vmul.f32 %v1447, %v1067
        %v1473 = vmul.f32 %v1448, %v1067
        %v1474 = vmul.f32 %v1449, %v1067
        %v1475 = vmul.f32 %v1450, %v1067
        %v1476 = vmul.f32 %v1451, %v1067
        %v1477 = vmul.f32 %v1452, %v1067
        %v1478 = vmul.f32 %v1453, %v1067
        %v1479 = vmul.f32 %v1454, %v1067
        %v1480 = vmul.f32 %v1455, %v1067
        %v1481 = vmul.f32 %v1456, %v1067
        %v1482 = vmul.f32 %v1457, %v1067
        %v1483 = vmul.f32 %v1458, %v1067
        %v1484 = vmul.f32 %v1459, %v1067
        %v1485 = vmul.f32 %v1460, %v1067
        %v1486 = vmul.f32 %v1461, %v1067
        %v1487 = vmul.f32 %v1462, %v1067
        %v1488 = vmul.f32 %v1463, %v1067
        %v1489 = vadd.f32 %v1464, %v1098
        %v1490 = vadd.f32 %v1465, %v1098
        %v1491 = vadd.f32 %v1466, %v1098
        %v1492 = vadd.f32 %v1467, %v1098
        %v1493 = vadd.f32 %v1468, %v1098
        %v1494 = vadd.f32 %v1469, %v1098
        %v1495 = vadd.f32 %v1470, %v1098
        %v1496 = vadd.f32 %v1471, %v1098
        %v1497 = vadd.f32 %v1472, %v1098
        %v1498 = vadd.f32 %v1473, %v1098
        %v1499 = vadd.f32 %v1474, %v1098
        %v1500 = vadd.f32 %v1475, %v1098
        %v1501 = vadd.f32 %v1476, %v1098
        %v1502 = vadd.f32 %v1477, %v1098
        %v1503 = vadd.f32 %v1478, %v1098
        %v1504 = vadd.f32 %v1479, %v1098
        %v1505 = vadd.f32 %v1480, %v1098
        %v1506 = vadd.f32 %v1481, %v1098
        %v1507 = vadd.f32 %v1482, %v1098
        %v1508 = vadd.f32 %v1483, %v1098
        %v1509 = vadd.f32 %v1484, %v1098
        %v1510 = vadd.f32 %v1485, %v1098
        %v1511 = vadd.f32 %v1486, %v1098
        %v1512 = vadd.f32 %v1487, %v1098
        %v1513 = vadd.f32 %v1488, %v1098
        %v1514 = vmax.f32 %v1100, %v1489
        %v1515 = vmax.f32 %v1101, %v1490
        %v1516 = vmax.f32 %v1102, %v1491
        %v1517 = vmax.f32 %v1103, %v1492
        %v1518 = vmax.f32 %v1104, %v1493
        %v1519 = vmax.f32 %v1105, %v1494
        %v1520 = vmax.f32 %v1106, %v1495
        %v1521 = vmax.f32 %v1107, %v1496
        %v1522 = vmax.f32 %v1108, %v1497
        %v1523 = vmax.f32 %v1109, %v1498
        %v1524 = vmax.f32 %v1110, %v1499
        %v1525 = vmax.f32 %v1111, %v1500
        %v1526 = vmax.f32 %v1112, %v1501
        %v1527 = vmax.f32 %v1113, %v1502
        %v1528 = vmax.f32 %v1114, %v1503
        %v1529 = vmax.f32 %v1115, %v1504
        %v1530 = vmax.f32 %v1116, %v1505
        %v1531 = vmax.f32 %v1117, %v1506
        %v1532 = vmax.f32 %v1118, %v1507
        %v1533 = vmax.f32 %v1119, %v1508
        %v1534 = vmax.f32 %v1120, %v1509
        %v1535 = vmax.f32 %v1121, %v1510
        %v1536 = vmax.f32 %v1122, %v1511
        %v1537 = vmax.f32 %v1123, %v1512
        %v1538 = vmax.f32 %v1124, %v1513
        %s1539 = scalar_lea.vmem %s662, 200 [#allocation3]
        %v1540 = vld [vmem:[%s1539] sm:$0xf]
        %v1541 = vld [vmem:[%s1539 + $0x4] sm:$0xf]
        %v1542 = vld [vmem:[%s1539 + $0x8] sm:$0xf]
        %v1543 = vld [vmem:[%s1539 + $0xc] sm:$0xf]
        %v1544 = vld [vmem:[%s1539 + $0x10] sm:$0xf]
        %v1545 = vld [vmem:[%s1539 + $0x14] sm:$0xf]
        %v1546 = vld [vmem:[%s1539 + $0x18] sm:$0xf]
        %v1547 = vld [vmem:[%s1539 + $0x1c] sm:$0xf]
        %v1548 = vld [vmem:[%s1539 + $0x20] sm:$0xf]
        %v1549 = vld [vmem:[%s1539 + $0x24] sm:$0xf]
        %v1550 = vld [vmem:[%s1539 + $0x28] sm:$0xf]
        %v1551 = vld [vmem:[%s1539 + $0x2c] sm:$0xf]
        %v1552 = vld [vmem:[%s1539 + $0x30] sm:$0xf]
        %v1553 = vld [vmem:[%s1539 + $0x34] sm:$0xf]
        %v1554 = vld [vmem:[%s1539 + $0x38] sm:$0xf]
        %v1555 = vld [vmem:[%s1539 + $0x3c] sm:$0xf]
        %v1556 = vld [vmem:[%s1539 + $0x40] sm:$0xf]
        %v1557 = vld [vmem:[%s1539 + $0x44] sm:$0xf]
        %v1558 = vld [vmem:[%s1539 + $0x48] sm:$0xf]
        %v1559 = vld [vmem:[%s1539 + $0x4c] sm:$0xf]
        %v1560 = vld [vmem:[%s1539 + $0x50] sm:$0xf]
        %v1561 = vld [vmem:[%s1539 + $0x54] sm:$0xf]
        %v1562 = vld [vmem:[%s1539 + $0x58] sm:$0xf]
        %v1563 = vld [vmem:[%s1539 + $0x5c] sm:$0xf]
        %v1564 = vld [vmem:[%s1539 + $0x60] sm:$0xf]
        %v1590 = vunpack.c.l.b16 %v1540
        %v1591 = vunpack.c.l.b16 %v1541
        %v1592 = vunpack.c.l.b16 %v1542
        %v1593 = vunpack.c.l.b16 %v1543
        %v1594 = vunpack.c.l.b16 %v1544
        %v1595 = vunpack.c.l.b16 %v1545
        %v1596 = vunpack.c.l.b16 %v1546
        %v1597 = vunpack.c.l.b16 %v1547
        %v1598 = vunpack.c.l.b16 %v1548
        %v1599 = vunpack.c.l.b16 %v1549
        %v1600 = vunpack.c.l.b16 %v1550
        %v1601 = vunpack.c.l.b16 %v1551
        %v1602 = vunpack.c.l.b16 %v1552
        %v1603 = vunpack.c.l.b16 %v1553
        %v1604 = vunpack.c.l.b16 %v1554
        %v1605 = vunpack.c.l.b16 %v1555
        %v1606 = vunpack.c.l.b16 %v1556
        %v1607 = vunpack.c.l.b16 %v1557
        %v1608 = vunpack.c.l.b16 %v1558
        %v1609 = vunpack.c.l.b16 %v1559
        %v1610 = vunpack.c.l.b16 %v1560
        %v1611 = vunpack.c.l.b16 %v1561
        %v1612 = vunpack.c.l.b16 %v1562
        %v1613 = vunpack.c.l.b16 %v1563
        %v1614 = vunpack.c.l.b16 %v1564
        %v1615 = vpack.c.b16 %v1591, %v1590
        %v1616 = vpack.c.b16 %v1593, %v1592
        %v1617 = vpack.c.b16 %v1595, %v1594
        %v1618 = vpack.c.b16 %v1597, %v1596
        %v1619 = vpack.c.b16 %v1599, %v1598
        %v1620 = vpack.c.b16 %v1601, %v1600
        %v1621 = vpack.c.b16 %v1603, %v1602
        %v1622 = vpack.c.b16 %v1605, %v1604
        %v1623 = vpack.c.b16 %v1607, %v1606
        %v1624 = vpack.c.b16 %v1609, %v1608
        %v1625 = vpack.c.b16 %v1611, %v1610
        %v1626 = vpack.c.b16 %v1613, %v1612
        %v1627 = vpack.c.b16 %v1614, %v1614
        %v1629 = vsel %vm803, %v1615, 0
        %v1632 = vsel %vm803, %v1616, 0
        %v1635 = vsel %vm803, %v1617, 0
        %v1638 = vsel %vm803, %v1618, 0
        %v1641 = vsel %vm803, %v1619, 0
        %v1644 = vsel %vm803, %v1620, 0
        %v1647 = vsel %vm803, %v1621, 0
        %v1650 = vsel %vm803, %v1622, 0
        %v1653 = vsel %vm803, %v1623, 0
        %v1656 = vsel %vm803, %v1624, 0
        %v1659 = vsel %vm803, %v1625, 0
        %v1662 = vsel %vm803, %v1626, 0
        %v1665 = vsel %vm803, %v1627, 0
        %1667 = vmatprep.subr.bf16.mxu0 0
        %1668 = vmatpush1.bf16.msra.mxu0 0
        %1669 = vmatprep.subr.bf16.mxu0 0
        %1670 = vmatpush1.bf16.msra.mxu0 0
        %1671 = vmatprep.subr.bf16.mxu0 0
        %1672 = vmatpush1.bf16.msra.mxu0 0
        %1673 = vmatprep.subr.bf16.mxu0 0
        %1674 = vmatpush1.bf16.msra.mxu0 0
        %1675 = vmatprep.subr.bf16.mxu0 0
        %1676 = vmatpush1.bf16.msra.mxu0 0
        %1677 = vmatprep.subr.bf16.mxu0 0
        %1678 = vmatpush1.bf16.msra.mxu0 0
        %1679 = vmatprep.subr.bf16.mxu0 0
        %1680 = vmatpush1.bf16.msra.mxu0 0
        %1681 = vmatprep.subr.bf16.mxu0 0
        %1682 = vmatpush1.bf16.msra.mxu0 %v801
        %1683 = vmatprep.subr.bf16.mxu0 0
        %1684 = vmatpush2.bf16.msra.mxu0 0
        %1685 = vmatprep.subr.bf16.mxu0 0
        %1686 = vmatpush2.bf16.msra.mxu0 0
        %1687 = vmatprep.subr.bf16.mxu0 0
        %1688 = vmatpush2.bf16.msra.mxu0 0
        %1689 = vmatprep.subr.bf16.mxu0 0
        %1690 = vmatpush2.bf16.msra.mxu0 0
        %1691 = vmatprep.subr.bf16.mxu0 0
        %1692 = vmatpush2.bf16.msra.mxu0 0
        %1693 = vmatprep.subr.bf16.mxu0 0
        %1694 = vmatpush2.bf16.msra.mxu0 0
        %1695 = vmatprep.subr.bf16.mxu0 0
        %1696 = vmatpush2.bf16.msra.mxu0 0
        %1697 = vmatprep.subr.bf16.mxu0 0
        %1698 = vmatpush2.bf16.msra.mxu0 0
        %1699 = vmatprep.mubr.bf16.mxu0 0
        %1700 = vmatmul.mubr.bf16.gmra.mxu0 %v1629
        %v1701 = vpop.f32.mrf.mxu0
        %v1702 = vadd.f32 %v732, %v1701
        %v1703 = vpop.f32.mrf.mxu0
        %v1704 = vpop.f32.mrf.mxu0
        %v1705 = vadd.f32 %v732, %v1704
        %v1706 = vpop.f32.mrf.mxu0
        %1707 = vmatprep.mubr.bf16.mxu0 0
        %1708 = vmatmul.mubr.bf16.gmra.mxu0 %v1632
        %v1709 = vpop.f32.mrf.mxu0
        %v1710 = vadd.f32 %v732, %v1709
        %v1711 = vpop.f32.mrf.mxu0
        %v1712 = vpop.f32.mrf.mxu0
        %v1713 = vadd.f32 %v732, %v1712
        %v1714 = vpop.f32.mrf.mxu0
        %1715 = vmatprep.mubr.bf16.mxu0 0
        %1716 = vmatmul.mubr.bf16.gmra.mxu0 %v1635
        %v1717 = vpop.f32.mrf.mxu0
        %v1718 = vadd.f32 %v732, %v1717
        %v1719 = vpop.f32.mrf.mxu0
        %v1720 = vpop.f32.mrf.mxu0
        %v1721 = vadd.f32 %v732, %v1720
        %v1722 = vpop.f32.mrf.mxu0
        %1723 = vmatprep.mubr.bf16.mxu0 0
        %1724 = vmatmul.mubr.bf16.gmra.mxu0 %v1638
        %v1725 = vpop.f32.mrf.mxu0
        %v1726 = vadd.f32 %v732, %v1725
        %v1727 = vpop.f32.mrf.mxu0
        %v1728 = vpop.f32.mrf.mxu0
        %v1729 = vadd.f32 %v732, %v1728
        %v1730 = vpop.f32.mrf.mxu0
        %1731 = vmatprep.mubr.bf16.mxu0 0
        %1732 = vmatmul.mubr.bf16.gmra.mxu0 %v1641
        %v1733 = vpop.f32.mrf.mxu0
        %v1734 = vadd.f32 %v732, %v1733
        %v1735 = vpop.f32.mrf.mxu0
        %v1736 = vpop.f32.mrf.mxu0
        %v1737 = vadd.f32 %v732, %v1736
        %v1738 = vpop.f32.mrf.mxu0
        %1739 = vmatprep.mubr.bf16.mxu0 0
        %1740 = vmatmul.mubr.bf16.gmra.mxu0 %v1644
        %v1741 = vpop.f32.mrf.mxu0
        %v1742 = vadd.f32 %v732, %v1741
        %v1743 = vpop.f32.mrf.mxu0
        %v1744 = vpop.f32.mrf.mxu0
        %v1745 = vadd.f32 %v732, %v1744
        %v1746 = vpop.f32.mrf.mxu0
        %1747 = vmatprep.mubr.bf16.mxu0 0
        %1748 = vmatmul.mubr.bf16.gmra.mxu0 %v1647
        %v1749 = vpop.f32.mrf.mxu0
        %v1750 = vadd.f32 %v732, %v1749
        %v1751 = vpop.f32.mrf.mxu0
        %v1752 = vpop.f32.mrf.mxu0
        %v1753 = vadd.f32 %v732, %v1752
        %v1754 = vpop.f32.mrf.mxu0
        %1755 = vmatprep.mubr.bf16.mxu0 0
        %1756 = vmatmul.mubr.bf16.gmra.mxu0 %v1650
        %v1757 = vpop.f32.mrf.mxu0
        %v1758 = vadd.f32 %v732, %v1757
        %v1759 = vpop.f32.mrf.mxu0
        %v1760 = vpop.f32.mrf.mxu0
        %v1761 = vadd.f32 %v732, %v1760
        %v1762 = vpop.f32.mrf.mxu0
        %1763 = vmatprep.mubr.bf16.mxu0 0
        %1764 = vmatmul.mubr.bf16.gmra.mxu0 %v1653
        %v1765 = vpop.f32.mrf.mxu0
        %v1766 = vadd.f32 %v732, %v1765
        %v1767 = vpop.f32.mrf.mxu0
        %v1768 = vpop.f32.mrf.mxu0
        %v1769 = vadd.f32 %v732, %v1768
        %v1770 = vpop.f32.mrf.mxu0
        %1771 = vmatprep.mubr.bf16.mxu0 0
        %1772 = vmatmul.mubr.bf16.gmra.mxu0 %v1656
        %v1773 = vpop.f32.mrf.mxu0
        %v1774 = vadd.f32 %v732, %v1773
        %v1775 = vpop.f32.mrf.mxu0
        %v1776 = vpop.f32.mrf.mxu0
        %v1777 = vadd.f32 %v732, %v1776
        %v1778 = vpop.f32.mrf.mxu0
        %1779 = vmatprep.mubr.bf16.mxu0 0
        %1780 = vmatmul.mubr.bf16.gmra.mxu0 %v1659
        %v1781 = vpop.f32.mrf.mxu0
        %v1782 = vadd.f32 %v732, %v1781
        %v1783 = vpop.f32.mrf.mxu0
        %v1784 = vpop.f32.mrf.mxu0
        %v1785 = vadd.f32 %v732, %v1784
        %v1786 = vpop.f32.mrf.mxu0
        %1787 = vmatprep.mubr.bf16.mxu0 0
        %1788 = vmatmul.mubr.bf16.gmra.mxu0 %v1662
        %v1789 = vpop.f32.mrf.mxu0
        %v1790 = vadd.f32 %v732, %v1789
        %v1791 = vpop.f32.mrf.mxu0
        %v1792 = vpop.f32.mrf.mxu0
        %v1793 = vadd.f32 %v732, %v1792
        %v1794 = vpop.f32.mrf.mxu0
        %1795 = vmatprep.mubr.bf16.mxu0 0
        %1796 = vmatmul.mubr.bf16.gmra.mxu0 %v1665
        %v1797 = vpop.f32.mrf.mxu0
        %v1798 = vadd.f32 %v732, %v1797
        %v1799 = vpop.f32.mrf.mxu0
        %v1800 = vpop.f32.mrf.mxu0
        %v1801 = vpop.f32.mrf.mxu0
        %1802 = vdwg.mxu0
        %vm1803 = vcmp.ge.f32.partialorder %v1702, 0.0
        %vm1804 = vcmp.ge.f32.partialorder %v1705, 0.0
        %vm1805 = vcmp.ge.f32.partialorder %v1710, 0.0
        %vm1806 = vcmp.ge.f32.partialorder %v1713, 0.0
        %vm1807 = vcmp.ge.f32.partialorder %v1718, 0.0
        %vm1808 = vcmp.ge.f32.partialorder %v1721, 0.0
        %vm1809 = vcmp.ge.f32.partialorder %v1726, 0.0
        %vm1810 = vcmp.ge.f32.partialorder %v1729, 0.0
        %vm1811 = vcmp.ge.f32.partialorder %v1734, 0.0
        %vm1812 = vcmp.ge.f32.partialorder %v1737, 0.0
        %vm1813 = vcmp.ge.f32.partialorder %v1742, 0.0
        %vm1814 = vcmp.ge.f32.partialorder %v1745, 0.0
        %vm1815 = vcmp.ge.f32.partialorder %v1750, 0.0
        %vm1816 = vcmp.ge.f32.partialorder %v1753, 0.0
        %vm1817 = vcmp.ge.f32.partialorder %v1758, 0.0
        %vm1818 = vcmp.ge.f32.partialorder %v1761, 0.0
        %vm1819 = vcmp.ge.f32.partialorder %v1766, 0.0
        %vm1820 = vcmp.ge.f32.partialorder %v1769, 0.0
        %vm1821 = vcmp.ge.f32.partialorder %v1774, 0.0
        %vm1822 = vcmp.ge.f32.partialorder %v1777, 0.0
        %vm1823 = vcmp.ge.f32.partialorder %v1782, 0.0
        %vm1824 = vcmp.ge.f32.partialorder %v1785, 0.0
        %vm1825 = vcmp.ge.f32.partialorder %v1790, 0.0
        %vm1826 = vcmp.ge.f32.partialorder %v1793, 0.0
        %vm1827 = vcmp.ge.f32.partialorder %v1798, 0.0
        %v1828 = vmul.f32 %v1011, %v1702
        %v1829 = vmul.f32 %v1011, %v1705
        %v1830 = vmul.f32 %v1011, %v1710
        %v1831 = vmul.f32 %v1011, %v1713
        %v1832 = vmul.f32 %v1011, %v1718
        %v1833 = vmul.f32 %v1011, %v1721
        %v1834 = vmul.f32 %v1011, %v1726
        %v1835 = vmul.f32 %v1011, %v1729
        %v1836 = vmul.f32 %v1011, %v1734
        %v1837 = vmul.f32 %v1011, %v1737
        %v1838 = vmul.f32 %v1011, %v1742
        %v1839 = vmul.f32 %v1011, %v1745
        %v1840 = vmul.f32 %v1011, %v1750
        %v1841 = vmul.f32 %v1011, %v1753
        %v1842 = vmul.f32 %v1011, %v1758
        %v1843 = vmul.f32 %v1011, %v1761
        %v1844 = vmul.f32 %v1011, %v1766
        %v1845 = vmul.f32 %v1011, %v1769
        %v1846 = vmul.f32 %v1011, %v1774
        %v1847 = vmul.f32 %v1011, %v1777
        %v1848 = vmul.f32 %v1011, %v1782
        %v1849 = vmul.f32 %v1011, %v1785
        %v1850 = vmul.f32 %v1011, %v1790
        %v1851 = vmul.f32 %v1011, %v1793
        %v1852 = vmul.f32 %v1011, %v1798
        %v1853 = vsel %vm1803, %v1702, %v1828
        %v1854 = vsel %vm1804, %v1705, %v1829
        %v1855 = vsel %vm1805, %v1710, %v1830
        %v1856 = vsel %vm1806, %v1713, %v1831
        %v1857 = vsel %vm1807, %v1718, %v1832
        %v1858 = vsel %vm1808, %v1721, %v1833
        %v1859 = vsel %vm1809, %v1726, %v1834
        %v1860 = vsel %vm1810, %v1729, %v1835
        %v1861 = vsel %vm1811, %v1734, %v1836
        %v1862 = vsel %vm1812, %v1737, %v1837
        %v1863 = vsel %vm1813, %v1742, %v1838
        %v1864 = vsel %vm1814, %v1745, %v1839
        %v1865 = vsel %vm1815, %v1750, %v1840
        %v1866 = vsel %vm1816, %v1753, %v1841
        %v1867 = vsel %vm1817, %v1758, %v1842
        %v1868 = vsel %vm1818, %v1761, %v1843
        %v1869 = vsel %vm1819, %v1766, %v1844
        %v1870 = vsel %vm1820, %v1769, %v1845
        %v1871 = vsel %vm1821, %v1774, %v1846
        %v1872 = vsel %vm1822, %v1777, %v1847
        %v1873 = vsel %vm1823, %v1782, %v1848
        %v1874 = vsel %vm1824, %v1785, %v1849
        %v1875 = vsel %vm1825, %v1790, %v1850
        %v1876 = vsel %vm1826, %v1793, %v1851
        %v1877 = vsel %vm1827, %v1798, %v1852
        %v1878 = vmul.f32 %v1853, %v1067
        %v1879 = vmul.f32 %v1854, %v1067
        %v1880 = vmul.f32 %v1855, %v1067
        %v1881 = vmul.f32 %v1856, %v1067
        %v1882 = vmul.f32 %v1857, %v1067
        %v1883 = vmul.f32 %v1858, %v1067
        %v1884 = vmul.f32 %v1859, %v1067
        %v1885 = vmul.f32 %v1860, %v1067
        %v1886 = vmul.f32 %v1861, %v1067
        %v1887 = vmul.f32 %v1862, %v1067
        %v1888 = vmul.f32 %v1863, %v1067
        %v1889 = vmul.f32 %v1864, %v1067
        %v1890 = vmul.f32 %v1865, %v1067
        %v1891 = vmul.f32 %v1866, %v1067
        %v1892 = vmul.f32 %v1867, %v1067
        %v1893 = vmul.f32 %v1868, %v1067
        %v1894 = vmul.f32 %v1869, %v1067
        %v1895 = vmul.f32 %v1870, %v1067
        %v1896 = vmul.f32 %v1871, %v1067
        %v1897 = vmul.f32 %v1872, %v1067
        %v1898 = vmul.f32 %v1873, %v1067
        %v1899 = vmul.f32 %v1874, %v1067
        %v1900 = vmul.f32 %v1875, %v1067
        %v1901 = vmul.f32 %v1876, %v1067
        %v1902 = vmul.f32 %v1877, %v1067
        %v1903 = vadd.f32 %v1878, %v1098
        %v1904 = vadd.f32 %v1879, %v1098
        %v1905 = vadd.f32 %v1880, %v1098
        %v1906 = vadd.f32 %v1881, %v1098
        %v1907 = vadd.f32 %v1882, %v1098
        %v1908 = vadd.f32 %v1883, %v1098
        %v1909 = vadd.f32 %v1884, %v1098
        %v1910 = vadd.f32 %v1885, %v1098
        %v1911 = vadd.f32 %v1886, %v1098
        %v1912 = vadd.f32 %v1887, %v1098
        %v1913 = vadd.f32 %v1888, %v1098
        %v1914 = vadd.f32 %v1889, %v1098
        %v1915 = vadd.f32 %v1890, %v1098
        %v1916 = vadd.f32 %v1891, %v1098
        %v1917 = vadd.f32 %v1892, %v1098
        %v1918 = vadd.f32 %v1893, %v1098
        %v1919 = vadd.f32 %v1894, %v1098
        %v1920 = vadd.f32 %v1895, %v1098
        %v1921 = vadd.f32 %v1896, %v1098
        %v1922 = vadd.f32 %v1897, %v1098
        %v1923 = vadd.f32 %v1898, %v1098
        %v1924 = vadd.f32 %v1899, %v1098
        %v1925 = vadd.f32 %v1900, %v1098
        %v1926 = vadd.f32 %v1901, %v1098
        %v1927 = vadd.f32 %v1902, %v1098
        %v1928 = vmax.f32 %v1514, %v1903
        %v1929 = vmax.f32 %v1515, %v1904
        %v1930 = vmax.f32 %v1516, %v1905
        %v1931 = vmax.f32 %v1517, %v1906
        %v1932 = vmax.f32 %v1518, %v1907
        %v1933 = vmax.f32 %v1519, %v1908
        %v1934 = vmax.f32 %v1520, %v1909
        %v1935 = vmax.f32 %v1521, %v1910
        %v1936 = vmax.f32 %v1522, %v1911
        %v1937 = vmax.f32 %v1523, %v1912
        %v1938 = vmax.f32 %v1524, %v1913
        %v1939 = vmax.f32 %v1525, %v1914
        %v1940 = vmax.f32 %v1526, %v1915
        %v1941 = vmax.f32 %v1527, %v1916
        %v1942 = vmax.f32 %v1528, %v1917
        %v1943 = vmax.f32 %v1529, %v1918
        %v1944 = vmax.f32 %v1530, %v1919
        %v1945 = vmax.f32 %v1531, %v1920
        %v1946 = vmax.f32 %v1532, %v1921
        %v1947 = vmax.f32 %v1533, %v1922
        %v1948 = vmax.f32 %v1534, %v1923
        %v1949 = vmax.f32 %v1535, %v1924
        %v1950 = vmax.f32 %v1536, %v1925
        %v1951 = vmax.f32 %v1537, %v1926
        %v1952 = vmax.f32 %v1538, %v1927
        %s1953 = scalar_lea.vmem %s662, 300 [#allocation3]
        %v1954 = vld [vmem:[%s1953] sm:$0xf]
        %v1955 = vld [vmem:[%s1953 + $0x4] sm:$0xf]
        %v1956 = vld [vmem:[%s1953 + $0x8] sm:$0xf]
        %v1957 = vld [vmem:[%s1953 + $0xc] sm:$0xf]
        %v1958 = vld [vmem:[%s1953 + $0x10] sm:$0xf]
        %v1959 = vld [vmem:[%s1953 + $0x14] sm:$0xf]
        %v1960 = vld [vmem:[%s1953 + $0x18] sm:$0xf]
        %v1961 = vld [vmem:[%s1953 + $0x1c] sm:$0xf]
        %v1962 = vld [vmem:[%s1953 + $0x20] sm:$0xf]
        %v1963 = vld [vmem:[%s1953 + $0x24] sm:$0xf]
        %v1964 = vld [vmem:[%s1953 + $0x28] sm:$0xf]
        %v1965 = vld [vmem:[%s1953 + $0x2c] sm:$0xf]
        %v1966 = vld [vmem:[%s1953 + $0x30] sm:$0xf]
        %v1967 = vld [vmem:[%s1953 + $0x34] sm:$0xf]
        %v1968 = vld [vmem:[%s1953 + $0x38] sm:$0xf]
        %v1969 = vld [vmem:[%s1953 + $0x3c] sm:$0xf]
        %v1970 = vld [vmem:[%s1953 + $0x40] sm:$0xf]
        %v1971 = vld [vmem:[%s1953 + $0x44] sm:$0xf]
        %v1972 = vld [vmem:[%s1953 + $0x48] sm:$0xf]
        %v1973 = vld [vmem:[%s1953 + $0x4c] sm:$0xf]
        %v1974 = vld [vmem:[%s1953 + $0x50] sm:$0xf]
        %v1975 = vld [vmem:[%s1953 + $0x54] sm:$0xf]
        %v1976 = vld [vmem:[%s1953 + $0x58] sm:$0xf]
        %v1977 = vld [vmem:[%s1953 + $0x5c] sm:$0xf]
        %v1978 = vld [vmem:[%s1953 + $0x60] sm:$0xf]
        %v2004 = vunpack.c.l.b16 %v1954
        %v2005 = vunpack.c.l.b16 %v1955
        %v2006 = vunpack.c.l.b16 %v1956
        %v2007 = vunpack.c.l.b16 %v1957
        %v2008 = vunpack.c.l.b16 %v1958
        %v2009 = vunpack.c.l.b16 %v1959
        %v2010 = vunpack.c.l.b16 %v1960
        %v2011 = vunpack.c.l.b16 %v1961
        %v2012 = vunpack.c.l.b16 %v1962
        %v2013 = vunpack.c.l.b16 %v1963
        %v2014 = vunpack.c.l.b16 %v1964
        %v2015 = vunpack.c.l.b16 %v1965
        %v2016 = vunpack.c.l.b16 %v1966
        %v2017 = vunpack.c.l.b16 %v1967
        %v2018 = vunpack.c.l.b16 %v1968
        %v2019 = vunpack.c.l.b16 %v1969
        %v2020 = vunpack.c.l.b16 %v1970
        %v2021 = vunpack.c.l.b16 %v1971
        %v2022 = vunpack.c.l.b16 %v1972
        %v2023 = vunpack.c.l.b16 %v1973
        %v2024 = vunpack.c.l.b16 %v1974
        %v2025 = vunpack.c.l.b16 %v1975
        %v2026 = vunpack.c.l.b16 %v1976
        %v2027 = vunpack.c.l.b16 %v1977
        %v2028 = vunpack.c.l.b16 %v1978
        %v2029 = vpack.c.b16 %v2005, %v2004
        %v2030 = vpack.c.b16 %v2007, %v2006
        %v2031 = vpack.c.b16 %v2009, %v2008
        %v2032 = vpack.c.b16 %v2011, %v2010
        %v2033 = vpack.c.b16 %v2013, %v2012
        %v2034 = vpack.c.b16 %v2015, %v2014
        %v2035 = vpack.c.b16 %v2017, %v2016
        %v2036 = vpack.c.b16 %v2019, %v2018
        %v2037 = vpack.c.b16 %v2021, %v2020
        %v2038 = vpack.c.b16 %v2023, %v2022
        %v2039 = vpack.c.b16 %v2025, %v2024
        %v2040 = vpack.c.b16 %v2027, %v2026
        %v2041 = vpack.c.b16 %v2028, %v2028
        %v2043 = vsel %vm803, %v2029, 0
        %v2046 = vsel %vm803, %v2030, 0
        %v2049 = vsel %vm803, %v2031, 0
        %v2052 = vsel %vm803, %v2032, 0
        %v2055 = vsel %vm803, %v2033, 0
        %v2058 = vsel %vm803, %v2034, 0
        %v2061 = vsel %vm803, %v2035, 0
        %v2064 = vsel %vm803, %v2036, 0
        %v2067 = vsel %vm803, %v2037, 0
        %v2070 = vsel %vm803, %v2038, 0
        %v2073 = vsel %vm803, %v2039, 0
        %v2076 = vsel %vm803, %v2040, 0
        %v2079 = vsel %vm803, %v2041, 0
        %2081 = vmatprep.subr.bf16.mxu0 0
        %2082 = vmatpush1.bf16.msra.mxu0 0
        %2083 = vmatprep.subr.bf16.mxu0 0
        %2084 = vmatpush1.bf16.msra.mxu0 0
        %2085 = vmatprep.subr.bf16.mxu0 0
        %2086 = vmatpush1.bf16.msra.mxu0 0
        %2087 = vmatprep.subr.bf16.mxu0 0
        %2088 = vmatpush1.bf16.msra.mxu0 0
        %2089 = vmatprep.subr.bf16.mxu0 0
        %2090 = vmatpush1.bf16.msra.mxu0 0
        %2091 = vmatprep.subr.bf16.mxu0 0
        %2092 = vmatpush1.bf16.msra.mxu0 0
        %2093 = vmatprep.subr.bf16.mxu0 0
        %2094 = vmatpush1.bf16.msra.mxu0 0
        %2095 = vmatprep.subr.bf16.mxu0 0
        %2096 = vmatpush1.bf16.msra.mxu0 %v801
        %2097 = vmatprep.subr.bf16.mxu0 0
        %2098 = vmatpush2.bf16.msra.mxu0 0
        %2099 = vmatprep.subr.bf16.mxu0 0
        %2100 = vmatpush2.bf16.msra.mxu0 0
        %2101 = vmatprep.subr.bf16.mxu0 0
        %2102 = vmatpush2.bf16.msra.mxu0 0
        %2103 = vmatprep.subr.bf16.mxu0 0
        %2104 = vmatpush2.bf16.msra.mxu0 0
        %2105 = vmatprep.subr.bf16.mxu0 0
        %2106 = vmatpush2.bf16.msra.mxu0 0
        %2107 = vmatprep.subr.bf16.mxu0 0
        %2108 = vmatpush2.bf16.msra.mxu0 0
        %2109 = vmatprep.subr.bf16.mxu0 0
        %2110 = vmatpush2.bf16.msra.mxu0 0
        %2111 = vmatprep.subr.bf16.mxu0 0
        %2112 = vmatpush2.bf16.msra.mxu0 0
        %2113 = vmatprep.mubr.bf16.mxu0 0
        %2114 = vmatmul.mubr.bf16.gmra.mxu0 %v2043
        %v2115 = vpop.f32.mrf.mxu0
        %v2116 = vadd.f32 %v732, %v2115
        %v2117 = vpop.f32.mrf.mxu0
        %v2118 = vpop.f32.mrf.mxu0
        %v2119 = vadd.f32 %v732, %v2118
        %v2120 = vpop.f32.mrf.mxu0
        %2121 = vmatprep.mubr.bf16.mxu0 0
        %2122 = vmatmul.mubr.bf16.gmra.mxu0 %v2046
        %v2123 = vpop.f32.mrf.mxu0
        %v2124 = vadd.f32 %v732, %v2123
        %v2125 = vpop.f32.mrf.mxu0
        %v2126 = vpop.f32.mrf.mxu0
        %v2127 = vadd.f32 %v732, %v2126
        %v2128 = vpop.f32.mrf.mxu0
        %2129 = vmatprep.mubr.bf16.mxu0 0
        %2130 = vmatmul.mubr.bf16.gmra.mxu0 %v2049
        %v2131 = vpop.f32.mrf.mxu0
        %v2132 = vadd.f32 %v732, %v2131
        %v2133 = vpop.f32.mrf.mxu0
        %v2134 = vpop.f32.mrf.mxu0
        %v2135 = vadd.f32 %v732, %v2134
        %v2136 = vpop.f32.mrf.mxu0
        %2137 = vmatprep.mubr.bf16.mxu0 0
        %2138 = vmatmul.mubr.bf16.gmra.mxu0 %v2052
        %v2139 = vpop.f32.mrf.mxu0
        %v2140 = vadd.f32 %v732, %v2139
        %v2141 = vpop.f32.mrf.mxu0
        %v2142 = vpop.f32.mrf.mxu0
        %v2143 = vadd.f32 %v732, %v2142
        %v2144 = vpop.f32.mrf.mxu0
        %2145 = vmatprep.mubr.bf16.mxu0 0
        %2146 = vmatmul.mubr.bf16.gmra.mxu0 %v2055
        %v2147 = vpop.f32.mrf.mxu0
        %v2148 = vadd.f32 %v732, %v2147
        %v2149 = vpop.f32.mrf.mxu0
        %v2150 = vpop.f32.mrf.mxu0
        %v2151 = vadd.f32 %v732, %v2150
        %v2152 = vpop.f32.mrf.mxu0
        %2153 = vmatprep.mubr.bf16.mxu0 0
        %2154 = vmatmul.mubr.bf16.gmra.mxu0 %v2058
        %v2155 = vpop.f32.mrf.mxu0
        %v2156 = vadd.f32 %v732, %v2155
        %v2157 = vpop.f32.mrf.mxu0
        %v2158 = vpop.f32.mrf.mxu0
        %v2159 = vadd.f32 %v732, %v2158
        %v2160 = vpop.f32.mrf.mxu0
        %2161 = vmatprep.mubr.bf16.mxu0 0
        %2162 = vmatmul.mubr.bf16.gmra.mxu0 %v2061
        %v2163 = vpop.f32.mrf.mxu0
        %v2164 = vadd.f32 %v732, %v2163
        %v2165 = vpop.f32.mrf.mxu0
        %v2166 = vpop.f32.mrf.mxu0
        %v2167 = vadd.f32 %v732, %v2166
        %v2168 = vpop.f32.mrf.mxu0
        %2169 = vmatprep.mubr.bf16.mxu0 0
        %2170 = vmatmul.mubr.bf16.gmra.mxu0 %v2064
        %v2171 = vpop.f32.mrf.mxu0
        %v2172 = vadd.f32 %v732, %v2171
        %v2173 = vpop.f32.mrf.mxu0
        %v2174 = vpop.f32.mrf.mxu0
        %v2175 = vadd.f32 %v732, %v2174
        %v2176 = vpop.f32.mrf.mxu0
        %2177 = vmatprep.mubr.bf16.mxu0 0
        %2178 = vmatmul.mubr.bf16.gmra.mxu0 %v2067
        %v2179 = vpop.f32.mrf.mxu0
        %v2180 = vadd.f32 %v732, %v2179
        %v2181 = vpop.f32.mrf.mxu0
        %v2182 = vpop.f32.mrf.mxu0
        %v2183 = vadd.f32 %v732, %v2182
        %v2184 = vpop.f32.mrf.mxu0
        %2185 = vmatprep.mubr.bf16.mxu0 0
        %2186 = vmatmul.mubr.bf16.gmra.mxu0 %v2070
        %v2187 = vpop.f32.mrf.mxu0
        %v2188 = vadd.f32 %v732, %v2187
        %v2189 = vpop.f32.mrf.mxu0
        %v2190 = vpop.f32.mrf.mxu0
        %v2191 = vadd.f32 %v732, %v2190
        %v2192 = vpop.f32.mrf.mxu0
        %2193 = vmatprep.mubr.bf16.mxu0 0
        %2194 = vmatmul.mubr.bf16.gmra.mxu0 %v2073
        %v2195 = vpop.f32.mrf.mxu0
        %v2196 = vadd.f32 %v732, %v2195
        %v2197 = vpop.f32.mrf.mxu0
        %v2198 = vpop.f32.mrf.mxu0
        %v2199 = vadd.f32 %v732, %v2198
        %v2200 = vpop.f32.mrf.mxu0
        %2201 = vmatprep.mubr.bf16.mxu0 0
        %2202 = vmatmul.mubr.bf16.gmra.mxu0 %v2076
        %v2203 = vpop.f32.mrf.mxu0
        %v2204 = vadd.f32 %v732, %v2203
        %v2205 = vpop.f32.mrf.mxu0
        %v2206 = vpop.f32.mrf.mxu0
        %v2207 = vadd.f32 %v732, %v2206
        %v2208 = vpop.f32.mrf.mxu0
        %2209 = vmatprep.mubr.bf16.mxu0 0
        %2210 = vmatmul.mubr.bf16.gmra.mxu0 %v2079
        %v2211 = vpop.f32.mrf.mxu0
        %v2212 = vadd.f32 %v732, %v2211
        %v2213 = vpop.f32.mrf.mxu0
        %v2214 = vpop.f32.mrf.mxu0
        %v2215 = vpop.f32.mrf.mxu0
        %2216 = vdwg.mxu0
        %vm2217 = vcmp.ge.f32.partialorder %v2116, 0.0
        %vm2218 = vcmp.ge.f32.partialorder %v2119, 0.0
        %vm2219 = vcmp.ge.f32.partialorder %v2124, 0.0
        %vm2220 = vcmp.ge.f32.partialorder %v2127, 0.0
        %vm2221 = vcmp.ge.f32.partialorder %v2132, 0.0
        %vm2222 = vcmp.ge.f32.partialorder %v2135, 0.0
        %vm2223 = vcmp.ge.f32.partialorder %v2140, 0.0
        %vm2224 = vcmp.ge.f32.partialorder %v2143, 0.0
        %vm2225 = vcmp.ge.f32.partialorder %v2148, 0.0
        %vm2226 = vcmp.ge.f32.partialorder %v2151, 0.0
        %vm2227 = vcmp.ge.f32.partialorder %v2156, 0.0
        %vm2228 = vcmp.ge.f32.partialorder %v2159, 0.0
        %vm2229 = vcmp.ge.f32.partialorder %v2164, 0.0
        %vm2230 = vcmp.ge.f32.partialorder %v2167, 0.0
        %vm2231 = vcmp.ge.f32.partialorder %v2172, 0.0
        %vm2232 = vcmp.ge.f32.partialorder %v2175, 0.0
        %vm2233 = vcmp.ge.f32.partialorder %v2180, 0.0
        %vm2234 = vcmp.ge.f32.partialorder %v2183, 0.0
        %vm2235 = vcmp.ge.f32.partialorder %v2188, 0.0
        %vm2236 = vcmp.ge.f32.partialorder %v2191, 0.0
        %vm2237 = vcmp.ge.f32.partialorder %v2196, 0.0
        %vm2238 = vcmp.ge.f32.partialorder %v2199, 0.0
        %vm2239 = vcmp.ge.f32.partialorder %v2204, 0.0
        %vm2240 = vcmp.ge.f32.partialorder %v2207, 0.0
        %vm2241 = vcmp.ge.f32.partialorder %v2212, 0.0
        %v2242 = vmul.f32 %v1011, %v2116
        %v2243 = vmul.f32 %v1011, %v2119
        %v2244 = vmul.f32 %v1011, %v2124
        %v2245 = vmul.f32 %v1011, %v2127
        %v2246 = vmul.f32 %v1011, %v2132
        %v2247 = vmul.f32 %v1011, %v2135
        %v2248 = vmul.f32 %v1011, %v2140
        %v2249 = vmul.f32 %v1011, %v2143
        %v2250 = vmul.f32 %v1011, %v2148
        %v2251 = vmul.f32 %v1011, %v2151
        %v2252 = vmul.f32 %v1011, %v2156
        %v2253 = vmul.f32 %v1011, %v2159
        %v2254 = vmul.f32 %v1011, %v2164
        %v2255 = vmul.f32 %v1011, %v2167
        %v2256 = vmul.f32 %v1011, %v2172
        %v2257 = vmul.f32 %v1011, %v2175
        %v2258 = vmul.f32 %v1011, %v2180
        %v2259 = vmul.f32 %v1011, %v2183
        %v2260 = vmul.f32 %v1011, %v2188
        %v2261 = vmul.f32 %v1011, %v2191
        %v2262 = vmul.f32 %v1011, %v2196
        %v2263 = vmul.f32 %v1011, %v2199
        %v2264 = vmul.f32 %v1011, %v2204
        %v2265 = vmul.f32 %v1011, %v2207
        %v2266 = vmul.f32 %v1011, %v2212
        %v2267 = vsel %vm2217, %v2116, %v2242
        %v2268 = vsel %vm2218, %v2119, %v2243
        %v2269 = vsel %vm2219, %v2124, %v2244
        %v2270 = vsel %vm2220, %v2127, %v2245
        %v2271 = vsel %vm2221, %v2132, %v2246
        %v2272 = vsel %vm2222, %v2135, %v2247
        %v2273 = vsel %vm2223, %v2140, %v2248
        %v2274 = vsel %vm2224, %v2143, %v2249
        %v2275 = vsel %vm2225, %v2148, %v2250
        %v2276 = vsel %vm2226, %v2151, %v2251
        %v2277 = vsel %vm2227, %v2156, %v2252
        %v2278 = vsel %vm2228, %v2159, %v2253
        %v2279 = vsel %vm2229, %v2164, %v2254
        %v2280 = vsel %vm2230, %v2167, %v2255
        %v2281 = vsel %vm2231, %v2172, %v2256
        %v2282 = vsel %vm2232, %v2175, %v2257
        %v2283 = vsel %vm2233, %v2180, %v2258
        %v2284 = vsel %vm2234, %v2183, %v2259
        %v2285 = vsel %vm2235, %v2188, %v2260
        %v2286 = vsel %vm2236, %v2191, %v2261
        %v2287 = vsel %vm2237, %v2196, %v2262
        %v2288 = vsel %vm2238, %v2199, %v2263
        %v2289 = vsel %vm2239, %v2204, %v2264
        %v2290 = vsel %vm2240, %v2207, %v2265
        %v2291 = vsel %vm2241, %v2212, %v2266
        %v2292 = vmul.f32 %v2267, %v1067
        %v2293 = vmul.f32 %v2268, %v1067
        %v2294 = vmul.f32 %v2269, %v1067
        %v2295 = vmul.f32 %v2270, %v1067
        %v2296 = vmul.f32 %v2271, %v1067
        %v2297 = vmul.f32 %v2272, %v1067
        %v2298 = vmul.f32 %v2273, %v1067
        %v2299 = vmul.f32 %v2274, %v1067
        %v2300 = vmul.f32 %v2275, %v1067
        %v2301 = vmul.f32 %v2276, %v1067
        %v2302 = vmul.f32 %v2277, %v1067
        %v2303 = vmul.f32 %v2278, %v1067
        %v2304 = vmul.f32 %v2279, %v1067
        %v2305 = vmul.f32 %v2280, %v1067
        %v2306 = vmul.f32 %v2281, %v1067
        %v2307 = vmul.f32 %v2282, %v1067
        %v2308 = vmul.f32 %v2283, %v1067
        %v2309 = vmul.f32 %v2284, %v1067
        %v2310 = vmul.f32 %v2285, %v1067
        %v2311 = vmul.f32 %v2286, %v1067
        %v2312 = vmul.f32 %v2287, %v1067
        %v2313 = vmul.f32 %v2288, %v1067
        %v2314 = vmul.f32 %v2289, %v1067
        %v2315 = vmul.f32 %v2290, %v1067
        %v2316 = vmul.f32 %v2291, %v1067
        %v2317 = vadd.f32 %v2292, %v1098
        %v2318 = vadd.f32 %v2293, %v1098
        %v2319 = vadd.f32 %v2294, %v1098
        %v2320 = vadd.f32 %v2295, %v1098
        %v2321 = vadd.f32 %v2296, %v1098
        %v2322 = vadd.f32 %v2297, %v1098
        %v2323 = vadd.f32 %v2298, %v1098
        %v2324 = vadd.f32 %v2299, %v1098
        %v2325 = vadd.f32 %v2300, %v1098
        %v2326 = vadd.f32 %v2301, %v1098
        %v2327 = vadd.f32 %v2302, %v1098
        %v2328 = vadd.f32 %v2303, %v1098
        %v2329 = vadd.f32 %v2304, %v1098
        %v2330 = vadd.f32 %v2305, %v1098
        %v2331 = vadd.f32 %v2306, %v1098
        %v2332 = vadd.f32 %v2307, %v1098
        %v2333 = vadd.f32 %v2308, %v1098
        %v2334 = vadd.f32 %v2309, %v1098
        %v2335 = vadd.f32 %v2310, %v1098
        %v2336 = vadd.f32 %v2311, %v1098
        %v2337 = vadd.f32 %v2312, %v1098
        %v2338 = vadd.f32 %v2313, %v1098
        %v2339 = vadd.f32 %v2314, %v1098
        %v2340 = vadd.f32 %v2315, %v1098
        %v2341 = vadd.f32 %v2316, %v1098
        %v2342 = vmax.f32 %v1928, %v2317
        %v2343 = vmax.f32 %v1929, %v2318
        %v2344 = vmax.f32 %v1930, %v2319
        %v2345 = vmax.f32 %v1931, %v2320
        %v2346 = vmax.f32 %v1932, %v2321
        %v2347 = vmax.f32 %v1933, %v2322
        %v2348 = vmax.f32 %v1934, %v2323
        %v2349 = vmax.f32 %v1935, %v2324
        %v2350 = vmax.f32 %v1936, %v2325
        %v2351 = vmax.f32 %v1937, %v2326
        %v2352 = vmax.f32 %v1938, %v2327
        %v2353 = vmax.f32 %v1939, %v2328
        %v2354 = vmax.f32 %v1940, %v2329
        %v2355 = vmax.f32 %v1941, %v2330
        %v2356 = vmax.f32 %v1942, %v2331
        %v2357 = vmax.f32 %v1943, %v2332
        %v2358 = vmax.f32 %v1944, %v2333
        %v2359 = vmax.f32 %v1945, %v2334
        %v2360 = vmax.f32 %v1946, %v2335
        %v2361 = vmax.f32 %v1947, %v2336
        %v2362 = vmax.f32 %v1948, %v2337
        %v2363 = vmax.f32 %v1949, %v2338
        %v2364 = vmax.f32 %v1950, %v2339
        %v2365 = vmax.f32 %v1951, %v2340
        %v2366 = vmax.f32 %v1952, %v2341
        %v2367 = vpack.c.bf16 %v2343, %v2342
        %v2368 = vpack.c.bf16 %v2345, %v2344
        %v2369 = vpack.c.bf16 %v2347, %v2346
        %v2370 = vpack.c.bf16 %v2349, %v2348
        %v2371 = vpack.c.bf16 %v2351, %v2350
        %v2372 = vpack.c.bf16 %v2353, %v2352
        %v2373 = vpack.c.bf16 %v2355, %v2354
        %v2374 = vpack.c.bf16 %v2357, %v2356
        %v2375 = vpack.c.bf16 %v2359, %v2358
        %v2376 = vpack.c.bf16 %v2361, %v2360
        %v2377 = vpack.c.bf16 %v2363, %v2362
        %v2378 = vpack.c.bf16 %v2365, %v2364
        %v2379 = vpack.c.bf16 %v2366, %v2366
        %v2393 = vunpack.c.l.b16 %v2367
        %v2394 = vunpack.c.h.b16 %v2367
        %v2395 = vunpack.c.l.b16 %v2368
        %v2396 = vunpack.c.h.b16 %v2368
        %v2397 = vunpack.c.l.b16 %v2369
        %v2398 = vunpack.c.h.b16 %v2369
        %v2399 = vunpack.c.l.b16 %v2370
        %v2400 = vunpack.c.h.b16 %v2370
        %v2401 = vunpack.c.l.b16 %v2371
        %v2402 = vunpack.c.h.b16 %v2371
        %v2403 = vunpack.c.l.b16 %v2372
        %v2404 = vunpack.c.h.b16 %v2372
        %v2405 = vunpack.c.l.b16 %v2373
        %v2406 = vunpack.c.h.b16 %v2373
        %v2407 = vunpack.c.l.b16 %v2374
        %v2408 = vunpack.c.h.b16 %v2374
        %v2409 = vunpack.c.l.b16 %v2375
        %v2410 = vunpack.c.h.b16 %v2375
        %v2411 = vunpack.c.l.b16 %v2376
        %v2412 = vunpack.c.h.b16 %v2376
        %v2413 = vunpack.c.l.b16 %v2377
        %v2414 = vunpack.c.h.b16 %v2377
        %v2415 = vunpack.c.l.b16 %v2378
        %v2416 = vunpack.c.h.b16 %v2378
        %v2417 = vunpack.c.l.b16 %v2379
        %v2418 = vpack.c.b16 %v2393, %v2393
        %v2419 = vpack.c.b16 %v2394, %v2394
        %v2420 = vpack.c.b16 %v2395, %v2395
        %v2421 = vpack.c.b16 %v2396, %v2396
        %v2422 = vpack.c.b16 %v2397, %v2397
        %v2423 = vpack.c.b16 %v2398, %v2398
        %v2424 = vpack.c.b16 %v2399, %v2399
        %v2425 = vpack.c.b16 %v2400, %v2400
        %v2426 = vpack.c.b16 %v2401, %v2401
        %v2427 = vpack.c.b16 %v2402, %v2402
        %v2428 = vpack.c.b16 %v2403, %v2403
        %v2429 = vpack.c.b16 %v2404, %v2404
        %v2430 = vpack.c.b16 %v2405, %v2405
        %v2431 = vpack.c.b16 %v2406, %v2406
        %v2432 = vpack.c.b16 %v2407, %v2407
        %v2433 = vpack.c.b16 %v2408, %v2408
        %v2434 = vpack.c.b16 %v2409, %v2409
        %v2435 = vpack.c.b16 %v2410, %v2410
        %v2436 = vpack.c.b16 %v2411, %v2411
        %v2437 = vpack.c.b16 %v2412, %v2412
        %v2438 = vpack.c.b16 %v2413, %v2413
        %v2439 = vpack.c.b16 %v2414, %v2414
        %v2440 = vpack.c.b16 %v2415, %v2415
        %v2441 = vpack.c.b16 %v2416, %v2416
        %v2442 = vpack.c.b16 %v2417, %v2417
        %vm2468 = vcmask 519168
        %2469 = vst.msk [vmem:[%s694] sm:$0xf] %vm2468, %v2418
        %2470 = vst.msk [vmem:[%s694 + $0x4] sm:$0xf] %vm2468, %v2419
        %2471 = vst.msk [vmem:[%s694 + $0x8] sm:$0xf] %vm2468, %v2420
        %2472 = vst.msk [vmem:[%s694 + $0xc] sm:$0xf] %vm2468, %v2421
        %2473 = vst.msk [vmem:[%s694 + $0x10] sm:$0xf] %vm2468, %v2422
        %2474 = vst.msk [vmem:[%s694 + $0x14] sm:$0xf] %vm2468, %v2423
        %2475 = vst.msk [vmem:[%s694 + $0x18] sm:$0xf] %vm2468, %v2424
        %2476 = vst.msk [vmem:[%s694 + $0x1c] sm:$0xf] %vm2468, %v2425
        %2477 = vst.msk [vmem:[%s694 + $0x20] sm:$0xf] %vm2468, %v2426
        %2478 = vst.msk [vmem:[%s694 + $0x24] sm:$0xf] %vm2468, %v2427
        %2479 = vst.msk [vmem:[%s694 + $0x28] sm:$0xf] %vm2468, %v2428
        %2480 = vst.msk [vmem:[%s694 + $0x2c] sm:$0xf] %vm2468, %v2429
        %2481 = vst.msk [vmem:[%s694 + $0x30] sm:$0xf] %vm2468, %v2430
        %2482 = vst.msk [vmem:[%s694 + $0x34] sm:$0xf] %vm2468, %v2431
        %2483 = vst.msk [vmem:[%s694 + $0x38] sm:$0xf] %vm2468, %v2432
        %2484 = vst.msk [vmem:[%s694 + $0x3c] sm:$0xf] %vm2468, %v2433
        %2485 = vst.msk [vmem:[%s694 + $0x40] sm:$0xf] %vm2468, %v2434
        %2486 = vst.msk [vmem:[%s694 + $0x44] sm:$0xf] %vm2468, %v2435
        %2487 = vst.msk [vmem:[%s694 + $0x48] sm:$0xf] %vm2468, %v2436
        %2488 = vst.msk [vmem:[%s694 + $0x4c] sm:$0xf] %vm2468, %v2437
        %2489 = vst.msk [vmem:[%s694 + $0x50] sm:$0xf] %vm2468, %v2438
        %2490 = vst.msk [vmem:[%s694 + $0x54] sm:$0xf] %vm2468, %v2439
        %2491 = vst.msk [vmem:[%s694 + $0x58] sm:$0xf] %vm2468, %v2440
        %2492 = vst.msk [vmem:[%s694 + $0x5c] sm:$0xf] %vm2468, %v2441
        %2493 = vst.msk [vmem:[%s694 + $0x60] sm:$0xf] %vm2468, %v2442
        %s2494 = smul.u32 25, %s19
        %p2495 = scmp.lt.s32.totalorder %s2494, 49
        %s2496 = scalar_select %p2495, %s2494, 49
        %s2497 = smul.addr %s2496, 4
        %s2498 = scalar_lea.vmem %s6, %s2497
        // Predicated region
        $region86: #{fenet3_forward.3} parent=80 // pred_check
          %p2499 = pneg %p168
        $region87: #{fenet3_forward.3} parent=80 // pred_check_branch
          %2501 = sbr.rel (%p2499) target = $region89
        $region88: #{fenet3_forward.3} parent=80 // pred_region
          %s2502 = smul.u32 25, %s19
        $region89: #{fenet3_forward.3} parent=80 // pred_fallthru
          _
      $region81: #{fenet3_forward.3} parent=5 // pred_fallthru
        _
      %p2503 = scmp.le.s32.totalorder 2, %s14
      // Predicated region
      $region90: #{fenet3_forward.3} parent=5 // pred_check
        %p2504 = pneg %p2503
      $region91: #{fenet3_forward.3} parent=5 // pred_check_branch
        %2506 = sbr.rel (%p2504) target = $region93
      $region92: #{fenet3_forward.3} parent=5 // pred_region
        %s2507 = ssub.s32 %s14, 2
        // Predicated region
        $region94: #{fenet3_forward.3} parent=92 // pred_check
          %p2508 = pneg %p174
        $region95: #{fenet3_forward.3} parent=92 // pred_check_branch
          %2510 = sbr.rel (%p2508) target = $region97
        $region96: #{fenet3_forward.3} parent=92 // pred_region
          %s2511 = smul.u32 25, %s20
          %p2512 = scmp.lt.s32.totalorder %s2511, 49
          %s2513 = scalar_select %p2512, %s2511, 49
          %s2514 = smul.addr %s2513, 4
          %s2515 = scalar_lea.vmem %s6, %s2514
        $region97: #{fenet3_forward.3} parent=92 // pred_fallthru
          _
      $region93: #{fenet3_forward.3} parent=5 // pred_fallthru
        _
    $region6: #{fenet3_forward.3} parent=1 // loop_footer
      %s18 = sadd.s32 1, %s14
    $region7: #{fenet3_forward.3} parent=1 // loop_footer_branch
      %13 = sbr.rel target = $region3
    $region8: #{fenet3_forward.3} parent=1 // loop_exit
      _

// kernel: fenet3_forward.4
$region0: #{fenet3_forward.4}
  #allocation0 [shape = 'u32[]', space=smem, size = 0x4, offset = 0x4, fixed_abs, tag = 'smem constant byte address 0x4 - core index']
  #allocation1 [shape = 'u32[144,128]{1,0:T(1,128)}', space=vmem, size = 0x12000, scoped, tag = 'internal scratch']
  #allocation2 [shape = 'f32[1,1]{1,0:T(1,128)S(1)}', space=vmem, size = 0x200, scoped, tag = 'scoped memory for fenet3_forward.4']
  #allocation3 [shape = 'f32[1,1]{1,0:T(1,128)S(1)}', space=vmem, size = 0x200, scoped, tag = 'scoped memory for fenet3_forward.4']
  %s0 = inlined_call_operand.vmem [shape: bf16[4,80,1024], index: 0, kind: input, shape index: {}]
  %s1 = inlined_call_operand.vmem [shape: bf16[1024,64], index: 1, kind: input, shape index: {}]
  %s2 = inlined_call_operand.vmem [shape: f32[1,64], index: 2, kind: input, shape index: {}]
  %s3 = inlined_call_operand.<no memory space> [shape: f32[1,1], index: 3, kind: input, shape index: {}]
  %s4 = inlined_call_operand.vmem [shape: f32[1,64], index: 4, kind: input, shape index: {}]
  %s5 = inlined_call_operand.vmem [shape: f32[1,64], index: 5, kind: input, shape index: {}]
  %s6 = inlined_call_operand.vmem [shape: f32[1,64], index: 6, kind: input, shape index: {}]
  %s7 = inlined_call_operand.<no memory space> [shape: f32[1,1], index: 7, kind: input, shape index: {}]
  %s8 = inlined_call_operand.vmem [shape: bf16[80,64], index: 8, kind: output, shape index: {}]
  %s9 = sld [smem:[#allocation0]]
  $region88: #{fenet3_forward.4} parent=0
    _
  %s11 = ssub.s32 1, %s9
  %s12 = scalar_select 0, %s11, %s9
  %v13 = vstv %s3
  %14 = vst [vmem:[#allocation2] sm:$0x1] %v13
  %v15 = vstv %s7
  %16 = vst [vmem:[#allocation3] sm:$0x1] %v15
  $region1: #{fenet3_forward.4} parent=0
    #allocation4 [shape = 'u8[655360]{0}', space=vmem, size = 0xa0000, scoped, tag = 'input window, operand 0']
    loop: start=0, step=1, limit=4
    $region2: #{fenet3_forward.4} parent=1 // loop_pre_header
      _
    $region3: #{fenet3_forward.4} parent=1 // loop_header
      %s18 = sphi 0, %s22
      %p19 = scmp.ge.s32.totalorder %s18, 4
      %s28 = sphi 0, %s30
      %s31 = sphi 0, %s28
      %s32 = sphi 0, %s31
      %s48 = sphi 0, %s32
      %s52 = sphi 0, %s52
      %s54 = sphi 0, %s52
      %s55 = sphi 0, %s54
      %s69 = sphi 0, %s55
      %s73 = sphi 0, %s73
      %s75 = sphi 0, %s73
      %s76 = sphi 0, %s75
      %s90 = sphi 0, %s76
      %s94 = sphi 0, %s94
      %s96 = sphi 0, %s94
      %s97 = sphi 0, %s96
      %s111 = sphi 0, %s97
      %s115 = sphi 0, %s115
      %s117 = sphi 0, %s115
      %s118 = sphi 0, %s117
      %s132 = sphi 0, %s118
      %s136 = sphi 0, %s136
      %s138 = sphi 0, %s136
      %s139 = sphi 0, %s138
      %s153 = sphi 0, %s139
      %s157 = sphi 0, %s157
      %s159 = sphi 0, %s157
      %s160 = sphi 0, %s159
      %s174 = sphi 0, %s160
      %s178 = sphi 0, %s178
      %s180 = sphi 0, %s178
      %s181 = sphi 0, %s180
      %s195 = sphi 0, %s181
      %s201 = sphi 0, %s203
      %s204 = sphi 0, %s201
      %s205 = sphi 0, %s204
      %s221 = sphi 0, %s205
    $region4: #{fenet3_forward.4} parent=1 // loop_header_branch
      %21 = sbr.rel (%p19) target = $region8
    $region5: #{fenet3_forward.4} parent=1 // loop_body
      %s23 = ssub.s32 %s18, 1
      %s24 = ssub.s32 %s18, 2
      %s25 = sadd.s32 %s18, 1
      %s26 = ssub.s32 %s18, %s25
      %p27 = scmp.eq.s32.totalorder %s26, 0
      %s29 = sadd.s32 %s28, 1
      %s30 = scalar_select %p27, %s28, %s29
      %p33 = pneg %p27
      %p34 = scmp.eq.s32.totalorder %s18, 1
      %p35 = por %p33, %p34
      %p36 = scmp.ne.s32.totalorder %s28, %s31
      %p37 = scmp.eq.s32.totalorder %s18, 0
      %p38 = por %p36, %p37
      %p39 = scmp.ne.s32.totalorder %s28, %s31
      %p40 = scmp.eq.s32.totalorder %s23, 1
      %p41 = por %p39, %p40
      %p42 = scmp.ne.s32.totalorder %s31, %s32
      %p43 = scmp.eq.s32.totalorder %s23, 0
      %p44 = por %p42, %p43
      %p45 = scmp.ne.s32.totalorder %s31, %s32
      %p46 = scmp.eq.s32.totalorder %s24, 1
      %p47 = por %p45, %p46
      %p49 = scmp.ne.s32.totalorder %s32, %s48
      %p50 = scmp.eq.s32.totalorder %s24, 0
      %p51 = por %p49, %p50
      %s53 = sadd.s32 %s52, 1
      %p56 = scmp.eq.s32.totalorder %s18, 1
      %p57 = scmp.ne.s32.totalorder %s52, %s54
      %p58 = scmp.eq.s32.totalorder %s18, 0
      %p59 = por %p57, %p58
      %p60 = scmp.ne.s32.totalorder %s52, %s54
      %p61 = scmp.eq.s32.totalorder %s23, 1
      %p62 = por %p60, %p61
      %p63 = scmp.ne.s32.totalorder %s54, %s55
      %p64 = scmp.eq.s32.totalorder %s23, 0
      %p65 = por %p63, %p64
      %p66 = scmp.ne.s32.totalorder %s54, %s55
      %p67 = scmp.eq.s32.totalorder %s24, 1
      %p68 = por %p66, %p67
      %p70 = scmp.ne.s32.totalorder %s55, %s69
      %p71 = scmp.eq.s32.totalorder %s24, 0
      %p72 = por %p70, %p71
      %s74 = sadd.s32 %s73, 1
      %p77 = scmp.eq.s32.totalorder %s18, 1
      %p78 = scmp.ne.s32.totalorder %s73, %s75
      %p79 = scmp.eq.s32.totalorder %s18, 0
      %p80 = por %p78, %p79
      %p81 = scmp.ne.s32.totalorder %s73, %s75
      %p82 = scmp.eq.s32.totalorder %s23, 1
      %p83 = por %p81, %p82
      %p84 = scmp.ne.s32.totalorder %s75, %s76
      %p85 = scmp.eq.s32.totalorder %s23, 0
      %p86 = por %p84, %p85
      %p87 = scmp.ne.s32.totalorder %s75, %s76
      %p88 = scmp.eq.s32.totalorder %s24, 1
      %p89 = por %p87, %p88
      %p91 = scmp.ne.s32.totalorder %s76, %s90
      %p92 = scmp.eq.s32.totalorder %s24, 0
      %p93 = por %p91, %p92
      %s95 = sadd.s32 %s94, 1
      %p98 = scmp.eq.s32.totalorder %s18, 1
      %p99 = scmp.ne.s32.totalorder %s94, %s96
      %p100 = scmp.eq.s32.totalorder %s18, 0
      %p101 = por %p99, %p100
      %p102 = scmp.ne.s32.totalorder %s94, %s96
      %p103 = scmp.eq.s32.totalorder %s23, 1
      %p104 = por %p102, %p103
      %p105 = scmp.ne.s32.totalorder %s96, %s97
      %p106 = scmp.eq.s32.totalorder %s23, 0
      %p107 = por %p105, %p106
      %p108 = scmp.ne.s32.totalorder %s96, %s97
      %p109 = scmp.eq.s32.totalorder %s24, 1
      %p110 = por %p108, %p109
      %p112 = scmp.ne.s32.totalorder %s97, %s111
      %p113 = scmp.eq.s32.totalorder %s24, 0
      %p114 = por %p112, %p113
      %s116 = sadd.s32 %s115, 1
      %p119 = scmp.eq.s32.totalorder %s18, 1
      %p120 = scmp.ne.s32.totalorder %s115, %s117
      %p121 = scmp.eq.s32.totalorder %s18, 0
      %p122 = por %p120, %p121
      %p123 = scmp.ne.s32.totalorder %s115, %s117
      %p124 = scmp.eq.s32.totalorder %s23, 1
      %p125 = por %p123, %p124
      %p126 = scmp.ne.s32.totalorder %s117, %s118
      %p127 = scmp.eq.s32.totalorder %s23, 0
      %p128 = por %p126, %p127
      %p129 = scmp.ne.s32.totalorder %s117, %s118
      %p130 = scmp.eq.s32.totalorder %s24, 1
      %p131 = por %p129, %p130
      %p133 = scmp.ne.s32.totalorder %s118, %s132
      %p134 = scmp.eq.s32.totalorder %s24, 0
      %p135 = por %p133, %p134
      %s137 = sadd.s32 %s136, 1
      %p140 = scmp.eq.s32.totalorder %s18, 1
      %p141 = scmp.ne.s32.totalorder %s136, %s138
      %p142 = scmp.eq.s32.totalorder %s18, 0
      %p143 = por %p141, %p142
      %p144 = scmp.ne.s32.totalorder %s136, %s138
      %p145 = scmp.eq.s32.totalorder %s23, 1
      %p146 = por %p144, %p145
      %p147 = scmp.ne.s32.totalorder %s138, %s139
      %p148 = scmp.eq.s32.totalorder %s23, 0
      %p149 = por %p147, %p148
      %p150 = scmp.ne.s32.totalorder %s138, %s139
      %p151 = scmp.eq.s32.totalorder %s24, 1
      %p152 = por %p150, %p151
      %p154 = scmp.ne.s32.totalorder %s139, %s153
      %p155 = scmp.eq.s32.totalorder %s24, 0
      %p156 = por %p154, %p155
      %s158 = sadd.s32 %s157, 1
      %p161 = scmp.eq.s32.totalorder %s18, 1
      %p162 = scmp.ne.s32.totalorder %s157, %s159
      %p163 = scmp.eq.s32.totalorder %s18, 0
      %p164 = por %p162, %p163
      %p165 = scmp.ne.s32.totalorder %s157, %s159
      %p166 = scmp.eq.s32.totalorder %s23, 1
      %p167 = por %p165, %p166
      %p168 = scmp.ne.s32.totalorder %s159, %s160
      %p169 = scmp.eq.s32.totalorder %s23, 0
      %p170 = por %p168, %p169
      %p171 = scmp.ne.s32.totalorder %s159, %s160
      %p172 = scmp.eq.s32.totalorder %s24, 1
      %p173 = por %p171, %p172
      %p175 = scmp.ne.s32.totalorder %s160, %s174
      %p176 = scmp.eq.s32.totalorder %s24, 0
      %p177 = por %p175, %p176
      %s179 = sadd.s32 %s178, 1
      %p182 = scmp.eq.s32.totalorder %s18, 1
      %p183 = scmp.ne.s32.totalorder %s178, %s180
      %p184 = scmp.eq.s32.totalorder %s18, 0
      %p185 = por %p183, %p184
      %p186 = scmp.ne.s32.totalorder %s178, %s180
      %p187 = scmp.eq.s32.totalorder %s23, 1
      %p188 = por %p186, %p187
      %p189 = scmp.ne.s32.totalorder %s180, %s181
      %p190 = scmp.eq.s32.totalorder %s23, 0
      %p191 = por %p189, %p190
      %p192 = scmp.ne.s32.totalorder %s180, %s181
      %p193 = scmp.eq.s32.totalorder %s24, 1
      %p194 = por %p192, %p193
      %p196 = scmp.ne.s32.totalorder %s181, %s195
      %p197 = scmp.eq.s32.totalorder %s24, 0
      %p198 = por %p196, %p197
      %s199 = ssub.s32 %s18, %s25
      %p200 = scmp.eq.s32.totalorder %s199, 0
      %s202 = sadd.s32 %s201, 1
      %s203 = scalar_select %p200, %s201, %s202
      %p206 = pneg %p200
      %p207 = scmp.eq.s32.totalorder %s18, 1
      %p208 = por %p206, %p207
      %p209 = scmp.ne.s32.totalorder %s201, %s204
      %p210 = scmp.eq.s32.totalorder %s18, 0
      %p211 = por %p209, %p210
      %p212 = scmp.ne.s32.totalorder %s201, %s204
      %p213 = scmp.eq.s32.totalorder %s23, 1
      %p214 = por %p212, %p213
      %p215 = scmp.ne.s32.totalorder %s204, %s205
      %p216 = scmp.eq.s32.totalorder %s23, 0
      %p217 = por %p215, %p216
      %p218 = scmp.ne.s32.totalorder %s204, %s205
      %p219 = scmp.eq.s32.totalorder %s24, 1
      %p220 = por %p218, %p219
      %p222 = scmp.ne.s32.totalorder %s205, %s221
      %p223 = scmp.eq.s32.totalorder %s24, 0
      %p224 = por %p222, %p223
      %p225 = scmp.le.s32.totalorder 1, %s18
      %p226 = scmp.lt.s32.totalorder %s18, 3
      %p227 = pnand %p225, %p226
      %p228 = pneg %p227
      // Predicated region
      $region9: #{fenet3_forward.4} parent=5 // pred_check
        _
      $region10: #{fenet3_forward.4} parent=5 // pred_check_branch
        %230 = sbr.rel (%p227) target = $region12
      $region11: #{fenet3_forward.4} parent=5 // pred_region
        %s231 = ssub.s32 %s18, 1
        // Predicated region
        $region13: #{fenet3_forward.4} parent=11 // pred_check
          %p232 = pneg %p65
        $region14: #{fenet3_forward.4} parent=11 // pred_check_branch
          %234 = sbr.rel (%p232) target = $region16
        $region15: #{fenet3_forward.4} parent=11 // pred_region
          _
        $region16: #{fenet3_forward.4} parent=11 // pred_fallthru
          _
        // Predicated region
        $region17: #{fenet3_forward.4} parent=11 // pred_check
          %p235 = pneg %p86
        $region18: #{fenet3_forward.4} parent=11 // pred_check_branch
          %237 = sbr.rel (%p235) target = $region20
        $region19: #{fenet3_forward.4} parent=11 // pred_region
          _
        $region20: #{fenet3_forward.4} parent=11 // pred_fallthru
          _
        // Predicated region
        $region21: #{fenet3_forward.4} parent=11 // pred_check
          %p238 = pneg %p107
        $region22: #{fenet3_forward.4} parent=11 // pred_check_branch
          %240 = sbr.rel (%p238) target = $region24
        $region23: #{fenet3_forward.4} parent=11 // pred_region
          _
        $region24: #{fenet3_forward.4} parent=11 // pred_fallthru
          _
        // Predicated region
        $region25: #{fenet3_forward.4} parent=11 // pred_check
          %p241 = pneg %p128
        $region26: #{fenet3_forward.4} parent=11 // pred_check_branch
          %243 = sbr.rel (%p241) target = $region28
        $region27: #{fenet3_forward.4} parent=11 // pred_region
          _
        $region28: #{fenet3_forward.4} parent=11 // pred_fallthru
          _
        // Predicated region
        $region29: #{fenet3_forward.4} parent=11 // pred_check
          %p244 = pneg %p149
        $region30: #{fenet3_forward.4} parent=11 // pred_check_branch
          %246 = sbr.rel (%p244) target = $region32
        $region31: #{fenet3_forward.4} parent=11 // pred_region
          _
        $region32: #{fenet3_forward.4} parent=11 // pred_fallthru
          _
        // Predicated region
        $region33: #{fenet3_forward.4} parent=11 // pred_check
          %p247 = pneg %p170
        $region34: #{fenet3_forward.4} parent=11 // pred_check_branch
          %249 = sbr.rel (%p247) target = $region36
        $region35: #{fenet3_forward.4} parent=11 // pred_region
          _
        $region36: #{fenet3_forward.4} parent=11 // pred_fallthru
          _
        // Predicated region
        $region37: #{fenet3_forward.4} parent=11 // pred_check
          %p250 = pneg %p191
        $region38: #{fenet3_forward.4} parent=11 // pred_check_branch
          %252 = sbr.rel (%p250) target = $region40
        $region39: #{fenet3_forward.4} parent=11 // pred_region
          _
        $region40: #{fenet3_forward.4} parent=11 // pred_fallthru
          _
      $region12: #{fenet3_forward.4} parent=5 // pred_fallthru
        _
      %p253 = scmp.lt.s32.totalorder %s18, 2
      // Predicated region
      $region41: #{fenet3_forward.4} parent=5 // pred_check
        %p254 = pneg %p253
      $region42: #{fenet3_forward.4} parent=5 // pred_check_branch
        %256 = sbr.rel (%p254) target = $region44
      $region43: #{fenet3_forward.4} parent=5 // pred_region
        // Predicated region
        $region45: #{fenet3_forward.4} parent=43 // pred_check
          %p257 = pneg %p38
        $region46: #{fenet3_forward.4} parent=43 // pred_check_branch
          %259 = sbr.rel (%p257) target = $region48
        $region47: #{fenet3_forward.4} parent=43 // pred_region
          %s260 = sand.u32 %s28, 1
          %s261 = sand.u32 %s28, 1
          %s262 = smul.addr %s261, 640
          %s263 = scalar_lea.vmem [#allocation4], %s262
          %s264 = smul.u32 5, %s18
          %s265 = smul.addr %s264, 8
          %s266 = smul.addr %s265, 4
          %s267 = scalar_lea.vmem %s0, %s266
          // Predicated region
          $region49: #{fenet3_forward.4} parent=47 // pred_check
            _
          $region50: #{fenet3_forward.4} parent=47 // pred_check_branch
            %269 = sbr.rel (0) target = $region52
          $region51: #{fenet3_forward.4} parent=47 // pred_region
            // Predicated region
            $region53: #{fenet3_forward.4} parent=51 // pred_check
              _
            $region54: #{fenet3_forward.4} parent=51 // pred_check_branch
              %271 = sbr.rel (0) target = $region56
            $region55: #{fenet3_forward.4} parent=51 // pred_region
              loop: start=0, step=1, limit=1
              $region57: #{fenet3_forward.4} parent=55 // loop_pre_header
                _
              $region58: #{fenet3_forward.4} parent=55 // loop_header
                %s273 = sphi 0, %s277
                %p274 = scmp.ge.s32.totalorder %s273, 1
                %s278 = sphi %s267, %s267
                %s279 = sphi %s263, %s263
              $region59: #{fenet3_forward.4} parent=55 // loop_header_branch
                %276 = sbr.rel (%p274) target = $region63
              $region60: #{fenet3_forward.4} parent=55 // loop_body
                %v280 = vld [vmem:[%s278] sm:$0xff]
                %281 = vst [vmem:[%s279] sm:$0xff] %v280
                %v282 = vld [vmem:[%s278 + $0x8] sm:$0xff]
                %283 = vst [vmem:[%s279 + $0x8] sm:$0xff] %v282
                %v284 = vld [vmem:[%s278 + $0x10] sm:$0xff]
                %285 = vst [vmem:[%s279 + $0x10] sm:$0xff] %v284
                %v286 = vld [vmem:[%s278 + $0x18] sm:$0xff]
                %287 = vst [vmem:[%s279 + $0x18] sm:$0xff] %v286
                %v288 = vld [vmem:[%s278 + $0x20] sm:$0xff]
                %289 = vst [vmem:[%s279 + $0x20] sm:$0xff] %v288
                %v290 = vld [vmem:[%s278 + $0x28] sm:$0xff]
                %291 = vst [vmem:[%s279 + $0x28] sm:$0xff] %v290
                %v292 = vld [vmem:[%s278 + $0x30] sm:$0xff]
                %293 = vst [vmem:[%s279 + $0x30] sm:$0xff] %v292
                %v294 = vld [vmem:[%s278 + $0x38] sm:$0xff]
                %295 = vst [vmem:[%s279 + $0x38] sm:$0xff] %v294
                %v296 = vld [vmem:[%s278 + $0x40] sm:$0xff]
                %297 = vst [vmem:[%s279 + $0x40] sm:$0xff] %v296
                %v298 = vld [vmem:[%s278 + $0x48] sm:$0xff]
                %299 = vst [vmem:[%s279 + $0x48] sm:$0xff] %v298
                %v300 = vld [vmem:[%s278 + $0x50] sm:$0xff]
                %301 = vst [vmem:[%s279 + $0x50] sm:$0xff] %v300
                %v302 = vld [vmem:[%s278 + $0x58] sm:$0xff]
                %303 = vst [vmem:[%s279 + $0x58] sm:$0xff] %v302
                %v304 = vld [vmem:[%s278 + $0x60] sm:$0xff]
                %305 = vst [vmem:[%s279 + $0x60] sm:$0xff] %v304
                %v306 = vld [vmem:[%s278 + $0x68] sm:$0xff]
                %307 = vst [vmem:[%s279 + $0x68] sm:$0xff] %v306
                %v308 = vld [vmem:[%s278 + $0x70] sm:$0xff]
                %309 = vst [vmem:[%s279 + $0x70] sm:$0xff] %v308
                %v310 = vld [vmem:[%s278 + $0x78] sm:$0xff]
                %311 = vst [vmem:[%s279 + $0x78] sm:$0xff] %v310
                %v312 = vld [vmem:[%s278 + $0x80] sm:$0xff]
                %313 = vst [vmem:[%s279 + $0x80] sm:$0xff] %v312
                %v314 = vld [vmem:[%s278 + $0x88] sm:$0xff]
                %315 = vst [vmem:[%s279 + $0x88] sm:$0xff] %v314
                %v316 = vld [vmem:[%s278 + $0x90] sm:$0xff]
                %317 = vst [vmem:[%s279 + $0x90] sm:$0xff] %v316
                %v318 = vld [vmem:[%s278 + $0x98] sm:$0xff]
                %319 = vst [vmem:[%s279 + $0x98] sm:$0xff] %v318
                %v320 = vld [vmem:[%s278 + $0x140] sm:$0xff]
                %321 = vst [vmem:[%s279 + $0xa0] sm:$0xff] %v320
                %v322 = vld [vmem:[%s278 + $0x148] sm:$0xff]
                %323 = vst [vmem:[%s279 + $0xa8] sm:$0xff] %v322
                %v324 = vld [vmem:[%s278 + $0x150] sm:$0xff]
                %325 = vst [vmem:[%s279 + $0xb0] sm:$0xff] %v324
                %v326 = vld [vmem:[%s278 + $0x158] sm:$0xff]
                %327 = vst [vmem:[%s279 + $0xb8] sm:$0xff] %v326
                %v328 = vld [vmem:[%s278 + $0x160] sm:$0xff]
                %329 = vst [vmem:[%s279 + $0xc0] sm:$0xff] %v328
                %v330 = vld [vmem:[%s278 + $0x168] sm:$0xff]
                %331 = vst [vmem:[%s279 + $0xc8] sm:$0xff] %v330
                %v332 = vld [vmem:[%s278 + $0x170] sm:$0xff]
                %333 = vst [vmem:[%s279 + $0xd0] sm:$0xff] %v332
                %v334 = vld [vmem:[%s278 + $0x178] sm:$0xff]
                %335 = vst [vmem:[%s279 + $0xd8] sm:$0xff] %v334
                %v336 = vld [vmem:[%s278 + $0x180] sm:$0xff]
                %337 = vst [vmem:[%s279 + $0xe0] sm:$0xff] %v336
                %v338 = vld [vmem:[%s278 + $0x188] sm:$0xff]
                %339 = vst [vmem:[%s279 + $0xe8] sm:$0xff] %v338
                %v340 = vld [vmem:[%s278 + $0x190] sm:$0xff]
                %341 = vst [vmem:[%s279 + $0xf0] sm:$0xff] %v340
                %v342 = vld [vmem:[%s278 + $0x198] sm:$0xff]
                %343 = vst [vmem:[%s279 + $0xf8] sm:$0xff] %v342
                %v344 = vld [vmem:[%s278 + $0x1a0] sm:$0xff]
                %345 = vst [vmem:[%s279 + $0x100] sm:$0xff] %v344
                %v346 = vld [vmem:[%s278 + $0x1a8] sm:$0xff]
                %347 = vst [vmem:[%s279 + $0x108] sm:$0xff] %v346
                %v348 = vld [vmem:[%s278 + $0x1b0] sm:$0xff]
                %349 = vst [vmem:[%s279 + $0x110] sm:$0xff] %v348
                %v350 = vld [vmem:[%s278 + $0x1b8] sm:$0xff]
                %351 = vst [vmem:[%s279 + $0x118] sm:$0xff] %v350
                %v352 = vld [vmem:[%s278 + $0x1c0] sm:$0xff]
                %353 = vst [vmem:[%s279 + $0x120] sm:$0xff] %v352
                %v354 = vld [vmem:[%s278 + $0x1c8] sm:$0xff]
                %355 = vst [vmem:[%s279 + $0x128] sm:$0xff] %v354
                %v356 = vld [vmem:[%s278 + $0x1d0] sm:$0xff]
                %357 = vst [vmem:[%s279 + $0x130] sm:$0xff] %v356
                %v358 = vld [vmem:[%s278 + $0x1d8] sm:$0xff]
                %359 = vst [vmem:[%s279 + $0x138] sm:$0xff] %v358
                %v360 = vld [vmem:[%s278 + $0x280] sm:$0xff]
                %361 = vst [vmem:[%s279 + $0x140] sm:$0xff] %v360
                %v362 = vld [vmem:[%s278 + $0x288] sm:$0xff]
                %363 = vst [vmem:[%s279 + $0x148] sm:$0xff] %v362
                %v364 = vld [vmem:[%s278 + $0x290] sm:$0xff]
                %365 = vst [vmem:[%s279 + $0x150] sm:$0xff] %v364
                %v366 = vld [vmem:[%s278 + $0x298] sm:$0xff]
                %367 = vst [vmem:[%s279 + $0x158] sm:$0xff] %v366
                %v368 = vld [vmem:[%s278 + $0x2a0] sm:$0xff]
                %369 = vst [vmem:[%s279 + $0x160] sm:$0xff] %v368
                %v370 = vld [vmem:[%s278 + $0x2a8] sm:$0xff]
                %371 = vst [vmem:[%s279 + $0x168] sm:$0xff] %v370
                %v372 = vld [vmem:[%s278 + $0x2b0] sm:$0xff]
                %373 = vst [vmem:[%s279 + $0x170] sm:$0xff] %v372
                %v374 = vld [vmem:[%s278 + $0x2b8] sm:$0xff]
                %375 = vst [vmem:[%s279 + $0x178] sm:$0xff] %v374
                %v376 = vld [vmem:[%s278 + $0x2c0] sm:$0xff]
                %377 = vst [vmem:[%s279 + $0x180] sm:$0xff] %v376
                %v378 = vld [vmem:[%s278 + $0x2c8] sm:$0xff]
                %379 = vst [vmem:[%s279 + $0x188] sm:$0xff] %v378
                %v380 = vld [vmem:[%s278 + $0x2d0] sm:$0xff]
                %381 = vst [vmem:[%s279 + $0x190] sm:$0xff] %v380
                %v382 = vld [vmem:[%s278 + $0x2d8] sm:$0xff]
                %383 = vst [vmem:[%s279 + $0x198] sm:$0xff] %v382
                %v384 = vld [vmem:[%s278 + $0x2e0] sm:$0xff]
                %385 = vst [vmem:[%s279 + $0x1a0] sm:$0xff] %v384
                %v386 = vld [vmem:[%s278 + $0x2e8] sm:$0xff]
                %387 = vst [vmem:[%s279 + $0x1a8] sm:$0xff] %v386
                %v388 = vld [vmem:[%s278 + $0x2f0] sm:$0xff]
                %389 = vst [vmem:[%s279 + $0x1b0] sm:$0xff] %v388
                %v390 = vld [vmem:[%s278 + $0x2f8] sm:$0xff]
                %391 = vst [vmem:[%s279 + $0x1b8] sm:$0xff] %v390
                %v392 = vld [vmem:[%s278 + $0x300] sm:$0xff]
                %393 = vst [vmem:[%s279 + $0x1c0] sm:$0xff] %v392
                %v394 = vld [vmem:[%s278 + $0x308] sm:$0xff]
                %395 = vst [vmem:[%s279 + $0x1c8] sm:$0xff] %v394
                %v396 = vld [vmem:[%s278 + $0x310] sm:$0xff]
                %397 = vst [vmem:[%s279 + $0x1d0] sm:$0xff] %v396
                %v398 = vld [vmem:[%s278 + $0x318] sm:$0xff]
                %399 = vst [vmem:[%s279 + $0x1d8] sm:$0xff] %v398
                %v400 = vld [vmem:[%s278 + $0x3c0] sm:$0xff]
                %401 = vst [vmem:[%s279 + $0x1e0] sm:$0xff] %v400
                %v402 = vld [vmem:[%s278 + $0x3c8] sm:$0xff]
                %403 = vst [vmem:[%s279 + $0x1e8] sm:$0xff] %v402
                %v404 = vld [vmem:[%s278 + $0x3d0] sm:$0xff]
                %405 = vst [vmem:[%s279 + $0x1f0] sm:$0xff] %v404
                %v406 = vld [vmem:[%s278 + $0x3d8] sm:$0xff]
                %407 = vst [vmem:[%s279 + $0x1f8] sm:$0xff] %v406
                %v408 = vld [vmem:[%s278 + $0x3e0] sm:$0xff]
                %409 = vst [vmem:[%s279 + $0x200] sm:$0xff] %v408
                %v410 = vld [vmem:[%s278 + $0x3e8] sm:$0xff]
                %411 = vst [vmem:[%s279 + $0x208] sm:$0xff] %v410
                %v412 = vld [vmem:[%s278 + $0x3f0] sm:$0xff]
                %413 = vst [vmem:[%s279 + $0x210] sm:$0xff] %v412
                %v414 = vld [vmem:[%s278 + $0x3f8] sm:$0xff]
                %415 = vst [vmem:[%s279 + $0x218] sm:$0xff] %v414
                %v416 = vld [vmem:[%s278 + $0x400] sm:$0xff]
                %417 = vst [vmem:[%s279 + $0x220] sm:$0xff] %v416
                %v418 = vld [vmem:[%s278 + $0x408] sm:$0xff]
                %419 = vst [vmem:[%s279 + $0x228] sm:$0xff] %v418
                %v420 = vld [vmem:[%s278 + $0x410] sm:$0xff]
                %421 = vst [vmem:[%s279 + $0x230] sm:$0xff] %v420
                %v422 = vld [vmem:[%s278 + $0x418] sm:$0xff]
                %423 = vst [vmem:[%s279 + $0x238] sm:$0xff] %v422
                %v424 = vld [vmem:[%s278 + $0x420] sm:$0xff]
                %425 = vst [vmem:[%s279 + $0x240] sm:$0xff] %v424
                %v426 = vld [vmem:[%s278 + $0x428] sm:$0xff]
                %427 = vst [vmem:[%s279 + $0x248] sm:$0xff] %v426
                %v428 = vld [vmem:[%s278 + $0x430] sm:$0xff]
                %429 = vst [vmem:[%s279 + $0x250] sm:$0xff] %v428
                %v430 = vld [vmem:[%s278 + $0x438] sm:$0xff]
                %431 = vst [vmem:[%s279 + $0x258] sm:$0xff] %v430
                %v432 = vld [vmem:[%s278 + $0x440] sm:$0xff]
                %433 = vst [vmem:[%s279 + $0x260] sm:$0xff] %v432
                %v434 = vld [vmem:[%s278 + $0x448] sm:$0xff]
                %435 = vst [vmem:[%s279 + $0x268] sm:$0xff] %v434
                %v436 = vld [vmem:[%s278 + $0x450] sm:$0xff]
                %437 = vst [vmem:[%s279 + $0x270] sm:$0xff] %v436
                %v438 = vld [vmem:[%s278 + $0x458] sm:$0xff]
                %439 = vst [vmem:[%s279 + $0x278] sm:$0xff] %v438
              $region61: #{fenet3_forward.4} parent=55 // loop_footer
                %s277 = sadd.s32 1, %s273
              $region62: #{fenet3_forward.4} parent=55 // loop_footer_branch
                %272 = sbr.rel target = $region58
              $region63: #{fenet3_forward.4} parent=55 // loop_exit
                _
            $region56: #{fenet3_forward.4} parent=51 // pred_fallthru
              _
            // Predicated region
            $region64: #{fenet3_forward.4} parent=51 // pred_check
              _
            $region65: #{fenet3_forward.4} parent=51 // pred_check_branch
              %441 = sbr.rel target = $region67
            $region66: #{fenet3_forward.4} parent=51 // pred_region
              _
            $region67: #{fenet3_forward.4} parent=51 // pred_fallthru
              _
          $region52: #{fenet3_forward.4} parent=47 // pred_fallthru
            _
          %442 = vnop
        $region48: #{fenet3_forward.4} parent=43 // pred_fallthru
          _
      $region44: #{fenet3_forward.4} parent=5 // pred_fallthru
        _
      %p443 = scmp.le.s32.totalorder 1, %s18
      %p444 = scmp.lt.s32.totalorder %s18, 3
      %p445 = pnand %p443, %p444
      %p446 = pneg %p445
      // Predicated region
      $region68: #{fenet3_forward.4} parent=5 // pred_check
        _
      $region69: #{fenet3_forward.4} parent=5 // pred_check_branch
        %448 = sbr.rel (%p445) target = $region71
      $region70: #{fenet3_forward.4} parent=5 // pred_region
        %s449 = ssub.s32 %s18, 1
        %s450 = sand.u32 %s31, 1
        %s451 = sand.u32 %s31, 1
        %s452 = smul.addr %s451, 640
        %s453 = scalar_lea.vmem [#allocation4], %s452
        // Predicated region
        $region72: #{fenet3_forward.4} parent=70 // pred_check
          %p454 = pneg %p44
        $region73: #{fenet3_forward.4} parent=70 // pred_check_branch
          %456 = sbr.rel (%p454) target = $region75
        $region74: #{fenet3_forward.4} parent=70 // pred_region
          _
        $region75: #{fenet3_forward.4} parent=70 // pred_fallthru
          _
        %s457 = sand.u32 %s31, 1
        %s458 = sand.u32 %s31, 1
        %s459 = smul.addr %s458, 640
        %s460 = scalar_lea.vmem [#allocation4], %s459
        %p461 = pneg %p44
        %p462 = pneg %p41
        %p463 = pneg %p65
        %p464 = pneg %p62
        %p465 = pneg %p86
        %p466 = pneg %p83
        %p467 = pneg %p107
        %p468 = pneg %p104
        %p469 = pneg %p128
        %p470 = pneg %p125
        %p471 = pneg %p149
        %p472 = pneg %p146
        %p473 = pneg %p170
        %p474 = pneg %p167
        %p475 = pneg %p191
        %p476 = pneg %p188
        %p477 = pneg %p217
        %p478 = pneg %p214
        %s479 = smul.u32 5, %s23
        %p480 = scmp.lt.s32.totalorder %s479, 9
        %s481 = scalar_select %p480, %s479, 9
        %s482 = smul.addr %s481, 4
        %s483 = scalar_lea.vmem %s8, %s482
        %s484 = smul.u32 5, %s23
        %s485 = smul.u32 5, %s23
        %p486 = scmp.lt.s32.totalorder %s485, 9
        %s487 = scalar_select %p486, %s485, 9
        %s488 = smul.addr %s487, 4
        %s489 = scalar_lea.vmem %s8, %s488
        %s490 = smul.u32 5, %s23
        %v492 = vld [vmem:[%s1] sm:$0xf]
        %v493 = vld [vmem:[%s1 + $0x4] sm:$0xf]
        %v494 = vld [vmem:[%s1 + $0x8] sm:$0xf]
        %v495 = vld [vmem:[%s1 + $0xc] sm:$0xf]
        %v496 = vld [vmem:[%s1 + $0x10] sm:$0xf]
        %v497 = vld [vmem:[%s1 + $0x14] sm:$0xf]
        %v498 = vld [vmem:[%s1 + $0x18] sm:$0xf]
        %v499 = vld [vmem:[%s1 + $0x1c] sm:$0xf]
        %v500 = vld [vmem:[%s1 + $0x20] sm:$0xf]
        %v501 = vld [vmem:[%s1 + $0x24] sm:$0xf]
        %v502 = vld [vmem:[%s1 + $0x28] sm:$0xf]
        %v503 = vld [vmem:[%s1 + $0x2c] sm:$0xf]
        %v504 = vld [vmem:[%s1 + $0x30] sm:$0xf]
        %v505 = vld [vmem:[%s1 + $0x34] sm:$0xf]
        %v506 = vld [vmem:[%s1 + $0x38] sm:$0xf]
        %v507 = vld [vmem:[%s1 + $0x3c] sm:$0xf]
        %v508 = vld [vmem:[%s1 + $0x40] sm:$0xf]
        %v509 = vld [vmem:[%s1 + $0x44] sm:$0xf]
        %v510 = vld [vmem:[%s1 + $0x48] sm:$0xf]
        %v511 = vld [vmem:[%s1 + $0x4c] sm:$0xf]
        %v512 = vld [vmem:[%s1 + $0x50] sm:$0xf]
        %v513 = vld [vmem:[%s1 + $0x54] sm:$0xf]
        %v514 = vld [vmem:[%s1 + $0x58] sm:$0xf]
        %v515 = vld [vmem:[%s1 + $0x5c] sm:$0xf]
        %v516 = vld [vmem:[%s1 + $0x60] sm:$0xf]
        %v517 = vld [vmem:[%s1 + $0x64] sm:$0xf]
        %v518 = vld [vmem:[%s1 + $0x68] sm:$0xf]
        %v519 = vld [vmem:[%s1 + $0x6c] sm:$0xf]
        %v520 = vld [vmem:[%s1 + $0x70] sm:$0xf]
        %v521 = vld [vmem:[%s1 + $0x74] sm:$0xf]
        %v522 = vld [vmem:[%s1 + $0x78] sm:$0xf]
        %v523 = vld [vmem:[%s1 + $0x7c] sm:$0xf]
        %v524 = vld [vmem:[%s1 + $0x80] sm:$0xf]
        %v525 = vld [vmem:[%s1 + $0x84] sm:$0xf]
        %v526 = vld [vmem:[%s1 + $0x88] sm:$0xf]
        %v527 = vld [vmem:[%s1 + $0x8c] sm:$0xf]
        %v528 = vld [vmem:[%s1 + $0x90] sm:$0xf]
        %v529 = vld [vmem:[%s1 + $0x94] sm:$0xf]
        %v530 = vld [vmem:[%s1 + $0x98] sm:$0xf]
        %v531 = vld [vmem:[%s1 + $0x9c] sm:$0xf]
        %v532 = vld [vmem:[%s1 + $0xa0] sm:$0xf]
        %v533 = vld [vmem:[%s1 + $0xa4] sm:$0xf]
        %v534 = vld [vmem:[%s1 + $0xa8] sm:$0xf]
        %v535 = vld [vmem:[%s1 + $0xac] sm:$0xf]
        %v536 = vld [vmem:[%s1 + $0xb0] sm:$0xf]
        %v537 = vld [vmem:[%s1 + $0xb4] sm:$0xf]
        %v538 = vld [vmem:[%s1 + $0xb8] sm:$0xf]
        %v539 = vld [vmem:[%s1 + $0xbc] sm:$0xf]
        %v540 = vld [vmem:[%s1 + $0xc0] sm:$0xf]
        %v541 = vld [vmem:[%s1 + $0xc4] sm:$0xf]
        %v542 = vld [vmem:[%s1 + $0xc8] sm:$0xf]
        %v543 = vld [vmem:[%s1 + $0xcc] sm:$0xf]
        %v544 = vld [vmem:[%s1 + $0xd0] sm:$0xf]
        %v545 = vld [vmem:[%s1 + $0xd4] sm:$0xf]
        %v546 = vld [vmem:[%s1 + $0xd8] sm:$0xf]
        %v547 = vld [vmem:[%s1 + $0xdc] sm:$0xf]
        %v548 = vld [vmem:[%s1 + $0xe0] sm:$0xf]
        %v549 = vld [vmem:[%s1 + $0xe4] sm:$0xf]
        %v550 = vld [vmem:[%s1 + $0xe8] sm:$0xf]
        %v551 = vld [vmem:[%s1 + $0xec] sm:$0xf]
        %v552 = vld [vmem:[%s1 + $0xf0] sm:$0xf]
        %v553 = vld [vmem:[%s1 + $0xf4] sm:$0xf]
        %v554 = vld [vmem:[%s1 + $0xf8] sm:$0xf]
        %v555 = vld [vmem:[%s1 + $0xfc] sm:$0xf]
        %v556 = vld [vmem:[%s1 + $0x100] sm:$0xf]
        %v557 = vld [vmem:[%s1 + $0x104] sm:$0xf]
        %v558 = vld [vmem:[%s1 + $0x108] sm:$0xf]
        %v559 = vld [vmem:[%s1 + $0x10c] sm:$0xf]
        %v560 = vld [vmem:[%s1 + $0x110] sm:$0xf]
        %v561 = vld [vmem:[%s1 + $0x114] sm:$0xf]
        %v562 = vld [vmem:[%s1 + $0x118] sm:$0xf]
        %v563 = vld [vmem:[%s1 + $0x11c] sm:$0xf]
        %v564 = vld [vmem:[%s1 + $0x120] sm:$0xf]
        %v565 = vld [vmem:[%s1 + $0x124] sm:$0xf]
        %v566 = vld [vmem:[%s1 + $0x128] sm:$0xf]
        %v567 = vld [vmem:[%s1 + $0x12c] sm:$0xf]
        %v568 = vld [vmem:[%s1 + $0x130] sm:$0xf]
        %v569 = vld [vmem:[%s1 + $0x134] sm:$0xf]
        %v570 = vld [vmem:[%s1 + $0x138] sm:$0xf]
        %v571 = vld [vmem:[%s1 + $0x13c] sm:$0xf]
        %v572 = vld [vmem:[%s1 + $0x140] sm:$0xf]
        %v573 = vld [vmem:[%s1 + $0x144] sm:$0xf]
        %v574 = vld [vmem:[%s1 + $0x148] sm:$0xf]
        %v575 = vld [vmem:[%s1 + $0x14c] sm:$0xf]
        %v576 = vld [vmem:[%s1 + $0x150] sm:$0xf]
        %v577 = vld [vmem:[%s1 + $0x154] sm:$0xf]
        %v578 = vld [vmem:[%s1 + $0x158] sm:$0xf]
        %v579 = vld [vmem:[%s1 + $0x15c] sm:$0xf]
        %v580 = vld [vmem:[%s1 + $0x160] sm:$0xf]
        %v581 = vld [vmem:[%s1 + $0x164] sm:$0xf]
        %v582 = vld [vmem:[%s1 + $0x168] sm:$0xf]
        %v583 = vld [vmem:[%s1 + $0x16c] sm:$0xf]
        %v584 = vld [vmem:[%s1 + $0x170] sm:$0xf]
        %v585 = vld [vmem:[%s1 + $0x174] sm:$0xf]
        %v586 = vld [vmem:[%s1 + $0x178] sm:$0xf]
        %v587 = vld [vmem:[%s1 + $0x17c] sm:$0xf]
        %v588 = vld [vmem:[%s1 + $0x180] sm:$0xf]
        %v589 = vld [vmem:[%s1 + $0x184] sm:$0xf]
        %v590 = vld [vmem:[%s1 + $0x188] sm:$0xf]
        %v591 = vld [vmem:[%s1 + $0x18c] sm:$0xf]
        %v592 = vld [vmem:[%s1 + $0x190] sm:$0xf]
        %v593 = vld [vmem:[%s1 + $0x194] sm:$0xf]
        %v594 = vld [vmem:[%s1 + $0x198] sm:$0xf]
        %v595 = vld [vmem:[%s1 + $0x19c] sm:$0xf]
        %v596 = vld [vmem:[%s1 + $0x1a0] sm:$0xf]
        %v597 = vld [vmem:[%s1 + $0x1a4] sm:$0xf]
        %v598 = vld [vmem:[%s1 + $0x1a8] sm:$0xf]
        %v599 = vld [vmem:[%s1 + $0x1ac] sm:$0xf]
        %v600 = vld [vmem:[%s1 + $0x1b0] sm:$0xf]
        %v601 = vld [vmem:[%s1 + $0x1b4] sm:$0xf]
        %v602 = vld [vmem:[%s1 + $0x1b8] sm:$0xf]
        %v603 = vld [vmem:[%s1 + $0x1bc] sm:$0xf]
        %v604 = vld [vmem:[%s1 + $0x1c0] sm:$0xf]
        %v605 = vld [vmem:[%s1 + $0x1c4] sm:$0xf]
        %v606 = vld [vmem:[%s1 + $0x1c8] sm:$0xf]
        %v607 = vld [vmem:[%s1 + $0x1cc] sm:$0xf]
        %v608 = vld [vmem:[%s1 + $0x1d0] sm:$0xf]
        %v609 = vld [vmem:[%s1 + $0x1d4] sm:$0xf]
        %v610 = vld [vmem:[%s1 + $0x1d8] sm:$0xf]
        %v611 = vld [vmem:[%s1 + $0x1dc] sm:$0xf]
        %v612 = vld [vmem:[%s1 + $0x1e0] sm:$0xf]
        %v613 = vld [vmem:[%s1 + $0x1e4] sm:$0xf]
        %v614 = vld [vmem:[%s1 + $0x1e8] sm:$0xf]
        %v615 = vld [vmem:[%s1 + $0x1ec] sm:$0xf]
        %v616 = vld [vmem:[%s1 + $0x1f0] sm:$0xf]
        %v617 = vld [vmem:[%s1 + $0x1f4] sm:$0xf]
        %v618 = vld [vmem:[%s1 + $0x1f8] sm:$0xf]
        %v619 = vld [vmem:[%s1 + $0x1fc] sm:$0xf]
        %v620 = vld [vmem:[%s2] sm:$0x1]
        %v621 = vld [vmem:[#allocation2] sm:$0x1]
        %v622 = vld [vmem:[%s4] sm:$0x1]
        %v623 = vld [vmem:[%s5] sm:$0x1]
        %v624 = vld [vmem:[%s453] sm:$0xff]
        %v625 = vld [vmem:[%s453 + $0x8] sm:$0xff]
        %v626 = vld [vmem:[%s453 + $0x10] sm:$0xff]
        %v627 = vld [vmem:[%s453 + $0x18] sm:$0xff]
        %v628 = vld [vmem:[%s453 + $0x20] sm:$0xff]
        %v629 = vld [vmem:[%s453 + $0x28] sm:$0xff]
        %v630 = vld [vmem:[%s453 + $0x30] sm:$0xff]
        %v631 = vld [vmem:[%s453 + $0x38] sm:$0xff]
        %v632 = vld [vmem:[%s453 + $0x40] sm:$0xff]
        %v633 = vld [vmem:[%s453 + $0x48] sm:$0xff]
        %v634 = vld [vmem:[%s453 + $0x50] sm:$0xff]
        %v635 = vld [vmem:[%s453 + $0x58] sm:$0xff]
        %v636 = vld [vmem:[%s453 + $0x60] sm:$0xff]
        %v637 = vld [vmem:[%s453 + $0x68] sm:$0xff]
        %v638 = vld [vmem:[%s453 + $0x70] sm:$0xff]
        %v639 = vld [vmem:[%s453 + $0x78] sm:$0xff]
        %v640 = vld [vmem:[%s453 + $0x80] sm:$0xff]
        %v641 = vld [vmem:[%s453 + $0x88] sm:$0xff]
        %v642 = vld [vmem:[%s453 + $0x90] sm:$0xff]
        %v643 = vld [vmem:[%s453 + $0x98] sm:$0xff]
        %v645 = vlaneseq
        %v646 = vshrl.u32 %v645, 7
        %v647 = vsub.s32 0, %v646
        %v648 = vrot.slane %v620, %v647
        %v670 = vunpack.c.l.b16 %v624
        %v671 = vunpack.c.h.b16 %v624
        %v672 = vunpack.c.l.b16 %v625
        %v673 = vunpack.c.h.b16 %v625
        %v674 = vunpack.c.l.b16 %v626
        %v675 = vunpack.c.h.b16 %v626
        %v676 = vunpack.c.l.b16 %v627
        %v677 = vunpack.c.h.b16 %v627
        %v678 = vunpack.c.l.b16 %v628
        %v679 = vunpack.c.h.b16 %v628
        %v680 = vunpack.c.l.b16 %v629
        %v681 = vunpack.c.h.b16 %v629
        %v682 = vunpack.c.l.b16 %v630
        %v683 = vunpack.c.h.b16 %v630
        %v684 = vunpack.c.l.b16 %v631
        %v685 = vunpack.c.h.b16 %v631
        %v686 = vunpack.c.l.b16 %v632
        %v687 = vunpack.c.h.b16 %v632
        %v688 = vunpack.c.l.b16 %v633
        %v689 = vunpack.c.h.b16 %v633
        %v690 = vunpack.c.l.b16 %v634
        %v691 = vunpack.c.h.b16 %v634
        %v692 = vunpack.c.l.b16 %v635
        %v693 = vunpack.c.h.b16 %v635
        %v694 = vunpack.c.l.b16 %v636
        %v695 = vunpack.c.h.b16 %v636
        %v696 = vunpack.c.l.b16 %v637
        %v697 = vunpack.c.h.b16 %v637
        %v698 = vunpack.c.l.b16 %v638
        %v699 = vunpack.c.h.b16 %v638
        %v700 = vunpack.c.l.b16 %v639
        %v701 = vunpack.c.h.b16 %v639
        %v702 = vunpack.c.l.b16 %v640
        %v703 = vunpack.c.h.b16 %v640
        %v704 = vunpack.c.l.b16 %v641
        %v705 = vunpack.c.h.b16 %v641
        %v706 = vunpack.c.l.b16 %v642
        %v707 = vunpack.c.h.b16 %v642
        %v708 = vunpack.c.l.b16 %v643
        %v709 = vunpack.c.h.b16 %v643
        %v710 = vpack.c.b16 %v678, %v670
        %v711 = vpack.c.b16 %v679, %v671
        %v712 = vpack.c.b16 %v680, %v672
        %v713 = vpack.c.b16 %v681, %v673
        %v714 = vpack.c.b16 %v682, %v674
        %v715 = vpack.c.b16 %v683, %v675
        %v716 = vpack.c.b16 %v684, %v676
        %v717 = vpack.c.b16 %v685, %v677
        %v718 = vpack.c.b16 %v694, %v686
        %v719 = vpack.c.b16 %v695, %v687
        %v720 = vpack.c.b16 %v696, %v688
        %v721 = vpack.c.b16 %v697, %v689
        %v722 = vpack.c.b16 %v698, %v690
        %v723 = vpack.c.b16 %v699, %v691
        %v724 = vpack.c.b16 %v700, %v692
        %v725 = vpack.c.b16 %v701, %v693
        %v726 = vpack.c.b16 %v702, %v702
        %v727 = vpack.c.b16 %v703, %v703
        %v728 = vpack.c.b16 %v704, %v704
        %v729 = vpack.c.b16 %v705, %v705
        %v730 = vpack.c.b16 %v706, %v706
        %v731 = vpack.c.b16 %v707, %v707
        %v732 = vpack.c.b16 %v708, %v708
        %v733 = vpack.c.b16 %v709, %v709
        %v886 = vunpack.c.l.b16 %v492
        %v887 = vunpack.c.l.b16 %v493
        %v888 = vunpack.c.l.b16 %v494
        %v889 = vunpack.c.l.b16 %v495
        %v890 = vunpack.c.l.b16 %v496
        %v891 = vunpack.c.l.b16 %v497
        %v892 = vunpack.c.l.b16 %v498
        %v893 = vunpack.c.l.b16 %v499
        %v894 = vunpack.c.l.b16 %v500
        %v895 = vunpack.c.l.b16 %v501
        %v896 = vunpack.c.l.b16 %v502
        %v897 = vunpack.c.l.b16 %v503
        %v898 = vunpack.c.l.b16 %v504
        %v899 = vunpack.c.l.b16 %v505
        %v900 = vunpack.c.l.b16 %v506
        %v901 = vunpack.c.l.b16 %v507
        %v902 = vunpack.c.l.b16 %v508
        %v903 = vunpack.c.l.b16 %v509
        %v904 = vunpack.c.l.b16 %v510
        %v905 = vunpack.c.l.b16 %v511
        %v906 = vunpack.c.l.b16 %v512
        %v907 = vunpack.c.l.b16 %v513
        %v908 = vunpack.c.l.b16 %v514
        %v909 = vunpack.c.l.b16 %v515
        %v910 = vunpack.c.l.b16 %v516
        %v911 = vunpack.c.l.b16 %v517
        %v912 = vunpack.c.l.b16 %v518
        %v913 = vunpack.c.l.b16 %v519
        %v914 = vunpack.c.l.b16 %v520
        %v915 = vunpack.c.l.b16 %v521
        %v916 = vunpack.c.l.b16 %v522
        %v917 = vunpack.c.l.b16 %v523
        %v918 = vunpack.c.l.b16 %v524
        %v919 = vunpack.c.l.b16 %v525
        %v920 = vunpack.c.l.b16 %v526
        %v921 = vunpack.c.l.b16 %v527
        %v922 = vunpack.c.l.b16 %v528
        %v923 = vunpack.c.l.b16 %v529
        %v924 = vunpack.c.l.b16 %v530
        %v925 = vunpack.c.l.b16 %v531
        %v926 = vunpack.c.l.b16 %v532
        %v927 = vunpack.c.l.b16 %v533
        %v928 = vunpack.c.l.b16 %v534
        %v929 = vunpack.c.l.b16 %v535
        %v930 = vunpack.c.l.b16 %v536
        %v931 = vunpack.c.l.b16 %v537
        %v932 = vunpack.c.l.b16 %v538
        %v933 = vunpack.c.l.b16 %v539
        %v934 = vunpack.c.l.b16 %v540
        %v935 = vunpack.c.l.b16 %v541
        %v936 = vunpack.c.l.b16 %v542
        %v937 = vunpack.c.l.b16 %v543
        %v938 = vunpack.c.l.b16 %v544
        %v939 = vunpack.c.l.b16 %v545
        %v940 = vunpack.c.l.b16 %v546
        %v941 = vunpack.c.l.b16 %v547
        %v942 = vunpack.c.l.b16 %v548
        %v943 = vunpack.c.l.b16 %v549
        %v944 = vunpack.c.l.b16 %v550
        %v945 = vunpack.c.l.b16 %v551
        %v946 = vunpack.c.l.b16 %v552
        %v947 = vunpack.c.l.b16 %v553
        %v948 = vunpack.c.l.b16 %v554
        %v949 = vunpack.c.l.b16 %v555
        %v950 = vunpack.c.l.b16 %v556
        %v951 = vunpack.c.l.b16 %v557
        %v952 = vunpack.c.l.b16 %v558
        %v953 = vunpack.c.l.b16 %v559
        %v954 = vunpack.c.l.b16 %v560
        %v955 = vunpack.c.l.b16 %v561
        %v956 = vunpack.c.l.b16 %v562
        %v957 = vunpack.c.l.b16 %v563
        %v958 = vunpack.c.l.b16 %v564
        %v959 = vunpack.c.l.b16 %v565
        %v960 = vunpack.c.l.b16 %v566
        %v961 = vunpack.c.l.b16 %v567
        %v962 = vunpack.c.l.b16 %v568
        %v963 = vunpack.c.l.b16 %v569
        %v964 = vunpack.c.l.b16 %v570
        %v965 = vunpack.c.l.b16 %v571
        %v966 = vunpack.c.l.b16 %v572
        %v967 = vunpack.c.l.b16 %v573
        %v968 = vunpack.c.l.b16 %v574
        %v969 = vunpack.c.l.b16 %v575
        %v970 = vunpack.c.l.b16 %v576
        %v971 = vunpack.c.l.b16 %v577
        %v972 = vunpack.c.l.b16 %v578
        %v973 = vunpack.c.l.b16 %v579
        %v974 = vunpack.c.l.b16 %v580
        %v975 = vunpack.c.l.b16 %v581
        %v976 = vunpack.c.l.b16 %v582
        %v977 = vunpack.c.l.b16 %v583
        %v978 = vunpack.c.l.b16 %v584
        %v979 = vunpack.c.l.b16 %v585
        %v980 = vunpack.c.l.b16 %v586
        %v981 = vunpack.c.l.b16 %v587
        %v982 = vunpack.c.l.b16 %v588
        %v983 = vunpack.c.l.b16 %v589
        %v984 = vunpack.c.l.b16 %v590
        %v985 = vunpack.c.l.b16 %v591
        %v986 = vunpack.c.l.b16 %v592
        %v987 = vunpack.c.l.b16 %v593
        %v988 = vunpack.c.l.b16 %v594
        %v989 = vunpack.c.l.b16 %v595
        %v990 = vunpack.c.l.b16 %v596
        %v991 = vunpack.c.l.b16 %v597
        %v992 = vunpack.c.l.b16 %v598
        %v993 = vunpack.c.l.b16 %v599
        %v994 = vunpack.c.l.b16 %v600
        %v995 = vunpack.c.l.b16 %v601
        %v996 = vunpack.c.l.b16 %v602
        %v997 = vunpack.c.l.b16 %v603
        %v998 = vunpack.c.l.b16 %v604
        %v999 = vunpack.c.l.b16 %v605
        %v1000 = vunpack.c.l.b16 %v606
        %v1001 = vunpack.c.l.b16 %v607
        %v1002 = vunpack.c.l.b16 %v608
        %v1003 = vunpack.c.l.b16 %v609
        %v1004 = vunpack.c.l.b16 %v610
        %v1005 = vunpack.c.l.b16 %v611
        %v1006 = vunpack.c.l.b16 %v612
        %v1007 = vunpack.c.l.b16 %v613
        %v1008 = vunpack.c.l.b16 %v614
        %v1009 = vunpack.c.l.b16 %v615
        %v1010 = vunpack.c.l.b16 %v616
        %v1011 = vunpack.c.l.b16 %v617
        %v1012 = vunpack.c.l.b16 %v618
        %v1013 = vunpack.c.l.b16 %v619
        %v1014 = vpack.c.b16 %v887, %v886
        %v1015 = vpack.c.b16 %v889, %v888
        %v1016 = vpack.c.b16 %v891, %v890
        %v1017 = vpack.c.b16 %v893, %v892
        %v1018 = vpack.c.b16 %v895, %v894
        %v1019 = vpack.c.b16 %v897, %v896
        %v1020 = vpack.c.b16 %v899, %v898
        %v1021 = vpack.c.b16 %v901, %v900
        %v1022 = vpack.c.b16 %v903, %v902
        %v1023 = vpack.c.b16 %v905, %v904
        %v1024 = vpack.c.b16 %v907, %v906
        %v1025 = vpack.c.b16 %v909, %v908
        %v1026 = vpack.c.b16 %v911, %v910
        %v1027 = vpack.c.b16 %v913, %v912
        %v1028 = vpack.c.b16 %v915, %v914
        %v1029 = vpack.c.b16 %v917, %v916
        %v1030 = vpack.c.b16 %v919, %v918
        %v1031 = vpack.c.b16 %v921, %v920
        %v1032 = vpack.c.b16 %v923, %v922
        %v1033 = vpack.c.b16 %v925, %v924
        %v1034 = vpack.c.b16 %v927, %v926
        %v1035 = vpack.c.b16 %v929, %v928
        %v1036 = vpack.c.b16 %v931, %v930
        %v1037 = vpack.c.b16 %v933, %v932
        %v1038 = vpack.c.b16 %v935, %v934
        %v1039 = vpack.c.b16 %v937, %v936
        %v1040 = vpack.c.b16 %v939, %v938
        %v1041 = vpack.c.b16 %v941, %v940
        %v1042 = vpack.c.b16 %v943, %v942
        %v1043 = vpack.c.b16 %v945, %v944
        %v1044 = vpack.c.b16 %v947, %v946
        %v1045 = vpack.c.b16 %v949, %v948
        %v1046 = vpack.c.b16 %v951, %v950
        %v1047 = vpack.c.b16 %v953, %v952
        %v1048 = vpack.c.b16 %v955, %v954
        %v1049 = vpack.c.b16 %v957, %v956
        %v1050 = vpack.c.b16 %v959, %v958
        %v1051 = vpack.c.b16 %v961, %v960
        %v1052 = vpack.c.b16 %v963, %v962
        %v1053 = vpack.c.b16 %v965, %v964
        %v1054 = vpack.c.b16 %v967, %v966
        %v1055 = vpack.c.b16 %v969, %v968
        %v1056 = vpack.c.b16 %v971, %v970
        %v1057 = vpack.c.b16 %v973, %v972
        %v1058 = vpack.c.b16 %v975, %v974
        %v1059 = vpack.c.b16 %v977, %v976
        %v1060 = vpack.c.b16 %v979, %v978
        %v1061 = vpack.c.b16 %v981, %v980
        %v1062 = vpack.c.b16 %v983, %v982
        %v1063 = vpack.c.b16 %v985, %v984
        %v1064 = vpack.c.b16 %v987, %v986
        %v1065 = vpack.c.b16 %v989, %v988
        %v1066 = vpack.c.b16 %v991, %v990
        %v1067 = vpack.c.b16 %v993, %v992
        %v1068 = vpack.c.b16 %v995, %v994
        %v1069 = vpack.c.b16 %v997, %v996
        %v1070 = vpack.c.b16 %v999, %v998
        %v1071 = vpack.c.b16 %v1001, %v1000
        %v1072 = vpack.c.b16 %v1003, %v1002
        %v1073 = vpack.c.b16 %v1005, %v1004
        %v1074 = vpack.c.b16 %v1007, %v1006
        %v1075 = vpack.c.b16 %v1009, %v1008
        %v1076 = vpack.c.b16 %v1011, %v1010
        %v1077 = vpack.c.b16 %v1013, %v1012
        %1142 = vmatprep.subr.bf16.mxu0 0
        %1143 = vmatpush1.bf16.msra.mxu0 %v1021
        %1144 = vmatprep.subr.bf16.mxu0 0
        %1145 = vmatpush1.bf16.msra.mxu0 %v1020
        %1146 = vmatprep.subr.bf16.mxu0 0
        %1147 = vmatpush1.bf16.msra.mxu0 %v1019
        %1148 = vmatprep.subr.bf16.mxu0 0
        %1149 = vmatpush1.bf16.msra.mxu0 %v1018
        %1150 = vmatprep.subr.bf16.mxu0 0
        %1151 = vmatpush1.bf16.msra.mxu0 %v1017
        %1152 = vmatprep.subr.bf16.mxu0 0
        %1153 = vmatpush1.bf16.msra.mxu0 %v1016
        %1154 = vmatprep.subr.bf16.mxu0 0
        %1155 = vmatpush1.bf16.msra.mxu0 %v1015
        %1156 = vmatprep.subr.bf16.mxu0 0
        %1157 = vmatpush1.bf16.msra.mxu0 %v1014
        %1158 = vmatprep.subr.bf16.mxu0 0
        %1159 = vmatpush2.bf16.msra.mxu0 %v1029
        %1160 = vmatprep.subr.bf16.mxu0 0
        %1161 = vmatpush2.bf16.msra.mxu0 %v1028
        %1162 = vmatprep.subr.bf16.mxu0 0
        %1163 = vmatpush2.bf16.msra.mxu0 %v1027
        %1164 = vmatprep.subr.bf16.mxu0 0
        %1165 = vmatpush2.bf16.msra.mxu0 %v1026
        %1166 = vmatprep.subr.bf16.mxu0 0
        %1167 = vmatpush2.bf16.msra.mxu0 %v1025
        %1168 = vmatprep.subr.bf16.mxu0 0
        %1169 = vmatpush2.bf16.msra.mxu0 %v1024
        %1170 = vmatprep.subr.bf16.mxu0 0
        %1171 = vmatpush2.bf16.msra.mxu0 %v1023
        %1172 = vmatprep.subr.bf16.mxu0 0
        %1173 = vmatpush2.bf16.msra.mxu0 %v1022
        %1174 = vmatprep.mubr.bf16.mxu0 %v711
        %1175 = vmatmul.mubr.bf16.gmra.mxu0 %v710
        %v1176 = vpop.f32.mrf.mxu0
        %v1177 = vadd.f32 %v648, %v1176
        %v1178 = vpop.f32.mrf.mxu0
        %v1179 = vpop.f32.mrf.mxu0
        %v1180 = vadd.f32 %v648, %v1179
        %v1181 = vpop.f32.mrf.mxu0
        %1182 = vmatprep.mubr.bf16.mxu0 %v719
        %1183 = vmatmul.mubr.bf16.gmra.mxu0 %v718
        %v1184 = vpop.f32.mrf.mxu0
        %v1185 = vadd.f32 %v648, %v1184
        %v1186 = vpop.f32.mrf.mxu0
        %v1187 = vpop.f32.mrf.mxu0
        %v1188 = vadd.f32 %v648, %v1187
        %v1189 = vpop.f32.mrf.mxu0
        %1190 = vmatprep.mubr.bf16.mxu0 %v727
        %1191 = vmatmul.mubr.bf16.gmra.mxu0 %v726
        %v1192 = vpop.f32.mrf.mxu0
        %v1193 = vadd.f32 %v648, %v1192
        %v1194 = vpop.f32.mrf.mxu0
        %v1195 = vpop.f32.mrf.mxu0
        %v1196 = vpop.f32.mrf.mxu0
        %1197 = vdwg.mxu0
        %1198 = vmatprep.subr.bf16.mxu0 0
        %1199 = vmatpush1.bf16.msra.mxu0 %v1037
        %1200 = vmatprep.subr.bf16.mxu0 0
        %1201 = vmatpush1.bf16.msra.mxu0 %v1036
        %1202 = vmatprep.subr.bf16.mxu0 0
        %1203 = vmatpush1.bf16.msra.mxu0 %v1035
        %1204 = vmatprep.subr.bf16.mxu0 0
        %1205 = vmatpush1.bf16.msra.mxu0 %v1034
        %1206 = vmatprep.subr.bf16.mxu0 0
        %1207 = vmatpush1.bf16.msra.mxu0 %v1033
        %1208 = vmatprep.subr.bf16.mxu0 0
        %1209 = vmatpush1.bf16.msra.mxu0 %v1032
        %1210 = vmatprep.subr.bf16.mxu0 0
        %1211 = vmatpush1.bf16.msra.mxu0 %v1031
        %1212 = vmatprep.subr.bf16.mxu0 0
        %1213 = vmatpush1.bf16.msra.mxu0 %v1030
        %1214 = vmatprep.subr.bf16.mxu0 0
        %1215 = vmatpush2.bf16.msra.mxu0 %v1045
        %1216 = vmatprep.subr.bf16.mxu0 0
        %1217 = vmatpush2.bf16.msra.mxu0 %v1044
        %1218 = vmatprep.subr.bf16.mxu0 0
        %1219 = vmatpush2.bf16.msra.mxu0 %v1043
        %1220 = vmatprep.subr.bf16.mxu0 0
        %1221 = vmatpush2.bf16.msra.mxu0 %v1042
        %1222 = vmatprep.subr.bf16.mxu0 0
        %1223 = vmatpush2.bf16.msra.mxu0 %v1041
        %1224 = vmatprep.subr.bf16.mxu0 0
        %1225 = vmatpush2.bf16.msra.mxu0 %v1040
        %1226 = vmatprep.subr.bf16.mxu0 0
        %1227 = vmatpush2.bf16.msra.mxu0 %v1039
        %1228 = vmatprep.subr.bf16.mxu0 0
        %1229 = vmatpush2.bf16.msra.mxu0 %v1038
        %1230 = vmatprep.mubr.bf16.mxu0 %v713
        %1231 = vmatmul.mubr.bf16.gmra.mxu0 %v712
        %v1232 = vpop.f32.mrf.mxu0
        %v1233 = vadd.f32 %v1177, %v1232
        %v1234 = vpop.f32.mrf.mxu0
        %v1235 = vpop.f32.mrf.mxu0
        %v1236 = vadd.f32 %v1180, %v1235
        %v1237 = vpop.f32.mrf.mxu0
        %1238 = vmatprep.mubr.bf16.mxu0 %v721
        %1239 = vmatmul.mubr.bf16.gmra.mxu0 %v720
        %v1240 = vpop.f32.mrf.mxu0
        %v1241 = vadd.f32 %v1185, %v1240
        %v1242 = vpop.f32.mrf.mxu0
        %v1243 = vpop.f32.mrf.mxu0
        %v1244 = vadd.f32 %v1188, %v1243
        %v1245 = vpop.f32.mrf.mxu0
        %1246 = vmatprep.mubr.bf16.mxu0 %v729
        %1247 = vmatmul.mubr.bf16.gmra.mxu0 %v728
        %v1248 = vpop.f32.mrf.mxu0
        %v1249 = vadd.f32 %v1193, %v1248
        %v1250 = vpop.f32.mrf.mxu0
        %v1251 = vpop.f32.mrf.mxu0
        %v1252 = vpop.f32.mrf.mxu0
        %1253 = vdwg.mxu0
        %1254 = vmatprep.subr.bf16.mxu0 0
        %1255 = vmatpush1.bf16.msra.mxu0 %v1053
        %1256 = vmatprep.subr.bf16.mxu0 0
        %1257 = vmatpush1.bf16.msra.mxu0 %v1052
        %1258 = vmatprep.subr.bf16.mxu0 0
        %1259 = vmatpush1.bf16.msra.mxu0 %v1051
        %1260 = vmatprep.subr.bf16.mxu0 0
        %1261 = vmatpush1.bf16.msra.mxu0 %v1050
        %1262 = vmatprep.subr.bf16.mxu0 0
        %1263 = vmatpush1.bf16.msra.mxu0 %v1049
        %1264 = vmatprep.subr.bf16.mxu0 0
        %1265 = vmatpush1.bf16.msra.mxu0 %v1048
        %1266 = vmatprep.subr.bf16.mxu0 0
        %1267 = vmatpush1.bf16.msra.mxu0 %v1047
        %1268 = vmatprep.subr.bf16.mxu0 0
        %1269 = vmatpush1.bf16.msra.mxu0 %v1046
        %1270 = vmatprep.subr.bf16.mxu0 0
        %1271 = vmatpush2.bf16.msra.mxu0 %v1061
        %1272 = vmatprep.subr.bf16.mxu0 0
        %1273 = vmatpush2.bf16.msra.mxu0 %v1060
        %1274 = vmatprep.subr.bf16.mxu0 0
        %1275 = vmatpush2.bf16.msra.mxu0 %v1059
        %1276 = vmatprep.subr.bf16.mxu0 0
        %1277 = vmatpush2.bf16.msra.mxu0 %v1058
        %1278 = vmatprep.subr.bf16.mxu0 0
        %1279 = vmatpush2.bf16.msra.mxu0 %v1057
        %1280 = vmatprep.subr.bf16.mxu0 0
        %1281 = vmatpush2.bf16.msra.mxu0 %v1056
        %1282 = vmatprep.subr.bf16.mxu0 0
        %1283 = vmatpush2.bf16.msra.mxu0 %v1055
        %1284 = vmatprep.subr.bf16.mxu0 0
        %1285 = vmatpush2.bf16.msra.mxu0 %v1054
        %1286 = vmatprep.mubr.bf16.mxu0 %v715
        %1287 = vmatmul.mubr.bf16.gmra.mxu0 %v714
        %v1288 = vpop.f32.mrf.mxu0
        %v1289 = vadd.f32 %v1233, %v1288
        %v1290 = vpop.f32.mrf.mxu0
        %v1291 = vpop.f32.mrf.mxu0
        %v1292 = vadd.f32 %v1236, %v1291
        %v1293 = vpop.f32.mrf.mxu0
        %1294 = vmatprep.mubr.bf16.mxu0 %v723
        %1295 = vmatmul.mubr.bf16.gmra.mxu0 %v722
        %v1296 = vpop.f32.mrf.mxu0
        %v1297 = vadd.f32 %v1241, %v1296
        %v1298 = vpop.f32.mrf.mxu0
        %v1299 = vpop.f32.mrf.mxu0
        %v1300 = vadd.f32 %v1244, %v1299
        %v1301 = vpop.f32.mrf.mxu0
        %1302 = vmatprep.mubr.bf16.mxu0 %v731
        %1303 = vmatmul.mubr.bf16.gmra.mxu0 %v730
        %v1304 = vpop.f32.mrf.mxu0
        %v1305 = vadd.f32 %v1249, %v1304
        %v1306 = vpop.f32.mrf.mxu0
        %v1307 = vpop.f32.mrf.mxu0
        %v1308 = vpop.f32.mrf.mxu0
        %1309 = vdwg.mxu0
        %1310 = vmatprep.subr.bf16.mxu0 0
        %1311 = vmatpush1.bf16.msra.mxu0 %v1069
        %1312 = vmatprep.subr.bf16.mxu0 0
        %1313 = vmatpush1.bf16.msra.mxu0 %v1068
        %1314 = vmatprep.subr.bf16.mxu0 0
        %1315 = vmatpush1.bf16.msra.mxu0 %v1067
        %1316 = vmatprep.subr.bf16.mxu0 0
        %1317 = vmatpush1.bf16.msra.mxu0 %v1066
        %1318 = vmatprep.subr.bf16.mxu0 0
        %1319 = vmatpush1.bf16.msra.mxu0 %v1065
        %1320 = vmatprep.subr.bf16.mxu0 0
        %1321 = vmatpush1.bf16.msra.mxu0 %v1064
        %1322 = vmatprep.subr.bf16.mxu0 0
        %1323 = vmatpush1.bf16.msra.mxu0 %v1063
        %1324 = vmatprep.subr.bf16.mxu0 0
        %1325 = vmatpush1.bf16.msra.mxu0 %v1062
        %1326 = vmatprep.subr.bf16.mxu0 0
        %1327 = vmatpush2.bf16.msra.mxu0 %v1077
        %1328 = vmatprep.subr.bf16.mxu0 0
        %1329 = vmatpush2.bf16.msra.mxu0 %v1076
        %1330 = vmatprep.subr.bf16.mxu0 0
        %1331 = vmatpush2.bf16.msra.mxu0 %v1075
        %1332 = vmatprep.subr.bf16.mxu0 0
        %1333 = vmatpush2.bf16.msra.mxu0 %v1074
        %1334 = vmatprep.subr.bf16.mxu0 0
        %1335 = vmatpush2.bf16.msra.mxu0 %v1073
        %1336 = vmatprep.subr.bf16.mxu0 0
        %1337 = vmatpush2.bf16.msra.mxu0 %v1072
        %1338 = vmatprep.subr.bf16.mxu0 0
        %1339 = vmatpush2.bf16.msra.mxu0 %v1071
        %1340 = vmatprep.subr.bf16.mxu0 0
        %1341 = vmatpush2.bf16.msra.mxu0 %v1070
        %1342 = vmatprep.mubr.bf16.mxu0 %v717
        %1343 = vmatmul.mubr.bf16.gmra.mxu0 %v716
        %v1344 = vpop.f32.mrf.mxu0
        %v1345 = vadd.f32 %v1289, %v1344
        %v1346 = vpop.f32.mrf.mxu0
        %v1347 = vpop.f32.mrf.mxu0
        %v1348 = vadd.f32 %v1292, %v1347
        %v1349 = vpop.f32.mrf.mxu0
        %1350 = vmatprep.mubr.bf16.mxu0 %v725
        %1351 = vmatmul.mubr.bf16.gmra.mxu0 %v724
        %v1352 = vpop.f32.mrf.mxu0
        %v1353 = vadd.f32 %v1297, %v1352
        %v1354 = vpop.f32.mrf.mxu0
        %v1355 = vpop.f32.mrf.mxu0
        %v1356 = vadd.f32 %v1300, %v1355
        %v1357 = vpop.f32.mrf.mxu0
        %1358 = vmatprep.mubr.bf16.mxu0 %v733
        %1359 = vmatmul.mubr.bf16.gmra.mxu0 %v732
        %v1360 = vpop.f32.mrf.mxu0
        %v1361 = vadd.f32 %v1305, %v1360
        %v1362 = vpop.f32.mrf.mxu0
        %v1363 = vpop.f32.mrf.mxu0
        %v1364 = vpop.f32.mrf.mxu0
        %1365 = vdwg.mxu0
        %vm1366 = vcmp.ge.f32.partialorder %v1345, 0.0
        %vm1367 = vcmp.ge.f32.partialorder %v1348, 0.0
        %vm1368 = vcmp.ge.f32.partialorder %v1353, 0.0
        %vm1369 = vcmp.ge.f32.partialorder %v1356, 0.0
        %vm1370 = vcmp.ge.f32.partialorder %v1361, 0.0
        %v1372 = vlaneseq
        %v1373 = vshrl.u32 %v1372, 7
        %v1374 = vsub.s32 0, %v1373
        %v1375 = vrot.slane %v621, %v1374
        %1376 = vset.pattern.permute.xlu0 0
        %1377 = vperm.xlu0 %1376, %v1375
        %v1378 = vpop.permute.xlu0 %1377
        %v1380 = vmul.f32 %v1378, %v1345
        %v1381 = vmul.f32 %v1378, %v1348
        %v1382 = vmul.f32 %v1378, %v1353
        %v1383 = vmul.f32 %v1378, %v1356
        %v1384 = vmul.f32 %v1378, %v1361
        %v1385 = vsel %vm1366, %v1345, %v1380
        %v1386 = vsel %vm1367, %v1348, %v1381
        %v1387 = vsel %vm1368, %v1353, %v1382
        %v1388 = vsel %vm1369, %v1356, %v1383
        %v1389 = vsel %vm1370, %v1361, %v1384
        %v1391 = vlaneseq
        %v1392 = vshrl.u32 %v1391, 7
        %v1393 = vsub.s32 0, %v1392
        %v1394 = vrot.slane %v622, %v1393
        %v1396 = vmul.f32 %v1385, %v1394
        %v1397 = vmul.f32 %v1386, %v1394
        %v1398 = vmul.f32 %v1387, %v1394
        %v1399 = vmul.f32 %v1388, %v1394
        %v1400 = vmul.f32 %v1389, %v1394
        %v1402 = vlaneseq
        %v1403 = vshrl.u32 %v1402, 7
        %v1404 = vsub.s32 0, %v1403
        %v1405 = vrot.slane %v623, %v1404
        %v1407 = vadd.f32 %v1396, %v1405
        %v1408 = vadd.f32 %v1397, %v1405
        %v1409 = vadd.f32 %v1398, %v1405
        %v1410 = vadd.f32 %v1399, %v1405
        %v1411 = vadd.f32 %v1400, %v1405
        %s1412 = scalar_lea.vmem %s453, 160 [#allocation4]
        %v1413 = vld [vmem:[%s1412] sm:$0xff]
        %v1414 = vld [vmem:[%s1412 + $0x8] sm:$0xff]
        %v1415 = vld [vmem:[%s1412 + $0x10] sm:$0xff]
        %v1416 = vld [vmem:[%s1412 + $0x18] sm:$0xff]
        %v1417 = vld [vmem:[%s1412 + $0x20] sm:$0xff]
        %v1418 = vld [vmem:[%s1412 + $0x28] sm:$0xff]
        %v1419 = vld [vmem:[%s1412 + $0x30] sm:$0xff]
        %v1420 = vld [vmem:[%s1412 + $0x38] sm:$0xff]
        %v1421 = vld [vmem:[%s1412 + $0x40] sm:$0xff]
        %v1422 = vld [vmem:[%s1412 + $0x48] sm:$0xff]
        %v1423 = vld [vmem:[%s1412 + $0x50] sm:$0xff]
        %v1424 = vld [vmem:[%s1412 + $0x58] sm:$0xff]
        %v1425 = vld [vmem:[%s1412 + $0x60] sm:$0xff]
        %v1426 = vld [vmem:[%s1412 + $0x68] sm:$0xff]
        %v1427 = vld [vmem:[%s1412 + $0x70] sm:$0xff]
        %v1428 = vld [vmem:[%s1412 + $0x78] sm:$0xff]
        %v1429 = vld [vmem:[%s1412 + $0x80] sm:$0xff]
        %v1430 = vld [vmem:[%s1412 + $0x88] sm:$0xff]
        %v1431 = vld [vmem:[%s1412 + $0x90] sm:$0xff]
        %v1432 = vld [vmem:[%s1412 + $0x98] sm:$0xff]
        %v1453 = vunpack.c.l.b16 %v1413
        %v1454 = vunpack.c.h.b16 %v1413
        %v1455 = vunpack.c.l.b16 %v1414
        %v1456 = vunpack.c.h.b16 %v1414
        %v1457 = vunpack.c.l.b16 %v1415
        %v1458 = vunpack.c.h.b16 %v1415
        %v1459 = vunpack.c.l.b16 %v1416
        %v1460 = vunpack.c.h.b16 %v1416
        %v1461 = vunpack.c.l.b16 %v1417
        %v1462 = vunpack.c.h.b16 %v1417
        %v1463 = vunpack.c.l.b16 %v1418
        %v1464 = vunpack.c.h.b16 %v1418
        %v1465 = vunpack.c.l.b16 %v1419
        %v1466 = vunpack.c.h.b16 %v1419
        %v1467 = vunpack.c.l.b16 %v1420
        %v1468 = vunpack.c.h.b16 %v1420
        %v1469 = vunpack.c.l.b16 %v1421
        %v1470 = vunpack.c.h.b16 %v1421
        %v1471 = vunpack.c.l.b16 %v1422
        %v1472 = vunpack.c.h.b16 %v1422
        %v1473 = vunpack.c.l.b16 %v1423
        %v1474 = vunpack.c.h.b16 %v1423
        %v1475 = vunpack.c.l.b16 %v1424
        %v1476 = vunpack.c.h.b16 %v1424
        %v1477 = vunpack.c.l.b16 %v1425
        %v1478 = vunpack.c.h.b16 %v1425
        %v1479 = vunpack.c.l.b16 %v1426
        %v1480 = vunpack.c.h.b16 %v1426
        %v1481 = vunpack.c.l.b16 %v1427
        %v1482 = vunpack.c.h.b16 %v1427
        %v1483 = vunpack.c.l.b16 %v1428
        %v1484 = vunpack.c.h.b16 %v1428
        %v1485 = vunpack.c.l.b16 %v1429
        %v1486 = vunpack.c.h.b16 %v1429
        %v1487 = vunpack.c.l.b16 %v1430
        %v1488 = vunpack.c.h.b16 %v1430
        %v1489 = vunpack.c.l.b16 %v1431
        %v1490 = vunpack.c.h.b16 %v1431
        %v1491 = vunpack.c.l.b16 %v1432
        %v1492 = vunpack.c.h.b16 %v1432
        %v1493 = vpack.c.b16 %v1461, %v1453
        %v1494 = vpack.c.b16 %v1462, %v1454
        %v1495 = vpack.c.b16 %v1463, %v1455
        %v1496 = vpack.c.b16 %v1464, %v1456
        %v1497 = vpack.c.b16 %v1465, %v1457
        %v1498 = vpack.c.b16 %v1466, %v1458
        %v1499 = vpack.c.b16 %v1467, %v1459
        %v1500 = vpack.c.b16 %v1468, %v1460
        %v1501 = vpack.c.b16 %v1477, %v1469
        %v1502 = vpack.c.b16 %v1478, %v1470
        %v1503 = vpack.c.b16 %v1479, %v1471
        %v1504 = vpack.c.b16 %v1480, %v1472
        %v1505 = vpack.c.b16 %v1481, %v1473
        %v1506 = vpack.c.b16 %v1482, %v1474
        %v1507 = vpack.c.b16 %v1483, %v1475
        %v1508 = vpack.c.b16 %v1484, %v1476
        %v1509 = vpack.c.b16 %v1485, %v1485
        %v1510 = vpack.c.b16 %v1486, %v1486
        %v1511 = vpack.c.b16 %v1487, %v1487
        %v1512 = vpack.c.b16 %v1488, %v1488
        %v1513 = vpack.c.b16 %v1489, %v1489
        %v1514 = vpack.c.b16 %v1490, %v1490
        %v1515 = vpack.c.b16 %v1491, %v1491
        %v1516 = vpack.c.b16 %v1492, %v1492
        %1541 = vmatprep.subr.bf16.mxu0 0
        %1542 = vmatpush1.bf16.msra.mxu0 %v1021
        %1543 = vmatprep.subr.bf16.mxu0 0
        %1544 = vmatpush1.bf16.msra.mxu0 %v1020
        %1545 = vmatprep.subr.bf16.mxu0 0
        %1546 = vmatpush1.bf16.msra.mxu0 %v1019
        %1547 = vmatprep.subr.bf16.mxu0 0
        %1548 = vmatpush1.bf16.msra.mxu0 %v1018
        %1549 = vmatprep.subr.bf16.mxu0 0
        %1550 = vmatpush1.bf16.msra.mxu0 %v1017
        %1551 = vmatprep.subr.bf16.mxu0 0
        %1552 = vmatpush1.bf16.msra.mxu0 %v1016
        %1553 = vmatprep.subr.bf16.mxu0 0
        %1554 = vmatpush1.bf16.msra.mxu0 %v1015
        %1555 = vmatprep.subr.bf16.mxu0 0
        %1556 = vmatpush1.bf16.msra.mxu0 %v1014
        %1557 = vmatprep.subr.bf16.mxu0 0
        %1558 = vmatpush2.bf16.msra.mxu0 %v1029
        %1559 = vmatprep.subr.bf16.mxu0 0
        %1560 = vmatpush2.bf16.msra.mxu0 %v1028
        %1561 = vmatprep.subr.bf16.mxu0 0
        %1562 = vmatpush2.bf16.msra.mxu0 %v1027
        %1563 = vmatprep.subr.bf16.mxu0 0
        %1564 = vmatpush2.bf16.msra.mxu0 %v1026
        %1565 = vmatprep.subr.bf16.mxu0 0
        %1566 = vmatpush2.bf16.msra.mxu0 %v1025
        %1567 = vmatprep.subr.bf16.mxu0 0
        %1568 = vmatpush2.bf16.msra.mxu0 %v1024
        %1569 = vmatprep.subr.bf16.mxu0 0
        %1570 = vmatpush2.bf16.msra.mxu0 %v1023
        %1571 = vmatprep.subr.bf16.mxu0 0
        %1572 = vmatpush2.bf16.msra.mxu0 %v1022
        %1573 = vmatprep.mubr.bf16.mxu0 %v1494
        %1574 = vmatmul.mubr.bf16.gmra.mxu0 %v1493
        %v1575 = vpop.f32.mrf.mxu0
        %v1576 = vadd.f32 %v648, %v1575
        %v1577 = vpop.f32.mrf.mxu0
        %v1578 = vpop.f32.mrf.mxu0
        %v1579 = vadd.f32 %v648, %v1578
        %v1580 = vpop.f32.mrf.mxu0
        %1581 = vmatprep.mubr.bf16.mxu0 %v1502
        %1582 = vmatmul.mubr.bf16.gmra.mxu0 %v1501
        %v1583 = vpop.f32.mrf.mxu0
        %v1584 = vadd.f32 %v648, %v1583
        %v1585 = vpop.f32.mrf.mxu0
        %v1586 = vpop.f32.mrf.mxu0
        %v1587 = vadd.f32 %v648, %v1586
        %v1588 = vpop.f32.mrf.mxu0
        %1589 = vmatprep.mubr.bf16.mxu0 %v1510
        %1590 = vmatmul.mubr.bf16.gmra.mxu0 %v1509
        %v1591 = vpop.f32.mrf.mxu0
        %v1592 = vadd.f32 %v648, %v1591
        %v1593 = vpop.f32.mrf.mxu0
        %v1594 = vpop.f32.mrf.mxu0
        %v1595 = vpop.f32.mrf.mxu0
        %1596 = vdwg.mxu0
        %1597 = vmatprep.subr.bf16.mxu0 0
        %1598 = vmatpush1.bf16.msra.mxu0 %v1037
        %1599 = vmatprep.subr.bf16.mxu0 0
        %1600 = vmatpush1.bf16.msra.mxu0 %v1036
        %1601 = vmatprep.subr.bf16.mxu0 0
        %1602 = vmatpush1.bf16.msra.mxu0 %v1035
        %1603 = vmatprep.subr.bf16.mxu0 0
        %1604 = vmatpush1.bf16.msra.mxu0 %v1034
        %1605 = vmatprep.subr.bf16.mxu0 0
        %1606 = vmatpush1.bf16.msra.mxu0 %v1033
        %1607 = vmatprep.subr.bf16.mxu0 0
        %1608 = vmatpush1.bf16.msra.mxu0 %v1032
        %1609 = vmatprep.subr.bf16.mxu0 0
        %1610 = vmatpush1.bf16.msra.mxu0 %v1031
        %1611 = vmatprep.subr.bf16.mxu0 0
        %1612 = vmatpush1.bf16.msra.mxu0 %v1030
        %1613 = vmatprep.subr.bf16.mxu0 0
        %1614 = vmatpush2.bf16.msra.mxu0 %v1045
        %1615 = vmatprep.subr.bf16.mxu0 0
        %1616 = vmatpush2.bf16.msra.mxu0 %v1044
        %1617 = vmatprep.subr.bf16.mxu0 0
        %1618 = vmatpush2.bf16.msra.mxu0 %v1043
        %1619 = vmatprep.subr.bf16.mxu0 0
        %1620 = vmatpush2.bf16.msra.mxu0 %v1042
        %1621 = vmatprep.subr.bf16.mxu0 0
        %1622 = vmatpush2.bf16.msra.mxu0 %v1041
        %1623 = vmatprep.subr.bf16.mxu0 0
        %1624 = vmatpush2.bf16.msra.mxu0 %v1040
        %1625 = vmatprep.subr.bf16.mxu0 0
        %1626 = vmatpush2.bf16.msra.mxu0 %v1039
        %1627 = vmatprep.subr.bf16.mxu0 0
        %1628 = vmatpush2.bf16.msra.mxu0 %v1038
        %1629 = vmatprep.mubr.bf16.mxu0 %v1496
        %1630 = vmatmul.mubr.bf16.gmra.mxu0 %v1495
        %v1631 = vpop.f32.mrf.mxu0
        %v1632 = vadd.f32 %v1576, %v1631
        %v1633 = vpop.f32.mrf.mxu0
        %v1634 = vpop.f32.mrf.mxu0
        %v1635 = vadd.f32 %v1579, %v1634
        %v1636 = vpop.f32.mrf.mxu0
        %1637 = vmatprep.mubr.bf16.mxu0 %v1504
        %1638 = vmatmul.mubr.bf16.gmra.mxu0 %v1503
        %v1639 = vpop.f32.mrf.mxu0
        %v1640 = vadd.f32 %v1584, %v1639
        %v1641 = vpop.f32.mrf.mxu0
        %v1642 = vpop.f32.mrf.mxu0
        %v1643 = vadd.f32 %v1587, %v1642
        %v1644 = vpop.f32.mrf.mxu0
        %1645 = vmatprep.mubr.bf16.mxu0 %v1512
        %1646 = vmatmul.mubr.bf16.gmra.mxu0 %v1511
        %v1647 = vpop.f32.mrf.mxu0
        %v1648 = vadd.f32 %v1592, %v1647
        %v1649 = vpop.f32.mrf.mxu0
        %v1650 = vpop.f32.mrf.mxu0
        %v1651 = vpop.f32.mrf.mxu0
        %1652 = vdwg.mxu0
        %1653 = vmatprep.subr.bf16.mxu0 0
        %1654 = vmatpush1.bf16.msra.mxu0 %v1053
        %1655 = vmatprep.subr.bf16.mxu0 0
        %1656 = vmatpush1.bf16.msra.mxu0 %v1052
        %1657 = vmatprep.subr.bf16.mxu0 0
        %1658 = vmatpush1.bf16.msra.mxu0 %v1051
        %1659 = vmatprep.subr.bf16.mxu0 0
        %1660 = vmatpush1.bf16.msra.mxu0 %v1050
        %1661 = vmatprep.subr.bf16.mxu0 0
        %1662 = vmatpush1.bf16.msra.mxu0 %v1049
        %1663 = vmatprep.subr.bf16.mxu0 0
        %1664 = vmatpush1.bf16.msra.mxu0 %v1048
        %1665 = vmatprep.subr.bf16.mxu0 0
        %1666 = vmatpush1.bf16.msra.mxu0 %v1047
        %1667 = vmatprep.subr.bf16.mxu0 0
        %1668 = vmatpush1.bf16.msra.mxu0 %v1046
        %1669 = vmatprep.subr.bf16.mxu0 0
        %1670 = vmatpush2.bf16.msra.mxu0 %v1061
        %1671 = vmatprep.subr.bf16.mxu0 0
        %1672 = vmatpush2.bf16.msra.mxu0 %v1060
        %1673 = vmatprep.subr.bf16.mxu0 0
        %1674 = vmatpush2.bf16.msra.mxu0 %v1059
        %1675 = vmatprep.subr.bf16.mxu0 0
        %1676 = vmatpush2.bf16.msra.mxu0 %v1058
        %1677 = vmatprep.subr.bf16.mxu0 0
        %1678 = vmatpush2.bf16.msra.mxu0 %v1057
        %1679 = vmatprep.subr.bf16.mxu0 0
        %1680 = vmatpush2.bf16.msra.mxu0 %v1056
        %1681 = vmatprep.subr.bf16.mxu0 0
        %1682 = vmatpush2.bf16.msra.mxu0 %v1055
        %1683 = vmatprep.subr.bf16.mxu0 0
        %1684 = vmatpush2.bf16.msra.mxu0 %v1054
        %1685 = vmatprep.mubr.bf16.mxu0 %v1498
        %1686 = vmatmul.mubr.bf16.gmra.mxu0 %v1497
        %v1687 = vpop.f32.mrf.mxu0
        %v1688 = vadd.f32 %v1632, %v1687
        %v1689 = vpop.f32.mrf.mxu0
        %v1690 = vpop.f32.mrf.mxu0
        %v1691 = vadd.f32 %v1635, %v1690
        %v1692 = vpop.f32.mrf.mxu0
        %1693 = vmatprep.mubr.bf16.mxu0 %v1506
        %1694 = vmatmul.mubr.bf16.gmra.mxu0 %v1505
        %v1695 = vpop.f32.mrf.mxu0
        %v1696 = vadd.f32 %v1640, %v1695
        %v1697 = vpop.f32.mrf.mxu0
        %v1698 = vpop.f32.mrf.mxu0
        %v1699 = vadd.f32 %v1643, %v1698
        %v1700 = vpop.f32.mrf.mxu0
        %1701 = vmatprep.mubr.bf16.mxu0 %v1514
        %1702 = vmatmul.mubr.bf16.gmra.mxu0 %v1513
        %v1703 = vpop.f32.mrf.mxu0
        %v1704 = vadd.f32 %v1648, %v1703
        %v1705 = vpop.f32.mrf.mxu0
        %v1706 = vpop.f32.mrf.mxu0
        %v1707 = vpop.f32.mrf.mxu0
        %1708 = vdwg.mxu0
        %1709 = vmatprep.subr.bf16.mxu0 0
        %1710 = vmatpush1.bf16.msra.mxu0 %v1069
        %1711 = vmatprep.subr.bf16.mxu0 0
        %1712 = vmatpush1.bf16.msra.mxu0 %v1068
        %1713 = vmatprep.subr.bf16.mxu0 0
        %1714 = vmatpush1.bf16.msra.mxu0 %v1067
        %1715 = vmatprep.subr.bf16.mxu0 0
        %1716 = vmatpush1.bf16.msra.mxu0 %v1066
        %1717 = vmatprep.subr.bf16.mxu0 0
        %1718 = vmatpush1.bf16.msra.mxu0 %v1065
        %1719 = vmatprep.subr.bf16.mxu0 0
        %1720 = vmatpush1.bf16.msra.mxu0 %v1064
        %1721 = vmatprep.subr.bf16.mxu0 0
        %1722 = vmatpush1.bf16.msra.mxu0 %v1063
        %1723 = vmatprep.subr.bf16.mxu0 0
        %1724 = vmatpush1.bf16.msra.mxu0 %v1062
        %1725 = vmatprep.subr.bf16.mxu0 0
        %1726 = vmatpush2.bf16.msra.mxu0 %v1077
        %1727 = vmatprep.subr.bf16.mxu0 0
        %1728 = vmatpush2.bf16.msra.mxu0 %v1076
        %1729 = vmatprep.subr.bf16.mxu0 0
        %1730 = vmatpush2.bf16.msra.mxu0 %v1075
        %1731 = vmatprep.subr.bf16.mxu0 0
        %1732 = vmatpush2.bf16.msra.mxu0 %v1074
        %1733 = vmatprep.subr.bf16.mxu0 0
        %1734 = vmatpush2.bf16.msra.mxu0 %v1073
        %1735 = vmatprep.subr.bf16.mxu0 0
        %1736 = vmatpush2.bf16.msra.mxu0 %v1072
        %1737 = vmatprep.subr.bf16.mxu0 0
        %1738 = vmatpush2.bf16.msra.mxu0 %v1071
        %1739 = vmatprep.subr.bf16.mxu0 0
        %1740 = vmatpush2.bf16.msra.mxu0 %v1070
        %1741 = vmatprep.mubr.bf16.mxu0 %v1500
        %1742 = vmatmul.mubr.bf16.gmra.mxu0 %v1499
        %v1743 = vpop.f32.mrf.mxu0
        %v1744 = vadd.f32 %v1688, %v1743
        %v1745 = vpop.f32.mrf.mxu0
        %v1746 = vpop.f32.mrf.mxu0
        %v1747 = vadd.f32 %v1691, %v1746
        %v1748 = vpop.f32.mrf.mxu0
        %1749 = vmatprep.mubr.bf16.mxu0 %v1508
        %1750 = vmatmul.mubr.bf16.gmra.mxu0 %v1507
        %v1751 = vpop.f32.mrf.mxu0
        %v1752 = vadd.f32 %v1696, %v1751
        %v1753 = vpop.f32.mrf.mxu0
        %v1754 = vpop.f32.mrf.mxu0
        %v1755 = vadd.f32 %v1699, %v1754
        %v1756 = vpop.f32.mrf.mxu0
        %1757 = vmatprep.mubr.bf16.mxu0 %v1516
        %1758 = vmatmul.mubr.bf16.gmra.mxu0 %v1515
        %v1759 = vpop.f32.mrf.mxu0
        %v1760 = vadd.f32 %v1704, %v1759
        %v1761 = vpop.f32.mrf.mxu0
        %v1762 = vpop.f32.mrf.mxu0
        %v1763 = vpop.f32.mrf.mxu0
        %1764 = vdwg.mxu0
        %vm1765 = vcmp.ge.f32.partialorder %v1744, 0.0
        %vm1766 = vcmp.ge.f32.partialorder %v1747, 0.0
        %vm1767 = vcmp.ge.f32.partialorder %v1752, 0.0
        %vm1768 = vcmp.ge.f32.partialorder %v1755, 0.0
        %vm1769 = vcmp.ge.f32.partialorder %v1760, 0.0
        %v1770 = vmul.f32 %v1378, %v1744
        %v1771 = vmul.f32 %v1378, %v1747
        %v1772 = vmul.f32 %v1378, %v1752
        %v1773 = vmul.f32 %v1378, %v1755
        %v1774 = vmul.f32 %v1378, %v1760
        %v1775 = vsel %vm1765, %v1744, %v1770
        %v1776 = vsel %vm1766, %v1747, %v1771
        %v1777 = vsel %vm1767, %v1752, %v1772
        %v1778 = vsel %vm1768, %v1755, %v1773
        %v1779 = vsel %vm1769, %v1760, %v1774
        %v1780 = vmul.f32 %v1775, %v1394
        %v1781 = vmul.f32 %v1776, %v1394
        %v1782 = vmul.f32 %v1777, %v1394
        %v1783 = vmul.f32 %v1778, %v1394
        %v1784 = vmul.f32 %v1779, %v1394
        %v1785 = vadd.f32 %v1780, %v1405
        %v1786 = vadd.f32 %v1781, %v1405
        %v1787 = vadd.f32 %v1782, %v1405
        %v1788 = vadd.f32 %v1783, %v1405
        %v1789 = vadd.f32 %v1784, %v1405
        %v1790 = vmax.f32 %v1407, %v1785
        %v1791 = vmax.f32 %v1408, %v1786
        %v1792 = vmax.f32 %v1409, %v1787
        %v1793 = vmax.f32 %v1410, %v1788
        %v1794 = vmax.f32 %v1411, %v1789
        %s1795 = scalar_lea.vmem %s453, 320 [#allocation4]
        %v1796 = vld [vmem:[%s1795] sm:$0xff]
        %v1797 = vld [vmem:[%s1795 + $0x8] sm:$0xff]
        %v1798 = vld [vmem:[%s1795 + $0x10] sm:$0xff]
        %v1799 = vld [vmem:[%s1795 + $0x18] sm:$0xff]
        %v1800 = vld [vmem:[%s1795 + $0x20] sm:$0xff]
        %v1801 = vld [vmem:[%s1795 + $0x28] sm:$0xff]
        %v1802 = vld [vmem:[%s1795 + $0x30] sm:$0xff]
        %v1803 = vld [vmem:[%s1795 + $0x38] sm:$0xff]
        %v1804 = vld [vmem:[%s1795 + $0x40] sm:$0xff]
        %v1805 = vld [vmem:[%s1795 + $0x48] sm:$0xff]
        %v1806 = vld [vmem:[%s1795 + $0x50] sm:$0xff]
        %v1807 = vld [vmem:[%s1795 + $0x58] sm:$0xff]
        %v1808 = vld [vmem:[%s1795 + $0x60] sm:$0xff]
        %v1809 = vld [vmem:[%s1795 + $0x68] sm:$0xff]
        %v1810 = vld [vmem:[%s1795 + $0x70] sm:$0xff]
        %v1811 = vld [vmem:[%s1795 + $0x78] sm:$0xff]
        %v1812 = vld [vmem:[%s1795 + $0x80] sm:$0xff]
        %v1813 = vld [vmem:[%s1795 + $0x88] sm:$0xff]
        %v1814 = vld [vmem:[%s1795 + $0x90] sm:$0xff]
        %v1815 = vld [vmem:[%s1795 + $0x98] sm:$0xff]
        %v1836 = vunpack.c.l.b16 %v1796
        %v1837 = vunpack.c.h.b16 %v1796
        %v1838 = vunpack.c.l.b16 %v1797
        %v1839 = vunpack.c.h.b16 %v1797
        %v1840 = vunpack.c.l.b16 %v1798
        %v1841 = vunpack.c.h.b16 %v1798
        %v1842 = vunpack.c.l.b16 %v1799
        %v1843 = vunpack.c.h.b16 %v1799
        %v1844 = vunpack.c.l.b16 %v1800
        %v1845 = vunpack.c.h.b16 %v1800
        %v1846 = vunpack.c.l.b16 %v1801
        %v1847 = vunpack.c.h.b16 %v1801
        %v1848 = vunpack.c.l.b16 %v1802
        %v1849 = vunpack.c.h.b16 %v1802
        %v1850 = vunpack.c.l.b16 %v1803
        %v1851 = vunpack.c.h.b16 %v1803
        %v1852 = vunpack.c.l.b16 %v1804
        %v1853 = vunpack.c.h.b16 %v1804
        %v1854 = vunpack.c.l.b16 %v1805
        %v1855 = vunpack.c.h.b16 %v1805
        %v1856 = vunpack.c.l.b16 %v1806
        %v1857 = vunpack.c.h.b16 %v1806
        %v1858 = vunpack.c.l.b16 %v1807
        %v1859 = vunpack.c.h.b16 %v1807
        %v1860 = vunpack.c.l.b16 %v1808
        %v1861 = vunpack.c.h.b16 %v1808
        %v1862 = vunpack.c.l.b16 %v1809
        %v1863 = vunpack.c.h.b16 %v1809
        %v1864 = vunpack.c.l.b16 %v1810
        %v1865 = vunpack.c.h.b16 %v1810
        %v1866 = vunpack.c.l.b16 %v1811
        %v1867 = vunpack.c.h.b16 %v1811
        %v1868 = vunpack.c.l.b16 %v1812
        %v1869 = vunpack.c.h.b16 %v1812
        %v1870 = vunpack.c.l.b16 %v1813
        %v1871 = vunpack.c.h.b16 %v1813
        %v1872 = vunpack.c.l.b16 %v1814
        %v1873 = vunpack.c.h.b16 %v1814
        %v1874 = vunpack.c.l.b16 %v1815
        %v1875 = vunpack.c.h.b16 %v1815
        %v1876 = vpack.c.b16 %v1844, %v1836
        %v1877 = vpack.c.b16 %v1845, %v1837
        %v1878 = vpack.c.b16 %v1846, %v1838
        %v1879 = vpack.c.b16 %v1847, %v1839
        %v1880 = vpack.c.b16 %v1848, %v1840
        %v1881 = vpack.c.b16 %v1849, %v1841
        %v1882 = vpack.c.b16 %v1850, %v1842
        %v1883 = vpack.c.b16 %v1851, %v1843
        %v1884 = vpack.c.b16 %v1860, %v1852
        %v1885 = vpack.c.b16 %v1861, %v1853
        %v1886 = vpack.c.b16 %v1862, %v1854
        %v1887 = vpack.c.b16 %v1863, %v1855
        %v1888 = vpack.c.b16 %v1864, %v1856
        %v1889 = vpack.c.b16 %v1865, %v1857
        %v1890 = vpack.c.b16 %v1866, %v1858
        %v1891 = vpack.c.b16 %v1867, %v1859
        %v1892 = vpack.c.b16 %v1868, %v1868
        %v1893 = vpack.c.b16 %v1869, %v1869
        %v1894 = vpack.c.b16 %v1870, %v1870
        %v1895 = vpack.c.b16 %v1871, %v1871
        %v1896 = vpack.c.b16 %v1872, %v1872
        %v1897 = vpack.c.b16 %v1873, %v1873
        %v1898 = vpack.c.b16 %v1874, %v1874
        %v1899 = vpack.c.b16 %v1875, %v1875
        %1924 = vmatprep.subr.bf16.mxu0 0
        %1925 = vmatpush1.bf16.msra.mxu0 %v1021
        %1926 = vmatprep.subr.bf16.mxu0 0
        %1927 = vmatpush1.bf16.msra.mxu0 %v1020
        %1928 = vmatprep.subr.bf16.mxu0 0
        %1929 = vmatpush1.bf16.msra.mxu0 %v1019
        %1930 = vmatprep.subr.bf16.mxu0 0
        %1931 = vmatpush1.bf16.msra.mxu0 %v1018
        %1932 = vmatprep.subr.bf16.mxu0 0
        %1933 = vmatpush1.bf16.msra.mxu0 %v1017
        %1934 = vmatprep.subr.bf16.mxu0 0
        %1935 = vmatpush1.bf16.msra.mxu0 %v1016
        %1936 = vmatprep.subr.bf16.mxu0 0
        %1937 = vmatpush1.bf16.msra.mxu0 %v1015
        %1938 = vmatprep.subr.bf16.mxu0 0
        %1939 = vmatpush1.bf16.msra.mxu0 %v1014
        %1940 = vmatprep.subr.bf16.mxu0 0
        %1941 = vmatpush2.bf16.msra.mxu0 %v1029
        %1942 = vmatprep.subr.bf16.mxu0 0
        %1943 = vmatpush2.bf16.msra.mxu0 %v1028
        %1944 = vmatprep.subr.bf16.mxu0 0
        %1945 = vmatpush2.bf16.msra.mxu0 %v1027
        %1946 = vmatprep.subr.bf16.mxu0 0
        %1947 = vmatpush2.bf16.msra.mxu0 %v1026
        %1948 = vmatprep.subr.bf16.mxu0 0
        %1949 = vmatpush2.bf16.msra.mxu0 %v1025
        %1950 = vmatprep.subr.bf16.mxu0 0
        %1951 = vmatpush2.bf16.msra.mxu0 %v1024
        %1952 = vmatprep.subr.bf16.mxu0 0
        %1953 = vmatpush2.bf16.msra.mxu0 %v1023
        %1954 = vmatprep.subr.bf16.mxu0 0
        %1955 = vmatpush2.bf16.msra.mxu0 %v1022
        %1956 = vmatprep.mubr.bf16.mxu0 %v1877
        %1957 = vmatmul.mubr.bf16.gmra.mxu0 %v1876
        %v1958 = vpop.f32.mrf.mxu0
        %v1959 = vadd.f32 %v648, %v1958
        %v1960 = vpop.f32.mrf.mxu0
        %v1961 = vpop.f32.mrf.mxu0
        %v1962 = vadd.f32 %v648, %v1961
        %v1963 = vpop.f32.mrf.mxu0
        %1964 = vmatprep.mubr.bf16.mxu0 %v1885
        %1965 = vmatmul.mubr.bf16.gmra.mxu0 %v1884
        %v1966 = vpop.f32.mrf.mxu0
        %v1967 = vadd.f32 %v648, %v1966
        %v1968 = vpop.f32.mrf.mxu0
        %v1969 = vpop.f32.mrf.mxu0
        %v1970 = vadd.f32 %v648, %v1969
        %v1971 = vpop.f32.mrf.mxu0
        %1972 = vmatprep.mubr.bf16.mxu0 %v1893
        %1973 = vmatmul.mubr.bf16.gmra.mxu0 %v1892
        %v1974 = vpop.f32.mrf.mxu0
        %v1975 = vadd.f32 %v648, %v1974
        %v1976 = vpop.f32.mrf.mxu0
        %v1977 = vpop.f32.mrf.mxu0
        %v1978 = vpop.f32.mrf.mxu0
        %1979 = vdwg.mxu0
        %1980 = vmatprep.subr.bf16.mxu0 0
        %1981 = vmatpush1.bf16.msra.mxu0 %v1037
        %1982 = vmatprep.subr.bf16.mxu0 0
        %1983 = vmatpush1.bf16.msra.mxu0 %v1036
        %1984 = vmatprep.subr.bf16.mxu0 0
        %1985 = vmatpush1.bf16.msra.mxu0 %v1035
        %1986 = vmatprep.subr.bf16.mxu0 0
        %1987 = vmatpush1.bf16.msra.mxu0 %v1034
        %1988 = vmatprep.subr.bf16.mxu0 0
        %1989 = vmatpush1.bf16.msra.mxu0 %v1033
        %1990 = vmatprep.subr.bf16.mxu0 0
        %1991 = vmatpush1.bf16.msra.mxu0 %v1032
        %1992 = vmatprep.subr.bf16.mxu0 0
        %1993 = vmatpush1.bf16.msra.mxu0 %v1031
        %1994 = vmatprep.subr.bf16.mxu0 0
        %1995 = vmatpush1.bf16.msra.mxu0 %v1030
        %1996 = vmatprep.subr.bf16.mxu0 0
        %1997 = vmatpush2.bf16.msra.mxu0 %v1045
        %1998 = vmatprep.subr.bf16.mxu0 0
        %1999 = vmatpush2.bf16.msra.mxu0 %v1044
        %2000 = vmatprep.subr.bf16.mxu0 0
        %2001 = vmatpush2.bf16.msra.mxu0 %v1043
        %2002 = vmatprep.subr.bf16.mxu0 0
        %2003 = vmatpush2.bf16.msra.mxu0 %v1042
        %2004 = vmatprep.subr.bf16.mxu0 0
        %2005 = vmatpush2.bf16.msra.mxu0 %v1041
        %2006 = vmatprep.subr.bf16.mxu0 0
        %2007 = vmatpush2.bf16.msra.mxu0 %v1040
        %2008 = vmatprep.subr.bf16.mxu0 0
        %2009 = vmatpush2.bf16.msra.mxu0 %v1039
        %2010 = vmatprep.subr.bf16.mxu0 0
        %2011 = vmatpush2.bf16.msra.mxu0 %v1038
        %2012 = vmatprep.mubr.bf16.mxu0 %v1879
        %2013 = vmatmul.mubr.bf16.gmra.mxu0 %v1878
        %v2014 = vpop.f32.mrf.mxu0
        %v2015 = vadd.f32 %v1959, %v2014
        %v2016 = vpop.f32.mrf.mxu0
        %v2017 = vpop.f32.mrf.mxu0
        %v2018 = vadd.f32 %v1962, %v2017
        %v2019 = vpop.f32.mrf.mxu0
        %2020 = vmatprep.mubr.bf16.mxu0 %v1887
        %2021 = vmatmul.mubr.bf16.gmra.mxu0 %v1886
        %v2022 = vpop.f32.mrf.mxu0
        %v2023 = vadd.f32 %v1967, %v2022
        %v2024 = vpop.f32.mrf.mxu0
        %v2025 = vpop.f32.mrf.mxu0
        %v2026 = vadd.f32 %v1970, %v2025
        %v2027 = vpop.f32.mrf.mxu0
        %2028 = vmatprep.mubr.bf16.mxu0 %v1895
        %2029 = vmatmul.mubr.bf16.gmra.mxu0 %v1894
        %v2030 = vpop.f32.mrf.mxu0
        %v2031 = vadd.f32 %v1975, %v2030
        %v2032 = vpop.f32.mrf.mxu0
        %v2033 = vpop.f32.mrf.mxu0
        %v2034 = vpop.f32.mrf.mxu0
        %2035 = vdwg.mxu0
        %2036 = vmatprep.subr.bf16.mxu0 0
        %2037 = vmatpush1.bf16.msra.mxu0 %v1053
        %2038 = vmatprep.subr.bf16.mxu0 0
        %2039 = vmatpush1.bf16.msra.mxu0 %v1052
        %2040 = vmatprep.subr.bf16.mxu0 0
        %2041 = vmatpush1.bf16.msra.mxu0 %v1051
        %2042 = vmatprep.subr.bf16.mxu0 0
        %2043 = vmatpush1.bf16.msra.mxu0 %v1050
        %2044 = vmatprep.subr.bf16.mxu0 0
        %2045 = vmatpush1.bf16.msra.mxu0 %v1049
        %2046 = vmatprep.subr.bf16.mxu0 0
        %2047 = vmatpush1.bf16.msra.mxu0 %v1048
        %2048 = vmatprep.subr.bf16.mxu0 0
        %2049 = vmatpush1.bf16.msra.mxu0 %v1047
        %2050 = vmatprep.subr.bf16.mxu0 0
        %2051 = vmatpush1.bf16.msra.mxu0 %v1046
        %2052 = vmatprep.subr.bf16.mxu0 0
        %2053 = vmatpush2.bf16.msra.mxu0 %v1061
        %2054 = vmatprep.subr.bf16.mxu0 0
        %2055 = vmatpush2.bf16.msra.mxu0 %v1060
        %2056 = vmatprep.subr.bf16.mxu0 0
        %2057 = vmatpush2.bf16.msra.mxu0 %v1059
        %2058 = vmatprep.subr.bf16.mxu0 0
        %2059 = vmatpush2.bf16.msra.mxu0 %v1058
        %2060 = vmatprep.subr.bf16.mxu0 0
        %2061 = vmatpush2.bf16.msra.mxu0 %v1057
        %2062 = vmatprep.subr.bf16.mxu0 0
        %2063 = vmatpush2.bf16.msra.mxu0 %v1056
        %2064 = vmatprep.subr.bf16.mxu0 0
        %2065 = vmatpush2.bf16.msra.mxu0 %v1055
        %2066 = vmatprep.subr.bf16.mxu0 0
        %2067 = vmatpush2.bf16.msra.mxu0 %v1054
        %2068 = vmatprep.mubr.bf16.mxu0 %v1881
        %2069 = vmatmul.mubr.bf16.gmra.mxu0 %v1880
        %v2070 = vpop.f32.mrf.mxu0
        %v2071 = vadd.f32 %v2015, %v2070
        %v2072 = vpop.f32.mrf.mxu0
        %v2073 = vpop.f32.mrf.mxu0
        %v2074 = vadd.f32 %v2018, %v2073
        %v2075 = vpop.f32.mrf.mxu0
        %2076 = vmatprep.mubr.bf16.mxu0 %v1889
        %2077 = vmatmul.mubr.bf16.gmra.mxu0 %v1888
        %v2078 = vpop.f32.mrf.mxu0
        %v2079 = vadd.f32 %v2023, %v2078
        %v2080 = vpop.f32.mrf.mxu0
        %v2081 = vpop.f32.mrf.mxu0
        %v2082 = vadd.f32 %v2026, %v2081
        %v2083 = vpop.f32.mrf.mxu0
        %2084 = vmatprep.mubr.bf16.mxu0 %v1897
        %2085 = vmatmul.mubr.bf16.gmra.mxu0 %v1896
        %v2086 = vpop.f32.mrf.mxu0
        %v2087 = vadd.f32 %v2031, %v2086
        %v2088 = vpop.f32.mrf.mxu0
        %v2089 = vpop.f32.mrf.mxu0
        %v2090 = vpop.f32.mrf.mxu0
        %2091 = vdwg.mxu0
        %2092 = vmatprep.subr.bf16.mxu0 0
        %2093 = vmatpush1.bf16.msra.mxu0 %v1069
        %2094 = vmatprep.subr.bf16.mxu0 0
        %2095 = vmatpush1.bf16.msra.mxu0 %v1068
        %2096 = vmatprep.subr.bf16.mxu0 0
        %2097 = vmatpush1.bf16.msra.mxu0 %v1067
        %2098 = vmatprep.subr.bf16.mxu0 0
        %2099 = vmatpush1.bf16.msra.mxu0 %v1066
        %2100 = vmatprep.subr.bf16.mxu0 0
        %2101 = vmatpush1.bf16.msra.mxu0 %v1065
        %2102 = vmatprep.subr.bf16.mxu0 0
        %2103 = vmatpush1.bf16.msra.mxu0 %v1064
        %2104 = vmatprep.subr.bf16.mxu0 0
        %2105 = vmatpush1.bf16.msra.mxu0 %v1063
        %2106 = vmatprep.subr.bf16.mxu0 0
        %2107 = vmatpush1.bf16.msra.mxu0 %v1062
        %2108 = vmatprep.subr.bf16.mxu0 0
        %2109 = vmatpush2.bf16.msra.mxu0 %v1077
        %2110 = vmatprep.subr.bf16.mxu0 0
        %2111 = vmatpush2.bf16.msra.mxu0 %v1076
        %2112 = vmatprep.subr.bf16.mxu0 0
        %2113 = vmatpush2.bf16.msra.mxu0 %v1075
        %2114 = vmatprep.subr.bf16.mxu0 0
        %2115 = vmatpush2.bf16.msra.mxu0 %v1074
        %2116 = vmatprep.subr.bf16.mxu0 0
        %2117 = vmatpush2.bf16.msra.mxu0 %v1073
        %2118 = vmatprep.subr.bf16.mxu0 0
        %2119 = vmatpush2.bf16.msra.mxu0 %v1072
        %2120 = vmatprep.subr.bf16.mxu0 0
        %2121 = vmatpush2.bf16.msra.mxu0 %v1071
        %2122 = vmatprep.subr.bf16.mxu0 0
        %2123 = vmatpush2.bf16.msra.mxu0 %v1070
        %2124 = vmatprep.mubr.bf16.mxu0 %v1883
        %2125 = vmatmul.mubr.bf16.gmra.mxu0 %v1882
        %v2126 = vpop.f32.mrf.mxu0
        %v2127 = vadd.f32 %v2071, %v2126
        %v2128 = vpop.f32.mrf.mxu0
        %v2129 = vpop.f32.mrf.mxu0
        %v2130 = vadd.f32 %v2074, %v2129
        %v2131 = vpop.f32.mrf.mxu0
        %2132 = vmatprep.mubr.bf16.mxu0 %v1891
        %2133 = vmatmul.mubr.bf16.gmra.mxu0 %v1890
        %v2134 = vpop.f32.mrf.mxu0
        %v2135 = vadd.f32 %v2079, %v2134
        %v2136 = vpop.f32.mrf.mxu0
        %v2137 = vpop.f32.mrf.mxu0
        %v2138 = vadd.f32 %v2082, %v2137
        %v2139 = vpop.f32.mrf.mxu0
        %2140 = vmatprep.mubr.bf16.mxu0 %v1899
        %2141 = vmatmul.mubr.bf16.gmra.mxu0 %v1898
        %v2142 = vpop.f32.mrf.mxu0
        %v2143 = vadd.f32 %v2087, %v2142
        %v2144 = vpop.f32.mrf.mxu0
        %v2145 = vpop.f32.mrf.mxu0
        %v2146 = vpop.f32.mrf.mxu0
        %2147 = vdwg.mxu0
        %vm2148 = vcmp.ge.f32.partialorder %v2127, 0.0
        %vm2149 = vcmp.ge.f32.partialorder %v2130, 0.0
        %vm2150 = vcmp.ge.f32.partialorder %v2135, 0.0
        %vm2151 = vcmp.ge.f32.partialorder %v2138, 0.0
        %vm2152 = vcmp.ge.f32.partialorder %v2143, 0.0
        %v2153 = vmul.f32 %v1378, %v2127
        %v2154 = vmul.f32 %v1378, %v2130
        %v2155 = vmul.f32 %v1378, %v2135
        %v2156 = vmul.f32 %v1378, %v2138
        %v2157 = vmul.f32 %v1378, %v2143
        %v2158 = vsel %vm2148, %v2127, %v2153
        %v2159 = vsel %vm2149, %v2130, %v2154
        %v2160 = vsel %vm2150, %v2135, %v2155
        %v2161 = vsel %vm2151, %v2138, %v2156
        %v2162 = vsel %vm2152, %v2143, %v2157
        %v2163 = vmul.f32 %v2158, %v1394
        %v2164 = vmul.f32 %v2159, %v1394
        %v2165 = vmul.f32 %v2160, %v1394
        %v2166 = vmul.f32 %v2161, %v1394
        %v2167 = vmul.f32 %v2162, %v1394
        %v2168 = vadd.f32 %v2163, %v1405
        %v2169 = vadd.f32 %v2164, %v1405
        %v2170 = vadd.f32 %v2165, %v1405
        %v2171 = vadd.f32 %v2166, %v1405
        %v2172 = vadd.f32 %v2167, %v1405
        %v2173 = vmax.f32 %v1790, %v2168
        %v2174 = vmax.f32 %v1791, %v2169
        %v2175 = vmax.f32 %v1792, %v2170
        %v2176 = vmax.f32 %v1793, %v2171
        %v2177 = vmax.f32 %v1794, %v2172
        %s2178 = scalar_lea.vmem %s453, 480 [#allocation4]
        %v2179 = vld [vmem:[%s2178] sm:$0xff]
        %v2180 = vld [vmem:[%s2178 + $0x8] sm:$0xff]
        %v2181 = vld [vmem:[%s2178 + $0x10] sm:$0xff]
        %v2182 = vld [vmem:[%s2178 + $0x18] sm:$0xff]
        %v2183 = vld [vmem:[%s2178 + $0x20] sm:$0xff]
        %v2184 = vld [vmem:[%s2178 + $0x28] sm:$0xff]
        %v2185 = vld [vmem:[%s2178 + $0x30] sm:$0xff]
        %v2186 = vld [vmem:[%s2178 + $0x38] sm:$0xff]
        %v2187 = vld [vmem:[%s2178 + $0x40] sm:$0xff]
        %v2188 = vld [vmem:[%s2178 + $0x48] sm:$0xff]
        %v2189 = vld [vmem:[%s2178 + $0x50] sm:$0xff]
        %v2190 = vld [vmem:[%s2178 + $0x58] sm:$0xff]
        %v2191 = vld [vmem:[%s2178 + $0x60] sm:$0xff]
        %v2192 = vld [vmem:[%s2178 + $0x68] sm:$0xff]
        %v2193 = vld [vmem:[%s2178 + $0x70] sm:$0xff]
        %v2194 = vld [vmem:[%s2178 + $0x78] sm:$0xff]
        %v2195 = vld [vmem:[%s2178 + $0x80] sm:$0xff]
        %v2196 = vld [vmem:[%s2178 + $0x88] sm:$0xff]
        %v2197 = vld [vmem:[%s2178 + $0x90] sm:$0xff]
        %v2198 = vld [vmem:[%s2178 + $0x98] sm:$0xff]
        %v2219 = vunpack.c.l.b16 %v2179
        %v2220 = vunpack.c.h.b16 %v2179
        %v2221 = vunpack.c.l.b16 %v2180
        %v2222 = vunpack.c.h.b16 %v2180
        %v2223 = vunpack.c.l.b16 %v2181
        %v2224 = vunpack.c.h.b16 %v2181
        %v2225 = vunpack.c.l.b16 %v2182
        %v2226 = vunpack.c.h.b16 %v2182
        %v2227 = vunpack.c.l.b16 %v2183
        %v2228 = vunpack.c.h.b16 %v2183
        %v2229 = vunpack.c.l.b16 %v2184
        %v2230 = vunpack.c.h.b16 %v2184
        %v2231 = vunpack.c.l.b16 %v2185
        %v2232 = vunpack.c.h.b16 %v2185
        %v2233 = vunpack.c.l.b16 %v2186
        %v2234 = vunpack.c.h.b16 %v2186
        %v2235 = vunpack.c.l.b16 %v2187
        %v2236 = vunpack.c.h.b16 %v2187
        %v2237 = vunpack.c.l.b16 %v2188
        %v2238 = vunpack.c.h.b16 %v2188
        %v2239 = vunpack.c.l.b16 %v2189
        %v2240 = vunpack.c.h.b16 %v2189
        %v2241 = vunpack.c.l.b16 %v2190
        %v2242 = vunpack.c.h.b16 %v2190
        %v2243 = vunpack.c.l.b16 %v2191
        %v2244 = vunpack.c.h.b16 %v2191
        %v2245 = vunpack.c.l.b16 %v2192
        %v2246 = vunpack.c.h.b16 %v2192
        %v2247 = vunpack.c.l.b16 %v2193
        %v2248 = vunpack.c.h.b16 %v2193
        %v2249 = vunpack.c.l.b16 %v2194
        %v2250 = vunpack.c.h.b16 %v2194
        %v2251 = vunpack.c.l.b16 %v2195
        %v2252 = vunpack.c.h.b16 %v2195
        %v2253 = vunpack.c.l.b16 %v2196
        %v2254 = vunpack.c.h.b16 %v2196
        %v2255 = vunpack.c.l.b16 %v2197
        %v2256 = vunpack.c.h.b16 %v2197
        %v2257 = vunpack.c.l.b16 %v2198
        %v2258 = vunpack.c.h.b16 %v2198
        %v2259 = vpack.c.b16 %v2227, %v2219
        %v2260 = vpack.c.b16 %v2228, %v2220
        %v2261 = vpack.c.b16 %v2229, %v2221
        %v2262 = vpack.c.b16 %v2230, %v2222
        %v2263 = vpack.c.b16 %v2231, %v2223
        %v2264 = vpack.c.b16 %v2232, %v2224
        %v2265 = vpack.c.b16 %v2233, %v2225
        %v2266 = vpack.c.b16 %v2234, %v2226
        %v2267 = vpack.c.b16 %v2243, %v2235
        %v2268 = vpack.c.b16 %v2244, %v2236
        %v2269 = vpack.c.b16 %v2245, %v2237
        %v2270 = vpack.c.b16 %v2246, %v2238
        %v2271 = vpack.c.b16 %v2247, %v2239
        %v2272 = vpack.c.b16 %v2248, %v2240
        %v2273 = vpack.c.b16 %v2249, %v2241
        %v2274 = vpack.c.b16 %v2250, %v2242
        %v2275 = vpack.c.b16 %v2251, %v2251
        %v2276 = vpack.c.b16 %v2252, %v2252
        %v2277 = vpack.c.b16 %v2253, %v2253
        %v2278 = vpack.c.b16 %v2254, %v2254
        %v2279 = vpack.c.b16 %v2255, %v2255
        %v2280 = vpack.c.b16 %v2256, %v2256
        %v2281 = vpack.c.b16 %v2257, %v2257
        %v2282 = vpack.c.b16 %v2258, %v2258
        %2307 = vmatprep.subr.bf16.mxu0 0
        %2308 = vmatpush1.bf16.msra.mxu0 %v1021
        %2309 = vmatprep.subr.bf16.mxu0 0
        %2310 = vmatpush1.bf16.msra.mxu0 %v1020
        %2311 = vmatprep.subr.bf16.mxu0 0
        %2312 = vmatpush1.bf16.msra.mxu0 %v1019
        %2313 = vmatprep.subr.bf16.mxu0 0
        %2314 = vmatpush1.bf16.msra.mxu0 %v1018
        %2315 = vmatprep.subr.bf16.mxu0 0
        %2316 = vmatpush1.bf16.msra.mxu0 %v1017
        %2317 = vmatprep.subr.bf16.mxu0 0
        %2318 = vmatpush1.bf16.msra.mxu0 %v1016
        %2319 = vmatprep.subr.bf16.mxu0 0
        %2320 = vmatpush1.bf16.msra.mxu0 %v1015
        %2321 = vmatprep.subr.bf16.mxu0 0
        %2322 = vmatpush1.bf16.msra.mxu0 %v1014
        %2323 = vmatprep.subr.bf16.mxu0 0
        %2324 = vmatpush2.bf16.msra.mxu0 %v1029
        %2325 = vmatprep.subr.bf16.mxu0 0
        %2326 = vmatpush2.bf16.msra.mxu0 %v1028
        %2327 = vmatprep.subr.bf16.mxu0 0
        %2328 = vmatpush2.bf16.msra.mxu0 %v1027
        %2329 = vmatprep.subr.bf16.mxu0 0
        %2330 = vmatpush2.bf16.msra.mxu0 %v1026
        %2331 = vmatprep.subr.bf16.mxu0 0
        %2332 = vmatpush2.bf16.msra.mxu0 %v1025
        %2333 = vmatprep.subr.bf16.mxu0 0
        %2334 = vmatpush2.bf16.msra.mxu0 %v1024
        %2335 = vmatprep.subr.bf16.mxu0 0
        %2336 = vmatpush2.bf16.msra.mxu0 %v1023
        %2337 = vmatprep.subr.bf16.mxu0 0
        %2338 = vmatpush2.bf16.msra.mxu0 %v1022
        %2339 = vmatprep.mubr.bf16.mxu0 %v2260
        %2340 = vmatmul.mubr.bf16.gmra.mxu0 %v2259
        %v2341 = vpop.f32.mrf.mxu0
        %v2342 = vadd.f32 %v648, %v2341
        %v2343 = vpop.f32.mrf.mxu0
        %v2344 = vpop.f32.mrf.mxu0
        %v2345 = vadd.f32 %v648, %v2344
        %v2346 = vpop.f32.mrf.mxu0
        %2347 = vmatprep.mubr.bf16.mxu0 %v2268
        %2348 = vmatmul.mubr.bf16.gmra.mxu0 %v2267
        %v2349 = vpop.f32.mrf.mxu0
        %v2350 = vadd.f32 %v648, %v2349
        %v2351 = vpop.f32.mrf.mxu0
        %v2352 = vpop.f32.mrf.mxu0
        %v2353 = vadd.f32 %v648, %v2352
        %v2354 = vpop.f32.mrf.mxu0
        %2355 = vmatprep.mubr.bf16.mxu0 %v2276
        %2356 = vmatmul.mubr.bf16.gmra.mxu0 %v2275
        %v2357 = vpop.f32.mrf.mxu0
        %v2358 = vadd.f32 %v648, %v2357
        %v2359 = vpop.f32.mrf.mxu0
        %v2360 = vpop.f32.mrf.mxu0
        %v2361 = vpop.f32.mrf.mxu0
        %2362 = vdwg.mxu0
        %2363 = vmatprep.subr.bf16.mxu0 0
        %2364 = vmatpush1.bf16.msra.mxu0 %v1037
        %2365 = vmatprep.subr.bf16.mxu0 0
        %2366 = vmatpush1.bf16.msra.mxu0 %v1036
        %2367 = vmatprep.subr.bf16.mxu0 0
        %2368 = vmatpush1.bf16.msra.mxu0 %v1035
        %2369 = vmatprep.subr.bf16.mxu0 0
        %2370 = vmatpush1.bf16.msra.mxu0 %v1034
        %2371 = vmatprep.subr.bf16.mxu0 0
        %2372 = vmatpush1.bf16.msra.mxu0 %v1033
        %2373 = vmatprep.subr.bf16.mxu0 0
        %2374 = vmatpush1.bf16.msra.mxu0 %v1032
        %2375 = vmatprep.subr.bf16.mxu0 0
        %2376 = vmatpush1.bf16.msra.mxu0 %v1031
        %2377 = vmatprep.subr.bf16.mxu0 0
        %2378 = vmatpush1.bf16.msra.mxu0 %v1030
        %2379 = vmatprep.subr.bf16.mxu0 0
        %2380 = vmatpush2.bf16.msra.mxu0 %v1045
        %2381 = vmatprep.subr.bf16.mxu0 0
        %2382 = vmatpush2.bf16.msra.mxu0 %v1044
        %2383 = vmatprep.subr.bf16.mxu0 0
        %2384 = vmatpush2.bf16.msra.mxu0 %v1043
        %2385 = vmatprep.subr.bf16.mxu0 0
        %2386 = vmatpush2.bf16.msra.mxu0 %v1042
        %2387 = vmatprep.subr.bf16.mxu0 0
        %2388 = vmatpush2.bf16.msra.mxu0 %v1041
        %2389 = vmatprep.subr.bf16.mxu0 0
        %2390 = vmatpush2.bf16.msra.mxu0 %v1040
        %2391 = vmatprep.subr.bf16.mxu0 0
        %2392 = vmatpush2.bf16.msra.mxu0 %v1039
        %2393 = vmatprep.subr.bf16.mxu0 0
        %2394 = vmatpush2.bf16.msra.mxu0 %v1038
        %2395 = vmatprep.mubr.bf16.mxu0 %v2262
        %2396 = vmatmul.mubr.bf16.gmra.mxu0 %v2261
        %v2397 = vpop.f32.mrf.mxu0
        %v2398 = vadd.f32 %v2342, %v2397
        %v2399 = vpop.f32.mrf.mxu0
        %v2400 = vpop.f32.mrf.mxu0
        %v2401 = vadd.f32 %v2345, %v2400
        %v2402 = vpop.f32.mrf.mxu0
        %2403 = vmatprep.mubr.bf16.mxu0 %v2270
        %2404 = vmatmul.mubr.bf16.gmra.mxu0 %v2269
        %v2405 = vpop.f32.mrf.mxu0
        %v2406 = vadd.f32 %v2350, %v2405
        %v2407 = vpop.f32.mrf.mxu0
        %v2408 = vpop.f32.mrf.mxu0
        %v2409 = vadd.f32 %v2353, %v2408
        %v2410 = vpop.f32.mrf.mxu0
        %2411 = vmatprep.mubr.bf16.mxu0 %v2278
        %2412 = vmatmul.mubr.bf16.gmra.mxu0 %v2277
        %v2413 = vpop.f32.mrf.mxu0
        %v2414 = vadd.f32 %v2358, %v2413
        %v2415 = vpop.f32.mrf.mxu0
        %v2416 = vpop.f32.mrf.mxu0
        %v2417 = vpop.f32.mrf.mxu0
        %2418 = vdwg.mxu0
        %2419 = vmatprep.subr.bf16.mxu0 0
        %2420 = vmatpush1.bf16.msra.mxu0 %v1053
        %2421 = vmatprep.subr.bf16.mxu0 0
        %2422 = vmatpush1.bf16.msra.mxu0 %v1052
        %2423 = vmatprep.subr.bf16.mxu0 0
        %2424 = vmatpush1.bf16.msra.mxu0 %v1051
        %2425 = vmatprep.subr.bf16.mxu0 0
        %2426 = vmatpush1.bf16.msra.mxu0 %v1050
        %2427 = vmatprep.subr.bf16.mxu0 0
        %2428 = vmatpush1.bf16.msra.mxu0 %v1049
        %2429 = vmatprep.subr.bf16.mxu0 0
        %2430 = vmatpush1.bf16.msra.mxu0 %v1048
        %2431 = vmatprep.subr.bf16.mxu0 0
        %2432 = vmatpush1.bf16.msra.mxu0 %v1047
        %2433 = vmatprep.subr.bf16.mxu0 0
        %2434 = vmatpush1.bf16.msra.mxu0 %v1046
        %2435 = vmatprep.subr.bf16.mxu0 0
        %2436 = vmatpush2.bf16.msra.mxu0 %v1061
        %2437 = vmatprep.subr.bf16.mxu0 0
        %2438 = vmatpush2.bf16.msra.mxu0 %v1060
        %2439 = vmatprep.subr.bf16.mxu0 0
        %2440 = vmatpush2.bf16.msra.mxu0 %v1059
        %2441 = vmatprep.subr.bf16.mxu0 0
        %2442 = vmatpush2.bf16.msra.mxu0 %v1058
        %2443 = vmatprep.subr.bf16.mxu0 0
        %2444 = vmatpush2.bf16.msra.mxu0 %v1057
        %2445 = vmatprep.subr.bf16.mxu0 0
        %2446 = vmatpush2.bf16.msra.mxu0 %v1056
        %2447 = vmatprep.subr.bf16.mxu0 0
        %2448 = vmatpush2.bf16.msra.mxu0 %v1055
        %2449 = vmatprep.subr.bf16.mxu0 0
        %2450 = vmatpush2.bf16.msra.mxu0 %v1054
        %2451 = vmatprep.mubr.bf16.mxu0 %v2264
        %2452 = vmatmul.mubr.bf16.gmra.mxu0 %v2263
        %v2453 = vpop.f32.mrf.mxu0
        %v2454 = vadd.f32 %v2398, %v2453
        %v2455 = vpop.f32.mrf.mxu0
        %v2456 = vpop.f32.mrf.mxu0
        %v2457 = vadd.f32 %v2401, %v2456
        %v2458 = vpop.f32.mrf.mxu0
        %2459 = vmatprep.mubr.bf16.mxu0 %v2272
        %2460 = vmatmul.mubr.bf16.gmra.mxu0 %v2271
        %v2461 = vpop.f32.mrf.mxu0
        %v2462 = vadd.f32 %v2406, %v2461
        %v2463 = vpop.f32.mrf.mxu0
        %v2464 = vpop.f32.mrf.mxu0
        %v2465 = vadd.f32 %v2409, %v2464
        %v2466 = vpop.f32.mrf.mxu0
        %2467 = vmatprep.mubr.bf16.mxu0 %v2280
        %2468 = vmatmul.mubr.bf16.gmra.mxu0 %v2279
        %v2469 = vpop.f32.mrf.mxu0
        %v2470 = vadd.f32 %v2414, %v2469
        %v2471 = vpop.f32.mrf.mxu0
        %v2472 = vpop.f32.mrf.mxu0
        %v2473 = vpop.f32.mrf.mxu0
        %2474 = vdwg.mxu0
        %2475 = vmatprep.subr.bf16.mxu0 0
        %2476 = vmatpush1.bf16.msra.mxu0 %v1069
        %2477 = vmatprep.subr.bf16.mxu0 0
        %2478 = vmatpush1.bf16.msra.mxu0 %v1068
        %2479 = vmatprep.subr.bf16.mxu0 0
        %2480 = vmatpush1.bf16.msra.mxu0 %v1067
        %2481 = vmatprep.subr.bf16.mxu0 0
        %2482 = vmatpush1.bf16.msra.mxu0 %v1066
        %2483 = vmatprep.subr.bf16.mxu0 0
        %2484 = vmatpush1.bf16.msra.mxu0 %v1065
        %2485 = vmatprep.subr.bf16.mxu0 0
        %2486 = vmatpush1.bf16.msra.mxu0 %v1064
        %2487 = vmatprep.subr.bf16.mxu0 0
        %2488 = vmatpush1.bf16.msra.mxu0 %v1063
        %2489 = vmatprep.subr.bf16.mxu0 0
        %2490 = vmatpush1.bf16.msra.mxu0 %v1062
        %2491 = vmatprep.subr.bf16.mxu0 0
        %2492 = vmatpush2.bf16.msra.mxu0 %v1077
        %2493 = vmatprep.subr.bf16.mxu0 0
        %2494 = vmatpush2.bf16.msra.mxu0 %v1076
        %2495 = vmatprep.subr.bf16.mxu0 0
        %2496 = vmatpush2.bf16.msra.mxu0 %v1075
        %2497 = vmatprep.subr.bf16.mxu0 0
        %2498 = vmatpush2.bf16.msra.mxu0 %v1074
        %2499 = vmatprep.subr.bf16.mxu0 0
        %2500 = vmatpush2.bf16.msra.mxu0 %v1073
        %2501 = vmatprep.subr.bf16.mxu0 0
        %2502 = vmatpush2.bf16.msra.mxu0 %v1072
        %2503 = vmatprep.subr.bf16.mxu0 0
        %2504 = vmatpush2.bf16.msra.mxu0 %v1071
        %2505 = vmatprep.subr.bf16.mxu0 0
        %2506 = vmatpush2.bf16.msra.mxu0 %v1070
        %2507 = vmatprep.mubr.bf16.mxu0 %v2266
        %2508 = vmatmul.mubr.bf16.gmra.mxu0 %v2265
        %v2509 = vpop.f32.mrf.mxu0
        %v2510 = vadd.f32 %v2454, %v2509
        %v2511 = vpop.f32.mrf.mxu0
        %v2512 = vpop.f32.mrf.mxu0
        %v2513 = vadd.f32 %v2457, %v2512
        %v2514 = vpop.f32.mrf.mxu0
        %2515 = vmatprep.mubr.bf16.mxu0 %v2274
        %2516 = vmatmul.mubr.bf16.gmra.mxu0 %v2273
        %v2517 = vpop.f32.mrf.mxu0
        %v2518 = vadd.f32 %v2462, %v2517
        %v2519 = vpop.f32.mrf.mxu0
        %v2520 = vpop.f32.mrf.mxu0
        %v2521 = vadd.f32 %v2465, %v2520
        %v2522 = vpop.f32.mrf.mxu0
        %2523 = vmatprep.mubr.bf16.mxu0 %v2282
        %2524 = vmatmul.mubr.bf16.gmra.mxu0 %v2281
        %v2525 = vpop.f32.mrf.mxu0
        %v2526 = vadd.f32 %v2470, %v2525
        %v2527 = vpop.f32.mrf.mxu0
        %v2528 = vpop.f32.mrf.mxu0
        %v2529 = vpop.f32.mrf.mxu0
        %2530 = vdwg.mxu0
        %vm2531 = vcmp.ge.f32.partialorder %v2510, 0.0
        %vm2532 = vcmp.ge.f32.partialorder %v2513, 0.0
        %vm2533 = vcmp.ge.f32.partialorder %v2518, 0.0
        %vm2534 = vcmp.ge.f32.partialorder %v2521, 0.0
        %vm2535 = vcmp.ge.f32.partialorder %v2526, 0.0
        %v2536 = vmul.f32 %v1378, %v2510
        %v2537 = vmul.f32 %v1378, %v2513
        %v2538 = vmul.f32 %v1378, %v2518
        %v2539 = vmul.f32 %v1378, %v2521
        %v2540 = vmul.f32 %v1378, %v2526
        %v2541 = vsel %vm2531, %v2510, %v2536
        %v2542 = vsel %vm2532, %v2513, %v2537
        %v2543 = vsel %vm2533, %v2518, %v2538
        %v2544 = vsel %vm2534, %v2521, %v2539
        %v2545 = vsel %vm2535, %v2526, %v2540
        %v2546 = vmul.f32 %v2541, %v1394
        %v2547 = vmul.f32 %v2542, %v1394
        %v2548 = vmul.f32 %v2543, %v1394
        %v2549 = vmul.f32 %v2544, %v1394
        %v2550 = vmul.f32 %v2545, %v1394
        %v2551 = vadd.f32 %v2546, %v1405
        %v2552 = vadd.f32 %v2547, %v1405
        %v2553 = vadd.f32 %v2548, %v1405
        %v2554 = vadd.f32 %v2549, %v1405
        %v2555 = vadd.f32 %v2550, %v1405
        %v2556 = vmax.f32 %v2173, %v2551
        %v2557 = vmax.f32 %v2174, %v2552
        %v2558 = vmax.f32 %v2175, %v2553
        %v2559 = vmax.f32 %v2176, %v2554
        %v2560 = vmax.f32 %v2177, %v2555
        %v2561 = vld [vmem:[%s6] sm:$0x1]
        %v2563 = vlaneseq
        %v2564 = vshrl.u32 %v2563, 7
        %v2565 = vsub.s32 0, %v2564
        %v2566 = vrot.slane %v2561, %v2565
        %v2568 = vmul.f32 %v2556, %v2566
        %v2569 = vmul.f32 %v2557, %v2566
        %v2570 = vmul.f32 %v2558, %v2566
        %v2571 = vmul.f32 %v2559, %v2566
        %v2572 = vmul.f32 %v2560, %v2566
        %vm2573 = vcmask 523264
        %v2574 = vsel %vm2573, %v2568, 0.0
        %2575 = vadd.xlane.f32.xlu0 %v2574
        %v2576 = vpop.xlane.xlu0 %2575
        %v2577 = vsel %vm2573, %v2569, 0.0
        %2578 = vadd.xlane.f32.xlu0 %v2577
        %v2579 = vpop.xlane.xlu0 %2578
        %v2580 = vsel %vm2573, %v2570, 0.0
        %2581 = vadd.xlane.f32.xlu0 %v2580
        %v2582 = vpop.xlane.xlu0 %2581
        %v2583 = vsel %vm2573, %v2571, 0.0
        %2584 = vadd.xlane.f32.xlu0 %v2583
        %v2585 = vpop.xlane.xlu0 %2584
        %v2586 = vsel %vm2573, %v2572, 0.0
        %2587 = vadd.xlane.f32.xlu0 %v2586
        %v2588 = vpop.xlane.xlu0 %2587
        %v2589 = vld [vmem:[#allocation3] sm:$0x1]
        %v2591 = vlaneseq
        %v2592 = vshrl.u32 %v2591, 7
        %v2593 = vsub.s32 0, %v2592
        %v2594 = vrot.slane %v2589, %v2593
        %v2596 = vadd.f32 %v2576, %v2594
        %v2597 = vadd.f32 %v2579, %v2594
        %v2598 = vadd.f32 %v2582, %v2594
        %v2599 = vadd.f32 %v2585, %v2594
        %v2600 = vadd.f32 %v2588, %v2594
        %v2601 = vmul.f32 %v2596, 1.442695
        %v2602 = vpow.pop %v2601
        %v2603 = vmul.f32 %v2597, 1.442695
        %v2604 = vpow.pop %v2603
        %v2605 = vmul.f32 %v2598, 1.442695
        %v2606 = vpow.pop %v2605
        %v2607 = vmul.f32 %v2599, 1.442695
        %v2608 = vpow.pop %v2607
        %v2609 = vmul.f32 %v2600, 1.442695
        %v2610 = vpow.pop %v2609
        %vm2611 = vcmp.gt.f32.partialorder %v2596, 20.0
        %vm2612 = vcmp.gt.f32.partialorder %v2597, 20.0
        %vm2613 = vcmp.gt.f32.partialorder %v2598, 20.0
        %vm2614 = vcmp.gt.f32.partialorder %v2599, 20.0
        %vm2615 = vcmp.gt.f32.partialorder %v2600, 20.0
        %vm2616 = vcmp.lt.f32.partialorder %v2596, -20.0
        %vm2617 = vcmp.lt.f32.partialorder %v2597, -20.0
        %vm2618 = vcmp.lt.f32.partialorder %v2598, -20.0
        %vm2619 = vcmp.lt.f32.partialorder %v2599, -20.0
        %vm2620 = vcmp.lt.f32.partialorder %v2600, -20.0
        %v2621 = vadd.f32 %v2602, 1.0
        %v2622 = vadd.f32 %v2604, 1.0
        %v2623 = vadd.f32 %v2606, 1.0
        %v2624 = vadd.f32 %v2608, 1.0
        %v2625 = vadd.f32 %v2610, 1.0
        %v2626 = vlog2.pop %v2621
        %v2627 = vmul.f32 %v2626, 0.6931472
        %v2628 = vlog2.pop %v2622
        %v2629 = vmul.f32 %v2628, 0.6931472
        %v2630 = vlog2.pop %v2623
        %v2631 = vmul.f32 %v2630, 0.6931472
        %v2632 = vlog2.pop %v2624
        %v2633 = vmul.f32 %v2632, 0.6931472
        %v2634 = vlog2.pop %v2625
        %v2635 = vmul.f32 %v2634, 0.6931472
        %v2636 = vsel %vm2616, %v2602, %v2627
        %v2637 = vsel %vm2617, %v2604, %v2629
        %v2638 = vsel %vm2618, %v2606, %v2631
        %v2639 = vsel %vm2619, %v2608, %v2633
        %v2640 = vsel %vm2620, %v2610, %v2635
        %v2641 = vsel %vm2611, %v2596, %v2636
        %v2642 = vsel %vm2612, %v2597, %v2637
        %v2643 = vsel %vm2613, %v2598, %v2638
        %v2644 = vsel %vm2614, %v2599, %v2639
        %v2645 = vsel %vm2615, %v2600, %v2640
        %2647 = vset.pattern.permute.xlu0 0
        %2648 = vperm.xlu0 %2647, %v2641
        %v2649 = vpop.permute.xlu0 %2648
        %2652 = vset.pattern.permute.xlu0 0
        %2653 = vperm.xlu0 %2652, %v2642
        %v2654 = vpop.permute.xlu0 %2653
        %2657 = vset.pattern.permute.xlu0 0
        %2658 = vperm.xlu0 %2657, %v2643
        %v2659 = vpop.permute.xlu0 %2658
        %2662 = vset.pattern.permute.xlu0 0
        %2663 = vperm.xlu0 %2662, %v2644
        %v2664 = vpop.permute.xlu0 %2663
        %2667 = vset.pattern.permute.xlu0 0
        %2668 = vperm.xlu0 %2667, %v2645
        %v2669 = vpop.permute.xlu0 %2668
        %v2671 = vmul.f32 %v2556, %v2649
        %v2672 = vmul.f32 %v2557, %v2654
        %v2673 = vmul.f32 %v2558, %v2659
        %v2674 = vmul.f32 %v2559, %v2664
        %v2675 = vmul.f32 %v2560, %v2669
        %v2676 = vpack.c.bf16 %v2672, %v2671
        %v2677 = vpack.c.bf16 %v2674, %v2673
        %v2678 = vpack.c.bf16 %v2675, %v2675
        %v2682 = vunpack.c.l.b16 %v2676
        %v2683 = vunpack.c.h.b16 %v2676
        %v2684 = vunpack.c.l.b16 %v2677
        %v2685 = vunpack.c.h.b16 %v2677
        %v2686 = vunpack.c.l.b16 %v2678
        %v2687 = vpack.c.b16 %v2682, %v2682
        %v2688 = vpack.c.b16 %v2683, %v2683
        %v2689 = vpack.c.b16 %v2684, %v2684
        %v2690 = vpack.c.b16 %v2685, %v2685
        %v2691 = vpack.c.b16 %v2686, %v2686
        %vm2697 = vcmask 519168
        %2698 = vst.msk [vmem:[%s489] sm:$0xf] %vm2697, %v2687
        %2699 = vst.msk [vmem:[%s489 + $0x4] sm:$0xf] %vm2697, %v2688
        %2700 = vst.msk [vmem:[%s489 + $0x8] sm:$0xf] %vm2697, %v2689
        %2701 = vst.msk [vmem:[%s489 + $0xc] sm:$0xf] %vm2697, %v2690
        %2702 = vst.msk [vmem:[%s489 + $0x10] sm:$0xf] %vm2697, %v2691
        %s2703 = smul.u32 5, %s23
        %p2704 = scmp.lt.s32.totalorder %s2703, 9
        %s2705 = scalar_select %p2704, %s2703, 9
        %s2706 = smul.addr %s2705, 4
        %s2707 = scalar_lea.vmem %s8, %s2706
        // Predicated region
        $region76: #{fenet3_forward.4} parent=70 // pred_check
          %p2708 = pneg %p214
        $region77: #{fenet3_forward.4} parent=70 // pred_check_branch
          %2710 = sbr.rel (%p2708) target = $region79
        $region78: #{fenet3_forward.4} parent=70 // pred_region
          %s2711 = smul.u32 5, %s23
        $region79: #{fenet3_forward.4} parent=70 // pred_fallthru
          _
      $region71: #{fenet3_forward.4} parent=5 // pred_fallthru
        _
      %p2712 = scmp.le.s32.totalorder 2, %s18
      // Predicated region
      $region80: #{fenet3_forward.4} parent=5 // pred_check
        %p2713 = pneg %p2712
      $region81: #{fenet3_forward.4} parent=5 // pred_check_branch
        %2715 = sbr.rel (%p2713) target = $region83
      $region82: #{fenet3_forward.4} parent=5 // pred_region
        %s2716 = ssub.s32 %s18, 2
        // Predicated region
        $region84: #{fenet3_forward.4} parent=82 // pred_check
          %p2717 = pneg %p220
        $region85: #{fenet3_forward.4} parent=82 // pred_check_branch
          %2719 = sbr.rel (%p2717) target = $region87
        $region86: #{fenet3_forward.4} parent=82 // pred_region
          %s2720 = smul.u32 5, %s24
          %p2721 = scmp.lt.s32.totalorder %s2720, 9
          %s2722 = scalar_select %p2721, %s2720, 9
          %s2723 = smul.addr %s2722, 4
          %s2724 = scalar_lea.vmem %s8, %s2723
        $region87: #{fenet3_forward.4} parent=82 // pred_fallthru
          _
      $region83: #{fenet3_forward.4} parent=5 // pred_fallthru
        _
    $region6: #{fenet3_forward.4} parent=1 // loop_footer
      %s22 = sadd.s32 1, %s18
    $region7: #{fenet3_forward.4} parent=1 // loop_footer_branch
      %17 = sbr.rel target = $region3
    $region8: #{fenet3_forward.4} parent=1 // loop_exit
      _

// kernel: fenet3_forward.5
$region0: #{fenet3_forward.5}
  #allocation0 [shape = 'u32[]', space=smem, size = 0x4, offset = 0x4, fixed_abs, tag = 'smem constant byte address 0x4 - core index']
  #allocation1 [shape = 'u32[144,128]{1,0:T(1,128)}', space=vmem, size = 0x12000, scoped, tag = 'internal scratch']
  %s0 = inlined_call_operand.vmem [shape: bf16[2,2304], index: 0, kind: input, shape index: {}]
  %s1 = inlined_call_operand.vmem [shape: bf16[2304,128], index: 1, kind: input, shape index: {}]
  %s2 = inlined_call_operand.vmem [shape: f32[1,128], index: 2, kind: input, shape index: {}]
  %s3 = inlined_call_operand.hbm [shape: f32[2,128], index: 3, kind: output, shape index: {}]
  %s4 = sld [smem:[#allocation0]]
  $region22: #{fenet3_forward.5} parent=0
    _
  %s6 = ssub.s32 1, %s4
  %s7 = scalar_select 0, %s6, %s4
  $region1: #{fenet3_forward.5} parent=0
    #allocation2 [shape = 'u8[1024]{0}', space=vmem, size = 0x400, scoped, tag = 'output window, operand 0, single buffered']
    #allocation3 [shape = 's32[1]{0}', space=sflag, size = 0x4, scoped, tag = 'scoped memory for fenet3_forward.5']
    %8 = vsyncpa [#allocation3], 0
    // Predicated region
    $region2: #{fenet3_forward.5} parent=1 // pred_check
      _
    $region3: #{fenet3_forward.5} parent=1 // pred_check_branch
      %10 = sbr.rel (0) target = $region5
    $region4: #{fenet3_forward.5} parent=1 // pred_region
      _
    $region5: #{fenet3_forward.5} parent=1 // pred_fallthru
      _
    // Predicated region
    $region6: #{fenet3_forward.5} parent=1 // pred_check
      _
    $region7: #{fenet3_forward.5} parent=1 // pred_check_branch
      %12 = sbr.rel (0) target = $region9
    $region8: #{fenet3_forward.5} parent=1 // pred_region
      _
    $region9: #{fenet3_forward.5} parent=1 // pred_fallthru
      _
    // Predicated region
    $region10: #{fenet3_forward.5} parent=1 // pred_check
      _
    $region11: #{fenet3_forward.5} parent=1 // pred_check_branch
      %14 = sbr.rel (0) target = $region13
    $region12: #{fenet3_forward.5} parent=1 // pred_region
      _
    $region13: #{fenet3_forward.5} parent=1 // pred_fallthru
      _
    %v16 = vld [vmem:[%s0] sm:$0xff]
    %v17 = vld [vmem:[%s0 + $0x8] sm:$0xff]
    %v18 = vld [vmem:[%s0 + $0x10] sm:$0x3]
    %v19 = vld [vmem:[%s1] sm:$0xf]
    %v20 = vld [vmem:[%s1 + $0x4] sm:$0xf]
    %v21 = vld [vmem:[%s1 + $0x8] sm:$0xf]
    %v22 = vld [vmem:[%s1 + $0xc] sm:$0xf]
    %v23 = vld [vmem:[%s1 + $0x10] sm:$0xf]
    %v24 = vld [vmem:[%s1 + $0x14] sm:$0xf]
    %v25 = vld [vmem:[%s1 + $0x18] sm:$0xf]
    %v26 = vld [vmem:[%s1 + $0x1c] sm:$0xf]
    %v27 = vld [vmem:[%s1 + $0x20] sm:$0xf]
    %v28 = vld [vmem:[%s1 + $0x24] sm:$0xf]
    %v29 = vld [vmem:[%s1 + $0x28] sm:$0xf]
    %v30 = vld [vmem:[%s1 + $0x2c] sm:$0xf]
    %v31 = vld [vmem:[%s1 + $0x30] sm:$0xf]
    %v32 = vld [vmem:[%s1 + $0x34] sm:$0xf]
    %v33 = vld [vmem:[%s1 + $0x38] sm:$0xf]
    %v34 = vld [vmem:[%s1 + $0x3c] sm:$0xf]
    %v35 = vld [vmem:[%s1 + $0x40] sm:$0xf]
    %v36 = vld [vmem:[%s1 + $0x44] sm:$0xf]
    %v37 = vld [vmem:[%s1 + $0x48] sm:$0xf]
    %v38 = vld [vmem:[%s1 + $0x4c] sm:$0xf]
    %v39 = vld [vmem:[%s1 + $0x50] sm:$0xf]
    %v40 = vld [vmem:[%s1 + $0x54] sm:$0xf]
    %v41 = vld [vmem:[%s1 + $0x58] sm:$0xf]
    %v42 = vld [vmem:[%s1 + $0x5c] sm:$0xf]
    %v43 = vld [vmem:[%s1 + $0x60] sm:$0xf]
    %v44 = vld [vmem:[%s1 + $0x64] sm:$0xf]
    %v45 = vld [vmem:[%s1 + $0x68] sm:$0xf]
    %v46 = vld [vmem:[%s1 + $0x6c] sm:$0xf]
    %v47 = vld [vmem:[%s1 + $0x70] sm:$0xf]
    %v48 = vld [vmem:[%s1 + $0x74] sm:$0xf]
    %v49 = vld [vmem:[%s1 + $0x78] sm:$0xf]
    %v50 = vld [vmem:[%s1 + $0x7c] sm:$0xf]
    %v51 = vld [vmem:[%s1 + $0x80] sm:$0xf]
    %v52 = vld [vmem:[%s1 + $0x84] sm:$0xf]
    %v53 = vld [vmem:[%s1 + $0x88] sm:$0xf]
    %v54 = vld [vmem:[%s1 + $0x8c] sm:$0xf]
    %v55 = vld [vmem:[%s1 + $0x90] sm:$0xf]
    %v56 = vld [vmem:[%s1 + $0x94] sm:$0xf]
    %v57 = vld [vmem:[%s1 + $0x98] sm:$0xf]
    %v58 = vld [vmem:[%s1 + $0x9c] sm:$0xf]
    %v59 = vld [vmem:[%s1 + $0xa0] sm:$0xf]
    %v60 = vld [vmem:[%s1 + $0xa4] sm:$0xf]
    %v61 = vld [vmem:[%s1 + $0xa8] sm:$0xf]
    %v62 = vld [vmem:[%s1 + $0xac] sm:$0xf]
    %v63 = vld [vmem:[%s1 + $0xb0] sm:$0xf]
    %v64 = vld [vmem:[%s1 + $0xb4] sm:$0xf]
    %v65 = vld [vmem:[%s1 + $0xb8] sm:$0xf]
    %v66 = vld [vmem:[%s1 + $0xbc] sm:$0xf]
    %v67 = vld [vmem:[%s1 + $0xc0] sm:$0xf]
    %v68 = vld [vmem:[%s1 + $0xc4] sm:$0xf]
    %v69 = vld [vmem:[%s1 + $0xc8] sm:$0xf]
    %v70 = vld [vmem:[%s1 + $0xcc] sm:$0xf]
    %v71 = vld [vmem:[%s1 + $0xd0] sm:$0xf]
    %v72 = vld [vmem:[%s1 + $0xd4] sm:$0xf]
    %v73 = vld [vmem:[%s1 + $0xd8] sm:$0xf]
    %v74 = vld [vmem:[%s1 + $0xdc] sm:$0xf]
    %v75 = vld [vmem:[%s1 + $0xe0] sm:$0xf]
    %v76 = vld [vmem:[%s1 + $0xe4] sm:$0xf]
    %v77 = vld [vmem:[%s1 + $0xe8] sm:$0xf]
    %v78 = vld [vmem:[%s1 + $0xec] sm:$0xf]
    %v79 = vld [vmem:[%s1 + $0xf0] sm:$0xf]
    %v80 = vld [vmem:[%s1 + $0xf4] sm:$0xf]
    %v81 = vld [vmem:[%s1 + $0xf8] sm:$0xf]
    %v82 = vld [vmem:[%s1 + $0xfc] sm:$0xf]
    %v83 = vld [vmem:[%s1 + $0x100] sm:$0xf]
    %v84 = vld [vmem:[%s1 + $0x104] sm:$0xf]
    %v85 = vld [vmem:[%s1 + $0x108] sm:$0xf]
    %v86 = vld [vmem:[%s1 + $0x10c] sm:$0xf]
    %v87 = vld [vmem:[%s1 + $0x110] sm:$0xf]
    %v88 = vld [vmem:[%s1 + $0x114] sm:$0xf]
    %v89 = vld [vmem:[%s1 + $0x118] sm:$0xf]
    %v90 = vld [vmem:[%s1 + $0x11c] sm:$0xf]
    %v91 = vld [vmem:[%s1 + $0x120] sm:$0xf]
    %v92 = vld [vmem:[%s1 + $0x124] sm:$0xf]
    %v93 = vld [vmem:[%s1 + $0x128] sm:$0xf]
    %v94 = vld [vmem:[%s1 + $0x12c] sm:$0xf]
    %v95 = vld [vmem:[%s1 + $0x130] sm:$0xf]
    %v96 = vld [vmem:[%s1 + $0x134] sm:$0xf]
    %v97 = vld [vmem:[%s1 + $0x138] sm:$0xf]
    %v98 = vld [vmem:[%s1 + $0x13c] sm:$0xf]
    %v99 = vld [vmem:[%s1 + $0x140] sm:$0xf]
    %v100 = vld [vmem:[%s1 + $0x144] sm:$0xf]
    %v101 = vld [vmem:[%s1 + $0x148] sm:$0xf]
    %v102 = vld [vmem:[%s1 + $0x14c] sm:$0xf]
    %v103 = vld [vmem:[%s1 + $0x150] sm:$0xf]
    %v104 = vld [vmem:[%s1 + $0x154] sm:$0xf]
    %v105 = vld [vmem:[%s1 + $0x158] sm:$0xf]
    %v106 = vld [vmem:[%s1 + $0x15c] sm:$0xf]
    %v107 = vld [vmem:[%s1 + $0x160] sm:$0xf]
    %v108 = vld [vmem:[%s1 + $0x164] sm:$0xf]
    %v109 = vld [vmem:[%s1 + $0x168] sm:$0xf]
    %v110 = vld [vmem:[%s1 + $0x16c] sm:$0xf]
    %v111 = vld [vmem:[%s1 + $0x170] sm:$0xf]
    %v112 = vld [vmem:[%s1 + $0x174] sm:$0xf]
    %v113 = vld [vmem:[%s1 + $0x178] sm:$0xf]
    %v114 = vld [vmem:[%s1 + $0x17c] sm:$0xf]
    %v115 = vld [vmem:[%s1 + $0x180] sm:$0xf]
    %v116 = vld [vmem:[%s1 + $0x184] sm:$0xf]
    %v117 = vld [vmem:[%s1 + $0x188] sm:$0xf]
    %v118 = vld [vmem:[%s1 + $0x18c] sm:$0xf]
    %v119 = vld [vmem:[%s1 + $0x190] sm:$0xf]
    %v120 = vld [vmem:[%s1 + $0x194] sm:$0xf]
    %v121 = vld [vmem:[%s1 + $0x198] sm:$0xf]
    %v122 = vld [vmem:[%s1 + $0x19c] sm:$0xf]
    %v123 = vld [vmem:[%s1 + $0x1a0] sm:$0xf]
    %v124 = vld [vmem:[%s1 + $0x1a4] sm:$0xf]
    %v125 = vld [vmem:[%s1 + $0x1a8] sm:$0xf]
    %v126 = vld [vmem:[%s1 + $0x1ac] sm:$0xf]
    %v127 = vld [vmem:[%s1 + $0x1b0] sm:$0xf]
    %v128 = vld [vmem:[%s1 + $0x1b4] sm:$0xf]
    %v129 = vld [vmem:[%s1 + $0x1b8] sm:$0xf]
    %v130 = vld [vmem:[%s1 + $0x1bc] sm:$0xf]
    %v131 = vld [vmem:[%s1 + $0x1c0] sm:$0xf]
    %v132 = vld [vmem:[%s1 + $0x1c4] sm:$0xf]
    %v133 = vld [vmem:[%s1 + $0x1c8] sm:$0xf]
    %v134 = vld [vmem:[%s1 + $0x1cc] sm:$0xf]
    %v135 = vld [vmem:[%s1 + $0x1d0] sm:$0xf]
    %v136 = vld [vmem:[%s1 + $0x1d4] sm:$0xf]
    %v137 = vld [vmem:[%s1 + $0x1d8] sm:$0xf]
    %v138 = vld [vmem:[%s1 + $0x1dc] sm:$0xf]
    %v139 = vld [vmem:[%s1 + $0x1e0] sm:$0xf]
    %v140 = vld [vmem:[%s1 + $0x1e4] sm:$0xf]
    %v141 = vld [vmem:[%s1 + $0x1e8] sm:$0xf]
    %v142 = vld [vmem:[%s1 + $0x1ec] sm:$0xf]
    %v143 = vld [vmem:[%s1 + $0x1f0] sm:$0xf]
    %v144 = vld [vmem:[%s1 + $0x1f4] sm:$0xf]
    %v145 = vld [vmem:[%s1 + $0x1f8] sm:$0xf]
    %v146 = vld [vmem:[%s1 + $0x1fc] sm:$0xf]
    %v147 = vld [vmem:[%s1 + $0x200] sm:$0xf]
    %v148 = vld [vmem:[%s1 + $0x204] sm:$0xf]
    %v149 = vld [vmem:[%s1 + $0x208] sm:$0xf]
    %v150 = vld [vmem:[%s1 + $0x20c] sm:$0xf]
    %v151 = vld [vmem:[%s1 + $0x210] sm:$0xf]
    %v152 = vld [vmem:[%s1 + $0x214] sm:$0xf]
    %v153 = vld [vmem:[%s1 + $0x218] sm:$0xf]
    %v154 = vld [vmem:[%s1 + $0x21c] sm:$0xf]
    %v155 = vld [vmem:[%s1 + $0x220] sm:$0xf]
    %v156 = vld [vmem:[%s1 + $0x224] sm:$0xf]
    %v157 = vld [vmem:[%s1 + $0x228] sm:$0xf]
    %v158 = vld [vmem:[%s1 + $0x22c] sm:$0xf]
    %v159 = vld [vmem:[%s1 + $0x230] sm:$0xf]
    %v160 = vld [vmem:[%s1 + $0x234] sm:$0xf]
    %v161 = vld [vmem:[%s1 + $0x238] sm:$0xf]
    %v162 = vld [vmem:[%s1 + $0x23c] sm:$0xf]
    %v163 = vld [vmem:[%s1 + $0x240] sm:$0xf]
    %v164 = vld [vmem:[%s1 + $0x244] sm:$0xf]
    %v165 = vld [vmem:[%s1 + $0x248] sm:$0xf]
    %v166 = vld [vmem:[%s1 + $0x24c] sm:$0xf]
    %v167 = vld [vmem:[%s1 + $0x250] sm:$0xf]
    %v168 = vld [vmem:[%s1 + $0x254] sm:$0xf]
    %v169 = vld [vmem:[%s1 + $0x258] sm:$0xf]
    %v170 = vld [vmem:[%s1 + $0x25c] sm:$0xf]
    %v171 = vld [vmem:[%s1 + $0x260] sm:$0xf]
    %v172 = vld [vmem:[%s1 + $0x264] sm:$0xf]
    %v173 = vld [vmem:[%s1 + $0x268] sm:$0xf]
    %v174 = vld [vmem:[%s1 + $0x26c] sm:$0xf]
    %v175 = vld [vmem:[%s1 + $0x270] sm:$0xf]
    %v176 = vld [vmem:[%s1 + $0x274] sm:$0xf]
    %v177 = vld [vmem:[%s1 + $0x278] sm:$0xf]
    %v178 = vld [vmem:[%s1 + $0x27c] sm:$0xf]
    %v179 = vld [vmem:[%s1 + $0x280] sm:$0xf]
    %v180 = vld [vmem:[%s1 + $0x284] sm:$0xf]
    %v181 = vld [vmem:[%s1 + $0x288] sm:$0xf]
    %v182 = vld [vmem:[%s1 + $0x28c] sm:$0xf]
    %v183 = vld [vmem:[%s1 + $0x290] sm:$0xf]
    %v184 = vld [vmem:[%s1 + $0x294] sm:$0xf]
    %v185 = vld [vmem:[%s1 + $0x298] sm:$0xf]
    %v186 = vld [vmem:[%s1 + $0x29c] sm:$0xf]
    %v187 = vld [vmem:[%s1 + $0x2a0] sm:$0xf]
    %v188 = vld [vmem:[%s1 + $0x2a4] sm:$0xf]
    %v189 = vld [vmem:[%s1 + $0x2a8] sm:$0xf]
    %v190 = vld [vmem:[%s1 + $0x2ac] sm:$0xf]
    %v191 = vld [vmem:[%s1 + $0x2b0] sm:$0xf]
    %v192 = vld [vmem:[%s1 + $0x2b4] sm:$0xf]
    %v193 = vld [vmem:[%s1 + $0x2b8] sm:$0xf]
    %v194 = vld [vmem:[%s1 + $0x2bc] sm:$0xf]
    %v195 = vld [vmem:[%s1 + $0x2c0] sm:$0xf]
    %v196 = vld [vmem:[%s1 + $0x2c4] sm:$0xf]
    %v197 = vld [vmem:[%s1 + $0x2c8] sm:$0xf]
    %v198 = vld [vmem:[%s1 + $0x2cc] sm:$0xf]
    %v199 = vld [vmem:[%s1 + $0x2d0] sm:$0xf]
    %v200 = vld [vmem:[%s1 + $0x2d4] sm:$0xf]
    %v201 = vld [vmem:[%s1 + $0x2d8] sm:$0xf]
    %v202 = vld [vmem:[%s1 + $0x2dc] sm:$0xf]
    %v203 = vld [vmem:[%s1 + $0x2e0] sm:$0xf]
    %v204 = vld [vmem:[%s1 + $0x2e4] sm:$0xf]
    %v205 = vld [vmem:[%s1 + $0x2e8] sm:$0xf]
    %v206 = vld [vmem:[%s1 + $0x2ec] sm:$0xf]
    %v207 = vld [vmem:[%s1 + $0x2f0] sm:$0xf]
    %v208 = vld [vmem:[%s1 + $0x2f4] sm:$0xf]
    %v209 = vld [vmem:[%s1 + $0x2f8] sm:$0xf]
    %v210 = vld [vmem:[%s1 + $0x2fc] sm:$0xf]
    %v211 = vld [vmem:[%s1 + $0x300] sm:$0xf]
    %v212 = vld [vmem:[%s1 + $0x304] sm:$0xf]
    %v213 = vld [vmem:[%s1 + $0x308] sm:$0xf]
    %v214 = vld [vmem:[%s1 + $0x30c] sm:$0xf]
    %v215 = vld [vmem:[%s1 + $0x310] sm:$0xf]
    %v216 = vld [vmem:[%s1 + $0x314] sm:$0xf]
    %v217 = vld [vmem:[%s1 + $0x318] sm:$0xf]
    %v218 = vld [vmem:[%s1 + $0x31c] sm:$0xf]
    %v219 = vld [vmem:[%s1 + $0x320] sm:$0xf]
    %v220 = vld [vmem:[%s1 + $0x324] sm:$0xf]
    %v221 = vld [vmem:[%s1 + $0x328] sm:$0xf]
    %v222 = vld [vmem:[%s1 + $0x32c] sm:$0xf]
    %v223 = vld [vmem:[%s1 + $0x330] sm:$0xf]
    %v224 = vld [vmem:[%s1 + $0x334] sm:$0xf]
    %v225 = vld [vmem:[%s1 + $0x338] sm:$0xf]
    %v226 = vld [vmem:[%s1 + $0x33c] sm:$0xf]
    %v227 = vld [vmem:[%s1 + $0x340] sm:$0xf]
    %v228 = vld [vmem:[%s1 + $0x344] sm:$0xf]
    %v229 = vld [vmem:[%s1 + $0x348] sm:$0xf]
    %v230 = vld [vmem:[%s1 + $0x34c] sm:$0xf]
    %v231 = vld [vmem:[%s1 + $0x350] sm:$0xf]
    %v232 = vld [vmem:[%s1 + $0x354] sm:$0xf]
    %v233 = vld [vmem:[%s1 + $0x358] sm:$0xf]
    %v234 = vld [vmem:[%s1 + $0x35c] sm:$0xf]
    %v235 = vld [vmem:[%s1 + $0x360] sm:$0xf]
    %v236 = vld [vmem:[%s1 + $0x364] sm:$0xf]
    %v237 = vld [vmem:[%s1 + $0x368] sm:$0xf]
    %v238 = vld [vmem:[%s1 + $0x36c] sm:$0xf]
    %v239 = vld [vmem:[%s1 + $0x370] sm:$0xf]
    %v240 = vld [vmem:[%s1 + $0x374] sm:$0xf]
    %v241 = vld [vmem:[%s1 + $0x378] sm:$0xf]
    %v242 = vld [vmem:[%s1 + $0x37c] sm:$0xf]
    %v243 = vld [vmem:[%s1 + $0x380] sm:$0xf]
    %v244 = vld [vmem:[%s1 + $0x384] sm:$0xf]
    %v245 = vld [vmem:[%s1 + $0x388] sm:$0xf]
    %v246 = vld [vmem:[%s1 + $0x38c] sm:$0xf]
    %v247 = vld [vmem:[%s1 + $0x390] sm:$0xf]
    %v248 = vld [vmem:[%s1 + $0x394] sm:$0xf]
    %v249 = vld [vmem:[%s1 + $0x398] sm:$0xf]
    %v250 = vld [vmem:[%s1 + $0x39c] sm:$0xf]
    %v251 = vld [vmem:[%s1 + $0x3a0] sm:$0xf]
    %v252 = vld [vmem:[%s1 + $0x3a4] sm:$0xf]
    %v253 = vld [vmem:[%s1 + $0x3a8] sm:$0xf]
    %v254 = vld [vmem:[%s1 + $0x3ac] sm:$0xf]
    %v255 = vld [vmem:[%s1 + $0x3b0] sm:$0xf]
    %v256 = vld [vmem:[%s1 + $0x3b4] sm:$0xf]
    %v257 = vld [vmem:[%s1 + $0x3b8] sm:$0xf]
    %v258 = vld [vmem:[%s1 + $0x3bc] sm:$0xf]
    %v259 = vld [vmem:[%s1 + $0x3c0] sm:$0xf]
    %v260 = vld [vmem:[%s1 + $0x3c4] sm:$0xf]
    %v261 = vld [vmem:[%s1 + $0x3c8] sm:$0xf]
    %v262 = vld [vmem:[%s1 + $0x3cc] sm:$0xf]
    %v263 = vld [vmem:[%s1 + $0x3d0] sm:$0xf]
    %v264 = vld [vmem:[%s1 + $0x3d4] sm:$0xf]
    %v265 = vld [vmem:[%s1 + $0x3d8] sm:$0xf]
    %v266 = vld [vmem:[%s1 + $0x3dc] sm:$0xf]
    %v267 = vld [vmem:[%s1 + $0x3e0] sm:$0xf]
    %v268 = vld [vmem:[%s1 + $0x3e4] sm:$0xf]
    %v269 = vld [vmem:[%s1 + $0x3e8] sm:$0xf]
    %v270 = vld [vmem:[%s1 + $0x3ec] sm:$0xf]
    %v271 = vld [vmem:[%s1 + $0x3f0] sm:$0xf]
    %v272 = vld [vmem:[%s1 + $0x3f4] sm:$0xf]
    %v273 = vld [vmem:[%s1 + $0x3f8] sm:$0xf]
    %v274 = vld [vmem:[%s1 + $0x3fc] sm:$0xf]
    %v275 = vld [vmem:[%s1 + $0x400] sm:$0xf]
    %v276 = vld [vmem:[%s1 + $0x404] sm:$0xf]
    %v277 = vld [vmem:[%s1 + $0x408] sm:$0xf]
    %v278 = vld [vmem:[%s1 + $0x40c] sm:$0xf]
    %v279 = vld [vmem:[%s1 + $0x410] sm:$0xf]
    %v280 = vld [vmem:[%s1 + $0x414] sm:$0xf]
    %v281 = vld [vmem:[%s1 + $0x418] sm:$0xf]
    %v282 = vld [vmem:[%s1 + $0x41c] sm:$0xf]
    %v283 = vld [vmem:[%s1 + $0x420] sm:$0xf]
    %v284 = vld [vmem:[%s1 + $0x424] sm:$0xf]
    %v285 = vld [vmem:[%s1 + $0x428] sm:$0xf]
    %v286 = vld [vmem:[%s1 + $0x42c] sm:$0xf]
    %v287 = vld [vmem:[%s1 + $0x430] sm:$0xf]
    %v288 = vld [vmem:[%s1 + $0x434] sm:$0xf]
    %v289 = vld [vmem:[%s1 + $0x438] sm:$0xf]
    %v290 = vld [vmem:[%s1 + $0x43c] sm:$0xf]
    %v291 = vld [vmem:[%s1 + $0x440] sm:$0xf]
    %v292 = vld [vmem:[%s1 + $0x444] sm:$0xf]
    %v293 = vld [vmem:[%s1 + $0x448] sm:$0xf]
    %v294 = vld [vmem:[%s1 + $0x44c] sm:$0xf]
    %v295 = vld [vmem:[%s1 + $0x450] sm:$0xf]
    %v296 = vld [vmem:[%s1 + $0x454] sm:$0xf]
    %v297 = vld [vmem:[%s1 + $0x458] sm:$0xf]
    %v298 = vld [vmem:[%s1 + $0x45c] sm:$0xf]
    %v299 = vld [vmem:[%s1 + $0x460] sm:$0xf]
    %v300 = vld [vmem:[%s1 + $0x464] sm:$0xf]
    %v301 = vld [vmem:[%s1 + $0x468] sm:$0xf]
    %v302 = vld [vmem:[%s1 + $0x46c] sm:$0xf]
    %v303 = vld [vmem:[%s1 + $0x470] sm:$0xf]
    %v304 = vld [vmem:[%s1 + $0x474] sm:$0xf]
    %v305 = vld [vmem:[%s1 + $0x478] sm:$0xf]
    %v306 = vld [vmem:[%s1 + $0x47c] sm:$0xf]
    %v307 = vld [vmem:[%s2] sm:$0x1]
    %v309 = vlaneseq
    %v310 = vshrl.u32 %v309, 7
    %v311 = vsub.s32 0, %v310
    %v312 = vrot.slane %v307, %v311
    %v317 = vcombine.high %v16, %v16
    %v319 = vunpack.c.l.s4 1966171168
    %v320 = vunpack.c.0.s8 %v319
    %v321 = vlaneseq
    %v322 = vshrl.u32 %v321, 7
    %v323 = vsub.s32 %v320, %v322
    %v324 = vrot.slane %v16, %v323
    %v326 = vunpack.c.l.s4 1966171168
    %v327 = vunpack.c.0.s8 %v326
    %v328 = vlaneseq
    %v329 = vshrl.u32 %v328, 7
    %v330 = vsub.s32 %v327, %v329
    %v331 = vrot.slane %v317, %v330
    %v332 = vcombine.high %v324, %v324
    %v333 = vcombine.high %v331, %v331
    %v335 = vunpack.c.l.s4 1966171168
    %v336 = vunpack.c.0.s8 %v335
    %v337 = vlaneseq
    %v338 = vshrl.u32 %v337, 7
    %v339 = vsub.s32 %v336, %v338
    %v340 = vrot.slane %v324, %v339
    %v342 = vunpack.c.l.s4 1966171168
    %v343 = vunpack.c.0.s8 %v342
    %v344 = vlaneseq
    %v345 = vshrl.u32 %v344, 7
    %v346 = vsub.s32 %v343, %v345
    %v347 = vrot.slane %v331, %v346
    %v349 = vunpack.c.l.s4 1966171168
    %v350 = vunpack.c.0.s8 %v349
    %v351 = vlaneseq
    %v352 = vshrl.u32 %v351, 7
    %v353 = vsub.s32 %v350, %v352
    %v354 = vrot.slane %v332, %v353
    %v356 = vunpack.c.l.s4 1966171168
    %v357 = vunpack.c.0.s8 %v356
    %v358 = vlaneseq
    %v359 = vshrl.u32 %v358, 7
    %v360 = vsub.s32 %v357, %v359
    %v361 = vrot.slane %v333, %v360
    %v362 = vcombine.high %v340, %v340
    %v363 = vcombine.high %v347, %v347
    %v364 = vcombine.high %v354, %v354
    %v365 = vcombine.high %v361, %v361
    %v366 = vcombine.high %v17, %v17
    %v368 = vunpack.c.l.s4 1966171168
    %v369 = vunpack.c.0.s8 %v368
    %v370 = vlaneseq
    %v371 = vshrl.u32 %v370, 7
    %v372 = vsub.s32 %v369, %v371
    %v373 = vrot.slane %v17, %v372
    %v375 = vunpack.c.l.s4 1966171168
    %v376 = vunpack.c.0.s8 %v375
    %v377 = vlaneseq
    %v378 = vshrl.u32 %v377, 7
    %v379 = vsub.s32 %v376, %v378
    %v380 = vrot.slane %v366, %v379
    %v381 = vcombine.high %v373, %v373
    %v382 = vcombine.high %v380, %v380
    %v384 = vunpack.c.l.s4 1966171168
    %v385 = vunpack.c.0.s8 %v384
    %v386 = vlaneseq
    %v387 = vshrl.u32 %v386, 7
    %v388 = vsub.s32 %v385, %v387
    %v389 = vrot.slane %v373, %v388
    %v391 = vunpack.c.l.s4 1966171168
    %v392 = vunpack.c.0.s8 %v391
    %v393 = vlaneseq
    %v394 = vshrl.u32 %v393, 7
    %v395 = vsub.s32 %v392, %v394
    %v396 = vrot.slane %v380, %v395
    %v398 = vunpack.c.l.s4 1966171168
    %v399 = vunpack.c.0.s8 %v398
    %v400 = vlaneseq
    %v401 = vshrl.u32 %v400, 7
    %v402 = vsub.s32 %v399, %v401
    %v403 = vrot.slane %v381, %v402
    %v405 = vunpack.c.l.s4 1966171168
    %v406 = vunpack.c.0.s8 %v405
    %v407 = vlaneseq
    %v408 = vshrl.u32 %v407, 7
    %v409 = vsub.s32 %v406, %v408
    %v410 = vrot.slane %v382, %v409
    %v411 = vcombine.high %v389, %v389
    %v412 = vcombine.high %v396, %v396
    %v413 = vcombine.high %v403, %v403
    %v414 = vcombine.high %v410, %v410
    %v416 = vunpack.c.l.s4 1966171168
    %v417 = vunpack.c.0.s8 %v416
    %v418 = vlaneseq
    %v419 = vshrl.u32 %v418, 7
    %v420 = vsub.s32 %v417, %v419
    %v421 = vrot.slane %v18, %v420
    %v422 = vcombine.high %v421, %v421
    %v424 = vunpack.c.l.s4 1966171168
    %v425 = vunpack.c.0.s8 %v424
    %v426 = vlaneseq
    %v427 = vshrl.u32 %v426, 7
    %v428 = vsub.s32 %v425, %v427
    %v429 = vrot.slane %v421, %v428
    %v431 = vunpack.c.l.s4 1966171168
    %v432 = vunpack.c.0.s8 %v431
    %v433 = vlaneseq
    %v434 = vshrl.u32 %v433, 7
    %v435 = vsub.s32 %v432, %v434
    %v436 = vrot.slane %v422, %v435
    %v743 = vunpack.c.l.b16 %v19
    %v744 = vunpack.c.l.b16 %v20
    %v745 = vunpack.c.l.b16 %v21
    %v746 = vunpack.c.l.b16 %v22
    %v747 = vunpack.c.l.b16 %v23
    %v748 = vunpack.c.l.b16 %v24
    %v749 = vunpack.c.l.b16 %v25
    %v750 = vunpack.c.l.b16 %v26
    %v751 = vunpack.c.l.b16 %v27
    %v752 = vunpack.c.l.b16 %v28
    %v753 = vunpack.c.l.b16 %v29
    %v754 = vunpack.c.l.b16 %v30
    %v755 = vunpack.c.l.b16 %v31
    %v756 = vunpack.c.l.b16 %v32
    %v757 = vunpack.c.l.b16 %v33
    %v758 = vunpack.c.l.b16 %v34
    %v759 = vunpack.c.l.b16 %v35
    %v760 = vunpack.c.l.b16 %v36
    %v761 = vunpack.c.l.b16 %v37
    %v762 = vunpack.c.l.b16 %v38
    %v763 = vunpack.c.l.b16 %v39
    %v764 = vunpack.c.l.b16 %v40
    %v765 = vunpack.c.l.b16 %v41
    %v766 = vunpack.c.l.b16 %v42
    %v767 = vunpack.c.l.b16 %v43
    %v768 = vunpack.c.l.b16 %v44
    %v769 = vunpack.c.l.b16 %v45
    %v770 = vunpack.c.l.b16 %v46
    %v771 = vunpack.c.l.b16 %v47
    %v772 = vunpack.c.l.b16 %v48
    %v773 = vunpack.c.l.b16 %v49
    %v774 = vunpack.c.l.b16 %v50
    %v775 = vunpack.c.l.b16 %v51
    %v776 = vunpack.c.l.b16 %v52
    %v777 = vunpack.c.l.b16 %v53
    %v778 = vunpack.c.l.b16 %v54
    %v779 = vunpack.c.l.b16 %v55
    %v780 = vunpack.c.l.b16 %v56
    %v781 = vunpack.c.l.b16 %v57
    %v782 = vunpack.c.l.b16 %v58
    %v783 = vunpack.c.l.b16 %v59
    %v784 = vunpack.c.l.b16 %v60
    %v785 = vunpack.c.l.b16 %v61
    %v786 = vunpack.c.l.b16 %v62
    %v787 = vunpack.c.l.b16 %v63
    %v788 = vunpack.c.l.b16 %v64
    %v789 = vunpack.c.l.b16 %v65
    %v790 = vunpack.c.l.b16 %v66
    %v791 = vunpack.c.l.b16 %v67
    %v792 = vunpack.c.l.b16 %v68
    %v793 = vunpack.c.l.b16 %v69
    %v794 = vunpack.c.l.b16 %v70
    %v795 = vunpack.c.l.b16 %v71
    %v796 = vunpack.c.l.b16 %v72
    %v797 = vunpack.c.l.b16 %v73
    %v798 = vunpack.c.l.b16 %v74
    %v799 = vunpack.c.l.b16 %v75
    %v800 = vunpack.c.l.b16 %v76
    %v801 = vunpack.c.l.b16 %v77
    %v802 = vunpack.c.l.b16 %v78
    %v803 = vunpack.c.l.b16 %v79
    %v804 = vunpack.c.l.b16 %v80
    %v805 = vunpack.c.l.b16 %v81
    %v806 = vunpack.c.l.b16 %v82
    %v807 = vunpack.c.l.b16 %v83
    %v808 = vunpack.c.l.b16 %v84
    %v809 = vunpack.c.l.b16 %v85
    %v810 = vunpack.c.l.b16 %v86
    %v811 = vunpack.c.l.b16 %v87
    %v812 = vunpack.c.l.b16 %v88
    %v813 = vunpack.c.l.b16 %v89
    %v814 = vunpack.c.l.b16 %v90
    %v815 = vunpack.c.l.b16 %v91
    %v816 = vunpack.c.l.b16 %v92
    %v817 = vunpack.c.l.b16 %v93
    %v818 = vunpack.c.l.b16 %v94
    %v819 = vunpack.c.l.b16 %v95
    %v820 = vunpack.c.l.b16 %v96
    %v821 = vunpack.c.l.b16 %v97
    %v822 = vunpack.c.l.b16 %v98
    %v823 = vunpack.c.l.b16 %v99
    %v824 = vunpack.c.l.b16 %v100
    %v825 = vunpack.c.l.b16 %v101
    %v826 = vunpack.c.l.b16 %v102
    %v827 = vunpack.c.l.b16 %v103
    %v828 = vunpack.c.l.b16 %v104
    %v829 = vunpack.c.l.b16 %v105
    %v830 = vunpack.c.l.b16 %v106
    %v831 = vunpack.c.l.b16 %v107
    %v832 = vunpack.c.l.b16 %v108
    %v833 = vunpack.c.l.b16 %v109
    %v834 = vunpack.c.l.b16 %v110
    %v835 = vunpack.c.l.b16 %v111
    %v836 = vunpack.c.l.b16 %v112
    %v837 = vunpack.c.l.b16 %v113
    %v838 = vunpack.c.l.b16 %v114
    %v839 = vunpack.c.l.b16 %v115
    %v840 = vunpack.c.l.b16 %v116
    %v841 = vunpack.c.l.b16 %v117
    %v842 = vunpack.c.l.b16 %v118
    %v843 = vunpack.c.l.b16 %v119
    %v844 = vunpack.c.l.b16 %v120
    %v845 = vunpack.c.l.b16 %v121
    %v846 = vunpack.c.l.b16 %v122
    %v847 = vunpack.c.l.b16 %v123
    %v848 = vunpack.c.l.b16 %v124
    %v849 = vunpack.c.l.b16 %v125
    %v850 = vunpack.c.l.b16 %v126
    %v851 = vunpack.c.l.b16 %v127
    %v852 = vunpack.c.l.b16 %v128
    %v853 = vunpack.c.l.b16 %v129
    %v854 = vunpack.c.l.b16 %v130
    %v855 = vunpack.c.l.b16 %v131
    %v856 = vunpack.c.l.b16 %v132
    %v857 = vunpack.c.l.b16 %v133
    %v858 = vunpack.c.l.b16 %v134
    %v859 = vunpack.c.l.b16 %v135
    %v860 = vunpack.c.l.b16 %v136
    %v861 = vunpack.c.l.b16 %v137
    %v862 = vunpack.c.l.b16 %v138
    %v863 = vunpack.c.l.b16 %v139
    %v864 = vunpack.c.l.b16 %v140
    %v865 = vunpack.c.l.b16 %v141
    %v866 = vunpack.c.l.b16 %v142
    %v867 = vunpack.c.l.b16 %v143
    %v868 = vunpack.c.l.b16 %v144
    %v869 = vunpack.c.l.b16 %v145
    %v870 = vunpack.c.l.b16 %v146
    %v871 = vunpack.c.l.b16 %v147
    %v872 = vunpack.c.l.b16 %v148
    %v873 = vunpack.c.l.b16 %v149
    %v874 = vunpack.c.l.b16 %v150
    %v875 = vunpack.c.l.b16 %v151
    %v876 = vunpack.c.l.b16 %v152
    %v877 = vunpack.c.l.b16 %v153
    %v878 = vunpack.c.l.b16 %v154
    %v879 = vunpack.c.l.b16 %v155
    %v880 = vunpack.c.l.b16 %v156
    %v881 = vunpack.c.l.b16 %v157
    %v882 = vunpack.c.l.b16 %v158
    %v883 = vunpack.c.l.b16 %v159
    %v884 = vunpack.c.l.b16 %v160
    %v885 = vunpack.c.l.b16 %v161
    %v886 = vunpack.c.l.b16 %v162
    %v887 = vunpack.c.l.b16 %v163
    %v888 = vunpack.c.l.b16 %v164
    %v889 = vunpack.c.l.b16 %v165
    %v890 = vunpack.c.l.b16 %v166
    %v891 = vunpack.c.l.b16 %v167
    %v892 = vunpack.c.l.b16 %v168
    %v893 = vunpack.c.l.b16 %v169
    %v894 = vunpack.c.l.b16 %v170
    %v895 = vunpack.c.l.b16 %v171
    %v896 = vunpack.c.l.b16 %v172
    %v897 = vunpack.c.l.b16 %v173
    %v898 = vunpack.c.l.b16 %v174
    %v899 = vunpack.c.l.b16 %v175
    %v900 = vunpack.c.l.b16 %v176
    %v901 = vunpack.c.l.b16 %v177
    %v902 = vunpack.c.l.b16 %v178
    %v903 = vunpack.c.l.b16 %v179
    %v904 = vunpack.c.l.b16 %v180
    %v905 = vunpack.c.l.b16 %v181
    %v906 = vunpack.c.l.b16 %v182
    %v907 = vunpack.c.l.b16 %v183
    %v908 = vunpack.c.l.b16 %v184
    %v909 = vunpack.c.l.b16 %v185
    %v910 = vunpack.c.l.b16 %v186
    %v911 = vunpack.c.l.b16 %v187
    %v912 = vunpack.c.l.b16 %v188
    %v913 = vunpack.c.l.b16 %v189
    %v914 = vunpack.c.l.b16 %v190
    %v915 = vunpack.c.l.b16 %v191
    %v916 = vunpack.c.l.b16 %v192
    %v917 = vunpack.c.l.b16 %v193
    %v918 = vunpack.c.l.b16 %v194
    %v919 = vunpack.c.l.b16 %v195
    %v920 = vunpack.c.l.b16 %v196
    %v921 = vunpack.c.l.b16 %v197
    %v922 = vunpack.c.l.b16 %v198
    %v923 = vunpack.c.l.b16 %v199
    %v924 = vunpack.c.l.b16 %v200
    %v925 = vunpack.c.l.b16 %v201
    %v926 = vunpack.c.l.b16 %v202
    %v927 = vunpack.c.l.b16 %v203
    %v928 = vunpack.c.l.b16 %v204
    %v929 = vunpack.c.l.b16 %v205
    %v930 = vunpack.c.l.b16 %v206
    %v931 = vunpack.c.l.b16 %v207
    %v932 = vunpack.c.l.b16 %v208
    %v933 = vunpack.c.l.b16 %v209
    %v934 = vunpack.c.l.b16 %v210
    %v935 = vunpack.c.l.b16 %v211
    %v936 = vunpack.c.l.b16 %v212
    %v937 = vunpack.c.l.b16 %v213
    %v938 = vunpack.c.l.b16 %v214
    %v939 = vunpack.c.l.b16 %v215
    %v940 = vunpack.c.l.b16 %v216
    %v941 = vunpack.c.l.b16 %v217
    %v942 = vunpack.c.l.b16 %v218
    %v943 = vunpack.c.l.b16 %v219
    %v944 = vunpack.c.l.b16 %v220
    %v945 = vunpack.c.l.b16 %v221
    %v946 = vunpack.c.l.b16 %v222
    %v947 = vunpack.c.l.b16 %v223
    %v948 = vunpack.c.l.b16 %v224
    %v949 = vunpack.c.l.b16 %v225
    %v950 = vunpack.c.l.b16 %v226
    %v951 = vunpack.c.l.b16 %v227
    %v952 = vunpack.c.l.b16 %v228
    %v953 = vunpack.c.l.b16 %v229
    %v954 = vunpack.c.l.b16 %v230
    %v955 = vunpack.c.l.b16 %v231
    %v956 = vunpack.c.l.b16 %v232
    %v957 = vunpack.c.l.b16 %v233
    %v958 = vunpack.c.l.b16 %v234
    %v959 = vunpack.c.l.b16 %v235
    %v960 = vunpack.c.l.b16 %v236
    %v961 = vunpack.c.l.b16 %v237
    %v962 = vunpack.c.l.b16 %v238
    %v963 = vunpack.c.l.b16 %v239
    %v964 = vunpack.c.l.b16 %v240
    %v965 = vunpack.c.l.b16 %v241
    %v966 = vunpack.c.l.b16 %v242
    %v967 = vunpack.c.l.b16 %v243
    %v968 = vunpack.c.l.b16 %v244
    %v969 = vunpack.c.l.b16 %v245
    %v970 = vunpack.c.l.b16 %v246
    %v971 = vunpack.c.l.b16 %v247
    %v972 = vunpack.c.l.b16 %v248
    %v973 = vunpack.c.l.b16 %v249
    %v974 = vunpack.c.l.b16 %v250
    %v975 = vunpack.c.l.b16 %v251
    %v976 = vunpack.c.l.b16 %v252
    %v977 = vunpack.c.l.b16 %v253
    %v978 = vunpack.c.l.b16 %v254
    %v979 = vunpack.c.l.b16 %v255
    %v980 = vunpack.c.l.b16 %v256
    %v981 = vunpack.c.l.b16 %v257
    %v982 = vunpack.c.l.b16 %v258
    %v983 = vunpack.c.l.b16 %v259
    %v984 = vunpack.c.l.b16 %v260
    %v985 = vunpack.c.l.b16 %v261
    %v986 = vunpack.c.l.b16 %v262
    %v987 = vunpack.c.l.b16 %v263
    %v988 = vunpack.c.l.b16 %v264
    %v989 = vunpack.c.l.b16 %v265
    %v990 = vunpack.c.l.b16 %v266
    %v991 = vunpack.c.l.b16 %v267
    %v992 = vunpack.c.l.b16 %v268
    %v993 = vunpack.c.l.b16 %v269
    %v994 = vunpack.c.l.b16 %v270
    %v995 = vunpack.c.l.b16 %v271
    %v996 = vunpack.c.l.b16 %v272
    %v997 = vunpack.c.l.b16 %v273
    %v998 = vunpack.c.l.b16 %v274
    %v999 = vunpack.c.l.b16 %v275
    %v1000 = vunpack.c.l.b16 %v276
    %v1001 = vunpack.c.l.b16 %v277
    %v1002 = vunpack.c.l.b16 %v278
    %v1003 = vunpack.c.l.b16 %v279
    %v1004 = vunpack.c.l.b16 %v280
    %v1005 = vunpack.c.l.b16 %v281
    %v1006 = vunpack.c.l.b16 %v282
    %v1007 = vunpack.c.l.b16 %v283
    %v1008 = vunpack.c.l.b16 %v284
    %v1009 = vunpack.c.l.b16 %v285
    %v1010 = vunpack.c.l.b16 %v286
    %v1011 = vunpack.c.l.b16 %v287
    %v1012 = vunpack.c.l.b16 %v288
    %v1013 = vunpack.c.l.b16 %v289
    %v1014 = vunpack.c.l.b16 %v290
    %v1015 = vunpack.c.l.b16 %v291
    %v1016 = vunpack.c.l.b16 %v292
    %v1017 = vunpack.c.l.b16 %v293
    %v1018 = vunpack.c.l.b16 %v294
    %v1019 = vunpack.c.l.b16 %v295
    %v1020 = vunpack.c.l.b16 %v296
    %v1021 = vunpack.c.l.b16 %v297
    %v1022 = vunpack.c.l.b16 %v298
    %v1023 = vunpack.c.l.b16 %v299
    %v1024 = vunpack.c.l.b16 %v300
    %v1025 = vunpack.c.l.b16 %v301
    %v1026 = vunpack.c.l.b16 %v302
    %v1027 = vunpack.c.l.b16 %v303
    %v1028 = vunpack.c.l.b16 %v304
    %v1029 = vunpack.c.l.b16 %v305
    %v1030 = vunpack.c.l.b16 %v306
    %v1031 = vpack.c.b16 %v744, %v743
    %v1032 = vpack.c.b16 %v746, %v745
    %v1033 = vpack.c.b16 %v748, %v747
    %v1034 = vpack.c.b16 %v750, %v749
    %v1035 = vpack.c.b16 %v752, %v751
    %v1036 = vpack.c.b16 %v754, %v753
    %v1037 = vpack.c.b16 %v756, %v755
    %v1038 = vpack.c.b16 %v758, %v757
    %v1039 = vpack.c.b16 %v760, %v759
    %v1040 = vpack.c.b16 %v762, %v761
    %v1041 = vpack.c.b16 %v764, %v763
    %v1042 = vpack.c.b16 %v766, %v765
    %v1043 = vpack.c.b16 %v768, %v767
    %v1044 = vpack.c.b16 %v770, %v769
    %v1045 = vpack.c.b16 %v772, %v771
    %v1046 = vpack.c.b16 %v774, %v773
    %v1047 = vpack.c.b16 %v776, %v775
    %v1048 = vpack.c.b16 %v778, %v777
    %v1049 = vpack.c.b16 %v780, %v779
    %v1050 = vpack.c.b16 %v782, %v781
    %v1051 = vpack.c.b16 %v784, %v783
    %v1052 = vpack.c.b16 %v786, %v785
    %v1053 = vpack.c.b16 %v788, %v787
    %v1054 = vpack.c.b16 %v790, %v789
    %v1055 = vpack.c.b16 %v792, %v791
    %v1056 = vpack.c.b16 %v794, %v793
    %v1057 = vpack.c.b16 %v796, %v795
    %v1058 = vpack.c.b16 %v798, %v797
    %v1059 = vpack.c.b16 %v800, %v799
    %v1060 = vpack.c.b16 %v802, %v801
    %v1061 = vpack.c.b16 %v804, %v803
    %v1062 = vpack.c.b16 %v806, %v805
    %v1063 = vpack.c.b16 %v808, %v807
    %v1064 = vpack.c.b16 %v810, %v809
    %v1065 = vpack.c.b16 %v812, %v811
    %v1066 = vpack.c.b16 %v814, %v813
    %v1067 = vpack.c.b16 %v816, %v815
    %v1068 = vpack.c.b16 %v818, %v817
    %v1069 = vpack.c.b16 %v820, %v819
    %v1070 = vpack.c.b16 %v822, %v821
    %v1071 = vpack.c.b16 %v824, %v823
    %v1072 = vpack.c.b16 %v826, %v825
    %v1073 = vpack.c.b16 %v828, %v827
    %v1074 = vpack.c.b16 %v830, %v829
    %v1075 = vpack.c.b16 %v832, %v831
    %v1076 = vpack.c.b16 %v834, %v833
    %v1077 = vpack.c.b16 %v836, %v835
    %v1078 = vpack.c.b16 %v838, %v837
    %v1079 = vpack.c.b16 %v840, %v839
    %v1080 = vpack.c.b16 %v842, %v841
    %v1081 = vpack.c.b16 %v844, %v843
    %v1082 = vpack.c.b16 %v846, %v845
    %v1083 = vpack.c.b16 %v848, %v847
    %v1084 = vpack.c.b16 %v850, %v849
    %v1085 = vpack.c.b16 %v852, %v851
    %v1086 = vpack.c.b16 %v854, %v853
    %v1087 = vpack.c.b16 %v856, %v855
    %v1088 = vpack.c.b16 %v858, %v857
    %v1089 = vpack.c.b16 %v860, %v859
    %v1090 = vpack.c.b16 %v862, %v861
    %v1091 = vpack.c.b16 %v864, %v863
    %v1092 = vpack.c.b16 %v866, %v865
    %v1093 = vpack.c.b16 %v868, %v867
    %v1094 = vpack.c.b16 %v870, %v869
    %v1095 = vpack.c.b16 %v872, %v871
    %v1096 = vpack.c.b16 %v874, %v873
    %v1097 = vpack.c.b16 %v876, %v875
    %v1098 = vpack.c.b16 %v878, %v877
    %v1099 = vpack.c.b16 %v880, %v879
    %v1100 = vpack.c.b16 %v882, %v881
    %v1101 = vpack.c.b16 %v884, %v883
    %v1102 = vpack.c.b16 %v886, %v885
    %v1103 = vpack.c.b16 %v888, %v887
    %v1104 = vpack.c.b16 %v890, %v889
    %v1105 = vpack.c.b16 %v892, %v891
    %v1106 = vpack.c.b16 %v894, %v893
    %v1107 = vpack.c.b16 %v896, %v895
    %v1108 = vpack.c.b16 %v898, %v897
    %v1109 = vpack.c.b16 %v900, %v899
    %v1110 = vpack.c.b16 %v902, %v901
    %v1111 = vpack.c.b16 %v904, %v903
    %v1112 = vpack.c.b16 %v906, %v905
    %v1113 = vpack.c.b16 %v908, %v907
    %v1114 = vpack.c.b16 %v910, %v909
    %v1115 = vpack.c.b16 %v912, %v911
    %v1116 = vpack.c.b16 %v914, %v913
    %v1117 = vpack.c.b16 %v916, %v915
    %v1118 = vpack.c.b16 %v918, %v917
    %v1119 = vpack.c.b16 %v920, %v919
    %v1120 = vpack.c.b16 %v922, %v921
    %v1121 = vpack.c.b16 %v924, %v923
    %v1122 = vpack.c.b16 %v926, %v925
    %v1123 = vpack.c.b16 %v928, %v927
    %v1124 = vpack.c.b16 %v930, %v929
    %v1125 = vpack.c.b16 %v932, %v931
    %v1126 = vpack.c.b16 %v934, %v933
    %v1127 = vpack.c.b16 %v936, %v935
    %v1128 = vpack.c.b16 %v938, %v937
    %v1129 = vpack.c.b16 %v940, %v939
    %v1130 = vpack.c.b16 %v942, %v941
    %v1131 = vpack.c.b16 %v944, %v943
    %v1132 = vpack.c.b16 %v946, %v945
    %v1133 = vpack.c.b16 %v948, %v947
    %v1134 = vpack.c.b16 %v950, %v949
    %v1135 = vpack.c.b16 %v952, %v951
    %v1136 = vpack.c.b16 %v954, %v953
    %v1137 = vpack.c.b16 %v956, %v955
    %v1138 = vpack.c.b16 %v958, %v957
    %v1139 = vpack.c.b16 %v960, %v959
    %v1140 = vpack.c.b16 %v962, %v961
    %v1141 = vpack.c.b16 %v964, %v963
    %v1142 = vpack.c.b16 %v966, %v965
    %v1143 = vpack.c.b16 %v968, %v967
    %v1144 = vpack.c.b16 %v970, %v969
    %v1145 = vpack.c.b16 %v972, %v971
    %v1146 = vpack.c.b16 %v974, %v973
    %v1147 = vpack.c.b16 %v976, %v975
    %v1148 = vpack.c.b16 %v978, %v977
    %v1149 = vpack.c.b16 %v980, %v979
    %v1150 = vpack.c.b16 %v982, %v981
    %v1151 = vpack.c.b16 %v984, %v983
    %v1152 = vpack.c.b16 %v986, %v985
    %v1153 = vpack.c.b16 %v988, %v987
    %v1154 = vpack.c.b16 %v990, %v989
    %v1155 = vpack.c.b16 %v992, %v991
    %v1156 = vpack.c.b16 %v994, %v993
    %v1157 = vpack.c.b16 %v996, %v995
    %v1158 = vpack.c.b16 %v998, %v997
    %v1159 = vpack.c.b16 %v1000, %v999
    %v1160 = vpack.c.b16 %v1002, %v1001
    %v1161 = vpack.c.b16 %v1004, %v1003
    %v1162 = vpack.c.b16 %v1006, %v1005
    %v1163 = vpack.c.b16 %v1008, %v1007
    %v1164 = vpack.c.b16 %v1010, %v1009
    %v1165 = vpack.c.b16 %v1012, %v1011
    %v1166 = vpack.c.b16 %v1014, %v1013
    %v1167 = vpack.c.b16 %v1016, %v1015
    %v1168 = vpack.c.b16 %v1018, %v1017
    %v1169 = vpack.c.b16 %v1020, %v1019
    %v1170 = vpack.c.b16 %v1022, %v1021
    %v1171 = vpack.c.b16 %v1024, %v1023
    %v1172 = vpack.c.b16 %v1026, %v1025
    %v1173 = vpack.c.b16 %v1028, %v1027
    %v1174 = vpack.c.b16 %v1030, %v1029
    %1319 = vmatprep.subr.bf16.mxu0 0
    %1320 = vmatpush1.bf16.msra.mxu0 %v1038
    %1321 = vmatprep.subr.bf16.mxu0 0
    %1322 = vmatpush1.bf16.msra.mxu0 %v1037
    %1323 = vmatprep.subr.bf16.mxu0 0
    %1324 = vmatpush1.bf16.msra.mxu0 %v1036
    %1325 = vmatprep.subr.bf16.mxu0 0
    %1326 = vmatpush1.bf16.msra.mxu0 %v1035
    %1327 = vmatprep.subr.bf16.mxu0 0
    %1328 = vmatpush1.bf16.msra.mxu0 %v1034
    %1329 = vmatprep.subr.bf16.mxu0 0
    %1330 = vmatpush1.bf16.msra.mxu0 %v1033
    %1331 = vmatprep.subr.bf16.mxu0 0
    %1332 = vmatpush1.bf16.msra.mxu0 %v1032
    %1333 = vmatprep.subr.bf16.mxu0 0
    %1334 = vmatpush1.bf16.msra.mxu0 %v1031
    %1335 = vmatprep.subr.bf16.mxu0 0
    %1336 = vmatpush2.bf16.msra.mxu0 %v1046
    %1337 = vmatprep.subr.bf16.mxu0 0
    %1338 = vmatpush2.bf16.msra.mxu0 %v1045
    %1339 = vmatprep.subr.bf16.mxu0 0
    %1340 = vmatpush2.bf16.msra.mxu0 %v1044
    %1341 = vmatprep.subr.bf16.mxu0 0
    %1342 = vmatpush2.bf16.msra.mxu0 %v1043
    %1343 = vmatprep.subr.bf16.mxu0 0
    %1344 = vmatpush2.bf16.msra.mxu0 %v1042
    %1345 = vmatprep.subr.bf16.mxu0 0
    %1346 = vmatpush2.bf16.msra.mxu0 %v1041
    %1347 = vmatprep.subr.bf16.mxu0 0
    %1348 = vmatpush2.bf16.msra.mxu0 %v1040
    %1349 = vmatprep.subr.bf16.mxu0 0
    %1350 = vmatpush2.bf16.msra.mxu0 %v1039
    %1351 = vmatprep.mubr.bf16.mxu0 %v354
    %1352 = vmatmul.mubr.bf16.gmra.mxu0 %v340
    %v1353 = vpop.f32.mrf.mxu0
    %v1354 = vadd.f32 %v312, %v1353
    %v1355 = vpop.f32.mrf.mxu0
    %v1356 = vpop.f32.mrf.mxu0
    %v1357 = vpop.f32.mrf.mxu0
    %1358 = vdwg.mxu0
    %1359 = vmatprep.subr.bf16.mxu0 0
    %1360 = vmatpush1.bf16.msra.mxu0 %v1054
    %1361 = vmatprep.subr.bf16.mxu0 0
    %1362 = vmatpush1.bf16.msra.mxu0 %v1053
    %1363 = vmatprep.subr.bf16.mxu0 0
    %1364 = vmatpush1.bf16.msra.mxu0 %v1052
    %1365 = vmatprep.subr.bf16.mxu0 0
    %1366 = vmatpush1.bf16.msra.mxu0 %v1051
    %1367 = vmatprep.subr.bf16.mxu0 0
    %1368 = vmatpush1.bf16.msra.mxu0 %v1050
    %1369 = vmatprep.subr.bf16.mxu0 0
    %1370 = vmatpush1.bf16.msra.mxu0 %v1049
    %1371 = vmatprep.subr.bf16.mxu0 0
    %1372 = vmatpush1.bf16.msra.mxu0 %v1048
    %1373 = vmatprep.subr.bf16.mxu0 0
    %1374 = vmatpush1.bf16.msra.mxu0 %v1047
    %1375 = vmatprep.subr.bf16.mxu0 0
    %1376 = vmatpush2.bf16.msra.mxu0 %v1062
    %1377 = vmatprep.subr.bf16.mxu0 0
    %1378 = vmatpush2.bf16.msra.mxu0 %v1061
    %1379 = vmatprep.subr.bf16.mxu0 0
    %1380 = vmatpush2.bf16.msra.mxu0 %v1060
    %1381 = vmatprep.subr.bf16.mxu0 0
    %1382 = vmatpush2.bf16.msra.mxu0 %v1059
    %1383 = vmatprep.subr.bf16.mxu0 0
    %1384 = vmatpush2.bf16.msra.mxu0 %v1058
    %1385 = vmatprep.subr.bf16.mxu0 0
    %1386 = vmatpush2.bf16.msra.mxu0 %v1057
    %1387 = vmatprep.subr.bf16.mxu0 0
    %1388 = vmatpush2.bf16.msra.mxu0 %v1056
    %1389 = vmatprep.subr.bf16.mxu0 0
    %1390 = vmatpush2.bf16.msra.mxu0 %v1055
    %1391 = vmatprep.mubr.bf16.mxu0 %v364
    %1392 = vmatmul.mubr.bf16.gmra.mxu0 %v362
    %v1393 = vpop.f32.mrf.mxu0
    %v1394 = vadd.f32 %v1354, %v1393
    %v1395 = vpop.f32.mrf.mxu0
    %v1396 = vpop.f32.mrf.mxu0
    %v1397 = vpop.f32.mrf.mxu0
    %1398 = vdwg.mxu0
    %1399 = vmatprep.subr.bf16.mxu0 0
    %1400 = vmatpush1.bf16.msra.mxu0 %v1070
    %1401 = vmatprep.subr.bf16.mxu0 0
    %1402 = vmatpush1.bf16.msra.mxu0 %v1069
    %1403 = vmatprep.subr.bf16.mxu0 0
    %1404 = vmatpush1.bf16.msra.mxu0 %v1068
    %1405 = vmatprep.subr.bf16.mxu0 0
    %1406 = vmatpush1.bf16.msra.mxu0 %v1067
    %1407 = vmatprep.subr.bf16.mxu0 0
    %1408 = vmatpush1.bf16.msra.mxu0 %v1066
    %1409 = vmatprep.subr.bf16.mxu0 0
    %1410 = vmatpush1.bf16.msra.mxu0 %v1065
    %1411 = vmatprep.subr.bf16.mxu0 0
    %1412 = vmatpush1.bf16.msra.mxu0 %v1064
    %1413 = vmatprep.subr.bf16.mxu0 0
    %1414 = vmatpush1.bf16.msra.mxu0 %v1063
    %1415 = vmatprep.subr.bf16.mxu0 0
    %1416 = vmatpush2.bf16.msra.mxu0 %v1078
    %1417 = vmatprep.subr.bf16.mxu0 0
    %1418 = vmatpush2.bf16.msra.mxu0 %v1077
    %1419 = vmatprep.subr.bf16.mxu0 0
    %1420 = vmatpush2.bf16.msra.mxu0 %v1076
    %1421 = vmatprep.subr.bf16.mxu0 0
    %1422 = vmatpush2.bf16.msra.mxu0 %v1075
    %1423 = vmatprep.subr.bf16.mxu0 0
    %1424 = vmatpush2.bf16.msra.mxu0 %v1074
    %1425 = vmatprep.subr.bf16.mxu0 0
    %1426 = vmatpush2.bf16.msra.mxu0 %v1073
    %1427 = vmatprep.subr.bf16.mxu0 0
    %1428 = vmatpush2.bf16.msra.mxu0 %v1072
    %1429 = vmatprep.subr.bf16.mxu0 0
    %1430 = vmatpush2.bf16.msra.mxu0 %v1071
    %1431 = vmatprep.mubr.bf16.mxu0 %v361
    %1432 = vmatmul.mubr.bf16.gmra.mxu0 %v347
    %v1433 = vpop.f32.mrf.mxu0
    %v1434 = vadd.f32 %v1394, %v1433
    %v1435 = vpop.f32.mrf.mxu0
    %v1436 = vpop.f32.mrf.mxu0
    %v1437 = vpop.f32.mrf.mxu0
    %1438 = vdwg.mxu0
    %1439 = vmatprep.subr.bf16.mxu0 0
    %1440 = vmatpush1.bf16.msra.mxu0 %v1086
    %1441 = vmatprep.subr.bf16.mxu0 0
    %1442 = vmatpush1.bf16.msra.mxu0 %v1085
    %1443 = vmatprep.subr.bf16.mxu0 0
    %1444 = vmatpush1.bf16.msra.mxu0 %v1084
    %1445 = vmatprep.subr.bf16.mxu0 0
    %1446 = vmatpush1.bf16.msra.mxu0 %v1083
    %1447 = vmatprep.subr.bf16.mxu0 0
    %1448 = vmatpush1.bf16.msra.mxu0 %v1082
    %1449 = vmatprep.subr.bf16.mxu0 0
    %1450 = vmatpush1.bf16.msra.mxu0 %v1081
    %1451 = vmatprep.subr.bf16.mxu0 0
    %1452 = vmatpush1.bf16.msra.mxu0 %v1080
    %1453 = vmatprep.subr.bf16.mxu0 0
    %1454 = vmatpush1.bf16.msra.mxu0 %v1079
    %1455 = vmatprep.subr.bf16.mxu0 0
    %1456 = vmatpush2.bf16.msra.mxu0 %v1094
    %1457 = vmatprep.subr.bf16.mxu0 0
    %1458 = vmatpush2.bf16.msra.mxu0 %v1093
    %1459 = vmatprep.subr.bf16.mxu0 0
    %1460 = vmatpush2.bf16.msra.mxu0 %v1092
    %1461 = vmatprep.subr.bf16.mxu0 0
    %1462 = vmatpush2.bf16.msra.mxu0 %v1091
    %1463 = vmatprep.subr.bf16.mxu0 0
    %1464 = vmatpush2.bf16.msra.mxu0 %v1090
    %1465 = vmatprep.subr.bf16.mxu0 0
    %1466 = vmatpush2.bf16.msra.mxu0 %v1089
    %1467 = vmatprep.subr.bf16.mxu0 0
    %1468 = vmatpush2.bf16.msra.mxu0 %v1088
    %1469 = vmatprep.subr.bf16.mxu0 0
    %1470 = vmatpush2.bf16.msra.mxu0 %v1087
    %1471 = vmatprep.mubr.bf16.mxu0 %v365
    %1472 = vmatmul.mubr.bf16.gmra.mxu0 %v363
    %v1473 = vpop.f32.mrf.mxu0
    %v1474 = vadd.f32 %v1434, %v1473
    %v1475 = vpop.f32.mrf.mxu0
    %v1476 = vpop.f32.mrf.mxu0
    %v1477 = vpop.f32.mrf.mxu0
    %1478 = vdwg.mxu0
    %1479 = vmatprep.subr.bf16.mxu0 0
    %1480 = vmatpush1.bf16.msra.mxu0 %v1102
    %1481 = vmatprep.subr.bf16.mxu0 0
    %1482 = vmatpush1.bf16.msra.mxu0 %v1101
    %1483 = vmatprep.subr.bf16.mxu0 0
    %1484 = vmatpush1.bf16.msra.mxu0 %v1100
    %1485 = vmatprep.subr.bf16.mxu0 0
    %1486 = vmatpush1.bf16.msra.mxu0 %v1099
    %1487 = vmatprep.subr.bf16.mxu0 0
    %1488 = vmatpush1.bf16.msra.mxu0 %v1098
    %1489 = vmatprep.subr.bf16.mxu0 0
    %1490 = vmatpush1.bf16.msra.mxu0 %v1097
    %1491 = vmatprep.subr.bf16.mxu0 0
    %1492 = vmatpush1.bf16.msra.mxu0 %v1096
    %1493 = vmatprep.subr.bf16.mxu0 0
    %1494 = vmatpush1.bf16.msra.mxu0 %v1095
    %1495 = vmatprep.subr.bf16.mxu0 0
    %1496 = vmatpush2.bf16.msra.mxu0 %v1110
    %1497 = vmatprep.subr.bf16.mxu0 0
    %1498 = vmatpush2.bf16.msra.mxu0 %v1109
    %1499 = vmatprep.subr.bf16.mxu0 0
    %1500 = vmatpush2.bf16.msra.mxu0 %v1108
    %1501 = vmatprep.subr.bf16.mxu0 0
    %1502 = vmatpush2.bf16.msra.mxu0 %v1107
    %1503 = vmatprep.subr.bf16.mxu0 0
    %1504 = vmatpush2.bf16.msra.mxu0 %v1106
    %1505 = vmatprep.subr.bf16.mxu0 0
    %1506 = vmatpush2.bf16.msra.mxu0 %v1105
    %1507 = vmatprep.subr.bf16.mxu0 0
    %1508 = vmatpush2.bf16.msra.mxu0 %v1104
    %1509 = vmatprep.subr.bf16.mxu0 0
    %1510 = vmatpush2.bf16.msra.mxu0 %v1103
    %1511 = vmatprep.mubr.bf16.mxu0 %v403
    %1512 = vmatmul.mubr.bf16.gmra.mxu0 %v389
    %v1513 = vpop.f32.mrf.mxu0
    %v1514 = vadd.f32 %v1474, %v1513
    %v1515 = vpop.f32.mrf.mxu0
    %v1516 = vpop.f32.mrf.mxu0
    %v1517 = vpop.f32.mrf.mxu0
    %1518 = vdwg.mxu0
    %1519 = vmatprep.subr.bf16.mxu0 0
    %1520 = vmatpush1.bf16.msra.mxu0 %v1118
    %1521 = vmatprep.subr.bf16.mxu0 0
    %1522 = vmatpush1.bf16.msra.mxu0 %v1117
    %1523 = vmatprep.subr.bf16.mxu0 0
    %1524 = vmatpush1.bf16.msra.mxu0 %v1116
    %1525 = vmatprep.subr.bf16.mxu0 0
    %1526 = vmatpush1.bf16.msra.mxu0 %v1115
    %1527 = vmatprep.subr.bf16.mxu0 0
    %1528 = vmatpush1.bf16.msra.mxu0 %v1114
    %1529 = vmatprep.subr.bf16.mxu0 0
    %1530 = vmatpush1.bf16.msra.mxu0 %v1113
    %1531 = vmatprep.subr.bf16.mxu0 0
    %1532 = vmatpush1.bf16.msra.mxu0 %v1112
    %1533 = vmatprep.subr.bf16.mxu0 0
    %1534 = vmatpush1.bf16.msra.mxu0 %v1111
    %1535 = vmatprep.subr.bf16.mxu0 0
    %1536 = vmatpush2.bf16.msra.mxu0 %v1126
    %1537 = vmatprep.subr.bf16.mxu0 0
    %1538 = vmatpush2.bf16.msra.mxu0 %v1125
    %1539 = vmatprep.subr.bf16.mxu0 0
    %1540 = vmatpush2.bf16.msra.mxu0 %v1124
    %1541 = vmatprep.subr.bf16.mxu0 0
    %1542 = vmatpush2.bf16.msra.mxu0 %v1123
    %1543 = vmatprep.subr.bf16.mxu0 0
    %1544 = vmatpush2.bf16.msra.mxu0 %v1122
    %1545 = vmatprep.subr.bf16.mxu0 0
    %1546 = vmatpush2.bf16.msra.mxu0 %v1121
    %1547 = vmatprep.subr.bf16.mxu0 0
    %1548 = vmatpush2.bf16.msra.mxu0 %v1120
    %1549 = vmatprep.subr.bf16.mxu0 0
    %1550 = vmatpush2.bf16.msra.mxu0 %v1119
    %1551 = vmatprep.mubr.bf16.mxu0 %v413
    %1552 = vmatmul.mubr.bf16.gmra.mxu0 %v411
    %v1553 = vpop.f32.mrf.mxu0
    %v1554 = vadd.f32 %v1514, %v1553
    %v1555 = vpop.f32.mrf.mxu0
    %v1556 = vpop.f32.mrf.mxu0
    %v1557 = vpop.f32.mrf.mxu0
    %1558 = vdwg.mxu0
    %1559 = vmatprep.subr.bf16.mxu0 0
    %1560 = vmatpush1.bf16.msra.mxu0 %v1134
    %1561 = vmatprep.subr.bf16.mxu0 0
    %1562 = vmatpush1.bf16.msra.mxu0 %v1133
    %1563 = vmatprep.subr.bf16.mxu0 0
    %1564 = vmatpush1.bf16.msra.mxu0 %v1132
    %1565 = vmatprep.subr.bf16.mxu0 0
    %1566 = vmatpush1.bf16.msra.mxu0 %v1131
    %1567 = vmatprep.subr.bf16.mxu0 0
    %1568 = vmatpush1.bf16.msra.mxu0 %v1130
    %1569 = vmatprep.subr.bf16.mxu0 0
    %1570 = vmatpush1.bf16.msra.mxu0 %v1129
    %1571 = vmatprep.subr.bf16.mxu0 0
    %1572 = vmatpush1.bf16.msra.mxu0 %v1128
    %1573 = vmatprep.subr.bf16.mxu0 0
    %1574 = vmatpush1.bf16.msra.mxu0 %v1127
    %1575 = vmatprep.subr.bf16.mxu0 0
    %1576 = vmatpush2.bf16.msra.mxu0 %v1142
    %1577 = vmatprep.subr.bf16.mxu0 0
    %1578 = vmatpush2.bf16.msra.mxu0 %v1141
    %1579 = vmatprep.subr.bf16.mxu0 0
    %1580 = vmatpush2.bf16.msra.mxu0 %v1140
    %1581 = vmatprep.subr.bf16.mxu0 0
    %1582 = vmatpush2.bf16.msra.mxu0 %v1139
    %1583 = vmatprep.subr.bf16.mxu0 0
    %1584 = vmatpush2.bf16.msra.mxu0 %v1138
    %1585 = vmatprep.subr.bf16.mxu0 0
    %1586 = vmatpush2.bf16.msra.mxu0 %v1137
    %1587 = vmatprep.subr.bf16.mxu0 0
    %1588 = vmatpush2.bf16.msra.mxu0 %v1136
    %1589 = vmatprep.subr.bf16.mxu0 0
    %1590 = vmatpush2.bf16.msra.mxu0 %v1135
    %1591 = vmatprep.mubr.bf16.mxu0 %v410
    %1592 = vmatmul.mubr.bf16.gmra.mxu0 %v396
    %v1593 = vpop.f32.mrf.mxu0
    %v1594 = vadd.f32 %v1554, %v1593
    %v1595 = vpop.f32.mrf.mxu0
    %v1596 = vpop.f32.mrf.mxu0
    %v1597 = vpop.f32.mrf.mxu0
    %1598 = vdwg.mxu0
    %1599 = vmatprep.subr.bf16.mxu0 0
    %1600 = vmatpush1.bf16.msra.mxu0 %v1150
    %1601 = vmatprep.subr.bf16.mxu0 0
    %1602 = vmatpush1.bf16.msra.mxu0 %v1149
    %1603 = vmatprep.subr.bf16.mxu0 0
    %1604 = vmatpush1.bf16.msra.mxu0 %v1148
    %1605 = vmatprep.subr.bf16.mxu0 0
    %1606 = vmatpush1.bf16.msra.mxu0 %v1147
    %1607 = vmatprep.subr.bf16.mxu0 0
    %1608 = vmatpush1.bf16.msra.mxu0 %v1146
    %1609 = vmatprep.subr.bf16.mxu0 0
    %1610 = vmatpush1.bf16.msra.mxu0 %v1145
    %1611 = vmatprep.subr.bf16.mxu0 0
    %1612 = vmatpush1.bf16.msra.mxu0 %v1144
    %1613 = vmatprep.subr.bf16.mxu0 0
    %1614 = vmatpush1.bf16.msra.mxu0 %v1143
    %1615 = vmatprep.subr.bf16.mxu0 0
    %1616 = vmatpush2.bf16.msra.mxu0 %v1158
    %1617 = vmatprep.subr.bf16.mxu0 0
    %1618 = vmatpush2.bf16.msra.mxu0 %v1157
    %1619 = vmatprep.subr.bf16.mxu0 0
    %1620 = vmatpush2.bf16.msra.mxu0 %v1156
    %1621 = vmatprep.subr.bf16.mxu0 0
    %1622 = vmatpush2.bf16.msra.mxu0 %v1155
    %1623 = vmatprep.subr.bf16.mxu0 0
    %1624 = vmatpush2.bf16.msra.mxu0 %v1154
    %1625 = vmatprep.subr.bf16.mxu0 0
    %1626 = vmatpush2.bf16.msra.mxu0 %v1153
    %1627 = vmatprep.subr.bf16.mxu0 0
    %1628 = vmatpush2.bf16.msra.mxu0 %v1152
    %1629 = vmatprep.subr.bf16.mxu0 0
    %1630 = vmatpush2.bf16.msra.mxu0 %v1151
    %1631 = vmatprep.mubr.bf16.mxu0 %v414
    %1632 = vmatmul.mubr.bf16.gmra.mxu0 %v412
    %v1633 = vpop.f32.mrf.mxu0
    %v1634 = vadd.f32 %v1594, %v1633
    %v1635 = vpop.f32.mrf.mxu0
    %v1636 = vpop.f32.mrf.mxu0
    %v1637 = vpop.f32.mrf.mxu0
    %1638 = vdwg.mxu0
    %1639 = vmatprep.subr.bf16.mxu0 0
    %1640 = vmatpush1.bf16.msra.mxu0 %v1166
    %1641 = vmatprep.subr.bf16.mxu0 0
    %1642 = vmatpush1.bf16.msra.mxu0 %v1165
    %1643 = vmatprep.subr.bf16.mxu0 0
    %1644 = vmatpush1.bf16.msra.mxu0 %v1164
    %1645 = vmatprep.subr.bf16.mxu0 0
    %1646 = vmatpush1.bf16.msra.mxu0 %v1163
    %1647 = vmatprep.subr.bf16.mxu0 0
    %1648 = vmatpush1.bf16.msra.mxu0 %v1162
    %1649 = vmatprep.subr.bf16.mxu0 0
    %1650 = vmatpush1.bf16.msra.mxu0 %v1161
    %1651 = vmatprep.subr.bf16.mxu0 0
    %1652 = vmatpush1.bf16.msra.mxu0 %v1160
    %1653 = vmatprep.subr.bf16.mxu0 0
    %1654 = vmatpush1.bf16.msra.mxu0 %v1159
    %1655 = vmatprep.subr.bf16.mxu0 0
    %1656 = vmatpush2.bf16.msra.mxu0 %v1174
    %1657 = vmatprep.subr.bf16.mxu0 0
    %1658 = vmatpush2.bf16.msra.mxu0 %v1173
    %1659 = vmatprep.subr.bf16.mxu0 0
    %1660 = vmatpush2.bf16.msra.mxu0 %v1172
    %1661 = vmatprep.subr.bf16.mxu0 0
    %1662 = vmatpush2.bf16.msra.mxu0 %v1171
    %1663 = vmatprep.subr.bf16.mxu0 0
    %1664 = vmatpush2.bf16.msra.mxu0 %v1170
    %1665 = vmatprep.subr.bf16.mxu0 0
    %1666 = vmatpush2.bf16.msra.mxu0 %v1169
    %1667 = vmatprep.subr.bf16.mxu0 0
    %1668 = vmatpush2.bf16.msra.mxu0 %v1168
    %1669 = vmatprep.subr.bf16.mxu0 0
    %1670 = vmatpush2.bf16.msra.mxu0 %v1167
    %1671 = vmatprep.mubr.bf16.mxu0 %v436
    %1672 = vmatmul.mubr.bf16.gmra.mxu0 %v429
    %v1673 = vpop.f32.mrf.mxu0
    %v1674 = vadd.f32 %v1634, %v1673
    %v1675 = vpop.f32.mrf.mxu0
    %v1676 = vpop.f32.mrf.mxu0
    %v1677 = vpop.f32.mrf.mxu0
    %1678 = vdwg.mxu0
    %v1679 = vmul.f32 %v1674, %v1674
    %vm1680 = vcmask 1041408
    %v1681 = vsel %vm1680, %v1679, 0.0
    %1682 = vadd.xlane.f32.xlu0 %v1681
    %v1683 = vpop.xlane.xlu0 %1682
    %v1684 = vmax.f32 %v1683, 1e-24
    %v1685 = vrsqrt.pop %v1684
    %v1686 = vmul.f32 %v1674, %v1685
    %1687 = vst [vmem:[#allocation2] sm:$0x3] %v1686
    // Predicated region
    $region14: #{fenet3_forward.5} parent=1 // pred_check
      _
    $region15: #{fenet3_forward.5} parent=1 // pred_check_branch
      %1689 = sbr.rel (0) target = $region17
    $region16: #{fenet3_forward.5} parent=1 // pred_region
      %s1691 = ssub.s32 32, 32
      %1692 = vsyncadd [#allocation3], %s1691
      %s1694 = sshll.u32 [#allocation2], 4
      %s1695 = int_to_ptr.vmem [resolvable:$true] %s1694
      %1697 = dma.vmem_to_hbm [thread:$0]  %s1695, 32, %s3, [#allocation3]
    $region17: #{fenet3_forward.5} parent=1 // pred_fallthru
      _
    // Predicated region
    $region18: #{fenet3_forward.5} parent=1 // pred_check
      _
    $region19: #{fenet3_forward.5} parent=1 // pred_check_branch
      %1699 = sbr.rel (0) target = $region21
    $region20: #{fenet3_forward.5} parent=1 // pred_region
      %1700 = dma.done [#allocation3], 32
    $region21: #{fenet3_forward.5} parent=1 // pred_fallthru
      _
    %1701 = vsyncpa [#allocation3], 1

</llo_original>
